<compile_context>
chip_gen: v7x
topology: tpu7x:2x2x1
jax: 0.10.0
libtpu: 0.0.40
codegen_flags: <defaults>
</compile_context>

<pallas_src>
import math
from functools import partial

import numpy as np
import jax
import jax.numpy as jnp
from jax.experimental import pallas as pl
from jax.experimental.pallas import tpu as pltpu


ACT_DTYPE = jnp.bfloat16   # residual-stream / activation dtype in HBM
MXU_DTYPE = jnp.bfloat16   # matmul operand dtype (accumulation stays f32)

# Explicit scoped-VMEM limits (defaults: 16 MiB v5e / 32 MiB v6e+v7x).
# 64 MiB fits all three generations' physical VMEM at these dims; re-derive
# the per-block budget (weights + (T,3D) QKV + (H,T,T) scores + (T,mlp)) at
# production sizes.
BLOCK_VMEM_LIMIT_BYTES = 64 * 1024 * 1024
SIMPLE_VMEM_LIMIT_BYTES = 32 * 1024 * 1024


def _round_up(x, m):
    return (x + m - 1) // m * m


def _choose_tile(L, cap=128):
    """Largest tile <= cap that divides L and is a multiple of 8 (else L)."""
    if L <= cap:
        return L
    for t in range(cap, 0, -8):
        if L % t == 0:
            return t
    return L


def _const_spec(shape):
    """BlockSpec for a grid-invariant operand: single-buffered (no 2x VMEM)."""
    index_map = lambda *_: (0,) * len(shape)
    buffered = getattr(pl, "Buffered", None)
    if buffered is not None:
        try:
            return pl.BlockSpec(shape, index_map, pipeline_mode=buffered(1))
        except TypeError:  # older jax without pipeline_mode kwarg
            pass
    return pl.BlockSpec(shape, index_map)


def _layernorm_cast(x, g, b, eps, out_dtype):
    # x: (T, D) f32; stats in f32, normalized output emitted directly in the
    # matmul dtype (halves the elementwise-path footprint).
    mu = jnp.mean(x, axis=-1, keepdims=True)
    xc = x - mu
    var = jnp.mean(xc * xc, axis=-1, keepdims=True)
    return ((xc * jax.lax.rsqrt(var + eps)) * g + b).astype(out_dtype)


# ----------------------------------------------------------------------------
# Kernel 1: patch embedding (Conv2d k=s=p as matmul) + (pos-embed + conv bias)
# ----------------------------------------------------------------------------

def _patch_embed_kernel(p_ref, w_ref, pos_ref, o_ref):
    y = jnp.dot(p_ref[0], w_ref[...], preferred_element_type=jnp.float32)
    o_ref[0] = (y + pos_ref[0]).astype(o_ref.dtype)


def pallas_patch_embed(patches, w, pos_bias):
    # patches: (N, L, C*p*p) bf16; w: (C*p*p, D) bf16; pos_bias: (1, L, D) f32
    N, L, Cpp = patches.shape
    D = w.shape[1]
    tl = _choose_tile(L)
    return pl.pallas_call(
        _patch_embed_kernel,
        grid=(N, L // tl),
        in_specs=[
            pl.BlockSpec((1, tl, Cpp), lambda n, j: (n, j, 0)),
            _const_spec((Cpp, D)),
            pl.BlockSpec((1, tl, D), lambda n, j: (0, j, 0)),
        ],
        out_specs=pl.BlockSpec((1, tl, D), lambda n, j: (n, j, 0)),
        out_shape=jax.ShapeDtypeStruct((N, L, D), ACT_DTYPE),
        compiler_params=pltpu.CompilerParams(
            dimension_semantics=("parallel", "parallel"),
            vmem_limit_bytes=SIMPLE_VMEM_LIMIT_BYTES),
    )(patches, w, pos_bias)


# ----------------------------------------------------------------------------
# Kernel 2: fused pre-LN transformer block (attention + MLP), grid over batch
# ----------------------------------------------------------------------------

def pallas_transformer_block(x, blk, num_heads, valid_len, pre_add=None, eps=1e-6):
    N, T, D = x.shape
    H = num_heads
    hd = D // H
    scale = 1.0 / math.sqrt(hd)

    def kernel(*refs):
        if pre_add is not None:
            (x_ref, pre_ref, wqkv_ref, bqkv_ref, wo_ref, bo_ref,
             g1_ref, bn1_ref, g2_ref, bn2_ref,
             w1_ref, b1_ref, w2_ref, b2_ref, o_ref) = refs
        else:
            (x_ref, wqkv_ref, bqkv_ref, wo_ref, bo_ref,
             g1_ref, bn1_ref, g2_ref, bn2_ref,
             w1_ref, b1_ref, w2_ref, b2_ref, o_ref) = refs
            pre_ref = None

        x_f = x_ref[0].astype(jnp.float32)                       # (T, D)
        if pre_ref is not None:                                  # dec pos-embed
            x_f = x_f + pre_ref[0]

        # ---- attention branch -------------------------------------------
        y = _layernorm_cast(x_f, g1_ref[...], bn1_ref[...], eps, MXU_DTYPE)
        qkv = (jnp.dot(y, wqkv_ref[...], preferred_element_type=jnp.float32)
               + bqkv_ref[...]).astype(MXU_DTYPE)                # (T, 3D)

        # head-batched layout (H, T, hd): no unrolled per-head compute,
        # no lane-concat of head outputs.
        q = jnp.stack([qkv[:, h * hd:(h + 1) * hd] for h in range(H)], axis=0)
        k = jnp.stack([qkv[:, D + h * hd:D + (h + 1) * hd] for h in range(H)],
                      axis=0)
        v = jnp.stack([qkv[:, 2 * D + h * hd:2 * D + (h + 1) * hd]
                       for h in range(H)], axis=0)

        s = jax.lax.dot_general(q, k, (((2,), (2,)), ((0,), (0,))),
                                preferred_element_type=jnp.float32) * scale
        if valid_len < T:  # mask padded key columns (token dim padded to 8k)
            col = jax.lax.broadcasted_iota(jnp.int32, (H, T, T), 2)
            s = jnp.where(col < valid_len, s, -1e30)
        m = jnp.max(s, axis=-1, keepdims=True)
        e = jnp.exp(s - m)
        p = e * pl.reciprocal(jnp.sum(e, axis=-1, keepdims=True), approx=True)
        o_h = jax.lax.dot_general(p.astype(MXU_DTYPE), v,
                                  (((2,), (1,)), ((0,), (0,))),
                                  preferred_element_type=jnp.float32)  # (H,T,hd)
        # out-projection with head-major Wo (H, hd, D): batched matmul + sum
        proj = jax.lax.dot_general(o_h.astype(MXU_DTYPE), wo_ref[...],
                                   (((2,), (1,)), ((0,), (0,))),
                                   preferred_element_type=jnp.float32)  # (H,T,D)
        attn = jnp.sum(proj, axis=0) + bo_ref[...]
        x1 = x_f + attn                                          # residual (f32)

        # ---- MLP branch (hidden never leaves VMEM) ------------------------
        y2 = _layernorm_cast(x1, g2_ref[...], bn2_ref[...], eps, MXU_DTYPE)
        hdn = jnp.dot(y2, w1_ref[...], preferred_element_type=jnp.float32) + b1_ref[...]
        # TODO(synk): nn.GELU defaults to exact erf; tanh approximation used for
        # guaranteed Mosaic lowering.
        hdn = jax.nn.gelu(hdn, approximate=True)
        mlp = jnp.dot(hdn.astype(MXU_DTYPE), w2_ref[...],
                      preferred_element_type=jnp.float32) + b2_ref[...]
        o_ref[0] = (x1 + mlp).astype(o_ref.dtype)

    tok_spec = pl.BlockSpec((1, T, D), lambda n: (n, 0, 0))
    in_specs = [tok_spec]
    args = [x]
    if pre_add is not None:
        in_specs.append(_const_spec((1, T, D)))
        args.append(pre_add.astype(jnp.float32))
    weight_keys = ["wqkv", "bqkv", "wo_r", "bo", "ln1_g", "ln1_b", "ln2_g",
                   "ln2_b", "w1", "b1", "w2", "b2"]
    for kname in weight_keys:
        a = blk[kname]
        in_specs.append(_const_spec(a.shape))
        args.append(a)

    # TODO(synk): at production T/D add a query-tile grid axis (or split the
    # block into attention + MLP kernels) to stay within v7x's 64 MiB VMEM.
    return pl.pallas_call(
        kernel,
        grid=(N,),
        in_specs=in_specs,
        out_specs=tok_spec,
        out_shape=jax.ShapeDtypeStruct((N, T, D), ACT_DTYPE),
        compiler_params=pltpu.CompilerParams(
            dimension_semantics=("parallel",),
            vmem_limit_bytes=BLOCK_VMEM_LIMIT_BYTES),
    )(*args)


# ----------------------------------------------------------------------------
# Kernel 3: fused LayerNorm + Linear (enc_norm+dec_proj, dec_norm+decoder_pred)
#           tiled over flattened (N*T) rows
# ----------------------------------------------------------------------------

def _ln_linear_kernel(x_ref, g_ref, bn_ref, w_ref, b_ref, o_ref, *, eps):
    x = x_ref[...].astype(jnp.float32)
    y = _layernorm_cast(x, g_ref[...], bn_ref[...], eps, w_ref.dtype)
    o_ref[...] = (jnp.dot(y, w_ref[...], preferred_element_type=jnp.float32)
                  + b_ref[...]).astype(o_ref.dtype)


def pallas_ln_linear(x, g, bn, w, b, out_dtype, eps=1e-6):
    N, T, Din = x.shape
    Dout = w.shape[1]
    R = N * T
    x2 = x.reshape(R, Din)
    tr = 256 if R >= 256 else _round_up(R, 8)
    R_pad = _round_up(R, tr)
    if R_pad != R:  # padded rows are dropped after the call
        x2 = jnp.pad(x2, ((0, R_pad - R), (0, 0)))

    out = pl.pallas_call(
        partial(_ln_linear_kernel, eps=eps),
        grid=(R_pad // tr,),
        in_specs=[
            pl.BlockSpec((tr, Din), lambda i: (i, 0)),
            _const_spec((1, Din)),
            _const_spec((1, Din)),
            _const_spec((Din, Dout)),
            _const_spec((1, Dout)),
        ],
        out_specs=pl.BlockSpec((tr, Dout), lambda i: (i, 0)),
        out_shape=jax.ShapeDtypeStruct((R_pad, Dout), out_dtype),
        compiler_params=pltpu.CompilerParams(
            dimension_semantics=("parallel",),
            vmem_limit_bytes=SIMPLE_VMEM_LIMIT_BYTES),
    )(x2, g, bn, w, b)
    return out[:R].reshape(N, T, Dout)


# ----------------------------------------------------------------------------
# Kernel 4: masked MSE loss, tiled lane-dense reduction with VMEM accumulators
# ----------------------------------------------------------------------------

def _masked_mse_kernel(d_ref, p_ref, o_ref, num_ref, den_ref, *, inv_p):
    @pl.when(pl.program_id(0) == 0)
    def _():
        num_ref[...] = jnp.zeros_like(num_ref)
        den_ref[...] = jnp.zeros_like(den_ref)

    d = d_ref[...]
    diff = d - p_ref[...]            # mask lane is identical in both -> 0 diff
    row_sq = jnp.sum(diff * diff, axis=-1, keepdims=True)        # (tr, 1)
    mask_col = d[:, -1:]             # {0,1} mask folded into last padded lane
    num_ref[...] += jnp.sum(row_sq * mask_col, keepdims=True)
    den_ref[...] += jnp.sum(mask_col, keepdims=True)

    @pl.when(pl.program_id(0) == pl.num_programs(0) - 1)
    def _():
        # NOTE: like the reference, no guard against an all-zero mask.
        o_ref[...] = num_ref[...] * inv_p / den_ref[...]


def pallas_masked_mse(desired, pred, mask):
    # desired/pred: (N, L, P) f32; mask: (N, L) f32 (1 = masked patch)
    N, L, P = desired.shape
    R = N * L
    d2 = desired.reshape(R, P).astype(jnp.float32)
    p2 = pred.reshape(R, P).astype(jnp.float32)
    m1 = mask.reshape(R).astype(jnp.float32)

    # Lane-dense payload: pad P to a multiple of 128 (always leaving >=1 spare
    # lane) and fold the mask into the last lane of BOTH streams.
    P_pad = _round_up(P + 1, 128)
    filler = jnp.zeros((R, P_pad - P - 1), jnp.float32)
    d2 = jnp.concatenate([d2, filler, m1[:, None]], axis=1)
    p2 = jnp.concatenate([p2, filler, m1[:, None]], axis=1)

    # TODO(synk): raise to 1024 on v5e/v6e (128 MiB VMEM); 512 fits v7x budget.
    tr = 512 if R >= 512 else _round_up(R, 8)
    R_pad = _round_up(R, tr)
    if R_pad != R:  # zero-padded rows carry mask==0 -> no effect on num or den
        pad = R_pad - R
        d2 = jnp.pad(d2, ((0, pad), (0, 0)))
        p2 = jnp.pad(p2, ((0, pad), (0, 0)))

    out = pl.pallas_call(
        partial(_masked_mse_kernel, inv_p=1.0 / P),
        grid=(R_pad // tr,),
        in_specs=[
            pl.BlockSpec((tr, P_pad), lambda i: (i, 0)),
            pl.BlockSpec((tr, P_pad), lambda i: (i, 0)),
        ],
        out_specs=pl.BlockSpec((1, 1), lambda i: (0, 0)),
        out_shape=jax.ShapeDtypeStruct((1, 1), jnp.float32),
        scratch_shapes=[pltpu.VMEM((1, 1), jnp.float32),
                        pltpu.VMEM((1, 1), jnp.float32)],
        compiler_params=pltpu.CompilerParams(
            dimension_semantics=("arbitrary",),
            vmem_limit_bytes=SIMPLE_VMEM_LIMIT_BYTES),
    )(d2, p2)
    return out[0, 0]


# ----------------------------------------------------------------------------
# Parameter initialization (deterministic synthetic weights, kernel-ready layout)
# ----------------------------------------------------------------------------

def xavier_uniform(key, fan_in, fan_out):
    limit = math.sqrt(6.0 / (fan_in + fan_out))
    return jax.random.uniform(key, (fan_in, fan_out), jnp.float32, -limit, limit)


def sincos_1d(grid_flat, dim):
    omega = np.arange(dim // 2, dtype=np.float32) / (dim / 2.0)
    omega = 1.0 / (10000.0 ** omega)
    prod = np.einsum("m,d->md", grid_flat.astype(np.float32), omega)
    return np.concatenate([np.sin(prod), np.cos(prod)], axis=1)


def sincos_2d_pos_embed(seq_len_2d, patch_size, dim, class_token=False):
    h = seq_len_2d[0] // patch_size
    w = seq_len_2d[1] // patch_size
    # matches torch.meshgrid([arange(w), arange(h)], indexing='xy')
    mg_h, mg_w = np.meshgrid(np.arange(w, dtype=np.float32),
                             np.arange(h, dtype=np.float32))
    emb_h = sincos_1d(mg_h.reshape(-1), dim // 2)
    emb_w = sincos_1d(mg_w.reshape(-1), dim // 2)
    emb = np.concatenate([emb_h, emb_w], axis=1)
    if class_token:
        emb = np.concatenate([np.zeros((1, dim), np.float32), emb], axis=0)
    return emb.astype(np.float32)


def init_block(key, dim, mlp_hidden, num_heads):
    hd = dim // num_heads
    ks = jax.random.split(key, 6)
    wq = xavier_uniform(ks[0], dim, dim)
    wk = xavier_uniform(ks[1], dim, dim)
    wv = xavier_uniform(ks[2], dim, dim)
    wo = xavier_uniform(ks[3], dim, dim)
    return {
        "ln1_g": jnp.ones((1, dim), jnp.float32),
        "ln1_b": jnp.zeros((1, dim), jnp.float32),
        "ln2_g": jnp.ones((1, dim), jnp.float32),
        "ln2_b": jnp.zeros((1, dim), jnp.float32),
        # Q/K/V projections fused into one (D, 3D) matmul
        "wqkv": jnp.concatenate([wq, wk, wv], axis=1).astype(MXU_DTYPE),
        "bqkv": jnp.zeros((1, 3 * dim), jnp.float32),
        # Wo stored head-major (H, hd, D): out-projection runs as a batched
        # matmul over heads + sum, avoiding any lane-concat of head outputs.
        "wo_r": wo.reshape(num_heads, hd, dim).astype(MXU_DTYPE),
        "bo": jnp.zeros((1, dim), jnp.float32),
        "w1": xavier_uniform(ks[4], dim, mlp_hidden).astype(MXU_DTYPE),
        "b1": jnp.zeros((1, mlp_hidden), jnp.float32),
        "w2": xavier_uniform(ks[5], mlp_hidden, dim).astype(MXU_DTYPE),
        "b2": jnp.zeros((1, dim), jnp.float32),
    }


def init_params(key, cfg):
    p = cfg["patch_size"]
    C = cfg["in_channels"]
    enc_dim, dec_dim = cfg["enc_dim"], cfg["dec_dim"]
    mlp_e = round(enc_dim * cfg["mlp_ratio"])
    mlp_d = round(dec_dim * cfg["mlp_ratio"])
    # NOTE: the reference builds dec_blocks with `for i in range(enc_depth)`
    # (not dec_depth) -- reproduced intentionally to match the module.
    n_dec_blocks = cfg["enc_depth"]
    ks = iter(jax.random.split(key, 5 + cfg["enc_depth"] + n_dec_blocks))

    enc_proj_w = xavier_uniform(next(ks), C * p * p, enc_dim)
    enc_proj_b = jnp.zeros((1, enc_dim), jnp.float32)
    enc_pos = jnp.asarray(sincos_2d_pos_embed(cfg["seq_len_2d"], p, enc_dim, True))[None]
    dec_pos = jnp.asarray(sincos_2d_pos_embed(cfg["seq_len_2d"], p, dec_dim, True))[None]

    params = {
        "enc_proj_w": enc_proj_w.astype(MXU_DTYPE),
        # Conv bias folded into the (non-cls) encoder pos-embed: one fewer
        # constant stream + broadcast add in the patch-embed kernel.
        "enc_pos_bias": enc_pos[:, 1:, :] + enc_proj_b,
        "class_token": 0.02 * jax.random.normal(next(ks), (1, 1, enc_dim), jnp.float32),
        "mask_token": 0.02 * jax.random.normal(next(ks), (1, 1, dec_dim), jnp.float32),
        "enc_pos_embed": enc_pos,
        "dec_pos_embed": dec_pos,
        "enc_norm_g": jnp.ones((1, enc_dim), jnp.float32),
        "enc_norm_b": jnp.zeros((1, enc_dim), jnp.float32),
        "dec_norm_g": jnp.ones((1, dec_dim), jnp.float32),
        "dec_norm_b": jnp.zeros((1, dec_dim), jnp.float32),
        "dec_proj_w": xavier_uniform(next(ks), enc_dim, dec_dim).astype(MXU_DTYPE),
        "dec_proj_b": jnp.zeros((1, dec_dim), jnp.float32),
        "dec_pred_w": xavier_uniform(next(ks), dec_dim, p * p * C).astype(MXU_DTYPE),
        "dec_pred_b": jnp.zeros((1, p * p * C), jnp.float32),
    }
    params["enc_blocks"] = [init_block(next(ks), enc_dim, mlp_e, cfg["enc_num_heads"])
                            for _ in range(cfg["enc_depth"])]
    params["dec_blocks"] = [init_block(next(ks), dec_dim, mlp_d, cfg["dec_num_heads"])
                            for _ in range(n_dec_blocks)]
    return params


# ----------------------------------------------------------------------------
# Model forward (use_age='no', dropout=0, loss_type='mse', norm_pix_loss=False)
# ----------------------------------------------------------------------------

def mae_forward(params, cfg, img, age, key_mask):
    del age  # use_age='no' -> unused (kept for signature parity with PyTorch)
    N, C, H, W = img.shape
    p = cfg["patch_size"]
    h, w = H // p, W // p
    l_full = h * w
    enc_dim, dec_dim = cfg["enc_dim"], cfg["dec_dim"]

    # ---- encoder ---------------------------------------------------------
    # Conv2d(kernel=stride=p) == per-patch matmul; per-patch element order (C, ph, pw)
    patches = img.reshape(N, C, h, p, w, p).transpose(0, 2, 4, 1, 3, 5).reshape(
        N, l_full, C * p * p)
    x = pallas_patch_embed(patches.astype(MXU_DTYPE),
                           params["enc_proj_w"], params["enc_pos_bias"])

    # random masking (data-dependent argsort/gather: plain-JAX glue)
    l_keep = round(l_full * (1.0 - cfg["mask_ratio"]))
    noise = jax.random.uniform(key_mask, (N, l_full))
    idx_shuffle = jnp.argsort(noise, axis=1)
    idx_keep = idx_shuffle[:, :l_keep]
    x_masked = jnp.take_along_axis(x, idx_keep[..., None], axis=1)
    mask = jnp.ones((N, l_full), jnp.float32).at[:, :l_keep].set(0.0)
    idx_restore = jnp.argsort(idx_shuffle, axis=1)
    mask = jnp.take_along_axis(mask, idx_restore, axis=1)

    cls = (params["class_token"] + params["enc_pos_embed"][:, :1, :]).astype(x.dtype)
    x = jnp.concatenate([jnp.broadcast_to(cls, (N, 1, enc_dim)), x_masked], axis=1)

    # pad tokens to a multiple of 8 (cls makes T = 8k+1); padded keys are
    # masked inside the attention kernel, padded rows dropped afterwards.
    t_enc = 1 + l_keep
    t_enc_pad = _round_up(t_enc, 8)
    if t_enc_pad != t_enc:
        x = jnp.pad(x, ((0, 0), (0, t_enc_pad - t_enc), (0, 0)))
    for blk in params["enc_blocks"]:
        x = pallas_transformer_block(x, blk, cfg["enc_num_heads"], valid_len=t_enc)
    x = x[:, :t_enc]

    # ---- decoder ---------------------------------------------------------
    # enc_norm fused into dec_proj prologue
    x = pallas_ln_linear(x, params["enc_norm_g"], params["enc_norm_b"],
                         params["dec_proj_w"], params["dec_proj_b"],
                         out_dtype=ACT_DTYPE)
    cls_tok = x[:, :1, :]
    xr = x[:, 1:, :]
    n_mask = idx_restore.shape[1] - xr.shape[1]
    mask_tokens = jnp.broadcast_to(params["mask_token"].astype(x.dtype),
                                   (N, n_mask, dec_dim))
    xr = jnp.concatenate([xr, mask_tokens], axis=1)
    xr = jnp.take_along_axis(xr, idx_restore[..., None], axis=1)
    x = jnp.concatenate([cls_tok, xr], axis=1)

    t_dec = 1 + l_full
    t_dec_pad = _round_up(t_dec, 8)
    dec_pos = params["dec_pos_embed"]
    if t_dec_pad != t_dec:
        x = jnp.pad(x, ((0, 0), (0, t_dec_pad - t_dec), (0, 0)))
        dec_pos = jnp.pad(dec_pos, ((0, 0), (0, t_dec_pad - t_dec), (0, 0)))

    # decoder pos-embed add fused into the first decoder block's prologue
    for li, blk in enumerate(params["dec_blocks"]):
        x = pallas_transformer_block(
            x, blk, cfg["dec_num_heads"], valid_len=t_dec,
            pre_add=dec_pos if li == 0 else None)

    # dec_norm fused into decoder_pred prologue (LN is per-token, so dropping
    # cls/padding before the norm is equivalent)
    pred = pallas_ln_linear(x[:, 1:t_dec, :], params["dec_norm_g"], params["dec_norm_b"],
                            params["dec_pred_w"], params["dec_pred_b"],
                            out_dtype=jnp.float32)

    # ---- reconstruction loss (mse, norm_pix_loss=False) -------------------
    # patchify: einsum 'NChpwq->NhwpqC' -> per-patch element order (ph, pw, C)
    desired = img.reshape(N, C, h, p, w, p).transpose(0, 2, 4, 3, 5, 1).reshape(
        N, l_full, p * p * C)
    return pallas_masked_mse(desired, pred, mask)


# ----------------------------------------------------------------------------

if __name__ == "__main__":
    cfg = dict(
        seq_len_2d=(16, 16), patch_size=4, mask_ratio=0.5, in_channels=2,
        enc_num_heads=4, enc_dim=32, enc_depth=2,
        dec_num_heads=4, dec_dim=32, dec_depth=2,
        mlp_ratio=2.0,
    )
    params = init_params(jax.random.PRNGKey(42), cfg)

    key = jax.random.PRNGKey(0)
    k_img, k_age, k_mask = jax.random.split(key, 3)
    img = jax.random.normal(k_img, (2, cfg["in_channels"], 16, 16), jnp.float32)
    age = jax.random.normal(k_age, (2,), jnp.float32)

    loss_fn = jax.jit(lambda prm, im, ag, km: mae_forward(prm, cfg, im, ag, km))
    loss = jax.block_until_ready(loss_fn(params, img, age, k_mask))
    assert loss.shape == () and bool(jnp.isfinite(loss))
    print("KERNEL_OK")
</pallas_src>

<mosaic_0001>
module attributes {stable_mosaic.version = 11 : i64} {
  func.func @_patch_embed_kernel(%arg0: i32, %arg1: i32, %arg2: memref<1x16x32xbf16, #tpu.memory_space<vmem>>, %arg3: memref<32x32xbf16, #tpu.memory_space<vmem>>, %arg4: memref<1x16x32xf32, #tpu.memory_space<vmem>>, %arg5: memref<1x16x32xbf16, #tpu.memory_space<vmem>>) attributes {dimension_semantics = [#tpu.dimension_semantics<parallel>, #tpu.dimension_semantics<parallel>], iteration_bounds = array<i64: 2, 1>, scalar_prefetch = 0 : i64, scratch_operands = 0 : i64, tpu.core_type = #tpu.core_type<tc>, window_params = [{transform_indices = @transform_0, window_bounds = array<i64: 1, 16, 32>}, {pipeline_mode = #tpu.pipeline_mode<synchronous>, transform_indices = @transform_1, window_bounds = array<i64: 32, 32>}, {transform_indices = @transform_2, window_bounds = array<i64: 1, 16, 32>}, {transform_indices = @transform_3, window_bounds = array<i64: 1, 16, 32>}]} {
    %c0 = arith.constant 0 : index
    %c0_0 = arith.constant 0 : index
    %c0_1 = arith.constant 0 : index
    %0 = vector.load %arg2[%c0, %c0_0, %c0_1] : memref<1x16x32xbf16, #tpu.memory_space<vmem>>, vector<1x16x32xbf16>
    %1 = vector.shape_cast %0 : vector<1x16x32xbf16> to vector<16x32xbf16>
    %c0_2 = arith.constant 0 : index
    %c0_3 = arith.constant 0 : index
    %2 = vector.load %arg3[%c0_2, %c0_3] : memref<32x32xbf16, #tpu.memory_space<vmem>>, vector<32x32xbf16>
    %cst = arith.constant dense<0.000000e+00> : vector<16x32xf32>
    %3 = tpu.matmul %1, %2, %cst {dimension_numbers = #tpu.dot_dimension_numbers<[1], [0], [0], [1], [0, 0, 1, 1], [], []>} : vector<16x32xbf16>, vector<32x32xbf16>, vector<16x32xf32> -> vector<16x32xf32>
    %c0_4 = arith.constant 0 : index
    %c0_5 = arith.constant 0 : index
    %c0_6 = arith.constant 0 : index
    %4 = vector.load %arg4[%c0_4, %c0_5, %c0_6] : memref<1x16x32xf32, #tpu.memory_space<vmem>>, vector<1x16x32xf32>
    %5 = vector.shape_cast %4 : vector<1x16x32xf32> to vector<16x32xf32>
    %6 = arith.addf %3, %5 : vector<16x32xf32>
    %7 = arith.truncf %6 : vector<16x32xf32> to vector<16x32xbf16>
    %c0_7 = arith.constant 0 : index
    %c0_8 = arith.constant 0 : index
    %c0_9 = arith.constant 0 : index
    %8 = vector.load %arg5[%c0_7, %c0_8, %c0_9] : memref<1x16x32xbf16, #tpu.memory_space<vmem>>, vector<1x16x32xbf16>
    %9 = vector.shape_cast %8 : vector<1x16x32xbf16> to vector<16x32xbf16>
    %10 = vector.shape_cast %7 : vector<16x32xbf16> to vector<1x16x32xbf16>
    tpu.vector_store %arg5[%c0_7, %c0_8, %c0_9], %10 {strides = array<i32>} : memref<1x16x32xbf16, #tpu.memory_space<vmem>>, vector<1x16x32xbf16>,
    return
  }
  func.func @transform_0(%arg0: i32, %arg1: i32) -> (i32, i32, i32) {
    %c0_i32 = arith.constant 0 : i32
    %c0_i32_0 = arith.constant 0 : i32
    return %arg0, %arg1, %c0_i32 : i32, i32, i32
  }
  func.func @transform_1(%arg0: i32, %arg1: i32) -> (i32, i32) {
    %c0_i32 = arith.constant 0 : i32
    %c0_i32_0 = arith.constant 0 : i32
    %c0_i32_1 = arith.constant 0 : i32
    return %c0_i32, %c0_i32_0 : i32, i32
  }
  func.func @transform_2(%arg0: i32, %arg1: i32) -> (i32, i32, i32) {
    %c0_i32 = arith.constant 0 : i32
    %c0_i32_0 = arith.constant 0 : i32
    %c0_i32_1 = arith.constant 0 : i32
    return %c0_i32, %arg1, %c0_i32_0 : i32, i32, i32
  }
  func.func @transform_3(%arg0: i32, %arg1: i32) -> (i32, i32, i32) {
    %c0_i32 = arith.constant 0 : i32
    %c0_i32_0 = arith.constant 0 : i32
    return %arg0, %arg1, %c0_i32 : i32, i32, i32
  }
}

module attributes {stable_mosaic.version = 11 : i64} {
  func.func @kernel(%arg0: i32, %arg1: memref<1x16x32xbf16, #tpu.memory_space<vmem>>, %arg2: memref<32x96xbf16, #tpu.memory_space<vmem>>, %arg3: memref<1x96xf32, #tpu.memory_space<vmem>>, %arg4: memref<4x8x32xbf16, #tpu.memory_space<vmem>>, %arg5: memref<1x32xf32, #tpu.memory_space<vmem>>, %arg6: memref<1x32xf32, #tpu.memory_space<vmem>>, %arg7: memref<1x32xf32, #tpu.memory_space<vmem>>, %arg8: memref<1x32xf32, #tpu.memory_space<vmem>>, %arg9: memref<1x32xf32, #tpu.memory_space<vmem>>, %arg10: memref<32x64xbf16, #tpu.memory_space<vmem>>, %arg11: memref<1x64xf32, #tpu.memory_space<vmem>>, %arg12: memref<64x32xbf16, #tpu.memory_space<vmem>>, %arg13: memref<1x32xf32, #tpu.memory_space<vmem>>, %arg14: memref<1x16x32xbf16, #tpu.memory_space<vmem>>) attributes {dimension_semantics = [#tpu.dimension_semantics<parallel>], iteration_bounds = array<i64: 2>, scalar_prefetch = 0 : i64, scratch_operands = 0 : i64, tpu.core_type = #tpu.core_type<tc>, window_params = [{transform_indices = @transform_0, window_bounds = array<i64: 1, 16, 32>}, {pipeline_mode = #tpu.pipeline_mode<synchronous>, transform_indices = @transform_1, window_bounds = array<i64: 32, 96>}, {pipeline_mode = #tpu.pipeline_mode<synchronous>, transform_indices = @transform_2, window_bounds = array<i64: 1, 96>}, {pipeline_mode = #tpu.pipeline_mode<synchronous>, transform_indices = @transform_3, window_bounds = array<i64: 4, 8, 32>}, {pipeline_mode = #tpu.pipeline_mode<synchronous>, transform_indices = @transform_4, window_bounds = array<i64: 1, 32>}, {pipeline_mode = #tpu.pipeline_mode<synchronous>, transform_indices = @transform_5, window_bounds = array<i64: 1, 32>}, {pipeline_mode = #tpu.pipeline_mode<synchronous>, transform_indices = @transform_6, window_bounds = array<i64: 1, 32>}, {pipeline_mode = #tpu.pipeline_mode<synchronous>, transform_indices = @transform_7, window_bounds = array<i64: 1, 32>}, {pipeline_mode = #tpu.pipeline_mode<synchronous>, transform_indices = @transform_8, window_bounds = array<i64: 1, 32>}, {pipeline_mode = #tpu.pipeline_mode<synchronous>, transform_indices = @transform_9, window_bounds = array<i64: 32, 64>}, {pipeline_mode = #tpu.pipeline_mode<synchronous>, transform_indices = @transform_10, window_bounds = array<i64: 1, 64>}, {pipeline_mode = #tpu.pipeline_mode<synchronous>, transform_indices = @transform_11, window_bounds = array<i64: 64, 32>}, {pipeline_mode = #tpu.pipeline_mode<synchronous>, transform_indices = @transform_12, window_bounds = array<i64: 1, 32>}, {transform_indices = @transform_13, window_bounds = array<i64: 1, 16, 32>}]} {
    %c0 = arith.constant 0 : index
    %c0_0 = arith.constant 0 : index
    %c0_1 = arith.constant 0 : index
    %0 = vector.load %arg1[%c0, %c0_0, %c0_1] : memref<1x16x32xbf16, #tpu.memory_space<vmem>>, vector<1x16x32xbf16>
    %1 = vector.shape_cast %0 : vector<1x16x32xbf16> to vector<16x32xbf16>
    %2 = arith.extf %1 : vector<16x32xbf16> to vector<16x32xf32>
    %c0_2 = arith.constant 0 : index
    %c0_3 = arith.constant 0 : index
    %3 = vector.load %arg6[%c0_2, %c0_3] : memref<1x32xf32, #tpu.memory_space<vmem>>, vector<1x32xf32>
    %c0_4 = arith.constant 0 : index
    %c0_5 = arith.constant 0 : index
    %4 = vector.load %arg7[%c0_4, %c0_5] : memref<1x32xf32, #tpu.memory_space<vmem>>, vector<1x32xf32>
    %cst = arith.constant dense<0.000000e+00> : vector<16xf32>
    %5 = vector.multi_reduction <add>, %2, %cst [1] : vector<16x32xf32> to vector<16xf32>
    %6 = vector.shape_cast %5 : vector<16xf32> to vector<16x1xf32>
    %cst_6 = arith.constant 3.200000e+01 : f32
    %7 = vector.broadcast %cst_6 : f32 to vector<16x1xf32>
    %8 = arith.divf %6, %7 : vector<16x1xf32>
    %9 = vector.broadcast %8 : vector<16x1xf32> to vector<16x32xf32>
    %10 = arith.subf %2, %9 : vector<16x32xf32>
    %11 = arith.mulf %10, %10 : vector<16x32xf32>
    %cst_7 = arith.constant dense<0.000000e+00> : vector<16xf32>
    %12 = vector.multi_reduction <add>, %11, %cst_7 [1] : vector<16x32xf32> to vector<16xf32>
    %13 = vector.shape_cast %12 : vector<16xf32> to vector<16x1xf32>
    %cst_8 = arith.constant 3.200000e+01 : f32
    %14 = vector.broadcast %cst_8 : f32 to vector<16x1xf32>
    %15 = arith.divf %13, %14 : vector<16x1xf32>
    %cst_9 = arith.constant 9.99999997E-7 : f32
    %16 = vector.broadcast %cst_9 : f32 to vector<16x1xf32>
    %17 = arith.addf %15, %16 : vector<16x1xf32>
    %18 = math.rsqrt %17 : vector<16x1xf32>
    %19 = vector.broadcast %18 : vector<16x1xf32> to vector<16x32xf32>
    %20 = arith.mulf %10, %19 : vector<16x32xf32>
    %21 = vector.broadcast %3 : vector<1x32xf32> to vector<16x32xf32>
    %22 = arith.mulf %20, %21 : vector<16x32xf32>
    %23 = vector.broadcast %4 : vector<1x32xf32> to vector<16x32xf32>
    %24 = arith.addf %22, %23 : vector<16x32xf32>
    %25 = arith.truncf %24 : vector<16x32xf32> to vector<16x32xbf16>
    %c0_10 = arith.constant 0 : index
    %c0_11 = arith.constant 0 : index
    %26 = vector.load %arg2[%c0_10, %c0_11] : memref<32x96xbf16, #tpu.memory_space<vmem>>, vector<32x96xbf16>
    %cst_12 = arith.constant dense<0.000000e+00> : vector<16x96xf32>
    %27 = tpu.matmul %25, %26, %cst_12 {dimension_numbers = #tpu.dot_dimension_numbers<[1], [0], [0], [1], [0, 0, 1, 1], [], []>} : vector<16x32xbf16>, vector<32x96xbf16>, vector<16x96xf32> -> vector<16x96xf32>
    %c0_13 = arith.constant 0 : index
    %c0_14 = arith.constant 0 : index
    %28 = vector.load %arg3[%c0_13, %c0_14] : memref<1x96xf32, #tpu.memory_space<vmem>>, vector<1x96xf32>
    %29 = vector.broadcast %28 : vector<1x96xf32> to vector<16x96xf32>
    %30 = arith.addf %27, %29 : vector<16x96xf32>
    %31 = arith.truncf %30 : vector<16x96xf32> to vector<16x96xbf16>
    %32 = vector.extract_strided_slice %31 {offsets = [0, 0], sizes = [16, 8], strides = [1, 1]} : vector<16x96xbf16> to vector<16x8xbf16>
    %33 = vector.extract_strided_slice %31 {offsets = [0, 8], sizes = [16, 8], strides = [1, 1]} : vector<16x96xbf16> to vector<16x8xbf16>
    %34 = vector.extract_strided_slice %31 {offsets = [0, 16], sizes = [16, 8], strides = [1, 1]} : vector<16x96xbf16> to vector<16x8xbf16>
    %35 = vector.extract_strided_slice %31 {offsets = [0, 24], sizes = [16, 8], strides = [1, 1]} : vector<16x96xbf16> to vector<16x8xbf16>
    %36 = vector.shape_cast %32 : vector<16x8xbf16> to vector<1x16x8xbf16>
    %37 = vector.shape_cast %33 : vector<16x8xbf16> to vector<1x16x8xbf16>
    %38 = vector.shape_cast %34 : vector<16x8xbf16> to vector<1x16x8xbf16>
    %39 = vector.shape_cast %35 : vector<16x8xbf16> to vector<1x16x8xbf16>
    %40 = tpu.concatenate %36, %37, %38, %39 in 0 : vector<1x16x8xbf16>, vector<1x16x8xbf16>, vector<1x16x8xbf16>, vector<1x16x8xbf16> -> vector<4x16x8xbf16>
    %41 = vector.extract_strided_slice %31 {offsets = [0, 32], sizes = [16, 8], strides = [1, 1]} : vector<16x96xbf16> to vector<16x8xbf16>
    %42 = vector.extract_strided_slice %31 {offsets = [0, 40], sizes = [16, 8], strides = [1, 1]} : vector<16x96xbf16> to vector<16x8xbf16>
    %43 = vector.extract_strided_slice %31 {offsets = [0, 48], sizes = [16, 8], strides = [1, 1]} : vector<16x96xbf16> to vector<16x8xbf16>
    %44 = vector.extract_strided_slice %31 {offsets = [0, 56], sizes = [16, 8], strides = [1, 1]} : vector<16x96xbf16> to vector<16x8xbf16>
    %45 = vector.shape_cast %41 : vector<16x8xbf16> to vector<1x16x8xbf16>
    %46 = vector.shape_cast %42 : vector<16x8xbf16> to vector<1x16x8xbf16>
    %47 = vector.shape_cast %43 : vector<16x8xbf16> to vector<1x16x8xbf16>
    %48 = vector.shape_cast %44 : vector<16x8xbf16> to vector<1x16x8xbf16>
    %49 = tpu.concatenate %45, %46, %47, %48 in 0 : vector<1x16x8xbf16>, vector<1x16x8xbf16>, vector<1x16x8xbf16>, vector<1x16x8xbf16> -> vector<4x16x8xbf16>
    %50 = vector.extract_strided_slice %31 {offsets = [0, 64], sizes = [16, 8], strides = [1, 1]} : vector<16x96xbf16> to vector<16x8xbf16>
    %51 = vector.extract_strided_slice %31 {offsets = [0, 72], sizes = [16, 8], strides = [1, 1]} : vector<16x96xbf16> to vector<16x8xbf16>
    %52 = vector.extract_strided_slice %31 {offsets = [0, 80], sizes = [16, 8], strides = [1, 1]} : vector<16x96xbf16> to vector<16x8xbf16>
    %53 = vector.extract_strided_slice %31 {offsets = [0, 88], sizes = [16, 8], strides = [1, 1]} : vector<16x96xbf16> to vector<16x8xbf16>
    %54 = vector.shape_cast %50 : vector<16x8xbf16> to vector<1x16x8xbf16>
    %55 = vector.shape_cast %51 : vector<16x8xbf16> to vector<1x16x8xbf16>
    %56 = vector.shape_cast %52 : vector<16x8xbf16> to vector<1x16x8xbf16>
    %57 = vector.shape_cast %53 : vector<16x8xbf16> to vector<1x16x8xbf16>
    %58 = tpu.concatenate %54, %55, %56, %57 in 0 : vector<1x16x8xbf16>, vector<1x16x8xbf16>, vector<1x16x8xbf16>, vector<1x16x8xbf16> -> vector<4x16x8xbf16>
    %cst_15 = arith.constant dense<0.000000e+00> : vector<4x16x16xf32>
    %59 = tpu.matmul %40, %49, %cst_15 {dimension_numbers = #tpu.dot_dimension_numbers<[2], [2], [1], [1], [0, 0, 0, 1, 1, 1], [0], [0]>} : vector<4x16x8xbf16>, vector<4x16x8xbf16>, vector<4x16x16xf32> -> vector<4x16x16xf32>
    %cst_16 = arith.constant 0.353553385 : f32
    %60 = vector.broadcast %cst_16 : f32 to vector<4x16x16xf32>
    %61 = arith.mulf %59, %60 : vector<4x16x16xf32>
    %62 = tpu.iota {dimensions = array<i32: 2>} : vector<4x16x16xi32>
    %c9_i32 = arith.constant 9 : i32
    %63 = vector.broadcast %c9_i32 : i32 to vector<4x16x16xi32>
    %64 = arith.cmpi slt, %62, %63 : vector<4x16x16xi32>
    %cst_17 = arith.constant -1.000000e+30 : f32
    %65 = vector.broadcast %cst_17 : f32 to vector<4x16x16xf32>
    %66 = arith.select %64, %61, %65 : vector<4x16x16xi1>, vector<4x16x16xf32>
    %cst_18 = arith.constant dense<0xFF800000> : vector<4x16xf32>
    %67 = vector.multi_reduction <maximumf>, %66, %cst_18 [2] : vector<4x16x16xf32> to vector<4x16xf32>
    %68 = vector.shape_cast %67 : vector<4x16xf32> to vector<4x16x1xf32>
    %69 = vector.broadcast %68 : vector<4x16x1xf32> to vector<4x16x16xf32>
    %70 = arith.subf %66, %69 : vector<4x16x16xf32>
    %71 = math.exp %70 : vector<4x16x16xf32>
    %cst_19 = arith.constant dense<0.000000e+00> : vector<4x16xf32>
    %72 = vector.multi_reduction <add>, %71, %cst_19 [2] : vector<4x16x16xf32> to vector<4x16xf32>
    %73 = vector.shape_cast %72 : vector<4x16xf32> to vector<4x16x1xf32>
    %74 = tpu.reciprocal %73 {approx = true} : vector<4x16x1xf32> -> vector<4x16x1xf32>
    %75 = vector.broadcast %74 : vector<4x16x1xf32> to vector<4x16x16xf32>
    %76 = arith.mulf %71, %75 : vector<4x16x16xf32>
    %77 = arith.truncf %76 : vector<4x16x16xf32> to vector<4x16x16xbf16>
    %cst_20 = arith.constant dense<0.000000e+00> : vector<4x16x8xf32>
    %78 = tpu.matmul %77, %58, %cst_20 {dimension_numbers = #tpu.dot_dimension_numbers<[2], [1], [1], [2], [0, 0, 0, 1, 1, 2], [0], [0]>} : vector<4x16x16xbf16>, vector<4x16x8xbf16>, vector<4x16x8xf32> -> vector<4x16x8xf32>
    %79 = arith.truncf %78 : vector<4x16x8xf32> to vector<4x16x8xbf16>
    %c0_21 = arith.constant 0 : index
    %c0_22 = arith.constant 0 : index
    %c0_23 = arith.constant 0 : index
    %80 = vector.load %arg4[%c0_21, %c0_22, %c0_23] : memref<4x8x32xbf16, #tpu.memory_space<vmem>>, vector<4x8x32xbf16>
    %cst_24 = arith.constant dense<0.000000e+00> : vector<4x16x32xf32>
    %81 = tpu.matmul %79, %80, %cst_24 {dimension_numbers = #tpu.dot_dimension_numbers<[2], [1], [1], [2], [0, 0, 0, 1, 1, 2], [0], [0]>} : vector<4x16x8xbf16>, vector<4x8x32xbf16>, vector<4x16x32xf32> -> vector<4x16x32xf32>
    %cst_25 = arith.constant dense<0.000000e+00> : vector<16x32xf32>
    %82 = vector.multi_reduction <add>, %81, %cst_25 [0] : vector<4x16x32xf32> to vector<16x32xf32>
    %c0_26 = arith.constant 0 : index
    %c0_27 = arith.constant 0 : index
    %83 = vector.load %arg5[%c0_26, %c0_27] : memref<1x32xf32, #tpu.memory_space<vmem>>, vector<1x32xf32>
    %84 = vector.broadcast %83 : vector<1x32xf32> to vector<16x32xf32>
    %85 = arith.addf %82, %84 : vector<16x32xf32>
    %86 = arith.addf %2, %85 : vector<16x32xf32>
    %c0_28 = arith.constant 0 : index
    %c0_29 = arith.constant 0 : index
    %87 = vector.load %arg8[%c0_28, %c0_29] : memref<1x32xf32, #tpu.memory_space<vmem>>, vector<1x32xf32>
    %c0_30 = arith.constant 0 : index
    %c0_31 = arith.constant 0 : index
    %88 = vector.load %arg9[%c0_30, %c0_31] : memref<1x32xf32, #tpu.memory_space<vmem>>, vector<1x32xf32>
    %cst_32 = arith.constant dense<0.000000e+00> : vector<16xf32>
    %89 = vector.multi_reduction <add>, %86, %cst_32 [1] : vector<16x32xf32> to vector<16xf32>
    %90 = vector.shape_cast %89 : vector<16xf32> to vector<16x1xf32>
    %cst_33 = arith.constant 3.200000e+01 : f32
    %91 = vector.broadcast %cst_33 : f32 to vector<16x1xf32>
    %92 = arith.divf %90, %91 : vector<16x1xf32>
    %93 = vector.broadcast %92 : vector<16x1xf32> to vector<16x32xf32>
    %94 = arith.subf %86, %93 : vector<16x32xf32>
    %95 = arith.mulf %94, %94 : vector<16x32xf32>
    %cst_34 = arith.constant dense<0.000000e+00> : vector<16xf32>
    %96 = vector.multi_reduction <add>, %95, %cst_34 [1] : vector<16x32xf32> to vector<16xf32>
    %97 = vector.shape_cast %96 : vector<16xf32> to vector<16x1xf32>
    %cst_35 = arith.constant 3.200000e+01 : f32
    %98 = vector.broadcast %cst_35 : f32 to vector<16x1xf32>
    %99 = arith.divf %97, %98 : vector<16x1xf32>
    %cst_36 = arith.constant 9.99999997E-7 : f32
    %100 = vector.broadcast %cst_36 : f32 to vector<16x1xf32>
    %101 = arith.addf %99, %100 : vector<16x1xf32>
    %102 = math.rsqrt %101 : vector<16x1xf32>
    %103 = vector.broadcast %102 : vector<16x1xf32> to vector<16x32xf32>
    %104 = arith.mulf %94, %103 : vector<16x32xf32>
    %105 = vector.broadcast %87 : vector<1x32xf32> to vector<16x32xf32>
    %106 = arith.mulf %104, %105 : vector<16x32xf32>
    %107 = vector.broadcast %88 : vector<1x32xf32> to vector<16x32xf32>
    %108 = arith.addf %106, %107 : vector<16x32xf32>
    %109 = arith.truncf %108 : vector<16x32xf32> to vector<16x32xbf16>
    %c0_37 = arith.constant 0 : index
    %c0_38 = arith.constant 0 : index
    %110 = vector.load %arg10[%c0_37, %c0_38] : memref<32x64xbf16, #tpu.memory_space<vmem>>, vector<32x64xbf16>
    %cst_39 = arith.constant dense<0.000000e+00> : vector<16x64xf32>
    %111 = tpu.matmul %109, %110, %cst_39 {dimension_numbers = #tpu.dot_dimension_numbers<[1], [0], [0], [1], [0, 0, 1, 1], [], []>} : vector<16x32xbf16>, vector<32x64xbf16>, vector<16x64xf32> -> vector<16x64xf32>
    %c0_40 = arith.constant 0 : index
    %c0_41 = arith.constant 0 : index
    %112 = vector.load %arg11[%c0_40, %c0_41] : memref<1x64xf32, #tpu.memory_space<vmem>>, vector<1x64xf32>
    %113 = vector.broadcast %112 : vector<1x64xf32> to vector<16x64xf32>
    %114 = arith.addf %111, %113 : vector<16x64xf32>
    %115 = arith.mulf %114, %114 : vector<16x64xf32>
    %116 = arith.mulf %114, %115 : vector<16x64xf32>
    %cst_42 = arith.constant 4.471500e-02 : f32
    %117 = vector.broadcast %cst_42 : f32 to vector<16x64xf32>
    %118 = arith.mulf %117, %116 : vector<16x64xf32>
    %119 = arith.addf %114, %118 : vector<16x64xf32>
    %cst_43 = arith.constant 0.797884583 : f32
    %120 = vector.broadcast %cst_43 : f32 to vector<16x64xf32>
    %121 = arith.mulf %120, %119 : vector<16x64xf32>
    %122 = math.tanh %121 : vector<16x64xf32>
    %cst_44 = arith.constant 1.000000e+00 : f32
    %123 = vector.broadcast %cst_44 : f32 to vector<16x64xf32>
    %124 = arith.addf %123, %122 : vector<16x64xf32>
    %cst_45 = arith.constant 5.000000e-01 : f32
    %125 = vector.broadcast %cst_45 : f32 to vector<16x64xf32>
    %126 = arith.mulf %125, %124 : vector<16x64xf32>
    %127 = arith.mulf %114, %126 : vector<16x64xf32>
    %128 = arith.truncf %127 : vector<16x64xf32> to vector<16x64xbf16>
    %c0_46 = arith.constant 0 : index
    %c0_47 = arith.constant 0 : index
    %129 = vector.load %arg12[%c0_46, %c0_47] : memref<64x32xbf16, #tpu.memory_space<vmem>>, vector<64x32xbf16>
    %cst_48 = arith.constant dense<0.000000e+00> : vector<16x32xf32>
    %130 = tpu.matmul %128, %129, %cst_48 {dimension_numbers = #tpu.dot_dimension_numbers<[1], [0], [0], [1], [0, 0, 1, 1], [], []>} : vector<16x64xbf16>, vector<64x32xbf16>, vector<16x32xf32> -> vector<16x32xf32>
    %c0_49 = arith.constant 0 : index
    %c0_50 = arith.constant 0 : index
    %131 = vector.load %arg13[%c0_49, %c0_50] : memref<1x32xf32, #tpu.memory_space<vmem>>, vector<1x32xf32>
    %132 = vector.broadcast %131 : vector<1x32xf32> to vector<16x32xf32>
    %133 = arith.addf %130, %132 : vector<16x32xf32>
    %134 = arith.addf %86, %133 : vector<16x32xf32>
    %135 = arith.truncf %134 : vector<16x32xf32> to vector<16x32xbf16>
    %c0_51 = arith.constant 0 : index
    %c0_52 = arith.constant 0 : index
    %c0_53 = arith.constant 0 : index
    %136 = vector.load %arg14[%c0_51, %c0_52, %c0_53] : memref<1x16x32xbf16, #tpu.memory_space<vmem>>, vector<1x16x32xbf16>
    %137 = vector.shape_cast %136 : vector<1x16x32xbf16> to vector<16x32xbf16>
    %138 = vector.shape_cast %135 : vector<16x32xbf16> to vector<1x16x32xbf16>
    tpu.vector_store %arg14[%c0_51, %c0_52, %c0_53], %138 {strides = array<i32>} : memref<1x16x32xbf16, #tpu.memory_space<vmem>>, vector<1x16x32xbf16>,
    return
  }
  func.func @transform_0(%arg0: i32) -> (i32, i32, i32) {
    %c0_i32 = arith.constant 0 : i32
    %c0_i32_0 = arith.constant 0 : i32
    %c0_i32_1 = arith.constant 0 : i32
    return %arg0, %c0_i32, %c0_i32_0 : i32, i32, i32
  }
  func.func @transform_1(%arg0: i32) -> (i32, i32) {
    %c0_i32 = arith.constant 0 : i32
    %c0_i32_0 = arith.constant 0 : i32
    %c0_i32_1 = arith.constant 0 : i32
    return %c0_i32, %c0_i32_0 : i32, i32
  }
  func.func @transform_2(%arg0: i32) -> (i32, i32) {
    %c0_i32 = arith.constant 0 : i32
    %c0_i32_0 = arith.constant 0 : i32
    %c0_i32_1 = arith.constant 0 : i32
    return %c0_i32, %c0_i32_0 : i32, i32
  }
  func.func @transform_3(%arg0: i32) -> (i32, i32, i32) {
    %c0_i32 = arith.constant 0 : i32
    %c0_i32_0 = arith.constant 0 : i32
    %c0_i32_1 = arith.constant 0 : i32
    %c0_i32_2 = arith.constant 0 : i32
    return %c0_i32, %c0_i32_0, %c0_i32_1 : i32, i32, i32
  }
  func.func @transform_4(%arg0: i32) -> (i32, i32) {
    %c0_i32 = arith.constant 0 : i32
    %c0_i32_0 = arith.constant 0 : i32
    %c0_i32_1 = arith.constant 0 : i32
    return %c0_i32, %c0_i32_0 : i32, i32
  }
  func.func @transform_5(%arg0: i32) -> (i32, i32) {
    %c0_i32 = arith.constant 0 : i32
    %c0_i32_0 = arith.constant 0 : i32
    %c0_i32_1 = arith.constant 0 : i32
    return %c0_i32, %c0_i32_0 : i32, i32
  }
  func.func @transform_6(%arg0: i32) -> (i32, i32) {
    %c0_i32 = arith.constant 0 : i32
    %c0_i32_0 = arith.constant 0 : i32
    %c0_i32_1 = arith.constant 0 : i32
    return %c0_i32, %c0_i32_0 : i32, i32
  }
  func.func @transform_7(%arg0: i32) -> (i32, i32) {
    %c0_i32 = arith.constant 0 : i32
    %c0_i32_0 = arith.constant 0 : i32
    %c0_i32_1 = arith.constant 0 : i32
    return %c0_i32, %c0_i32_0 : i32, i32
  }
  func.func @transform_8(%arg0: i32) -> (i32, i32) {
    %c0_i32 = arith.constant 0 : i32
    %c0_i32_0 = arith.constant 0 : i32
    %c0_i32_1 = arith.constant 0 : i32
    return %c0_i32, %c0_i32_0 : i32, i32
  }
  func.func @transform_9(%arg0: i32) -> (i32, i32) {
    %c0_i32 = arith.constant 0 : i32
    %c0_i32_0 = arith.constant 0 : i32
    %c0_i32_1 = arith.constant 0 : i32
    return %c0_i32, %c0_i32_0 : i32, i32
  }
  func.func @transform_10(%arg0: i32) -> (i32, i32) {
    %c0_i32 = arith.constant 0 : i32
    %c0_i32_0 = arith.constant 0 : i32
    %c0_i32_1 = arith.constant 0 : i32
    return %c0_i32, %c0_i32_0 : i32, i32
  }
  func.func @transform_11(%arg0: i32) -> (i32, i32) {
    %c0_i32 = arith.constant 0 : i32
    %c0_i32_0 = arith.constant 0 : i32
    %c0_i32_1 = arith.constant 0 : i32
    return %c0_i32, %c0_i32_0 : i32, i32
  }
  func.func @transform_12(%arg0: i32) -> (i32, i32) {
    %c0_i32 = arith.constant 0 : i32
    %c0_i32_0 = arith.constant 0 : i32
    %c0_i32_1 = arith.constant 0 : i32
    return %c0_i32, %c0_i32_0 : i32, i32
  }
  func.func @transform_13(%arg0: i32) -> (i32, i32, i32) {
    %c0_i32 = arith.constant 0 : i32
    %c0_i32_0 = arith.constant 0 : i32
    %c0_i32_1 = arith.constant 0 : i32
    return %arg0, %c0_i32, %c0_i32_0 : i32, i32, i32
  }
}

module attributes {stable_mosaic.version = 11 : i64} {
  func.func @_ln_linear_kernel(%arg0: i32, %arg1: memref<24x32xbf16, #tpu.memory_space<vmem>>, %arg2: memref<1x32xf32, #tpu.memory_space<vmem>>, %arg3: memref<1x32xf32, #tpu.memory_space<vmem>>, %arg4: memref<32x32xbf16, #tpu.memory_space<vmem>>, %arg5: memref<1x32xf32, #tpu.memory_space<vmem>>, %arg6: memref<24x32xbf16, #tpu.memory_space<vmem>>) attributes {dimension_semantics = [#tpu.dimension_semantics<parallel>], iteration_bounds = array<i64: 1>, scalar_prefetch = 0 : i64, scratch_operands = 0 : i64, tpu.core_type = #tpu.core_type<tc>, window_params = [{transform_indices = @transform_0, window_bounds = array<i64: 24, 32>}, {pipeline_mode = #tpu.pipeline_mode<synchronous>, transform_indices = @transform_1, window_bounds = array<i64: 1, 32>}, {pipeline_mode = #tpu.pipeline_mode<synchronous>, transform_indices = @transform_2, window_bounds = array<i64: 1, 32>}, {pipeline_mode = #tpu.pipeline_mode<synchronous>, transform_indices = @transform_3, window_bounds = array<i64: 32, 32>}, {pipeline_mode = #tpu.pipeline_mode<synchronous>, transform_indices = @transform_4, window_bounds = array<i64: 1, 32>}, {transform_indices = @transform_5, window_bounds = array<i64: 24, 32>}]} {
    %c0 = arith.constant 0 : index
    %c0_0 = arith.constant 0 : index
    %0 = vector.load %arg1[%c0, %c0_0] : memref<24x32xbf16, #tpu.memory_space<vmem>>, vector<24x32xbf16>
    %1 = arith.extf %0 : vector<24x32xbf16> to vector<24x32xf32>
    %c0_1 = arith.constant 0 : index
    %c0_2 = arith.constant 0 : index
    %2 = vector.load %arg2[%c0_1, %c0_2] : memref<1x32xf32, #tpu.memory_space<vmem>>, vector<1x32xf32>
    %c0_3 = arith.constant 0 : index
    %c0_4 = arith.constant 0 : index
    %3 = vector.load %arg3[%c0_3, %c0_4] : memref<1x32xf32, #tpu.memory_space<vmem>>, vector<1x32xf32>
    %cst = arith.constant dense<0.000000e+00> : vector<24xf32>
    %4 = vector.multi_reduction <add>, %1, %cst [1] : vector<24x32xf32> to vector<24xf32>
    %5 = vector.shape_cast %4 : vector<24xf32> to vector<24x1xf32>
    %cst_5 = arith.constant 3.200000e+01 : f32
    %6 = vector.broadcast %cst_5 : f32 to vector<24x1xf32>
    %7 = arith.divf %5, %6 : vector<24x1xf32>
    %8 = vector.broadcast %7 : vector<24x1xf32> to vector<24x32xf32>
    %9 = arith.subf %1, %8 : vector<24x32xf32>
    %10 = arith.mulf %9, %9 : vector<24x32xf32>
    %cst_6 = arith.constant dense<0.000000e+00> : vector<24xf32>
    %11 = vector.multi_reduction <add>, %10, %cst_6 [1] : vector<24x32xf32> to vector<24xf32>
    %12 = vector.shape_cast %11 : vector<24xf32> to vector<24x1xf32>
    %cst_7 = arith.constant 3.200000e+01 : f32
    %13 = vector.broadcast %cst_7 : f32 to vector<24x1xf32>
    %14 = arith.divf %12, %13 : vector<24x1xf32>
    %cst_8 = arith.constant 9.99999997E-7 : f32
    %15 = vector.broadcast %cst_8 : f32 to vector<24x1xf32>
    %16 = arith.addf %14, %15 : vector<24x1xf32>
    %17 = math.rsqrt %16 : vector<24x1xf32>
    %18 = vector.broadcast %17 : vector<24x1xf32> to vector<24x32xf32>
    %19 = arith.mulf %9, %18 : vector<24x32xf32>
    %20 = vector.broadcast %2 : vector<1x32xf32> to vector<24x32xf32>
    %21 = arith.mulf %19, %20 : vector<24x32xf32>
    %22 = vector.broadcast %3 : vector<1x32xf32> to vector<24x32xf32>
    %23 = arith.addf %21, %22 : vector<24x32xf32>
    %24 = arith.truncf %23 : vector<24x32xf32> to vector<24x32xbf16>
    %c0_9 = arith.constant 0 : index
    %c0_10 = arith.constant 0 : index
    %25 = vector.load %arg4[%c0_9, %c0_10] : memref<32x32xbf16, #tpu.memory_space<vmem>>, vector<32x32xbf16>
    %cst_11 = arith.constant dense<0.000000e+00> : vector<24x32xf32>
    %26 = tpu.matmul %24, %25, %cst_11 {dimension_numbers = #tpu.dot_dimension_numbers<[1], [0], [0], [1], [0, 0, 1, 1], [], []>} : vector<24x32xbf16>, vector<32x32xbf16>, vector<24x32xf32> -> vector<24x32xf32>
    %c0_12 = arith.constant 0 : index
    %c0_13 = arith.constant 0 : index
    %27 = vector.load %arg5[%c0_12, %c0_13] : memref<1x32xf32, #tpu.memory_space<vmem>>, vector<1x32xf32>
    %28 = vector.broadcast %27 : vector<1x32xf32> to vector<24x32xf32>
    %29 = arith.addf %26, %28 : vector<24x32xf32>
    %30 = arith.truncf %29 : vector<24x32xf32> to vector<24x32xbf16>
    %c0_14 = arith.constant 0 : index
    %c0_15 = arith.constant 0 : index
    %31 = vector.load %arg6[%c0_14, %c0_15] : memref<24x32xbf16, #tpu.memory_space<vmem>>, vector<24x32xbf16>
    tpu.vector_store %arg6[%c0_14, %c0_15], %30 {strides = array<i32>} : memref<24x32xbf16, #tpu.memory_space<vmem>>, vector<24x32xbf16>,
    return
  }
  func.func @transform_0(%arg0: i32) -> (i32, i32) {
    %c0_i32 = arith.constant 0 : i32
    %c0_i32_0 = arith.constant 0 : i32
    return %arg0, %c0_i32 : i32, i32
  }
  func.func @transform_1(%arg0: i32) -> (i32, i32) {
    %c0_i32 = arith.constant 0 : i32
    %c0_i32_0 = arith.constant 0 : i32
    %c0_i32_1 = arith.constant 0 : i32
    return %c0_i32, %c0_i32_0 : i32, i32
  }
  func.func @transform_2(%arg0: i32) -> (i32, i32) {
    %c0_i32 = arith.constant 0 : i32
    %c0_i32_0 = arith.constant 0 : i32
    %c0_i32_1 = arith.constant 0 : i32
    return %c0_i32, %c0_i32_0 : i32, i32
  }
  func.func @transform_3(%arg0: i32) -> (i32, i32) {
    %c0_i32 = arith.constant 0 : i32
    %c0_i32_0 = arith.constant 0 : i32
    %c0_i32_1 = arith.constant 0 : i32
    return %c0_i32, %c0_i32_0 : i32, i32
  }
  func.func @transform_4(%arg0: i32) -> (i32, i32) {
    %c0_i32 = arith.constant 0 : i32
    %c0_i32_0 = arith.constant 0 : i32
    %c0_i32_1 = arith.constant 0 : i32
    return %c0_i32, %c0_i32_0 : i32, i32
  }
  func.func @transform_5(%arg0: i32) -> (i32, i32) {
    %c0_i32 = arith.constant 0 : i32
    %c0_i32_0 = arith.constant 0 : i32
    return %arg0, %c0_i32 : i32, i32
  }
}

module attributes {stable_mosaic.version = 11 : i64} {
  func.func @kernel(%arg0: i32, %arg1: memref<1x24x32xbf16, #tpu.memory_space<vmem>>, %arg2: memref<1x24x32xf32, #tpu.memory_space<vmem>>, %arg3: memref<32x96xbf16, #tpu.memory_space<vmem>>, %arg4: memref<1x96xf32, #tpu.memory_space<vmem>>, %arg5: memref<4x8x32xbf16, #tpu.memory_space<vmem>>, %arg6: memref<1x32xf32, #tpu.memory_space<vmem>>, %arg7: memref<1x32xf32, #tpu.memory_space<vmem>>, %arg8: memref<1x32xf32, #tpu.memory_space<vmem>>, %arg9: memref<1x32xf32, #tpu.memory_space<vmem>>, %arg10: memref<1x32xf32, #tpu.memory_space<vmem>>, %arg11: memref<32x64xbf16, #tpu.memory_space<vmem>>, %arg12: memref<1x64xf32, #tpu.memory_space<vmem>>, %arg13: memref<64x32xbf16, #tpu.memory_space<vmem>>, %arg14: memref<1x32xf32, #tpu.memory_space<vmem>>, %arg15: memref<1x24x32xbf16, #tpu.memory_space<vmem>>) attributes {dimension_semantics = [#tpu.dimension_semantics<parallel>], iteration_bounds = array<i64: 2>, scalar_prefetch = 0 : i64, scratch_operands = 0 : i64, tpu.core_type = #tpu.core_type<tc>, window_params = [{transform_indices = @transform_0, window_bounds = array<i64: 1, 24, 32>}, {pipeline_mode = #tpu.pipeline_mode<synchronous>, transform_indices = @transform_1, window_bounds = array<i64: 1, 24, 32>}, {pipeline_mode = #tpu.pipeline_mode<synchronous>, transform_indices = @transform_2, window_bounds = array<i64: 32, 96>}, {pipeline_mode = #tpu.pipeline_mode<synchronous>, transform_indices = @transform_3, window_bounds = array<i64: 1, 96>}, {pipeline_mode = #tpu.pipeline_mode<synchronous>, transform_indices = @transform_4, window_bounds = array<i64: 4, 8, 32>}, {pipeline_mode = #tpu.pipeline_mode<synchronous>, transform_indices = @transform_5, window_bounds = array<i64: 1, 32>}, {pipeline_mode = #tpu.pipeline_mode<synchronous>, transform_indices = @transform_6, window_bounds = array<i64: 1, 32>}, {pipeline_mode = #tpu.pipeline_mode<synchronous>, transform_indices = @transform_7, window_bounds = array<i64: 1, 32>}, {pipeline_mode = #tpu.pipeline_mode<synchronous>, transform_indices = @transform_8, window_bounds = array<i64: 1, 32>}, {pipeline_mode = #tpu.pipeline_mode<synchronous>, transform_indices = @transform_9, window_bounds = array<i64: 1, 32>}, {pipeline_mode = #tpu.pipeline_mode<synchronous>, transform_indices = @transform_10, window_bounds = array<i64: 32, 64>}, {pipeline_mode = #tpu.pipeline_mode<synchronous>, transform_indices = @transform_11, window_bounds = array<i64: 1, 64>}, {pipeline_mode = #tpu.pipeline_mode<synchronous>, transform_indices = @transform_12, window_bounds = array<i64: 64, 32>}, {pipeline_mode = #tpu.pipeline_mode<synchronous>, transform_indices = @transform_13, window_bounds = array<i64: 1, 32>}, {transform_indices = @transform_14, window_bounds = array<i64: 1, 24, 32>}]} {
    %c0 = arith.constant 0 : index
    %c0_0 = arith.constant 0 : index
    %c0_1 = arith.constant 0 : index
    %0 = vector.load %arg1[%c0, %c0_0, %c0_1] : memref<1x24x32xbf16, #tpu.memory_space<vmem>>, vector<1x24x32xbf16>
    %1 = vector.shape_cast %0 : vector<1x24x32xbf16> to vector<24x32xbf16>
    %2 = arith.extf %1 : vector<24x32xbf16> to vector<24x32xf32>
    %c0_2 = arith.constant 0 : index
    %c0_3 = arith.constant 0 : index
    %c0_4 = arith.constant 0 : index
    %3 = vector.load %arg2[%c0_2, %c0_3, %c0_4] : memref<1x24x32xf32, #tpu.memory_space<vmem>>, vector<1x24x32xf32>
    %4 = vector.shape_cast %3 : vector<1x24x32xf32> to vector<24x32xf32>
    %5 = arith.addf %2, %4 : vector<24x32xf32>
    %c0_5 = arith.constant 0 : index
    %c0_6 = arith.constant 0 : index
    %6 = vector.load %arg7[%c0_5, %c0_6] : memref<1x32xf32, #tpu.memory_space<vmem>>, vector<1x32xf32>
    %c0_7 = arith.constant 0 : index
    %c0_8 = arith.constant 0 : index
    %7 = vector.load %arg8[%c0_7, %c0_8] : memref<1x32xf32, #tpu.memory_space<vmem>>, vector<1x32xf32>
    %cst = arith.constant dense<0.000000e+00> : vector<24xf32>
    %8 = vector.multi_reduction <add>, %5, %cst [1] : vector<24x32xf32> to vector<24xf32>
    %9 = vector.shape_cast %8 : vector<24xf32> to vector<24x1xf32>
    %cst_9 = arith.constant 3.200000e+01 : f32
    %10 = vector.broadcast %cst_9 : f32 to vector<24x1xf32>
    %11 = arith.divf %9, %10 : vector<24x1xf32>
    %12 = vector.broadcast %11 : vector<24x1xf32> to vector<24x32xf32>
    %13 = arith.subf %5, %12 : vector<24x32xf32>
    %14 = arith.mulf %13, %13 : vector<24x32xf32>
    %cst_10 = arith.constant dense<0.000000e+00> : vector<24xf32>
    %15 = vector.multi_reduction <add>, %14, %cst_10 [1] : vector<24x32xf32> to vector<24xf32>
    %16 = vector.shape_cast %15 : vector<24xf32> to vector<24x1xf32>
    %cst_11 = arith.constant 3.200000e+01 : f32
    %17 = vector.broadcast %cst_11 : f32 to vector<24x1xf32>
    %18 = arith.divf %16, %17 : vector<24x1xf32>
    %cst_12 = arith.constant 9.99999997E-7 : f32
    %19 = vector.broadcast %cst_12 : f32 to vector<24x1xf32>
    %20 = arith.addf %18, %19 : vector<24x1xf32>
    %21 = math.rsqrt %20 : vector<24x1xf32>
    %22 = vector.broadcast %21 : vector<24x1xf32> to vector<24x32xf32>
    %23 = arith.mulf %13, %22 : vector<24x32xf32>
    %24 = vector.broadcast %6 : vector<1x32xf32> to vector<24x32xf32>
    %25 = arith.mulf %23, %24 : vector<24x32xf32>
    %26 = vector.broadcast %7 : vector<1x32xf32> to vector<24x32xf32>
    %27 = arith.addf %25, %26 : vector<24x32xf32>
    %28 = arith.truncf %27 : vector<24x32xf32> to vector<24x32xbf16>
    %c0_13 = arith.constant 0 : index
    %c0_14 = arith.constant 0 : index
    %29 = vector.load %arg3[%c0_13, %c0_14] : memref<32x96xbf16, #tpu.memory_space<vmem>>, vector<32x96xbf16>
    %cst_15 = arith.constant dense<0.000000e+00> : vector<24x96xf32>
    %30 = tpu.matmul %28, %29, %cst_15 {dimension_numbers = #tpu.dot_dimension_numbers<[1], [0], [0], [1], [0, 0, 1, 1], [], []>} : vector<24x32xbf16>, vector<32x96xbf16>, vector<24x96xf32> -> vector<24x96xf32>
    %c0_16 = arith.constant 0 : index
    %c0_17 = arith.constant 0 : index
    %31 = vector.load %arg4[%c0_16, %c0_17] : memref<1x96xf32, #tpu.memory_space<vmem>>, vector<1x96xf32>
    %32 = vector.broadcast %31 : vector<1x96xf32> to vector<24x96xf32>
    %33 = arith.addf %30, %32 : vector<24x96xf32>
    %34 = arith.truncf %33 : vector<24x96xf32> to vector<24x96xbf16>
    %35 = vector.extract_strided_slice %34 {offsets = [0, 0], sizes = [24, 8], strides = [1, 1]} : vector<24x96xbf16> to vector<24x8xbf16>
    %36 = vector.extract_strided_slice %34 {offsets = [0, 8], sizes = [24, 8], strides = [1, 1]} : vector<24x96xbf16> to vector<24x8xbf16>
    %37 = vector.extract_strided_slice %34 {offsets = [0, 16], sizes = [24, 8], strides = [1, 1]} : vector<24x96xbf16> to vector<24x8xbf16>
    %38 = vector.extract_strided_slice %34 {offsets = [0, 24], sizes = [24, 8], strides = [1, 1]} : vector<24x96xbf16> to vector<24x8xbf16>
    %39 = vector.shape_cast %35 : vector<24x8xbf16> to vector<1x24x8xbf16>
    %40 = vector.shape_cast %36 : vector<24x8xbf16> to vector<1x24x8xbf16>
    %41 = vector.shape_cast %37 : vector<24x8xbf16> to vector<1x24x8xbf16>
    %42 = vector.shape_cast %38 : vector<24x8xbf16> to vector<1x24x8xbf16>
    %43 = tpu.concatenate %39, %40, %41, %42 in 0 : vector<1x24x8xbf16>, vector<1x24x8xbf16>, vector<1x24x8xbf16>, vector<1x24x8xbf16> -> vector<4x24x8xbf16>
    %44 = vector.extract_strided_slice %34 {offsets = [0, 32], sizes = [24, 8], strides = [1, 1]} : vector<24x96xbf16> to vector<24x8xbf16>
    %45 = vector.extract_strided_slice %34 {offsets = [0, 40], sizes = [24, 8], strides = [1, 1]} : vector<24x96xbf16> to vector<24x8xbf16>
    %46 = vector.extract_strided_slice %34 {offsets = [0, 48], sizes = [24, 8], strides = [1, 1]} : vector<24x96xbf16> to vector<24x8xbf16>
    %47 = vector.extract_strided_slice %34 {offsets = [0, 56], sizes = [24, 8], strides = [1, 1]} : vector<24x96xbf16> to vector<24x8xbf16>
    %48 = vector.shape_cast %44 : vector<24x8xbf16> to vector<1x24x8xbf16>
    %49 = vector.shape_cast %45 : vector<24x8xbf16> to vector<1x24x8xbf16>
    %50 = vector.shape_cast %46 : vector<24x8xbf16> to vector<1x24x8xbf16>
    %51 = vector.shape_cast %47 : vector<24x8xbf16> to vector<1x24x8xbf16>
    %52 = tpu.concatenate %48, %49, %50, %51 in 0 : vector<1x24x8xbf16>, vector<1x24x8xbf16>, vector<1x24x8xbf16>, vector<1x24x8xbf16> -> vector<4x24x8xbf16>
    %53 = vector.extract_strided_slice %34 {offsets = [0, 64], sizes = [24, 8], strides = [1, 1]} : vector<24x96xbf16> to vector<24x8xbf16>
    %54 = vector.extract_strided_slice %34 {offsets = [0, 72], sizes = [24, 8], strides = [1, 1]} : vector<24x96xbf16> to vector<24x8xbf16>
    %55 = vector.extract_strided_slice %34 {offsets = [0, 80], sizes = [24, 8], strides = [1, 1]} : vector<24x96xbf16> to vector<24x8xbf16>
    %56 = vector.extract_strided_slice %34 {offsets = [0, 88], sizes = [24, 8], strides = [1, 1]} : vector<24x96xbf16> to vector<24x8xbf16>
    %57 = vector.shape_cast %53 : vector<24x8xbf16> to vector<1x24x8xbf16>
    %58 = vector.shape_cast %54 : vector<24x8xbf16> to vector<1x24x8xbf16>
    %59 = vector.shape_cast %55 : vector<24x8xbf16> to vector<1x24x8xbf16>
    %60 = vector.shape_cast %56 : vector<24x8xbf16> to vector<1x24x8xbf16>
    %61 = tpu.concatenate %57, %58, %59, %60 in 0 : vector<1x24x8xbf16>, vector<1x24x8xbf16>, vector<1x24x8xbf16>, vector<1x24x8xbf16> -> vector<4x24x8xbf16>
    %cst_18 = arith.constant dense<0.000000e+00> : vector<4x24x24xf32>
    %62 = tpu.matmul %43, %52, %cst_18 {dimension_numbers = #tpu.dot_dimension_numbers<[2], [2], [1], [1], [0, 0, 0, 1, 1, 1], [0], [0]>} : vector<4x24x8xbf16>, vector<4x24x8xbf16>, vector<4x24x24xf32> -> vector<4x24x24xf32>
    %cst_19 = arith.constant 0.353553385 : f32
    %63 = vector.broadcast %cst_19 : f32 to vector<4x24x24xf32>
    %64 = arith.mulf %62, %63 : vector<4x24x24xf32>
    %65 = tpu.iota {dimensions = array<i32: 2>} : vector<4x24x24xi32>
    %c17_i32 = arith.constant 17 : i32
    %66 = vector.broadcast %c17_i32 : i32 to vector<4x24x24xi32>
    %67 = arith.cmpi slt, %65, %66 : vector<4x24x24xi32>
    %cst_20 = arith.constant -1.000000e+30 : f32
    %68 = vector.broadcast %cst_20 : f32 to vector<4x24x24xf32>
    %69 = arith.select %67, %64, %68 : vector<4x24x24xi1>, vector<4x24x24xf32>
    %cst_21 = arith.constant dense<0xFF800000> : vector<4x24xf32>
    %70 = vector.multi_reduction <maximumf>, %69, %cst_21 [2] : vector<4x24x24xf32> to vector<4x24xf32>
    %71 = vector.shape_cast %70 : vector<4x24xf32> to vector<4x24x1xf32>
    %72 = vector.broadcast %71 : vector<4x24x1xf32> to vector<4x24x24xf32>
    %73 = arith.subf %69, %72 : vector<4x24x24xf32>
    %74 = math.exp %73 : vector<4x24x24xf32>
    %cst_22 = arith.constant dense<0.000000e+00> : vector<4x24xf32>
    %75 = vector.multi_reduction <add>, %74, %cst_22 [2] : vector<4x24x24xf32> to vector<4x24xf32>
    %76 = vector.shape_cast %75 : vector<4x24xf32> to vector<4x24x1xf32>
    %77 = tpu.reciprocal %76 {approx = true} : vector<4x24x1xf32> -> vector<4x24x1xf32>
    %78 = vector.broadcast %77 : vector<4x24x1xf32> to vector<4x24x24xf32>
    %79 = arith.mulf %74, %78 : vector<4x24x24xf32>
    %80 = arith.truncf %79 : vector<4x24x24xf32> to vector<4x24x24xbf16>
    %cst_23 = arith.constant dense<0.000000e+00> : vector<4x24x8xf32>
    %81 = tpu.matmul %80, %61, %cst_23 {dimension_numbers = #tpu.dot_dimension_numbers<[2], [1], [1], [2], [0, 0, 0, 1, 1, 2], [0], [0]>} : vector<4x24x24xbf16>, vector<4x24x8xbf16>, vector<4x24x8xf32> -> vector<4x24x8xf32>
    %82 = arith.truncf %81 : vector<4x24x8xf32> to vector<4x24x8xbf16>
    %c0_24 = arith.constant 0 : index
    %c0_25 = arith.constant 0 : index
    %c0_26 = arith.constant 0 : index
    %83 = vector.load %arg5[%c0_24, %c0_25, %c0_26] : memref<4x8x32xbf16, #tpu.memory_space<vmem>>, vector<4x8x32xbf16>
    %cst_27 = arith.constant dense<0.000000e+00> : vector<4x24x32xf32>
    %84 = tpu.matmul %82, %83, %cst_27 {dimension_numbers = #tpu.dot_dimension_numbers<[2], [1], [1], [2], [0, 0, 0, 1, 1, 2], [0], [0]>} : vector<4x24x8xbf16>, vector<4x8x32xbf16>, vector<4x24x32xf32> -> vector<4x24x32xf32>
    %cst_28 = arith.constant dense<0.000000e+00> : vector<24x32xf32>
    %85 = vector.multi_reduction <add>, %84, %cst_28 [0] : vector<4x24x32xf32> to vector<24x32xf32>
    %c0_29 = arith.constant 0 : index
    %c0_30 = arith.constant 0 : index
    %86 = vector.load %arg6[%c0_29, %c0_30] : memref<1x32xf32, #tpu.memory_space<vmem>>, vector<1x32xf32>
    %87 = vector.broadcast %86 : vector<1x32xf32> to vector<24x32xf32>
    %88 = arith.addf %85, %87 : vector<24x32xf32>
    %89 = arith.addf %5, %88 : vector<24x32xf32>
    %c0_31 = arith.constant 0 : index
    %c0_32 = arith.constant 0 : index
    %90 = vector.load %arg9[%c0_31, %c0_32] : memref<1x32xf32, #tpu.memory_space<vmem>>, vector<1x32xf32>
    %c0_33 = arith.constant 0 : index
    %c0_34 = arith.constant 0 : index
    %91 = vector.load %arg10[%c0_33, %c0_34] : memref<1x32xf32, #tpu.memory_space<vmem>>, vector<1x32xf32>
    %cst_35 = arith.constant dense<0.000000e+00> : vector<24xf32>
    %92 = vector.multi_reduction <add>, %89, %cst_35 [1] : vector<24x32xf32> to vector<24xf32>
    %93 = vector.shape_cast %92 : vector<24xf32> to vector<24x1xf32>
    %cst_36 = arith.constant 3.200000e+01 : f32
    %94 = vector.broadcast %cst_36 : f32 to vector<24x1xf32>
    %95 = arith.divf %93, %94 : vector<24x1xf32>
    %96 = vector.broadcast %95 : vector<24x1xf32> to vector<24x32xf32>
    %97 = arith.subf %89, %96 : vector<24x32xf32>
    %98 = arith.mulf %97, %97 : vector<24x32xf32>
    %cst_37 = arith.constant dense<0.000000e+00> : vector<24xf32>
    %99 = vector.multi_reduction <add>, %98, %cst_37 [1] : vector<24x32xf32> to vector<24xf32>
    %100 = vector.shape_cast %99 : vector<24xf32> to vector<24x1xf32>
    %cst_38 = arith.constant 3.200000e+01 : f32
    %101 = vector.broadcast %cst_38 : f32 to vector<24x1xf32>
    %102 = arith.divf %100, %101 : vector<24x1xf32>
    %cst_39 = arith.constant 9.99999997E-7 : f32
    %103 = vector.broadcast %cst_39 : f32 to vector<24x1xf32>
    %104 = arith.addf %102, %103 : vector<24x1xf32>
    %105 = math.rsqrt %104 : vector<24x1xf32>
    %106 = vector.broadcast %105 : vector<24x1xf32> to vector<24x32xf32>
    %107 = arith.mulf %97, %106 : vector<24x32xf32>
    %108 = vector.broadcast %90 : vector<1x32xf32> to vector<24x32xf32>
    %109 = arith.mulf %107, %108 : vector<24x32xf32>
    %110 = vector.broadcast %91 : vector<1x32xf32> to vector<24x32xf32>
    %111 = arith.addf %109, %110 : vector<24x32xf32>
    %112 = arith.truncf %111 : vector<24x32xf32> to vector<24x32xbf16>
    %c0_40 = arith.constant 0 : index
    %c0_41 = arith.constant 0 : index
    %113 = vector.load %arg11[%c0_40, %c0_41] : memref<32x64xbf16, #tpu.memory_space<vmem>>, vector<32x64xbf16>
    %cst_42 = arith.constant dense<0.000000e+00> : vector<24x64xf32>
    %114 = tpu.matmul %112, %113, %cst_42 {dimension_numbers = #tpu.dot_dimension_numbers<[1], [0], [0], [1], [0, 0, 1, 1], [], []>} : vector<24x32xbf16>, vector<32x64xbf16>, vector<24x64xf32> -> vector<24x64xf32>
    %c0_43 = arith.constant 0 : index
    %c0_44 = arith.constant 0 : index
    %115 = vector.load %arg12[%c0_43, %c0_44] : memref<1x64xf32, #tpu.memory_space<vmem>>, vector<1x64xf32>
    %116 = vector.broadcast %115 : vector<1x64xf32> to vector<24x64xf32>
    %117 = arith.addf %114, %116 : vector<24x64xf32>
    %118 = arith.mulf %117, %117 : vector<24x64xf32>
    %119 = arith.mulf %117, %118 : vector<24x64xf32>
    %cst_45 = arith.constant 4.471500e-02 : f32
    %120 = vector.broadcast %cst_45 : f32 to vector<24x64xf32>
    %121 = arith.mulf %120, %119 : vector<24x64xf32>
    %122 = arith.addf %117, %121 : vector<24x64xf32>
    %cst_46 = arith.constant 0.797884583 : f32
    %123 = vector.broadcast %cst_46 : f32 to vector<24x64xf32>
    %124 = arith.mulf %123, %122 : vector<24x64xf32>
    %125 = math.tanh %124 : vector<24x64xf32>
    %cst_47 = arith.constant 1.000000e+00 : f32
    %126 = vector.broadcast %cst_47 : f32 to vector<24x64xf32>
    %127 = arith.addf %126, %125 : vector<24x64xf32>
    %cst_48 = arith.constant 5.000000e-01 : f32
    %128 = vector.broadcast %cst_48 : f32 to vector<24x64xf32>
    %129 = arith.mulf %128, %127 : vector<24x64xf32>
    %130 = arith.mulf %117, %129 : vector<24x64xf32>
    %131 = arith.truncf %130 : vector<24x64xf32> to vector<24x64xbf16>
    %c0_49 = arith.constant 0 : index
    %c0_50 = arith.constant 0 : index
    %132 = vector.load %arg13[%c0_49, %c0_50] : memref<64x32xbf16, #tpu.memory_space<vmem>>, vector<64x32xbf16>
    %cst_51 = arith.constant dense<0.000000e+00> : vector<24x32xf32>
    %133 = tpu.matmul %131, %132, %cst_51 {dimension_numbers = #tpu.dot_dimension_numbers<[1], [0], [0], [1], [0, 0, 1, 1], [], []>} : vector<24x64xbf16>, vector<64x32xbf16>, vector<24x32xf32> -> vector<24x32xf32>
    %c0_52 = arith.constant 0 : index
    %c0_53 = arith.constant 0 : index
    %134 = vector.load %arg14[%c0_52, %c0_53] : memref<1x32xf32, #tpu.memory_space<vmem>>, vector<1x32xf32>
    %135 = vector.broadcast %134 : vector<1x32xf32> to vector<24x32xf32>
    %136 = arith.addf %133, %135 : vector<24x32xf32>
    %137 = arith.addf %89, %136 : vector<24x32xf32>
    %138 = arith.truncf %137 : vector<24x32xf32> to vector<24x32xbf16>
    %c0_54 = arith.constant 0 : index
    %c0_55 = arith.constant 0 : index
    %c0_56 = arith.constant 0 : index
    %139 = vector.load %arg15[%c0_54, %c0_55, %c0_56] : memref<1x24x32xbf16, #tpu.memory_space<vmem>>, vector<1x24x32xbf16>
    %140 = vector.shape_cast %139 : vector<1x24x32xbf16> to vector<24x32xbf16>
    %141 = vector.shape_cast %138 : vector<24x32xbf16> to vector<1x24x32xbf16>
    tpu.vector_store %arg15[%c0_54, %c0_55, %c0_56], %141 {strides = array<i32>} : memref<1x24x32xbf16, #tpu.memory_space<vmem>>, vector<1x24x32xbf16>,
    return
  }
  func.func @transform_0(%arg0: i32) -> (i32, i32, i32) {
    %c0_i32 = arith.constant 0 : i32
    %c0_i32_0 = arith.constant 0 : i32
    %c0_i32_1 = arith.constant 0 : i32
    return %arg0, %c0_i32, %c0_i32_0 : i32, i32, i32
  }
  func.func @transform_1(%arg0: i32) -> (i32, i32, i32) {
    %c0_i32 = arith.constant 0 : i32
    %c0_i32_0 = arith.constant 0 : i32
    %c0_i32_1 = arith.constant 0 : i32
    %c0_i32_2 = arith.constant 0 : i32
    return %c0_i32, %c0_i32_0, %c0_i32_1 : i32, i32, i32
  }
  func.func @transform_2(%arg0: i32) -> (i32, i32) {
    %c0_i32 = arith.constant 0 : i32
    %c0_i32_0 = arith.constant 0 : i32
    %c0_i32_1 = arith.constant 0 : i32
    return %c0_i32, %c0_i32_0 : i32, i32
  }
  func.func @transform_3(%arg0: i32) -> (i32, i32) {
    %c0_i32 = arith.constant 0 : i32
    %c0_i32_0 = arith.constant 0 : i32
    %c0_i32_1 = arith.constant 0 : i32
    return %c0_i32, %c0_i32_0 : i32, i32
  }
  func.func @transform_4(%arg0: i32) -> (i32, i32, i32) {
    %c0_i32 = arith.constant 0 : i32
    %c0_i32_0 = arith.constant 0 : i32
    %c0_i32_1 = arith.constant 0 : i32
    %c0_i32_2 = arith.constant 0 : i32
    return %c0_i32, %c0_i32_0, %c0_i32_1 : i32, i32, i32
  }
  func.func @transform_5(%arg0: i32) -> (i32, i32) {
    %c0_i32 = arith.constant 0 : i32
    %c0_i32_0 = arith.constant 0 : i32
    %c0_i32_1 = arith.constant 0 : i32
    return %c0_i32, %c0_i32_0 : i32, i32
  }
  func.func @transform_6(%arg0: i32) -> (i32, i32) {
    %c0_i32 = arith.constant 0 : i32
    %c0_i32_0 = arith.constant 0 : i32
    %c0_i32_1 = arith.constant 0 : i32
    return %c0_i32, %c0_i32_0 : i32, i32
  }
  func.func @transform_7(%arg0: i32) -> (i32, i32) {
    %c0_i32 = arith.constant 0 : i32
    %c0_i32_0 = arith.constant 0 : i32
    %c0_i32_1 = arith.constant 0 : i32
    return %c0_i32, %c0_i32_0 : i32, i32
  }
  func.func @transform_8(%arg0: i32) -> (i32, i32) {
    %c0_i32 = arith.constant 0 : i32
    %c0_i32_0 = arith.constant 0 : i32
    %c0_i32_1 = arith.constant 0 : i32
    return %c0_i32, %c0_i32_0 : i32, i32
  }
  func.func @transform_9(%arg0: i32) -> (i32, i32) {
    %c0_i32 = arith.constant 0 : i32
    %c0_i32_0 = arith.constant 0 : i32
    %c0_i32_1 = arith.constant 0 : i32
    return %c0_i32, %c0_i32_0 : i32, i32
  }
  func.func @transform_10(%arg0: i32) -> (i32, i32) {
    %c0_i32 = arith.constant 0 : i32
    %c0_i32_0 = arith.constant 0 : i32
    %c0_i32_1 = arith.constant 0 : i32
    return %c0_i32, %c0_i32_0 : i32, i32
  }
  func.func @transform_11(%arg0: i32) -> (i32, i32) {
    %c0_i32 = arith.constant 0 : i32
    %c0_i32_0 = arith.constant 0 : i32
    %c0_i32_1 = arith.constant 0 : i32
    return %c0_i32, %c0_i32_0 : i32, i32
  }
  func.func @transform_12(%arg0: i32) -> (i32, i32) {
    %c0_i32 = arith.constant 0 : i32
    %c0_i32_0 = arith.constant 0 : i32
    %c0_i32_1 = arith.constant 0 : i32
    return %c0_i32, %c0_i32_0 : i32, i32
  }
  func.func @transform_13(%arg0: i32) -> (i32, i32) {
    %c0_i32 = arith.constant 0 : i32
    %c0_i32_0 = arith.constant 0 : i32
    %c0_i32_1 = arith.constant 0 : i32
    return %c0_i32, %c0_i32_0 : i32, i32
  }
  func.func @transform_14(%arg0: i32) -> (i32, i32, i32) {
    %c0_i32 = arith.constant 0 : i32
    %c0_i32_0 = arith.constant 0 : i32
    %c0_i32_1 = arith.constant 0 : i32
    return %arg0, %c0_i32, %c0_i32_0 : i32, i32, i32
  }
}

module attributes {stable_mosaic.version = 11 : i64} {
  func.func @kernel(%arg0: i32, %arg1: memref<1x24x32xbf16, #tpu.memory_space<vmem>>, %arg2: memref<32x96xbf16, #tpu.memory_space<vmem>>, %arg3: memref<1x96xf32, #tpu.memory_space<vmem>>, %arg4: memref<4x8x32xbf16, #tpu.memory_space<vmem>>, %arg5: memref<1x32xf32, #tpu.memory_space<vmem>>, %arg6: memref<1x32xf32, #tpu.memory_space<vmem>>, %arg7: memref<1x32xf32, #tpu.memory_space<vmem>>, %arg8: memref<1x32xf32, #tpu.memory_space<vmem>>, %arg9: memref<1x32xf32, #tpu.memory_space<vmem>>, %arg10: memref<32x64xbf16, #tpu.memory_space<vmem>>, %arg11: memref<1x64xf32, #tpu.memory_space<vmem>>, %arg12: memref<64x32xbf16, #tpu.memory_space<vmem>>, %arg13: memref<1x32xf32, #tpu.memory_space<vmem>>, %arg14: memref<1x24x32xbf16, #tpu.memory_space<vmem>>) attributes {dimension_semantics = [#tpu.dimension_semantics<parallel>], iteration_bounds = array<i64: 2>, scalar_prefetch = 0 : i64, scratch_operands = 0 : i64, tpu.core_type = #tpu.core_type<tc>, window_params = [{transform_indices = @transform_0, window_bounds = array<i64: 1, 24, 32>}, {pipeline_mode = #tpu.pipeline_mode<synchronous>, transform_indices = @transform_1, window_bounds = array<i64: 32, 96>}, {pipeline_mode = #tpu.pipeline_mode<synchronous>, transform_indices = @transform_2, window_bounds = array<i64: 1, 96>}, {pipeline_mode = #tpu.pipeline_mode<synchronous>, transform_indices = @transform_3, window_bounds = array<i64: 4, 8, 32>}, {pipeline_mode = #tpu.pipeline_mode<synchronous>, transform_indices = @transform_4, window_bounds = array<i64: 1, 32>}, {pipeline_mode = #tpu.pipeline_mode<synchronous>, transform_indices = @transform_5, window_bounds = array<i64: 1, 32>}, {pipeline_mode = #tpu.pipeline_mode<synchronous>, transform_indices = @transform_6, window_bounds = array<i64: 1, 32>}, {pipeline_mode = #tpu.pipeline_mode<synchronous>, transform_indices = @transform_7, window_bounds = array<i64: 1, 32>}, {pipeline_mode = #tpu.pipeline_mode<synchronous>, transform_indices = @transform_8, window_bounds = array<i64: 1, 32>}, {pipeline_mode = #tpu.pipeline_mode<synchronous>, transform_indices = @transform_9, window_bounds = array<i64: 32, 64>}, {pipeline_mode = #tpu.pipeline_mode<synchronous>, transform_indices = @transform_10, window_bounds = array<i64: 1, 64>}, {pipeline_mode = #tpu.pipeline_mode<synchronous>, transform_indices = @transform_11, window_bounds = array<i64: 64, 32>}, {pipeline_mode = #tpu.pipeline_mode<synchronous>, transform_indices = @transform_12, window_bounds = array<i64: 1, 32>}, {transform_indices = @transform_13, window_bounds = array<i64: 1, 24, 32>}]} {
    %c0 = arith.constant 0 : index
    %c0_0 = arith.constant 0 : index
    %c0_1 = arith.constant 0 : index
    %0 = vector.load %arg1[%c0, %c0_0, %c0_1] : memref<1x24x32xbf16, #tpu.memory_space<vmem>>, vector<1x24x32xbf16>
    %1 = vector.shape_cast %0 : vector<1x24x32xbf16> to vector<24x32xbf16>
    %2 = arith.extf %1 : vector<24x32xbf16> to vector<24x32xf32>
    %c0_2 = arith.constant 0 : index
    %c0_3 = arith.constant 0 : index
    %3 = vector.load %arg6[%c0_2, %c0_3] : memref<1x32xf32, #tpu.memory_space<vmem>>, vector<1x32xf32>
    %c0_4 = arith.constant 0 : index
    %c0_5 = arith.constant 0 : index
    %4 = vector.load %arg7[%c0_4, %c0_5] : memref<1x32xf32, #tpu.memory_space<vmem>>, vector<1x32xf32>
    %cst = arith.constant dense<0.000000e+00> : vector<24xf32>
    %5 = vector.multi_reduction <add>, %2, %cst [1] : vector<24x32xf32> to vector<24xf32>
    %6 = vector.shape_cast %5 : vector<24xf32> to vector<24x1xf32>
    %cst_6 = arith.constant 3.200000e+01 : f32
    %7 = vector.broadcast %cst_6 : f32 to vector<24x1xf32>
    %8 = arith.divf %6, %7 : vector<24x1xf32>
    %9 = vector.broadcast %8 : vector<24x1xf32> to vector<24x32xf32>
    %10 = arith.subf %2, %9 : vector<24x32xf32>
    %11 = arith.mulf %10, %10 : vector<24x32xf32>
    %cst_7 = arith.constant dense<0.000000e+00> : vector<24xf32>
    %12 = vector.multi_reduction <add>, %11, %cst_7 [1] : vector<24x32xf32> to vector<24xf32>
    %13 = vector.shape_cast %12 : vector<24xf32> to vector<24x1xf32>
    %cst_8 = arith.constant 3.200000e+01 : f32
    %14 = vector.broadcast %cst_8 : f32 to vector<24x1xf32>
    %15 = arith.divf %13, %14 : vector<24x1xf32>
    %cst_9 = arith.constant 9.99999997E-7 : f32
    %16 = vector.broadcast %cst_9 : f32 to vector<24x1xf32>
    %17 = arith.addf %15, %16 : vector<24x1xf32>
    %18 = math.rsqrt %17 : vector<24x1xf32>
    %19 = vector.broadcast %18 : vector<24x1xf32> to vector<24x32xf32>
    %20 = arith.mulf %10, %19 : vector<24x32xf32>
    %21 = vector.broadcast %3 : vector<1x32xf32> to vector<24x32xf32>
    %22 = arith.mulf %20, %21 : vector<24x32xf32>
    %23 = vector.broadcast %4 : vector<1x32xf32> to vector<24x32xf32>
    %24 = arith.addf %22, %23 : vector<24x32xf32>
    %25 = arith.truncf %24 : vector<24x32xf32> to vector<24x32xbf16>
    %c0_10 = arith.constant 0 : index
    %c0_11 = arith.constant 0 : index
    %26 = vector.load %arg2[%c0_10, %c0_11] : memref<32x96xbf16, #tpu.memory_space<vmem>>, vector<32x96xbf16>
    %cst_12 = arith.constant dense<0.000000e+00> : vector<24x96xf32>
    %27 = tpu.matmul %25, %26, %cst_12 {dimension_numbers = #tpu.dot_dimension_numbers<[1], [0], [0], [1], [0, 0, 1, 1], [], []>} : vector<24x32xbf16>, vector<32x96xbf16>, vector<24x96xf32> -> vector<24x96xf32>
    %c0_13 = arith.constant 0 : index
    %c0_14 = arith.constant 0 : index
    %28 = vector.load %arg3[%c0_13, %c0_14] : memref<1x96xf32, #tpu.memory_space<vmem>>, vector<1x96xf32>
    %29 = vector.broadcast %28 : vector<1x96xf32> to vector<24x96xf32>
    %30 = arith.addf %27, %29 : vector<24x96xf32>
    %31 = arith.truncf %30 : vector<24x96xf32> to vector<24x96xbf16>
    %32 = vector.extract_strided_slice %31 {offsets = [0, 0], sizes = [24, 8], strides = [1, 1]} : vector<24x96xbf16> to vector<24x8xbf16>
    %33 = vector.extract_strided_slice %31 {offsets = [0, 8], sizes = [24, 8], strides = [1, 1]} : vector<24x96xbf16> to vector<24x8xbf16>
    %34 = vector.extract_strided_slice %31 {offsets = [0, 16], sizes = [24, 8], strides = [1, 1]} : vector<24x96xbf16> to vector<24x8xbf16>
    %35 = vector.extract_strided_slice %31 {offsets = [0, 24], sizes = [24, 8], strides = [1, 1]} : vector<24x96xbf16> to vector<24x8xbf16>
    %36 = vector.shape_cast %32 : vector<24x8xbf16> to vector<1x24x8xbf16>
    %37 = vector.shape_cast %33 : vector<24x8xbf16> to vector<1x24x8xbf16>
    %38 = vector.shape_cast %34 : vector<24x8xbf16> to vector<1x24x8xbf16>
    %39 = vector.shape_cast %35 : vector<24x8xbf16> to vector<1x24x8xbf16>
    %40 = tpu.concatenate %36, %37, %38, %39 in 0 : vector<1x24x8xbf16>, vector<1x24x8xbf16>, vector<1x24x8xbf16>, vector<1x24x8xbf16> -> vector<4x24x8xbf16>
    %41 = vector.extract_strided_slice %31 {offsets = [0, 32], sizes = [24, 8], strides = [1, 1]} : vector<24x96xbf16> to vector<24x8xbf16>
    %42 = vector.extract_strided_slice %31 {offsets = [0, 40], sizes = [24, 8], strides = [1, 1]} : vector<24x96xbf16> to vector<24x8xbf16>
    %43 = vector.extract_strided_slice %31 {offsets = [0, 48], sizes = [24, 8], strides = [1, 1]} : vector<24x96xbf16> to vector<24x8xbf16>
    %44 = vector.extract_strided_slice %31 {offsets = [0, 56], sizes = [24, 8], strides = [1, 1]} : vector<24x96xbf16> to vector<24x8xbf16>
    %45 = vector.shape_cast %41 : vector<24x8xbf16> to vector<1x24x8xbf16>
    %46 = vector.shape_cast %42 : vector<24x8xbf16> to vector<1x24x8xbf16>
    %47 = vector.shape_cast %43 : vector<24x8xbf16> to vector<1x24x8xbf16>
    %48 = vector.shape_cast %44 : vector<24x8xbf16> to vector<1x24x8xbf16>
    %49 = tpu.concatenate %45, %46, %47, %48 in 0 : vector<1x24x8xbf16>, vector<1x24x8xbf16>, vector<1x24x8xbf16>, vector<1x24x8xbf16> -> vector<4x24x8xbf16>
    %50 = vector.extract_strided_slice %31 {offsets = [0, 64], sizes = [24, 8], strides = [1, 1]} : vector<24x96xbf16> to vector<24x8xbf16>
    %51 = vector.extract_strided_slice %31 {offsets = [0, 72], sizes = [24, 8], strides = [1, 1]} : vector<24x96xbf16> to vector<24x8xbf16>
    %52 = vector.extract_strided_slice %31 {offsets = [0, 80], sizes = [24, 8], strides = [1, 1]} : vector<24x96xbf16> to vector<24x8xbf16>
    %53 = vector.extract_strided_slice %31 {offsets = [0, 88], sizes = [24, 8], strides = [1, 1]} : vector<24x96xbf16> to vector<24x8xbf16>
    %54 = vector.shape_cast %50 : vector<24x8xbf16> to vector<1x24x8xbf16>
    %55 = vector.shape_cast %51 : vector<24x8xbf16> to vector<1x24x8xbf16>
    %56 = vector.shape_cast %52 : vector<24x8xbf16> to vector<1x24x8xbf16>
    %57 = vector.shape_cast %53 : vector<24x8xbf16> to vector<1x24x8xbf16>
    %58 = tpu.concatenate %54, %55, %56, %57 in 0 : vector<1x24x8xbf16>, vector<1x24x8xbf16>, vector<1x24x8xbf16>, vector<1x24x8xbf16> -> vector<4x24x8xbf16>
    %cst_15 = arith.constant dense<0.000000e+00> : vector<4x24x24xf32>
    %59 = tpu.matmul %40, %49, %cst_15 {dimension_numbers = #tpu.dot_dimension_numbers<[2], [2], [1], [1], [0, 0, 0, 1, 1, 1], [0], [0]>} : vector<4x24x8xbf16>, vector<4x24x8xbf16>, vector<4x24x24xf32> -> vector<4x24x24xf32>
    %cst_16 = arith.constant 0.353553385 : f32
    %60 = vector.broadcast %cst_16 : f32 to vector<4x24x24xf32>
    %61 = arith.mulf %59, %60 : vector<4x24x24xf32>
    %62 = tpu.iota {dimensions = array<i32: 2>} : vector<4x24x24xi32>
    %c17_i32 = arith.constant 17 : i32
    %63 = vector.broadcast %c17_i32 : i32 to vector<4x24x24xi32>
    %64 = arith.cmpi slt, %62, %63 : vector<4x24x24xi32>
    %cst_17 = arith.constant -1.000000e+30 : f32
    %65 = vector.broadcast %cst_17 : f32 to vector<4x24x24xf32>
    %66 = arith.select %64, %61, %65 : vector<4x24x24xi1>, vector<4x24x24xf32>
    %cst_18 = arith.constant dense<0xFF800000> : vector<4x24xf32>
    %67 = vector.multi_reduction <maximumf>, %66, %cst_18 [2] : vector<4x24x24xf32> to vector<4x24xf32>
    %68 = vector.shape_cast %67 : vector<4x24xf32> to vector<4x24x1xf32>
    %69 = vector.broadcast %68 : vector<4x24x1xf32> to vector<4x24x24xf32>
    %70 = arith.subf %66, %69 : vector<4x24x24xf32>
    %71 = math.exp %70 : vector<4x24x24xf32>
    %cst_19 = arith.constant dense<0.000000e+00> : vector<4x24xf32>
    %72 = vector.multi_reduction <add>, %71, %cst_19 [2] : vector<4x24x24xf32> to vector<4x24xf32>
    %73 = vector.shape_cast %72 : vector<4x24xf32> to vector<4x24x1xf32>
    %74 = tpu.reciprocal %73 {approx = true} : vector<4x24x1xf32> -> vector<4x24x1xf32>
    %75 = vector.broadcast %74 : vector<4x24x1xf32> to vector<4x24x24xf32>
    %76 = arith.mulf %71, %75 : vector<4x24x24xf32>
    %77 = arith.truncf %76 : vector<4x24x24xf32> to vector<4x24x24xbf16>
    %cst_20 = arith.constant dense<0.000000e+00> : vector<4x24x8xf32>
    %78 = tpu.matmul %77, %58, %cst_20 {dimension_numbers = #tpu.dot_dimension_numbers<[2], [1], [1], [2], [0, 0, 0, 1, 1, 2], [0], [0]>} : vector<4x24x24xbf16>, vector<4x24x8xbf16>, vector<4x24x8xf32> -> vector<4x24x8xf32>
    %79 = arith.truncf %78 : vector<4x24x8xf32> to vector<4x24x8xbf16>
    %c0_21 = arith.constant 0 : index
    %c0_22 = arith.constant 0 : index
    %c0_23 = arith.constant 0 : index
    %80 = vector.load %arg4[%c0_21, %c0_22, %c0_23] : memref<4x8x32xbf16, #tpu.memory_space<vmem>>, vector<4x8x32xbf16>
    %cst_24 = arith.constant dense<0.000000e+00> : vector<4x24x32xf32>
    %81 = tpu.matmul %79, %80, %cst_24 {dimension_numbers = #tpu.dot_dimension_numbers<[2], [1], [1], [2], [0, 0, 0, 1, 1, 2], [0], [0]>} : vector<4x24x8xbf16>, vector<4x8x32xbf16>, vector<4x24x32xf32> -> vector<4x24x32xf32>
    %cst_25 = arith.constant dense<0.000000e+00> : vector<24x32xf32>
    %82 = vector.multi_reduction <add>, %81, %cst_25 [0] : vector<4x24x32xf32> to vector<24x32xf32>
    %c0_26 = arith.constant 0 : index
    %c0_27 = arith.constant 0 : index
    %83 = vector.load %arg5[%c0_26, %c0_27] : memref<1x32xf32, #tpu.memory_space<vmem>>, vector<1x32xf32>
    %84 = vector.broadcast %83 : vector<1x32xf32> to vector<24x32xf32>
    %85 = arith.addf %82, %84 : vector<24x32xf32>
    %86 = arith.addf %2, %85 : vector<24x32xf32>
    %c0_28 = arith.constant 0 : index
    %c0_29 = arith.constant 0 : index
    %87 = vector.load %arg8[%c0_28, %c0_29] : memref<1x32xf32, #tpu.memory_space<vmem>>, vector<1x32xf32>
    %c0_30 = arith.constant 0 : index
    %c0_31 = arith.constant 0 : index
    %88 = vector.load %arg9[%c0_30, %c0_31] : memref<1x32xf32, #tpu.memory_space<vmem>>, vector<1x32xf32>
    %cst_32 = arith.constant dense<0.000000e+00> : vector<24xf32>
    %89 = vector.multi_reduction <add>, %86, %cst_32 [1] : vector<24x32xf32> to vector<24xf32>
    %90 = vector.shape_cast %89 : vector<24xf32> to vector<24x1xf32>
    %cst_33 = arith.constant 3.200000e+01 : f32
    %91 = vector.broadcast %cst_33 : f32 to vector<24x1xf32>
    %92 = arith.divf %90, %91 : vector<24x1xf32>
    %93 = vector.broadcast %92 : vector<24x1xf32> to vector<24x32xf32>
    %94 = arith.subf %86, %93 : vector<24x32xf32>
    %95 = arith.mulf %94, %94 : vector<24x32xf32>
    %cst_34 = arith.constant dense<0.000000e+00> : vector<24xf32>
    %96 = vector.multi_reduction <add>, %95, %cst_34 [1] : vector<24x32xf32> to vector<24xf32>
    %97 = vector.shape_cast %96 : vector<24xf32> to vector<24x1xf32>
    %cst_35 = arith.constant 3.200000e+01 : f32
    %98 = vector.broadcast %cst_35 : f32 to vector<24x1xf32>
    %99 = arith.divf %97, %98 : vector<24x1xf32>
    %cst_36 = arith.constant 9.99999997E-7 : f32
    %100 = vector.broadcast %cst_36 : f32 to vector<24x1xf32>
    %101 = arith.addf %99, %100 : vector<24x1xf32>
    %102 = math.rsqrt %101 : vector<24x1xf32>
    %103 = vector.broadcast %102 : vector<24x1xf32> to vector<24x32xf32>
    %104 = arith.mulf %94, %103 : vector<24x32xf32>
    %105 = vector.broadcast %87 : vector<1x32xf32> to vector<24x32xf32>
    %106 = arith.mulf %104, %105 : vector<24x32xf32>
    %107 = vector.broadcast %88 : vector<1x32xf32> to vector<24x32xf32>
    %108 = arith.addf %106, %107 : vector<24x32xf32>
    %109 = arith.truncf %108 : vector<24x32xf32> to vector<24x32xbf16>
    %c0_37 = arith.constant 0 : index
    %c0_38 = arith.constant 0 : index
    %110 = vector.load %arg10[%c0_37, %c0_38] : memref<32x64xbf16, #tpu.memory_space<vmem>>, vector<32x64xbf16>
    %cst_39 = arith.constant dense<0.000000e+00> : vector<24x64xf32>
    %111 = tpu.matmul %109, %110, %cst_39 {dimension_numbers = #tpu.dot_dimension_numbers<[1], [0], [0], [1], [0, 0, 1, 1], [], []>} : vector<24x32xbf16>, vector<32x64xbf16>, vector<24x64xf32> -> vector<24x64xf32>
    %c0_40 = arith.constant 0 : index
    %c0_41 = arith.constant 0 : index
    %112 = vector.load %arg11[%c0_40, %c0_41] : memref<1x64xf32, #tpu.memory_space<vmem>>, vector<1x64xf32>
    %113 = vector.broadcast %112 : vector<1x64xf32> to vector<24x64xf32>
    %114 = arith.addf %111, %113 : vector<24x64xf32>
    %115 = arith.mulf %114, %114 : vector<24x64xf32>
    %116 = arith.mulf %114, %115 : vector<24x64xf32>
    %cst_42 = arith.constant 4.471500e-02 : f32
    %117 = vector.broadcast %cst_42 : f32 to vector<24x64xf32>
    %118 = arith.mulf %117, %116 : vector<24x64xf32>
    %119 = arith.addf %114, %118 : vector<24x64xf32>
    %cst_43 = arith.constant 0.797884583 : f32
    %120 = vector.broadcast %cst_43 : f32 to vector<24x64xf32>
    %121 = arith.mulf %120, %119 : vector<24x64xf32>
    %122 = math.tanh %121 : vector<24x64xf32>
    %cst_44 = arith.constant 1.000000e+00 : f32
    %123 = vector.broadcast %cst_44 : f32 to vector<24x64xf32>
    %124 = arith.addf %123, %122 : vector<24x64xf32>
    %cst_45 = arith.constant 5.000000e-01 : f32
    %125 = vector.broadcast %cst_45 : f32 to vector<24x64xf32>
    %126 = arith.mulf %125, %124 : vector<24x64xf32>
    %127 = arith.mulf %114, %126 : vector<24x64xf32>
    %128 = arith.truncf %127 : vector<24x64xf32> to vector<24x64xbf16>
    %c0_46 = arith.constant 0 : index
    %c0_47 = arith.constant 0 : index
    %129 = vector.load %arg12[%c0_46, %c0_47] : memref<64x32xbf16, #tpu.memory_space<vmem>>, vector<64x32xbf16>
    %cst_48 = arith.constant dense<0.000000e+00> : vector<24x32xf32>
    %130 = tpu.matmul %128, %129, %cst_48 {dimension_numbers = #tpu.dot_dimension_numbers<[1], [0], [0], [1], [0, 0, 1, 1], [], []>} : vector<24x64xbf16>, vector<64x32xbf16>, vector<24x32xf32> -> vector<24x32xf32>
    %c0_49 = arith.constant 0 : index
    %c0_50 = arith.constant 0 : index
    %131 = vector.load %arg13[%c0_49, %c0_50] : memref<1x32xf32, #tpu.memory_space<vmem>>, vector<1x32xf32>
    %132 = vector.broadcast %131 : vector<1x32xf32> to vector<24x32xf32>
    %133 = arith.addf %130, %132 : vector<24x32xf32>
    %134 = arith.addf %86, %133 : vector<24x32xf32>
    %135 = arith.truncf %134 : vector<24x32xf32> to vector<24x32xbf16>
    %c0_51 = arith.constant 0 : index
    %c0_52 = arith.constant 0 : index
    %c0_53 = arith.constant 0 : index
    %136 = vector.load %arg14[%c0_51, %c0_52, %c0_53] : memref<1x24x32xbf16, #tpu.memory_space<vmem>>, vector<1x24x32xbf16>
    %137 = vector.shape_cast %136 : vector<1x24x32xbf16> to vector<24x32xbf16>
    %138 = vector.shape_cast %135 : vector<24x32xbf16> to vector<1x24x32xbf16>
    tpu.vector_store %arg14[%c0_51, %c0_52, %c0_53], %138 {strides = array<i32>} : memref<1x24x32xbf16, #tpu.memory_space<vmem>>, vector<1x24x32xbf16>,
    return
  }
  func.func @transform_0(%arg0: i32) -> (i32, i32, i32) {
    %c0_i32 = arith.constant 0 : i32
    %c0_i32_0 = arith.constant 0 : i32
    %c0_i32_1 = arith.constant 0 : i32
    return %arg0, %c0_i32, %c0_i32_0 : i32, i32, i32
  }
  func.func @transform_1(%arg0: i32) -> (i32, i32) {
    %c0_i32 = arith.constant 0 : i32
    %c0_i32_0 = arith.constant 0 : i32
    %c0_i32_1 = arith.constant 0 : i32
    return %c0_i32, %c0_i32_0 : i32, i32
  }
  func.func @transform_2(%arg0: i32) -> (i32, i32) {
    %c0_i32 = arith.constant 0 : i32
    %c0_i32_0 = arith.constant 0 : i32
    %c0_i32_1 = arith.constant 0 : i32
    return %c0_i32, %c0_i32_0 : i32, i32
  }
  func.func @transform_3(%arg0: i32) -> (i32, i32, i32) {
    %c0_i32 = arith.constant 0 : i32
    %c0_i32_0 = arith.constant 0 : i32
    %c0_i32_1 = arith.constant 0 : i32
    %c0_i32_2 = arith.constant 0 : i32
    return %c0_i32, %c0_i32_0, %c0_i32_1 : i32, i32, i32
  }
  func.func @transform_4(%arg0: i32) -> (i32, i32) {
    %c0_i32 = arith.constant 0 : i32
    %c0_i32_0 = arith.constant 0 : i32
    %c0_i32_1 = arith.constant 0 : i32
    return %c0_i32, %c0_i32_0 : i32, i32
  }
  func.func @transform_5(%arg0: i32) -> (i32, i32) {
    %c0_i32 = arith.constant 0 : i32
    %c0_i32_0 = arith.constant 0 : i32
    %c0_i32_1 = arith.constant 0 : i32
    return %c0_i32, %c0_i32_0 : i32, i32
  }
  func.func @transform_6(%arg0: i32) -> (i32, i32) {
    %c0_i32 = arith.constant 0 : i32
    %c0_i32_0 = arith.constant 0 : i32
    %c0_i32_1 = arith.constant 0 : i32
    return %c0_i32, %c0_i32_0 : i32, i32
  }
  func.func @transform_7(%arg0: i32) -> (i32, i32) {
    %c0_i32 = arith.constant 0 : i32
    %c0_i32_0 = arith.constant 0 : i32
    %c0_i32_1 = arith.constant 0 : i32
    return %c0_i32, %c0_i32_0 : i32, i32
  }
  func.func @transform_8(%arg0: i32) -> (i32, i32) {
    %c0_i32 = arith.constant 0 : i32
    %c0_i32_0 = arith.constant 0 : i32
    %c0_i32_1 = arith.constant 0 : i32
    return %c0_i32, %c0_i32_0 : i32, i32
  }
  func.func @transform_9(%arg0: i32) -> (i32, i32) {
    %c0_i32 = arith.constant 0 : i32
    %c0_i32_0 = arith.constant 0 : i32
    %c0_i32_1 = arith.constant 0 : i32
    return %c0_i32, %c0_i32_0 : i32, i32
  }
  func.func @transform_10(%arg0: i32) -> (i32, i32) {
    %c0_i32 = arith.constant 0 : i32
    %c0_i32_0 = arith.constant 0 : i32
    %c0_i32_1 = arith.constant 0 : i32
    return %c0_i32, %c0_i32_0 : i32, i32
  }
  func.func @transform_11(%arg0: i32) -> (i32, i32) {
    %c0_i32 = arith.constant 0 : i32
    %c0_i32_0 = arith.constant 0 : i32
    %c0_i32_1 = arith.constant 0 : i32
    return %c0_i32, %c0_i32_0 : i32, i32
  }
  func.func @transform_12(%arg0: i32) -> (i32, i32) {
    %c0_i32 = arith.constant 0 : i32
    %c0_i32_0 = arith.constant 0 : i32
    %c0_i32_1 = arith.constant 0 : i32
    return %c0_i32, %c0_i32_0 : i32, i32
  }
  func.func @transform_13(%arg0: i32) -> (i32, i32, i32) {
    %c0_i32 = arith.constant 0 : i32
    %c0_i32_0 = arith.constant 0 : i32
    %c0_i32_1 = arith.constant 0 : i32
    return %arg0, %c0_i32, %c0_i32_0 : i32, i32, i32
  }
}

module attributes {stable_mosaic.version = 11 : i64} {
  func.func @_ln_linear_kernel(%arg0: i32, %arg1: memref<32x32xbf16, #tpu.memory_space<vmem>>, %arg2: memref<1x32xf32, #tpu.memory_space<vmem>>, %arg3: memref<1x32xf32, #tpu.memory_space<vmem>>, %arg4: memref<32x32xbf16, #tpu.memory_space<vmem>>, %arg5: memref<1x32xf32, #tpu.memory_space<vmem>>, %arg6: memref<32x32xf32, #tpu.memory_space<vmem>>) attributes {dimension_semantics = [#tpu.dimension_semantics<parallel>], iteration_bounds = array<i64: 1>, scalar_prefetch = 0 : i64, scratch_operands = 0 : i64, tpu.core_type = #tpu.core_type<tc>, window_params = [{transform_indices = @transform_0, window_bounds = array<i64: 32, 32>}, {pipeline_mode = #tpu.pipeline_mode<synchronous>, transform_indices = @transform_1, window_bounds = array<i64: 1, 32>}, {pipeline_mode = #tpu.pipeline_mode<synchronous>, transform_indices = @transform_2, window_bounds = array<i64: 1, 32>}, {pipeline_mode = #tpu.pipeline_mode<synchronous>, transform_indices = @transform_3, window_bounds = array<i64: 32, 32>}, {pipeline_mode = #tpu.pipeline_mode<synchronous>, transform_indices = @transform_4, window_bounds = array<i64: 1, 32>}, {transform_indices = @transform_5, window_bounds = array<i64: 32, 32>}]} {
    %c0 = arith.constant 0 : index
    %c0_0 = arith.constant 0 : index
    %0 = vector.load %arg1[%c0, %c0_0] : memref<32x32xbf16, #tpu.memory_space<vmem>>, vector<32x32xbf16>
    %1 = arith.extf %0 : vector<32x32xbf16> to vector<32x32xf32>
    %c0_1 = arith.constant 0 : index
    %c0_2 = arith.constant 0 : index
    %2 = vector.load %arg2[%c0_1, %c0_2] : memref<1x32xf32, #tpu.memory_space<vmem>>, vector<1x32xf32>
    %c0_3 = arith.constant 0 : index
    %c0_4 = arith.constant 0 : index
    %3 = vector.load %arg3[%c0_3, %c0_4] : memref<1x32xf32, #tpu.memory_space<vmem>>, vector<1x32xf32>
    %cst = arith.constant dense<0.000000e+00> : vector<32xf32>
    %4 = vector.multi_reduction <add>, %1, %cst [1] : vector<32x32xf32> to vector<32xf32>
    %5 = vector.shape_cast %4 : vector<32xf32> to vector<32x1xf32>
    %cst_5 = arith.constant 3.200000e+01 : f32
    %6 = vector.broadcast %cst_5 : f32 to vector<32x1xf32>
    %7 = arith.divf %5, %6 : vector<32x1xf32>
    %8 = vector.broadcast %7 : vector<32x1xf32> to vector<32x32xf32>
    %9 = arith.subf %1, %8 : vector<32x32xf32>
    %10 = arith.mulf %9, %9 : vector<32x32xf32>
    %cst_6 = arith.constant dense<0.000000e+00> : vector<32xf32>
    %11 = vector.multi_reduction <add>, %10, %cst_6 [1] : vector<32x32xf32> to vector<32xf32>
    %12 = vector.shape_cast %11 : vector<32xf32> to vector<32x1xf32>
    %cst_7 = arith.constant 3.200000e+01 : f32
    %13 = vector.broadcast %cst_7 : f32 to vector<32x1xf32>
    %14 = arith.divf %12, %13 : vector<32x1xf32>
    %cst_8 = arith.constant 9.99999997E-7 : f32
    %15 = vector.broadcast %cst_8 : f32 to vector<32x1xf32>
    %16 = arith.addf %14, %15 : vector<32x1xf32>
    %17 = math.rsqrt %16 : vector<32x1xf32>
    %18 = vector.broadcast %17 : vector<32x1xf32> to vector<32x32xf32>
    %19 = arith.mulf %9, %18 : vector<32x32xf32>
    %20 = vector.broadcast %2 : vector<1x32xf32> to vector<32x32xf32>
    %21 = arith.mulf %19, %20 : vector<32x32xf32>
    %22 = vector.broadcast %3 : vector<1x32xf32> to vector<32x32xf32>
    %23 = arith.addf %21, %22 : vector<32x32xf32>
    %24 = arith.truncf %23 : vector<32x32xf32> to vector<32x32xbf16>
    %c0_9 = arith.constant 0 : index
    %c0_10 = arith.constant 0 : index
    %25 = vector.load %arg4[%c0_9, %c0_10] : memref<32x32xbf16, #tpu.memory_space<vmem>>, vector<32x32xbf16>
    %cst_11 = arith.constant dense<0.000000e+00> : vector<32x32xf32>
    %26 = tpu.matmul %24, %25, %cst_11 {dimension_numbers = #tpu.dot_dimension_numbers<[1], [0], [0], [1], [0, 0, 1, 1], [], []>} : vector<32x32xbf16>, vector<32x32xbf16>, vector<32x32xf32> -> vector<32x32xf32>
    %c0_12 = arith.constant 0 : index
    %c0_13 = arith.constant 0 : index
    %27 = vector.load %arg5[%c0_12, %c0_13] : memref<1x32xf32, #tpu.memory_space<vmem>>, vector<1x32xf32>
    %28 = vector.broadcast %27 : vector<1x32xf32> to vector<32x32xf32>
    %29 = arith.addf %26, %28 : vector<32x32xf32>
    %c0_14 = arith.constant 0 : index
    %c0_15 = arith.constant 0 : index
    %30 = vector.load %arg6[%c0_14, %c0_15] : memref<32x32xf32, #tpu.memory_space<vmem>>, vector<32x32xf32>
    tpu.vector_store %arg6[%c0_14, %c0_15], %29 {strides = array<i32>} : memref<32x32xf32, #tpu.memory_space<vmem>>, vector<32x32xf32>,
    return
  }
  func.func @transform_0(%arg0: i32) -> (i32, i32) {
    %c0_i32 = arith.constant 0 : i32
    %c0_i32_0 = arith.constant 0 : i32
    return %arg0, %c0_i32 : i32, i32
  }
  func.func @transform_1(%arg0: i32) -> (i32, i32) {
    %c0_i32 = arith.constant 0 : i32
    %c0_i32_0 = arith.constant 0 : i32
    %c0_i32_1 = arith.constant 0 : i32
    return %c0_i32, %c0_i32_0 : i32, i32
  }
  func.func @transform_2(%arg0: i32) -> (i32, i32) {
    %c0_i32 = arith.constant 0 : i32
    %c0_i32_0 = arith.constant 0 : i32
    %c0_i32_1 = arith.constant 0 : i32
    return %c0_i32, %c0_i32_0 : i32, i32
  }
  func.func @transform_3(%arg0: i32) -> (i32, i32) {
    %c0_i32 = arith.constant 0 : i32
    %c0_i32_0 = arith.constant 0 : i32
    %c0_i32_1 = arith.constant 0 : i32
    return %c0_i32, %c0_i32_0 : i32, i32
  }
  func.func @transform_4(%arg0: i32) -> (i32, i32) {
    %c0_i32 = arith.constant 0 : i32
    %c0_i32_0 = arith.constant 0 : i32
    %c0_i32_1 = arith.constant 0 : i32
    return %c0_i32, %c0_i32_0 : i32, i32
  }
  func.func @transform_5(%arg0: i32) -> (i32, i32) {
    %c0_i32 = arith.constant 0 : i32
    %c0_i32_0 = arith.constant 0 : i32
    return %arg0, %c0_i32 : i32, i32
  }
}

module attributes {stable_mosaic.version = 11 : i64} {
  func.func @_masked_mse_kernel(%arg0: i32, %arg1: memref<32x128xf32, #tpu.memory_space<vmem>>, %arg2: memref<32x128xf32, #tpu.memory_space<vmem>>, %arg3: memref<1x1xf32, #tpu.memory_space<vmem>>, %arg4: memref<1x1xf32, #tpu.memory_space<vmem>>, %arg5: memref<1x1xf32, #tpu.memory_space<vmem>>) attributes {dimension_semantics = [#tpu.dimension_semantics<arbitrary>], iteration_bounds = array<i64: 1>, scalar_prefetch = 0 : i64, scratch_operands = 2 : i64, tpu.core_type = #tpu.core_type<tc>, window_params = [{transform_indices = @transform_0, window_bounds = array<i64: 32, 128>}, {transform_indices = @transform_1, window_bounds = array<i64: 32, 128>}, {pipeline_mode = #tpu.pipeline_mode<synchronous>, transform_indices = @transform_2, window_bounds = array<i64: 1, 1>}]} {
    %c0_i32 = arith.constant 0 : i32
    %0 = arith.cmpi eq, %arg0, %c0_i32 : i32
    %1 = arith.extui %0 : i1 to i32
    %c0_i32_0 = arith.constant 0 : i32
    %2 = arith.cmpi ne, %1, %c0_i32_0 : i32
    scf.if %2 {
      %cst_16 = arith.constant 0.000000e+00 : f32
      %30 = vector.broadcast %cst_16 : f32 to vector<1x1xf32>
      %c0_17 = arith.constant 0 : index
      %c0_18 = arith.constant 0 : index
      %31 = vector.load %arg4[%c0_17, %c0_18] : memref<1x1xf32, #tpu.memory_space<vmem>>, vector<1x1xf32>
      tpu.vector_store %arg4[%c0_17, %c0_18], %30 {strides = array<i32>} : memref<1x1xf32, #tpu.memory_space<vmem>>, vector<1x1xf32>,
      %cst_19 = arith.constant 0.000000e+00 : f32
      %32 = vector.broadcast %cst_19 : f32 to vector<1x1xf32>
      %c0_20 = arith.constant 0 : index
      %c0_21 = arith.constant 0 : index
      %33 = vector.load %arg5[%c0_20, %c0_21] : memref<1x1xf32, #tpu.memory_space<vmem>>, vector<1x1xf32>
      tpu.vector_store %arg5[%c0_20, %c0_21], %32 {strides = array<i32>} : memref<1x1xf32, #tpu.memory_space<vmem>>, vector<1x1xf32>,
    } else {
    }
    %c0 = arith.constant 0 : index
    %c0_1 = arith.constant 0 : index
    %3 = vector.load %arg1[%c0, %c0_1] : memref<32x128xf32, #tpu.memory_space<vmem>>, vector<32x128xf32>
    %c0_2 = arith.constant 0 : index
    %c0_3 = arith.constant 0 : index
    %4 = vector.load %arg2[%c0_2, %c0_3] : memref<32x128xf32, #tpu.memory_space<vmem>>, vector<32x128xf32>
    %5 = arith.subf %3, %4 : vector<32x128xf32>
    %6 = arith.mulf %5, %5 : vector<32x128xf32>
    %cst = arith.constant dense<0.000000e+00> : vector<32xf32>
    %7 = vector.multi_reduction <add>, %6, %cst [1] : vector<32x128xf32> to vector<32xf32>
    %8 = vector.shape_cast %7 : vector<32xf32> to vector<32x1xf32>
    %9 = vector.extract_strided_slice %3 {offsets = [0, 127], sizes = [32, 1], strides = [1, 1]} : vector<32x128xf32> to vector<32x1xf32>
    %c0_4 = arith.constant 0 : index
    %c0_5 = arith.constant 0 : index
    %10 = vector.load %arg4[%c0_4, %c0_5] : memref<1x1xf32, #tpu.memory_space<vmem>>, vector<1x1xf32>
    %11 = arith.mulf %8, %9 : vector<32x1xf32>
    %12 = vector.shape_cast %11 : vector<32x1xf32> to vector<1x32x1xf32>
    %cst_6 = arith.constant dense<0.000000e+00> : vector<1xf32>
    %13 = vector.multi_reduction <add>, %12, %cst_6 [1, 2] : vector<1x32x1xf32> to vector<1xf32>
    %14 = vector.shape_cast %13 : vector<1xf32> to vector<1x1x1xf32>
    %15 = vector.extract %14[0, 0, 0] : f32 from vector<1x1x1xf32>
    %16 = vector.broadcast %15 : f32 to vector<1x1xf32>
    %17 = arith.addf %10, %16 : vector<1x1xf32>
    %c0_7 = arith.constant 0 : index
    %c0_8 = arith.constant 0 : index
    %18 = vector.load %arg4[%c0_7, %c0_8] : memref<1x1xf32, #tpu.memory_space<vmem>>, vector<1x1xf32>
    tpu.vector_store %arg4[%c0_7, %c0_8], %17 {strides = array<i32>} : memref<1x1xf32, #tpu.memory_space<vmem>>, vector<1x1xf32>,
    %c0_9 = arith.constant 0 : index
    %c0_10 = arith.constant 0 : index
    %19 = vector.load %arg5[%c0_9, %c0_10] : memref<1x1xf32, #tpu.memory_space<vmem>>, vector<1x1xf32>
    %20 = vector.shape_cast %9 : vector<32x1xf32> to vector<1x32x1xf32>
    %cst_11 = arith.constant dense<0.000000e+00> : vector<1xf32>
    %21 = vector.multi_reduction <add>, %20, %cst_11 [1, 2] : vector<1x32x1xf32> to vector<1xf32>
    %22 = vector.shape_cast %21 : vector<1xf32> to vector<1x1x1xf32>
    %23 = vector.extract %22[0, 0, 0] : f32 from vector<1x1x1xf32>
    %24 = vector.broadcast %23 : f32 to vector<1x1xf32>
    %25 = arith.addf %19, %24 : vector<1x1xf32>
    %c0_12 = arith.constant 0 : index
    %c0_13 = arith.constant 0 : index
    %26 = vector.load %arg5[%c0_12, %c0_13] : memref<1x1xf32, #tpu.memory_space<vmem>>, vector<1x1xf32>
    tpu.vector_store %arg5[%c0_12, %c0_13], %25 {strides = array<i32>} : memref<1x1xf32, #tpu.memory_space<vmem>>, vector<1x1xf32>,
    %c0_i32_14 = arith.constant 0 : i32
    %27 = arith.cmpi eq, %arg0, %c0_i32_14 : i32
    %28 = arith.extui %27 : i1 to i32
    %c0_i32_15 = arith.constant 0 : i32
    %29 = arith.cmpi ne, %28, %c0_i32_15 : i32
    scf.if %29 {
      %c0_16 = arith.constant 0 : index
      %c0_17 = arith.constant 0 : index
      %30 = vector.load %arg4[%c0_16, %c0_17] : memref<1x1xf32, #tpu.memory_space<vmem>>, vector<1x1xf32>
      %cst_18 = arith.constant 3.125000e-02 : f32
      %31 = vector.broadcast %cst_18 : f32 to vector<1x1xf32>
      %32 = arith.mulf %30, %31 : vector<1x1xf32>
      %c0_19 = arith.constant 0 : index
      %c0_20 = arith.constant 0 : index
      %33 = vector.load %arg5[%c0_19, %c0_20] : memref<1x1xf32, #tpu.memory_space<vmem>>, vector<1x1xf32>
      %34 = arith.divf %32, %33 : vector<1x1xf32>
      %c0_21 = arith.constant 0 : index
      %c0_22 = arith.constant 0 : index
      %35 = vector.load %arg3[%c0_21, %c0_22] : memref<1x1xf32, #tpu.memory_space<vmem>>, vector<1x1xf32>
      tpu.vector_store %arg3[%c0_21, %c0_22], %34 {strides = array<i32>} : memref<1x1xf32, #tpu.memory_space<vmem>>, vector<1x1xf32>,
    } else {
    }
    return
  }
  func.func @transform_0(%arg0: i32) -> (i32, i32) {
    %c0_i32 = arith.constant 0 : i32
    %c0_i32_0 = arith.constant 0 : i32
    return %arg0, %c0_i32 : i32, i32
  }
  func.func @transform_1(%arg0: i32) -> (i32, i32) {
    %c0_i32 = arith.constant 0 : i32
    %c0_i32_0 = arith.constant 0 : i32
    return %arg0, %c0_i32 : i32, i32
  }
  func.func @transform_2(%arg0: i32) -> (i32, i32) {
    %c0_i32 = arith.constant 0 : i32
    %c0_i32_0 = arith.constant 0 : i32
    %c0_i32_1 = arith.constant 0 : i32
    return %c0_i32, %c0_i32_0 : i32, i32
  }
}

</mosaic_0001>

<llo_original>
// kernel: _lambda_.8
$region0: #{_lambda_.8}
  #allocation0 [shape = 'u32[]', space=smem, size = 0x4, offset = 0x4, fixed_abs, tag = 'smem constant byte address 0x4 - core index']
  #allocation1 [shape = 'u32[144,128]{1,0:T(1,128)}', space=vmem, size = 0x12000, scoped, tag = 'internal scratch']
  %s0 = inlined_call_operand.vmem [shape: bf16[2,16,32], index: 0, kind: input, shape index: {}]
  %s1 = inlined_call_operand.vmem [shape: bf16[32,32], index: 1, kind: input, shape index: {}]
  %s2 = inlined_call_operand.vmem [shape: f32[1,16,32], index: 2, kind: input, shape index: {}]
  %s3 = inlined_call_operand.vmem [shape: bf16[2,16,32], index: 3, kind: output, shape index: {}]
  %s4 = sld [smem:[#allocation0]]
  $region45: #{_lambda_.8} parent=0
    _
  %s6 = ssub.s32 1, %s4
  %s7 = scalar_select 0, %s6, %s4
  loop: start=0, step=1, limit=4
  $region2: #{_lambda_.8} parent=0 // loop_pre_header
    _
  $region3: #{_lambda_.8} parent=0 // loop_header
    %s9 = sphi 0, %s13
    %p10 = scmp.ge.s32.totalorder %s9, 4
    %s16 = sphi 0, %s28
    %s17 = sphi 0, %s24
    %s18 = sphi 0, %s16
    %s19 = sphi 0, %s17
    %s20 = sphi 0, %s18
    %s21 = sphi 0, %s19
    %s33 = sphi 0, %s35
    %s36 = sphi 0, %s33
    %s37 = sphi 0, %s36
    %s53 = sphi 0, %s37
    %s57 = sphi 0, %s57
    %s59 = sphi 0, %s57
    %s60 = sphi 0, %s59
    %s74 = sphi 0, %s60
    %s80 = sphi 0, %s82
    %s83 = sphi 0, %s80
    %s84 = sphi 0, %s83
    %s100 = sphi 0, %s84
    %s108 = sphi 0, %s110
    %s111 = sphi 0, %s108
    %s112 = sphi 0, %s111
    %s128 = sphi 0, %s112
  $region4: #{_lambda_.8} parent=0 // loop_header_branch
    %12 = sbr.rel (%p10) target = $region8
  $region5: #{_lambda_.8} parent=0 // loop_body
    %s14 = ssub.s32 %s9, 1
    %s15 = ssub.s32 %s9, 2
    %s22 = sadd.s32 1, %s17
    %p23 = scmp.ge.s32.totalorder %s22, 1
    %s24 = scalar_select %p23, 0, %s22
    %s25 = sadd.s32 1, %s16
    %s26 = scalar_select %p23, %s25, %s16
    %p27 = scmp.ge.s32.totalorder %s26, 2
    %s28 = scalar_select %p27, 0, %s26
    %s29 = ssub.s32 %s16, %s28
    %s30 = ssub.s32 %s17, %s24
    %s31 = sor.u32 %s29, %s30
    %p32 = scmp.eq.s32.totalorder %s31, 0
    %s34 = sadd.s32 %s33, 1
    %s35 = scalar_select %p32, %s33, %s34
    %p38 = pneg %p32
    %p39 = scmp.eq.s32.totalorder %s9, 1
    %p40 = por %p38, %p39
    %p41 = scmp.ne.s32.totalorder %s33, %s36
    %p42 = scmp.eq.s32.totalorder %s9, 0
    %p43 = por %p41, %p42
    %p44 = scmp.ne.s32.totalorder %s33, %s36
    %p45 = scmp.eq.s32.totalorder %s14, 1
    %p46 = por %p44, %p45
    %p47 = scmp.ne.s32.totalorder %s36, %s37
    %p48 = scmp.eq.s32.totalorder %s14, 0
    %p49 = por %p47, %p48
    %p50 = scmp.ne.s32.totalorder %s36, %s37
    %p51 = scmp.eq.s32.totalorder %s15, 1
    %p52 = por %p50, %p51
    %p54 = scmp.ne.s32.totalorder %s37, %s53
    %p55 = scmp.eq.s32.totalorder %s15, 0
    %p56 = por %p54, %p55
    %s58 = sadd.s32 %s57, 1
    %p61 = scmp.eq.s32.totalorder %s9, 1
    %p62 = scmp.ne.s32.totalorder %s57, %s59
    %p63 = scmp.eq.s32.totalorder %s9, 0
    %p64 = por %p62, %p63
    %p65 = scmp.ne.s32.totalorder %s57, %s59
    %p66 = scmp.eq.s32.totalorder %s14, 1
    %p67 = por %p65, %p66
    %p68 = scmp.ne.s32.totalorder %s59, %s60
    %p69 = scmp.eq.s32.totalorder %s14, 0
    %p70 = por %p68, %p69
    %p71 = scmp.ne.s32.totalorder %s59, %s60
    %p72 = scmp.eq.s32.totalorder %s15, 1
    %p73 = por %p71, %p72
    %p75 = scmp.ne.s32.totalorder %s60, %s74
    %p76 = scmp.eq.s32.totalorder %s15, 0
    %p77 = por %p75, %p76
    %s78 = ssub.s32 %s17, %s24
    %p79 = scmp.eq.s32.totalorder %s78, 0
    %s81 = sadd.s32 %s80, 1
    %s82 = scalar_select %p79, %s80, %s81
    %p85 = pneg %p79
    %p86 = scmp.eq.s32.totalorder %s9, 1
    %p87 = por %p85, %p86
    %p88 = scmp.ne.s32.totalorder %s80, %s83
    %p89 = scmp.eq.s32.totalorder %s9, 0
    %p90 = por %p88, %p89
    %p91 = scmp.ne.s32.totalorder %s80, %s83
    %p92 = scmp.eq.s32.totalorder %s14, 1
    %p93 = por %p91, %p92
    %p94 = scmp.ne.s32.totalorder %s83, %s84
    %p95 = scmp.eq.s32.totalorder %s14, 0
    %p96 = por %p94, %p95
    %p97 = scmp.ne.s32.totalorder %s83, %s84
    %p98 = scmp.eq.s32.totalorder %s15, 1
    %p99 = por %p97, %p98
    %p101 = scmp.ne.s32.totalorder %s84, %s100
    %p102 = scmp.eq.s32.totalorder %s15, 0
    %p103 = por %p101, %p102
    %s104 = ssub.s32 %s16, %s28
    %s105 = ssub.s32 %s17, %s24
    %s106 = sor.u32 %s104, %s105
    %p107 = scmp.eq.s32.totalorder %s106, 0
    %s109 = sadd.s32 %s108, 1
    %s110 = scalar_select %p107, %s108, %s109
    %p113 = pneg %p107
    %p114 = scmp.eq.s32.totalorder %s9, 1
    %p115 = por %p113, %p114
    %p116 = scmp.ne.s32.totalorder %s108, %s111
    %p117 = scmp.eq.s32.totalorder %s9, 0
    %p118 = por %p116, %p117
    %p119 = scmp.ne.s32.totalorder %s108, %s111
    %p120 = scmp.eq.s32.totalorder %s14, 1
    %p121 = por %p119, %p120
    %p122 = scmp.ne.s32.totalorder %s111, %s112
    %p123 = scmp.eq.s32.totalorder %s14, 0
    %p124 = por %p122, %p123
    %p125 = scmp.ne.s32.totalorder %s111, %s112
    %p126 = scmp.eq.s32.totalorder %s15, 1
    %p127 = por %p125, %p126
    %p129 = scmp.ne.s32.totalorder %s112, %s128
    %p130 = scmp.eq.s32.totalorder %s15, 0
    %p131 = por %p129, %p130
    %p132 = scmp.le.s32.totalorder 1, %s9
    %p133 = scmp.lt.s32.totalorder %s9, 3
    %p134 = pnand %p132, %p133
    %p135 = pneg %p134
    // Predicated region
    $region9: #{_lambda_.8} parent=5 // pred_check
      _
    $region10: #{_lambda_.8} parent=5 // pred_check_branch
      %137 = sbr.rel (%p134) target = $region12
    $region11: #{_lambda_.8} parent=5 // pred_region
      %s138 = ssub.s32 %s9, 1
      // Predicated region
      $region13: #{_lambda_.8} parent=11 // pred_check
        %p139 = pneg %p70
      $region14: #{_lambda_.8} parent=11 // pred_check_branch
        %141 = sbr.rel (%p139) target = $region16
      $region15: #{_lambda_.8} parent=11 // pred_region
        _
      $region16: #{_lambda_.8} parent=11 // pred_fallthru
        _
      // Predicated region
      $region17: #{_lambda_.8} parent=11 // pred_check
        %p142 = pneg %p96
      $region18: #{_lambda_.8} parent=11 // pred_check_branch
        %144 = sbr.rel (%p142) target = $region20
      $region19: #{_lambda_.8} parent=11 // pred_region
        %s145 = smul.u32 2, %s19
        %p146 = scmp.lt.s32.totalorder %s145, 1
        %s147 = scalar_select %p146, %s145, 1
        %s148 = smul.addr %s147, 8
        %s149 = scalar_lea.vmem %s2, %s148
        %s150 = smul.u32 2, %s19
      $region20: #{_lambda_.8} parent=11 // pred_fallthru
        _
    $region12: #{_lambda_.8} parent=5 // pred_fallthru
      _
    %p151 = scmp.lt.s32.totalorder %s9, 2
    // Predicated region
    $region21: #{_lambda_.8} parent=5 // pred_check
      %p152 = pneg %p151
    $region22: #{_lambda_.8} parent=5 // pred_check_branch
      %154 = sbr.rel (%p152) target = $region24
    $region23: #{_lambda_.8} parent=5 // pred_region
      // Predicated region
      $region25: #{_lambda_.8} parent=23 // pred_check
        %p155 = pneg %p43
      $region26: #{_lambda_.8} parent=23 // pred_check_branch
        %157 = sbr.rel (%p155) target = $region28
      $region27: #{_lambda_.8} parent=23 // pred_region
        %s158 = smul.u32 2, %s17
        %p159 = scmp.lt.s32.totalorder %s16, 1
        %s160 = scalar_select %p159, %s16, 1
        %p161 = scmp.lt.s32.totalorder %s158, 1
        %s162 = scalar_select %p161, %s158, 1
        %s163 = smul.addr %s160, 2
        %s164 = sadd.s32 %s162, %s163
        %s165 = smul.addr %s164, 4
        %s166 = scalar_lea.vmem %s0, %s165
        %s167 = smul.u32 2, %s17
      $region28: #{_lambda_.8} parent=23 // pred_fallthru
        _
    $region24: #{_lambda_.8} parent=5 // pred_fallthru
      _
    %p168 = scmp.le.s32.totalorder 1, %s9
    %p169 = scmp.lt.s32.totalorder %s9, 3
    %p170 = pnand %p168, %p169
    %p171 = pneg %p170
    // Predicated region
    $region29: #{_lambda_.8} parent=5 // pred_check
      _
    $region30: #{_lambda_.8} parent=5 // pred_check_branch
      %173 = sbr.rel (%p170) target = $region32
    $region31: #{_lambda_.8} parent=5 // pred_region
      %s174 = ssub.s32 %s9, 1
      %s175 = smul.u32 2, %s19
      %p176 = scmp.lt.s32.totalorder %s18, 1
      %s177 = scalar_select %p176, %s18, 1
      %p178 = scmp.lt.s32.totalorder %s175, 1
      %s179 = scalar_select %p178, %s175, 1
      %s180 = smul.addr %s177, 2
      %s181 = sadd.s32 %s179, %s180
      %s182 = smul.addr %s181, 4
      %s183 = scalar_lea.vmem %s0, %s182
      %p184 = pneg %p49
      %p185 = pneg %p46
      %p186 = pneg %p70
      %p187 = pneg %p67
      %s188 = smul.u32 2, %s19
      %p189 = scmp.lt.s32.totalorder %s188, 1
      %s190 = scalar_select %p189, %s188, 1
      %s191 = smul.addr %s190, 8
      %s192 = scalar_lea.vmem %s2, %s191
      %p193 = pneg %p96
      %p194 = pneg %p93
      %p195 = pneg %p124
      %p196 = pneg %p121
      %s197 = smul.u32 2, %s19
      %p198 = scmp.lt.s32.totalorder %s18, 1
      %s199 = scalar_select %p198, %s18, 1
      %p200 = scmp.lt.s32.totalorder %s197, 1
      %s201 = scalar_select %p200, %s197, 1
      %s202 = smul.addr %s199, 2
      %s203 = sadd.s32 %s201, %s202
      %s204 = smul.addr %s203, 4
      %s205 = scalar_lea.vmem %s3, %s204
      %s206 = smul.u32 2, %s19
      %p207 = scmp.lt.s32.totalorder %s18, 1
      %s208 = scalar_select %p207, %s18, 1
      %p209 = scmp.lt.s32.totalorder %s206, 1
      %s210 = scalar_select %p209, %s206, 1
      %s211 = smul.addr %s208, 2
      %s212 = sadd.s32 %s210, %s211
      %s213 = smul.addr %s212, 4
      %s214 = scalar_lea.vmem %s0, %s213
      %s215 = smul.u32 2, %s19
      %s216 = smul.u32 2, %s19
      %p217 = scmp.lt.s32.totalorder %s216, 1
      %s218 = scalar_select %p217, %s216, 1
      %s219 = smul.addr %s218, 8
      %s220 = scalar_lea.vmem %s2, %s219
      %s221 = smul.u32 2, %s19
      %s222 = smul.u32 2, %s19
      %p223 = scmp.lt.s32.totalorder %s18, 1
      %s224 = scalar_select %p223, %s18, 1
      %p225 = scmp.lt.s32.totalorder %s222, 1
      %s226 = scalar_select %p225, %s222, 1
      %s227 = smul.addr %s224, 2
      %s228 = sadd.s32 %s226, %s227
      %s229 = smul.addr %s228, 4
      %s230 = scalar_lea.vmem %s3, %s229
      %s231 = smul.u32 2, %s19
      %v233 = vld [vmem:[%s214] sm:$0xf]
      %v234 = vld [vmem:[%s214 + $0x4] sm:$0xf]
      %v235 = vld [vmem:[%s1] sm:$0xf]
      %v236 = vld [vmem:[%s1 + $0x4] sm:$0xf]
      %v237 = vld [vmem:[%s1 + $0x8] sm:$0xf]
      %v238 = vld [vmem:[%s1 + $0xc] sm:$0xf]
      %v239 = vld [vmem:[%s220] sm:$0xff]
      %v240 = vld [vmem:[%s220 + $0x8] sm:$0xff]
      %v243 = vunpack.c.l.b16 %v233
      %v244 = vunpack.c.l.b16 %v234
      %v245 = vpack.c.b16 %v244, %v243
      %v250 = vunpack.c.l.b16 %v235
      %v251 = vunpack.c.l.b16 %v236
      %v252 = vunpack.c.l.b16 %v237
      %v253 = vunpack.c.l.b16 %v238
      %v254 = vpack.c.b16 %v251, %v250
      %v255 = vpack.c.b16 %v253, %v252
      %vm258 = vcmask 261120
      %v260 = vsel %vm258, %v245, 0
      %262 = vmatprep.subr.bf16.mxu0 0
      %263 = vmatpush1.bf16.msra.mxu0 %v254
      %264 = vmatprep.subr.bf16.mxu0 0
      %265 = vmatpush1.bf16.msra.mxu0 %v255
      %266 = vmatprep.subr.bf16.mxu0 0
      %267 = vmatpush1.bf16.msra.mxu0 0
      %268 = vmatprep.subr.bf16.mxu0 0
      %269 = vmatpush1.bf16.msra.mxu0 0
      %270 = vmatprep.subr.bf16.mxu0 0
      %271 = vmatpush1.bf16.msra.mxu0 0
      %272 = vmatprep.subr.bf16.mxu0 0
      %273 = vmatpush1.bf16.msra.mxu0 0
      %274 = vmatprep.subr.bf16.mxu0 0
      %275 = vmatpush1.bf16.msra.mxu0 0
      %276 = vmatprep.subr.bf16.mxu0 0
      %277 = vmatpush1.bf16.msra.mxu0 0
      %278 = vmatprep.subr.bf16.mxu0 0
      %279 = vmatpush1.bf16.msra.mxu0 0
      %280 = vmatprep.subr.bf16.mxu0 0
      %281 = vmatpush1.bf16.msra.mxu0 0
      %282 = vmatprep.subr.bf16.mxu0 0
      %283 = vmatpush1.bf16.msra.mxu0 0
      %284 = vmatprep.subr.bf16.mxu0 0
      %285 = vmatpush1.bf16.msra.mxu0 0
      %286 = vmatprep.subr.bf16.mxu0 0
      %287 = vmatpush1.bf16.msra.mxu0 0
      %288 = vmatprep.subr.bf16.mxu0 0
      %289 = vmatpush1.bf16.msra.mxu0 0
      %290 = vmatprep.subr.bf16.mxu0 0
      %291 = vmatpush1.bf16.msra.mxu0 0
      %292 = vmatprep.subr.bf16.mxu0 0
      %293 = vmatpush1.bf16.msra.mxu0 0
      %294 = vmatprep.mubr.bf16.mxu0 0
      %295 = vmatmul.mubr.bf16.gmra.mrb[0].mxu0 %v260
      %v296 = vpop.f32.mrb[0].mxu0
      %v297 = vadd.f32 %v239, %v296
      %v298 = vpop.f32.mrb[0].mxu0
      %v299 = vpop.f32.mrb[0].mxu0
      %v300 = vadd.f32 %v240, %v299
      %v301 = vpop.f32.mrb[0].mxu0
      %302 = vdwg.mxu0
      %v303 = vpack.c.bf16 %v300, %v297
      %v305 = vunpack.c.l.b16 %v303
      %v306 = vunpack.c.h.b16 %v303
      %v307 = vpack.c.b16 %v305, %v305
      %v308 = vpack.c.b16 %v306, %v306
      %vm311 = vcmask 257024
      %312 = vst.msk [vmem:[%s230] sm:$0xf] %vm311, %v307
      %313 = vst.msk [vmem:[%s230 + $0x4] sm:$0xf] %vm311, %v308
      %s314 = smul.u32 2, %s19
      %p315 = scmp.lt.s32.totalorder %s18, 1
      %s316 = scalar_select %p315, %s18, 1
      %p317 = scmp.lt.s32.totalorder %s314, 1
      %s318 = scalar_select %p317, %s314, 1
      %s319 = smul.addr %s316, 2
      %s320 = sadd.s32 %s318, %s319
      %s321 = smul.addr %s320, 4
      %s322 = scalar_lea.vmem %s3, %s321
      // Predicated region
      $region33: #{_lambda_.8} parent=31 // pred_check
        %p323 = pneg %p121
      $region34: #{_lambda_.8} parent=31 // pred_check_branch
        %325 = sbr.rel (%p323) target = $region36
      $region35: #{_lambda_.8} parent=31 // pred_region
        %s326 = smul.u32 2, %s19
      $region36: #{_lambda_.8} parent=31 // pred_fallthru
        _
    $region32: #{_lambda_.8} parent=5 // pred_fallthru
      _
    %p327 = scmp.le.s32.totalorder 2, %s9
    // Predicated region
    $region37: #{_lambda_.8} parent=5 // pred_check
      %p328 = pneg %p327
    $region38: #{_lambda_.8} parent=5 // pred_check_branch
      %330 = sbr.rel (%p328) target = $region40
    $region39: #{_lambda_.8} parent=5 // pred_region
      %s331 = ssub.s32 %s9, 2
      // Predicated region
      $region41: #{_lambda_.8} parent=39 // pred_check
        %p332 = pneg %p127
      $region42: #{_lambda_.8} parent=39 // pred_check_branch
        %334 = sbr.rel (%p332) target = $region44
      $region43: #{_lambda_.8} parent=39 // pred_region
        %s335 = smul.u32 2, %s21
        %p336 = scmp.lt.s32.totalorder %s20, 1
        %s337 = scalar_select %p336, %s20, 1
        %p338 = scmp.lt.s32.totalorder %s335, 1
        %s339 = scalar_select %p338, %s335, 1
        %s340 = smul.addr %s337, 2
        %s341 = sadd.s32 %s339, %s340
        %s342 = smul.addr %s341, 4
        %s343 = scalar_lea.vmem %s3, %s342
      $region44: #{_lambda_.8} parent=39 // pred_fallthru
        _
    $region40: #{_lambda_.8} parent=5 // pred_fallthru
      _
  $region6: #{_lambda_.8} parent=0 // loop_footer
    %s13 = sadd.s32 1, %s9
  $region7: #{_lambda_.8} parent=0 // loop_footer_branch
    %8 = sbr.rel target = $region3
  $region8: #{_lambda_.8} parent=0 // loop_exit
    _

// kernel: _lambda_.11
$region0: #{_lambda_.11}
  #allocation0 [shape = 'u32[]', space=smem, size = 0x4, offset = 0x4, fixed_abs, tag = 'smem constant byte address 0x4 - core index']
  #allocation1 [shape = 'u32[144,128]{1,0:T(1,128)}', space=vmem, size = 0x12000, scoped, tag = 'internal scratch']
  %s0 = inlined_call_operand.vmem [shape: bf16[24,32], index: 0, kind: input, shape index: {}]
  %s1 = inlined_call_operand.vmem [shape: f32[1,32], index: 1, kind: input, shape index: {}]
  %s2 = inlined_call_operand.vmem [shape: f32[1,32], index: 2, kind: input, shape index: {}]
  %s3 = inlined_call_operand.vmem [shape: bf16[32,32], index: 3, kind: input, shape index: {}]
  %s4 = inlined_call_operand.vmem [shape: f32[1,32], index: 4, kind: input, shape index: {}]
  %s5 = inlined_call_operand.vmem [shape: bf16[24,32], index: 5, kind: output, shape index: {}]
  %s6 = sld [smem:[#allocation0]]
  $region30: #{_lambda_.11} parent=0
    _
  %s8 = ssub.s32 1, %s6
  %s9 = scalar_select 0, %s8, %s6
  // Predicated region
  $region2: #{_lambda_.11} parent=0 // pred_check
    _
  $region3: #{_lambda_.11} parent=0 // pred_check_branch
    %11 = sbr.rel (0) target = $region5
  $region4: #{_lambda_.11} parent=0 // pred_region
    _
  $region5: #{_lambda_.11} parent=0 // pred_fallthru
    _
  // Predicated region
  $region6: #{_lambda_.11} parent=0 // pred_check
    _
  $region7: #{_lambda_.11} parent=0 // pred_check_branch
    %13 = sbr.rel (0) target = $region9
  $region8: #{_lambda_.11} parent=0 // pred_region
    _
  $region9: #{_lambda_.11} parent=0 // pred_fallthru
    _
  // Predicated region
  $region10: #{_lambda_.11} parent=0 // pred_check
    _
  $region11: #{_lambda_.11} parent=0 // pred_check_branch
    %15 = sbr.rel (0) target = $region13
  $region12: #{_lambda_.11} parent=0 // pred_region
    _
  $region13: #{_lambda_.11} parent=0 // pred_fallthru
    _
  // Predicated region
  $region14: #{_lambda_.11} parent=0 // pred_check
    _
  $region15: #{_lambda_.11} parent=0 // pred_check_branch
    %17 = sbr.rel (0) target = $region17
  $region16: #{_lambda_.11} parent=0 // pred_region
    _
  $region17: #{_lambda_.11} parent=0 // pred_fallthru
    _
  // Predicated region
  $region18: #{_lambda_.11} parent=0 // pred_check
    _
  $region19: #{_lambda_.11} parent=0 // pred_check_branch
    %19 = sbr.rel (0) target = $region21
  $region20: #{_lambda_.11} parent=0 // pred_region
    _
  $region21: #{_lambda_.11} parent=0 // pred_fallthru
    _
  %v21 = vld [vmem:[%s0] sm:$0xf]
  %v22 = vld [vmem:[%s0 + $0x4] sm:$0xf]
  %v23 = vld [vmem:[%s0 + $0x8] sm:$0xf]
  %v24 = vunpack.c.l.bf16 %v21
  %v25 = vunpack.c.l.bf16 %v22
  %v26 = vunpack.c.l.bf16 %v23
  %v27 = vld [vmem:[%s1] sm:$0x1]
  %v28 = vld [vmem:[%s2] sm:$0x1]
  %vm29 = vcmask 261120
  %v30 = vsel %vm29, %v24, 0.0
  %31 = vadd.xlane.f32.xlu0 %v30
  %v32 = vpop.xlane.xlu0 %31
  %v33 = vsel %vm29, %v25, 0.0
  %34 = vadd.xlane.f32.xlu0 %v33
  %v35 = vpop.xlane.xlu0 %34
  %v36 = vsel %vm29, %v26, 0.0
  %37 = vadd.xlane.f32.xlu0 %v36
  %v38 = vpop.xlane.xlu0 %37
  %v39 = vrcp.pop 32.0
  %v40 = vmul.f32 %v32, %v39
  %v41 = vmul.f32 %v35, %v39
  %v42 = vmul.f32 %v38, %v39
  %v43 = vsub.f32 %v24, %v40
  %v44 = vsub.f32 %v25, %v41
  %v45 = vsub.f32 %v26, %v42
  %v46 = vmul.f32 %v43, %v43
  %v47 = vmul.f32 %v44, %v44
  %v48 = vmul.f32 %v45, %v45
  %v49 = vsel %vm29, %v46, 0.0
  %50 = vadd.xlane.f32.xlu0 %v49
  %v51 = vpop.xlane.xlu0 %50
  %v52 = vsel %vm29, %v47, 0.0
  %53 = vadd.xlane.f32.xlu0 %v52
  %v54 = vpop.xlane.xlu0 %53
  %v55 = vsel %vm29, %v48, 0.0
  %56 = vadd.xlane.f32.xlu0 %v55
  %v57 = vpop.xlane.xlu0 %56
  %v58 = vmul.f32 %v51, %v39
  %v59 = vmul.f32 %v54, %v39
  %v60 = vmul.f32 %v57, %v39
  %v61 = vadd.f32 %v58, 1e-06
  %v62 = vadd.f32 %v59, 1e-06
  %v63 = vadd.f32 %v60, 1e-06
  %v64 = vrsqrt.pop %v61
  %v65 = vrsqrt.pop %v62
  %v66 = vrsqrt.pop %v63
  %v67 = vmul.f32 %v43, %v64
  %v68 = vmul.f32 %v44, %v65
  %v69 = vmul.f32 %v45, %v66
  %v71 = vlaneseq
  %v72 = vshrl.u32 %v71, 7
  %v73 = vsub.s32 0, %v72
  %v74 = vrot.slane %v27, %v73
  %v76 = vmul.f32 %v67, %v74
  %v77 = vmul.f32 %v68, %v74
  %v78 = vmul.f32 %v69, %v74
  %v80 = vlaneseq
  %v81 = vshrl.u32 %v80, 7
  %v82 = vsub.s32 0, %v81
  %v83 = vrot.slane %v28, %v82
  %v85 = vadd.f32 %v76, %v83
  %v86 = vadd.f32 %v77, %v83
  %v87 = vadd.f32 %v78, %v83
  %v88 = vpack.c.bf16 %v86, %v85
  %v89 = vpack.c.bf16 %v87, %v87
  %v90 = vld [vmem:[%s3] sm:$0xf]
  %v91 = vld [vmem:[%s3 + $0x4] sm:$0xf]
  %v92 = vld [vmem:[%s3 + $0x8] sm:$0xf]
  %v93 = vld [vmem:[%s3 + $0xc] sm:$0xf]
  %v94 = vld [vmem:[%s4] sm:$0x1]
  %v96 = vlaneseq
  %v97 = vshrl.u32 %v96, 7
  %v98 = vsub.s32 0, %v97
  %v99 = vrot.slane %v94, %v98
  %v105 = vunpack.c.l.b16 %v90
  %v106 = vunpack.c.l.b16 %v91
  %v107 = vunpack.c.l.b16 %v92
  %v108 = vunpack.c.l.b16 %v93
  %v109 = vpack.c.b16 %v106, %v105
  %v110 = vpack.c.b16 %v108, %v107
  %v114 = vsel %vm29, %v88, 0
  %v117 = vsel %vm29, %v89, 0
  %119 = vmatprep.subr.bf16.mxu0 0
  %120 = vmatpush1.bf16.msra.mxu0 %v109
  %121 = vmatprep.subr.bf16.mxu0 0
  %122 = vmatpush1.bf16.msra.mxu0 %v110
  %123 = vmatprep.subr.bf16.mxu0 0
  %124 = vmatpush1.bf16.msra.mxu0 0
  %125 = vmatprep.subr.bf16.mxu0 0
  %126 = vmatpush1.bf16.msra.mxu0 0
  %127 = vmatprep.subr.bf16.mxu0 0
  %128 = vmatpush1.bf16.msra.mxu0 0
  %129 = vmatprep.subr.bf16.mxu0 0
  %130 = vmatpush1.bf16.msra.mxu0 0
  %131 = vmatprep.subr.bf16.mxu0 0
  %132 = vmatpush1.bf16.msra.mxu0 0
  %133 = vmatprep.subr.bf16.mxu0 0
  %134 = vmatpush1.bf16.msra.mxu0 0
  %135 = vmatprep.subr.bf16.mxu0 0
  %136 = vmatpush1.bf16.msra.mxu0 0
  %137 = vmatprep.subr.bf16.mxu0 0
  %138 = vmatpush1.bf16.msra.mxu0 0
  %139 = vmatprep.subr.bf16.mxu0 0
  %140 = vmatpush1.bf16.msra.mxu0 0
  %141 = vmatprep.subr.bf16.mxu0 0
  %142 = vmatpush1.bf16.msra.mxu0 0
  %143 = vmatprep.subr.bf16.mxu0 0
  %144 = vmatpush1.bf16.msra.mxu0 0
  %145 = vmatprep.subr.bf16.mxu0 0
  %146 = vmatpush1.bf16.msra.mxu0 0
  %147 = vmatprep.subr.bf16.mxu0 0
  %148 = vmatpush1.bf16.msra.mxu0 0
  %149 = vmatprep.subr.bf16.mxu0 0
  %150 = vmatpush1.bf16.msra.mxu0 0
  %151 = vmatprep.mubr.bf16.mxu0 0
  %152 = vmatmul.mubr.bf16.gmra.mrb[0].mxu0 %v114
  %v153 = vpop.f32.mrb[0].mxu0
  %v154 = vadd.f32 %v99, %v153
  %v155 = vpop.f32.mrb[0].mxu0
  %v156 = vpop.f32.mrb[0].mxu0
  %v157 = vadd.f32 %v99, %v156
  %v158 = vpop.f32.mrb[0].mxu0
  %159 = vmatprep.mubr.bf16.mxu0 0
  %160 = vmatmul.mubr.bf16.gmra.mrb[0].mxu0 %v117
  %v161 = vpop.f32.mrb[0].mxu0
  %v162 = vadd.f32 %v99, %v161
  %v163 = vpop.f32.mrb[0].mxu0
  %v164 = vpop.f32.mrb[0].mxu0
  %v165 = vpop.f32.mrb[0].mxu0
  %166 = vdwg.mxu0
  %v167 = vpack.c.bf16 %v157, %v154
  %v168 = vpack.c.bf16 %v162, %v162
  %v171 = vunpack.c.l.b16 %v167
  %v172 = vunpack.c.h.b16 %v167
  %v173 = vunpack.c.l.b16 %v168
  %v174 = vpack.c.b16 %v171, %v171
  %v175 = vpack.c.b16 %v172, %v172
  %v176 = vpack.c.b16 %v173, %v173
  %vm180 = vcmask 257024
  %181 = vst.msk [vmem:[%s5] sm:$0xf] %vm180, %v174
  %182 = vst.msk [vmem:[%s5 + $0x4] sm:$0xf] %vm180, %v175
  %183 = vst.msk [vmem:[%s5 + $0x8] sm:$0xf] %vm180, %v176
  // Predicated region
  $region22: #{_lambda_.11} parent=0 // pred_check
    _
  $region23: #{_lambda_.11} parent=0 // pred_check_branch
    %185 = sbr.rel (0) target = $region25
  $region24: #{_lambda_.11} parent=0 // pred_region
    _
  $region25: #{_lambda_.11} parent=0 // pred_fallthru
    _
  // Predicated region
  $region26: #{_lambda_.11} parent=0 // pred_check
    _
  $region27: #{_lambda_.11} parent=0 // pred_check_branch
    %187 = sbr.rel (0) target = $region29
  $region28: #{_lambda_.11} parent=0 // pred_region
    _
  $region29: #{_lambda_.11} parent=0 // pred_fallthru
    _

// kernel: _lambda_.9
$region0: #{_lambda_.9}
  #allocation0 [shape = 'u32[]', space=smem, size = 0x4, offset = 0x4, fixed_abs, tag = 'smem constant byte address 0x4 - core index']
  #allocation1 [shape = 'u32[144,128]{1,0:T(1,128)}', space=vmem, size = 0x12000, scoped, tag = 'internal scratch']
  %s0 = inlined_call_operand.hbm [shape: bf16[2,16,32], index: 0, kind: input, shape index: {}]
  %s1 = inlined_call_operand.hbm [shape: bf16[32,96], index: 1, kind: input, shape index: {}]
  %s2 = inlined_call_operand.hbm [shape: f32[1,96], index: 2, kind: input, shape index: {}]
  %s3 = inlined_call_operand.hbm [shape: bf16[4,8,32], index: 3, kind: input, shape index: {}]
  %s4 = inlined_call_operand.hbm [shape: f32[1,32], index: 4, kind: input, shape index: {}]
  %s5 = inlined_call_operand.hbm [shape: f32[1,32], index: 5, kind: input, shape index: {}]
  %s6 = inlined_call_operand.hbm [shape: f32[1,32], index: 6, kind: input, shape index: {}]
  %s7 = inlined_call_operand.hbm [shape: f32[1,32], index: 7, kind: input, shape index: {}]
  %s8 = inlined_call_operand.hbm [shape: f32[1,32], index: 8, kind: input, shape index: {}]
  %s9 = inlined_call_operand.hbm [shape: bf16[32,64], index: 9, kind: input, shape index: {}]
  %s10 = inlined_call_operand.hbm [shape: f32[1,64], index: 10, kind: input, shape index: {}]
  %s11 = inlined_call_operand.hbm [shape: bf16[64,32], index: 11, kind: input, shape index: {}]
  %s12 = inlined_call_operand.hbm [shape: f32[1,32], index: 12, kind: input, shape index: {}]
  %s13 = inlined_call_operand.hbm [shape: bf16[2,16,32], index: 13, kind: output, shape index: {}]
  %s14 = sld [smem:[#allocation0]]
  $region137: #{_lambda_.9} parent=0
    _
  %s16 = ssub.s32 1, %s14
  %s17 = scalar_select 0, %s16, %s14
  $region1: #{_lambda_.9} parent=0
    #allocation2 [shape = 'u8[8192]{0}', space=vmem, size = 0x2000, scoped, tag = 'input window, operand 0']
    #allocation3 [shape = 's32[2]{0}', space=sflag, size = 0x8, scoped, tag = 'scoped memory for _lambda_.9']
    #allocation4 [shape = 's32[2]{0}', space=sflag, size = 0x8, scoped, tag = 'scoped memory for _lambda_.9']
    #allocation5 [shape = 'u8[8192]{0}', space=vmem, size = 0x2000, scoped, tag = 'input window, operand 1, single buffered']
    #allocation6 [shape = 's32[1]{0}', space=sflag, size = 0x4, scoped, tag = 'scoped memory for _lambda_.9']
    #allocation7 [shape = 'u8[512]{0}', space=vmem, size = 0x400, scoped, tag = 'input window, operand 2, single buffered']
    #allocation8 [shape = 'u8[8192]{0}', space=vmem, size = 0x2000, scoped, tag = 'input window, operand 3, single buffered']
    #allocation9 [shape = 's32[1]{0}', space=sflag, size = 0x4, scoped, tag = 'scoped memory for _lambda_.9']
    #allocation10 [shape = 'u8[512]{0}', space=vmem, size = 0x400, scoped, tag = 'input window, operand 4, single buffered']
    #allocation11 [shape = 'u8[512]{0}', space=vmem, size = 0x400, scoped, tag = 'input window, operand 5, single buffered']
    #allocation12 [shape = 's32[1]{0}', space=sflag, size = 0x4, scoped, tag = 'scoped memory for _lambda_.9']
    #allocation13 [shape = 'u8[512]{0}', space=vmem, size = 0x400, scoped, tag = 'input window, operand 6, single buffered']
    #allocation14 [shape = 'u8[512]{0}', space=vmem, size = 0x400, scoped, tag = 'input window, operand 7, single buffered']
    #allocation15 [shape = 's32[1]{0}', space=sflag, size = 0x4, scoped, tag = 'scoped memory for _lambda_.9']
    #allocation16 [shape = 'u8[512]{0}', space=vmem, size = 0x400, scoped, tag = 'input window, operand 8, single buffered']
    #allocation17 [shape = 'u8[8192]{0}', space=vmem, size = 0x2000, scoped, tag = 'input window, operand 9, single buffered']
    #allocation18 [shape = 's32[1]{0}', space=sflag, size = 0x4, scoped, tag = 'scoped memory for _lambda_.9']
    #allocation19 [shape = 'u8[512]{0}', space=vmem, size = 0x400, scoped, tag = 'input window, operand 10, single buffered']
    #allocation20 [shape = 'u8[16384]{0}', space=vmem, size = 0x4000, scoped, tag = 'input window, operand 11, single buffered']
    #allocation21 [shape = 's32[1]{0}', space=sflag, size = 0x4, scoped, tag = 'scoped memory for _lambda_.9']
    #allocation22 [shape = 'u8[512]{0}', space=vmem, size = 0x400, scoped, tag = 'input window, operand 12, single buffered']
    #allocation23 [shape = 'u8[8192]{0}', space=vmem, size = 0x2000, scoped, tag = 'output window, operand 0']
    %18 = vsyncpa [#allocation3], 0
    %s19 = scalar_lea.sflag [#allocation3], 1
    %20 = vsyncpa %s19, 0
    %21 = vsyncpa [#allocation6], 0
    %22 = vsyncpa [#allocation9], 0
    %23 = vsyncpa [#allocation12], 0
    %24 = vsyncpa [#allocation15], 0
    %25 = vsyncpa [#allocation18], 0
    %26 = vsyncpa [#allocation21], 0
    %27 = vsyncpa [#allocation4], 0
    %s28 = scalar_lea.sflag [#allocation4], 1
    %29 = vsyncpa %s28, 0
    loop: start=0, step=1, limit=4
    $region2: #{_lambda_.9} parent=1 // loop_pre_header
      _
    $region3: #{_lambda_.9} parent=1 // loop_header
      %s31 = sphi 0, %s35
      %p32 = scmp.ge.s32.totalorder %s31, 4
      %s41 = sphi 0, %s43
      %s44 = sphi 0, %s41
      %s45 = sphi 0, %s44
      %s61 = sphi 0, %s45
      %s65 = sphi 0, %s65
      %s67 = sphi 0, %s65
      %s68 = sphi 0, %s67
      %s82 = sphi 0, %s68
      %s86 = sphi 0, %s86
      %s88 = sphi 0, %s86
      %s89 = sphi 0, %s88
      %s103 = sphi 0, %s89
      %s107 = sphi 0, %s107
      %s109 = sphi 0, %s107
      %s110 = sphi 0, %s109
      %s124 = sphi 0, %s110
      %s128 = sphi 0, %s128
      %s130 = sphi 0, %s128
      %s131 = sphi 0, %s130
      %s145 = sphi 0, %s131
      %s149 = sphi 0, %s149
      %s151 = sphi 0, %s149
      %s152 = sphi 0, %s151
      %s166 = sphi 0, %s152
      %s170 = sphi 0, %s170
      %s172 = sphi 0, %s170
      %s173 = sphi 0, %s172
      %s187 = sphi 0, %s173
      %s191 = sphi 0, %s191
      %s193 = sphi 0, %s191
      %s194 = sphi 0, %s193
      %s208 = sphi 0, %s194
      %s212 = sphi 0, %s212
      %s214 = sphi 0, %s212
      %s215 = sphi 0, %s214
      %s229 = sphi 0, %s215
      %s233 = sphi 0, %s233
      %s235 = sphi 0, %s233
      %s236 = sphi 0, %s235
      %s250 = sphi 0, %s236
      %s254 = sphi 0, %s254
      %s256 = sphi 0, %s254
      %s257 = sphi 0, %s256
      %s271 = sphi 0, %s257
      %s275 = sphi 0, %s275
      %s277 = sphi 0, %s275
      %s278 = sphi 0, %s277
      %s292 = sphi 0, %s278
      %s296 = sphi 0, %s296
      %s298 = sphi 0, %s296
      %s299 = sphi 0, %s298
      %s313 = sphi 0, %s299
      %s319 = sphi 0, %s321
      %s322 = sphi 0, %s319
      %s323 = sphi 0, %s322
      %s339 = sphi 0, %s323
    $region4: #{_lambda_.9} parent=1 // loop_header_branch
      %34 = sbr.rel (%p32) target = $region8
    $region5: #{_lambda_.9} parent=1 // loop_body
      %s36 = ssub.s32 %s31, 1
      %s37 = ssub.s32 %s31, 2
      %s38 = sadd.s32 %s31, 1
      %s39 = ssub.s32 %s31, %s38
      %p40 = scmp.eq.s32.totalorder %s39, 0
      %s42 = sadd.s32 %s41, 1
      %s43 = scalar_select %p40, %s41, %s42
      %p46 = pneg %p40
      %p47 = scmp.eq.s32.totalorder %s31, 1
      %p48 = por %p46, %p47
      %p49 = scmp.ne.s32.totalorder %s41, %s44
      %p50 = scmp.eq.s32.totalorder %s31, 0
      %p51 = por %p49, %p50
      %p52 = scmp.ne.s32.totalorder %s41, %s44
      %p53 = scmp.eq.s32.totalorder %s36, 1
      %p54 = por %p52, %p53
      %p55 = scmp.ne.s32.totalorder %s44, %s45
      %p56 = scmp.eq.s32.totalorder %s36, 0
      %p57 = por %p55, %p56
      %p58 = scmp.ne.s32.totalorder %s44, %s45
      %p59 = scmp.eq.s32.totalorder %s37, 1
      %p60 = por %p58, %p59
      %p62 = scmp.ne.s32.totalorder %s45, %s61
      %p63 = scmp.eq.s32.totalorder %s37, 0
      %p64 = por %p62, %p63
      %s66 = sadd.s32 %s65, 1
      %p69 = scmp.eq.s32.totalorder %s31, 1
      %p70 = scmp.ne.s32.totalorder %s65, %s67
      %p71 = scmp.eq.s32.totalorder %s31, 0
      %p72 = por %p70, %p71
      %p73 = scmp.ne.s32.totalorder %s65, %s67
      %p74 = scmp.eq.s32.totalorder %s36, 1
      %p75 = por %p73, %p74
      %p76 = scmp.ne.s32.totalorder %s67, %s68
      %p77 = scmp.eq.s32.totalorder %s36, 0
      %p78 = por %p76, %p77
      %p79 = scmp.ne.s32.totalorder %s67, %s68
      %p80 = scmp.eq.s32.totalorder %s37, 1
      %p81 = por %p79, %p80
      %p83 = scmp.ne.s32.totalorder %s68, %s82
      %p84 = scmp.eq.s32.totalorder %s37, 0
      %p85 = por %p83, %p84
      %s87 = sadd.s32 %s86, 1
      %p90 = scmp.eq.s32.totalorder %s31, 1
      %p91 = scmp.ne.s32.totalorder %s86, %s88
      %p92 = scmp.eq.s32.totalorder %s31, 0
      %p93 = por %p91, %p92
      %p94 = scmp.ne.s32.totalorder %s86, %s88
      %p95 = scmp.eq.s32.totalorder %s36, 1
      %p96 = por %p94, %p95
      %p97 = scmp.ne.s32.totalorder %s88, %s89
      %p98 = scmp.eq.s32.totalorder %s36, 0
      %p99 = por %p97, %p98
      %p100 = scmp.ne.s32.totalorder %s88, %s89
      %p101 = scmp.eq.s32.totalorder %s37, 1
      %p102 = por %p100, %p101
      %p104 = scmp.ne.s32.totalorder %s89, %s103
      %p105 = scmp.eq.s32.totalorder %s37, 0
      %p106 = por %p104, %p105
      %s108 = sadd.s32 %s107, 1
      %p111 = scmp.eq.s32.totalorder %s31, 1
      %p112 = scmp.ne.s32.totalorder %s107, %s109
      %p113 = scmp.eq.s32.totalorder %s31, 0
      %p114 = por %p112, %p113
      %p115 = scmp.ne.s32.totalorder %s107, %s109
      %p116 = scmp.eq.s32.totalorder %s36, 1
      %p117 = por %p115, %p116
      %p118 = scmp.ne.s32.totalorder %s109, %s110
      %p119 = scmp.eq.s32.totalorder %s36, 0
      %p120 = por %p118, %p119
      %p121 = scmp.ne.s32.totalorder %s109, %s110
      %p122 = scmp.eq.s32.totalorder %s37, 1
      %p123 = por %p121, %p122
      %p125 = scmp.ne.s32.totalorder %s110, %s124
      %p126 = scmp.eq.s32.totalorder %s37, 0
      %p127 = por %p125, %p126
      %s129 = sadd.s32 %s128, 1
      %p132 = scmp.eq.s32.totalorder %s31, 1
      %p133 = scmp.ne.s32.totalorder %s128, %s130
      %p134 = scmp.eq.s32.totalorder %s31, 0
      %p135 = por %p133, %p134
      %p136 = scmp.ne.s32.totalorder %s128, %s130
      %p137 = scmp.eq.s32.totalorder %s36, 1
      %p138 = por %p136, %p137
      %p139 = scmp.ne.s32.totalorder %s130, %s131
      %p140 = scmp.eq.s32.totalorder %s36, 0
      %p141 = por %p139, %p140
      %p142 = scmp.ne.s32.totalorder %s130, %s131
      %p143 = scmp.eq.s32.totalorder %s37, 1
      %p144 = por %p142, %p143
      %p146 = scmp.ne.s32.totalorder %s131, %s145
      %p147 = scmp.eq.s32.totalorder %s37, 0
      %p148 = por %p146, %p147
      %s150 = sadd.s32 %s149, 1
      %p153 = scmp.eq.s32.totalorder %s31, 1
      %p154 = scmp.ne.s32.totalorder %s149, %s151
      %p155 = scmp.eq.s32.totalorder %s31, 0
      %p156 = por %p154, %p155
      %p157 = scmp.ne.s32.totalorder %s149, %s151
      %p158 = scmp.eq.s32.totalorder %s36, 1
      %p159 = por %p157, %p158
      %p160 = scmp.ne.s32.totalorder %s151, %s152
      %p161 = scmp.eq.s32.totalorder %s36, 0
      %p162 = por %p160, %p161
      %p163 = scmp.ne.s32.totalorder %s151, %s152
      %p164 = scmp.eq.s32.totalorder %s37, 1
      %p165 = por %p163, %p164
      %p167 = scmp.ne.s32.totalorder %s152, %s166
      %p168 = scmp.eq.s32.totalorder %s37, 0
      %p169 = por %p167, %p168
      %s171 = sadd.s32 %s170, 1
      %p174 = scmp.eq.s32.totalorder %s31, 1
      %p175 = scmp.ne.s32.totalorder %s170, %s172
      %p176 = scmp.eq.s32.totalorder %s31, 0
      %p177 = por %p175, %p176
      %p178 = scmp.ne.s32.totalorder %s170, %s172
      %p179 = scmp.eq.s32.totalorder %s36, 1
      %p180 = por %p178, %p179
      %p181 = scmp.ne.s32.totalorder %s172, %s173
      %p182 = scmp.eq.s32.totalorder %s36, 0
      %p183 = por %p181, %p182
      %p184 = scmp.ne.s32.totalorder %s172, %s173
      %p185 = scmp.eq.s32.totalorder %s37, 1
      %p186 = por %p184, %p185
      %p188 = scmp.ne.s32.totalorder %s173, %s187
      %p189 = scmp.eq.s32.totalorder %s37, 0
      %p190 = por %p188, %p189
      %s192 = sadd.s32 %s191, 1
      %p195 = scmp.eq.s32.totalorder %s31, 1
      %p196 = scmp.ne.s32.totalorder %s191, %s193
      %p197 = scmp.eq.s32.totalorder %s31, 0
      %p198 = por %p196, %p197
      %p199 = scmp.ne.s32.totalorder %s191, %s193
      %p200 = scmp.eq.s32.totalorder %s36, 1
      %p201 = por %p199, %p200
      %p202 = scmp.ne.s32.totalorder %s193, %s194
      %p203 = scmp.eq.s32.totalorder %s36, 0
      %p204 = por %p202, %p203
      %p205 = scmp.ne.s32.totalorder %s193, %s194
      %p206 = scmp.eq.s32.totalorder %s37, 1
      %p207 = por %p205, %p206
      %p209 = scmp.ne.s32.totalorder %s194, %s208
      %p210 = scmp.eq.s32.totalorder %s37, 0
      %p211 = por %p209, %p210
      %s213 = sadd.s32 %s212, 1
      %p216 = scmp.eq.s32.totalorder %s31, 1
      %p217 = scmp.ne.s32.totalorder %s212, %s214
      %p218 = scmp.eq.s32.totalorder %s31, 0
      %p219 = por %p217, %p218
      %p220 = scmp.ne.s32.totalorder %s212, %s214
      %p221 = scmp.eq.s32.totalorder %s36, 1
      %p222 = por %p220, %p221
      %p223 = scmp.ne.s32.totalorder %s214, %s215
      %p224 = scmp.eq.s32.totalorder %s36, 0
      %p225 = por %p223, %p224
      %p226 = scmp.ne.s32.totalorder %s214, %s215
      %p227 = scmp.eq.s32.totalorder %s37, 1
      %p228 = por %p226, %p227
      %p230 = scmp.ne.s32.totalorder %s215, %s229
      %p231 = scmp.eq.s32.totalorder %s37, 0
      %p232 = por %p230, %p231
      %s234 = sadd.s32 %s233, 1
      %p237 = scmp.eq.s32.totalorder %s31, 1
      %p238 = scmp.ne.s32.totalorder %s233, %s235
      %p239 = scmp.eq.s32.totalorder %s31, 0
      %p240 = por %p238, %p239
      %p241 = scmp.ne.s32.totalorder %s233, %s235
      %p242 = scmp.eq.s32.totalorder %s36, 1
      %p243 = por %p241, %p242
      %p244 = scmp.ne.s32.totalorder %s235, %s236
      %p245 = scmp.eq.s32.totalorder %s36, 0
      %p246 = por %p244, %p245
      %p247 = scmp.ne.s32.totalorder %s235, %s236
      %p248 = scmp.eq.s32.totalorder %s37, 1
      %p249 = por %p247, %p248
      %p251 = scmp.ne.s32.totalorder %s236, %s250
      %p252 = scmp.eq.s32.totalorder %s37, 0
      %p253 = por %p251, %p252
      %s255 = sadd.s32 %s254, 1
      %p258 = scmp.eq.s32.totalorder %s31, 1
      %p259 = scmp.ne.s32.totalorder %s254, %s256
      %p260 = scmp.eq.s32.totalorder %s31, 0
      %p261 = por %p259, %p260
      %p262 = scmp.ne.s32.totalorder %s254, %s256
      %p263 = scmp.eq.s32.totalorder %s36, 1
      %p264 = por %p262, %p263
      %p265 = scmp.ne.s32.totalorder %s256, %s257
      %p266 = scmp.eq.s32.totalorder %s36, 0
      %p267 = por %p265, %p266
      %p268 = scmp.ne.s32.totalorder %s256, %s257
      %p269 = scmp.eq.s32.totalorder %s37, 1
      %p270 = por %p268, %p269
      %p272 = scmp.ne.s32.totalorder %s257, %s271
      %p273 = scmp.eq.s32.totalorder %s37, 0
      %p274 = por %p272, %p273
      %s276 = sadd.s32 %s275, 1
      %p279 = scmp.eq.s32.totalorder %s31, 1
      %p280 = scmp.ne.s32.totalorder %s275, %s277
      %p281 = scmp.eq.s32.totalorder %s31, 0
      %p282 = por %p280, %p281
      %p283 = scmp.ne.s32.totalorder %s275, %s277
      %p284 = scmp.eq.s32.totalorder %s36, 1
      %p285 = por %p283, %p284
      %p286 = scmp.ne.s32.totalorder %s277, %s278
      %p287 = scmp.eq.s32.totalorder %s36, 0
      %p288 = por %p286, %p287
      %p289 = scmp.ne.s32.totalorder %s277, %s278
      %p290 = scmp.eq.s32.totalorder %s37, 1
      %p291 = por %p289, %p290
      %p293 = scmp.ne.s32.totalorder %s278, %s292
      %p294 = scmp.eq.s32.totalorder %s37, 0
      %p295 = por %p293, %p294
      %s297 = sadd.s32 %s296, 1
      %p300 = scmp.eq.s32.totalorder %s31, 1
      %p301 = scmp.ne.s32.totalorder %s296, %s298
      %p302 = scmp.eq.s32.totalorder %s31, 0
      %p303 = por %p301, %p302
      %p304 = scmp.ne.s32.totalorder %s296, %s298
      %p305 = scmp.eq.s32.totalorder %s36, 1
      %p306 = por %p304, %p305
      %p307 = scmp.ne.s32.totalorder %s298, %s299
      %p308 = scmp.eq.s32.totalorder %s36, 0
      %p309 = por %p307, %p308
      %p310 = scmp.ne.s32.totalorder %s298, %s299
      %p311 = scmp.eq.s32.totalorder %s37, 1
      %p312 = por %p310, %p311
      %p314 = scmp.ne.s32.totalorder %s299, %s313
      %p315 = scmp.eq.s32.totalorder %s37, 0
      %p316 = por %p314, %p315
      %s317 = ssub.s32 %s31, %s38
      %p318 = scmp.eq.s32.totalorder %s317, 0
      %s320 = sadd.s32 %s319, 1
      %s321 = scalar_select %p318, %s319, %s320
      %p324 = pneg %p318
      %p325 = scmp.eq.s32.totalorder %s31, 1
      %p326 = por %p324, %p325
      %p327 = scmp.ne.s32.totalorder %s319, %s322
      %p328 = scmp.eq.s32.totalorder %s31, 0
      %p329 = por %p327, %p328
      %p330 = scmp.ne.s32.totalorder %s319, %s322
      %p331 = scmp.eq.s32.totalorder %s36, 1
      %p332 = por %p330, %p331
      %p333 = scmp.ne.s32.totalorder %s322, %s323
      %p334 = scmp.eq.s32.totalorder %s36, 0
      %p335 = por %p333, %p334
      %p336 = scmp.ne.s32.totalorder %s322, %s323
      %p337 = scmp.eq.s32.totalorder %s37, 1
      %p338 = por %p336, %p337
      %p340 = scmp.ne.s32.totalorder %s323, %s339
      %p341 = scmp.eq.s32.totalorder %s37, 0
      %p342 = por %p340, %p341
      %p343 = scmp.le.s32.totalorder 1, %s31
      %p344 = scmp.lt.s32.totalorder %s31, 3
      %p345 = pnand %p343, %p344
      %p346 = pneg %p345
      // Predicated region
      $region9: #{_lambda_.9} parent=5 // pred_check
        _
      $region10: #{_lambda_.9} parent=5 // pred_check_branch
        %348 = sbr.rel (%p345) target = $region12
      $region11: #{_lambda_.9} parent=5 // pred_region
        %s349 = ssub.s32 %s31, 1
        // Predicated region
        $region13: #{_lambda_.9} parent=11 // pred_check
          %p350 = pneg %p78
        $region14: #{_lambda_.9} parent=11 // pred_check_branch
          %352 = sbr.rel (%p350) target = $region16
        $region15: #{_lambda_.9} parent=11 // pred_region
          %s354 = ssub.s32 256, 256
          %355 = vsyncadd [#allocation6], %s354
          %s356 = sshll.u32 [#allocation5], 4
          %s357 = int_to_ptr.vmem [resolvable:$true] %s356
          %362 = dma.hbm_to_vmem [thread:$0]  %s1, 256, %s357, [#allocation6], 64, 64, 4
        $region16: #{_lambda_.9} parent=11 // pred_fallthru
          _
        // Predicated region
        $region17: #{_lambda_.9} parent=11 // pred_check
          %p363 = pneg %p99
        $region18: #{_lambda_.9} parent=11 // pred_check_branch
          %365 = sbr.rel (%p363) target = $region20
        $region19: #{_lambda_.9} parent=11 // pred_region
          %s367 = ssub.s32 16, 16
          %368 = vsyncadd [#allocation6], %s367
          %s370 = sshll.u32 [#allocation7], 4
          %s371 = int_to_ptr.vmem [resolvable:$true] %s370
          %373 = dma.hbm_to_vmem [thread:$0]  %s2, 16, %s371, [#allocation6]
        $region20: #{_lambda_.9} parent=11 // pred_fallthru
          _
        // Predicated region
        $region21: #{_lambda_.9} parent=11 // pred_check
          %p374 = pneg %p120
        $region22: #{_lambda_.9} parent=11 // pred_check_branch
          %376 = sbr.rel (%p374) target = $region24
        $region23: #{_lambda_.9} parent=11 // pred_region
          %s378 = ssub.s32 256, 256
          %379 = vsyncadd [#allocation9], %s378
          %s380 = sshll.u32 [#allocation8], 4
          %s381 = int_to_ptr.vmem [resolvable:$true] %s380
          %386 = dma.hbm_to_vmem [thread:$0]  %s3, 256, %s381, [#allocation9], 64, 64, 4
        $region24: #{_lambda_.9} parent=11 // pred_fallthru
          _
        // Predicated region
        $region25: #{_lambda_.9} parent=11 // pred_check
          %p387 = pneg %p141
        $region26: #{_lambda_.9} parent=11 // pred_check_branch
          %389 = sbr.rel (%p387) target = $region28
        $region27: #{_lambda_.9} parent=11 // pred_region
          %s391 = ssub.s32 16, 16
          %392 = vsyncadd [#allocation9], %s391
          %s394 = sshll.u32 [#allocation10], 4
          %s395 = int_to_ptr.vmem [resolvable:$true] %s394
          %397 = dma.hbm_to_vmem [thread:$0]  %s4, 16, %s395, [#allocation9]
        $region28: #{_lambda_.9} parent=11 // pred_fallthru
          _
        // Predicated region
        $region29: #{_lambda_.9} parent=11 // pred_check
          %p398 = pneg %p162
        $region30: #{_lambda_.9} parent=11 // pred_check_branch
          %400 = sbr.rel (%p398) target = $region32
        $region31: #{_lambda_.9} parent=11 // pred_region
          %s402 = ssub.s32 16, 16
          %403 = vsyncadd [#allocation12], %s402
          %s405 = sshll.u32 [#allocation11], 4
          %s406 = int_to_ptr.vmem [resolvable:$true] %s405
          %408 = dma.hbm_to_vmem [thread:$0]  %s5, 16, %s406, [#allocation12]
        $region32: #{_lambda_.9} parent=11 // pred_fallthru
          _
        // Predicated region
        $region33: #{_lambda_.9} parent=11 // pred_check
          %p409 = pneg %p183
        $region34: #{_lambda_.9} parent=11 // pred_check_branch
          %411 = sbr.rel (%p409) target = $region36
        $region35: #{_lambda_.9} parent=11 // pred_region
          %s413 = ssub.s32 16, 16
          %414 = vsyncadd [#allocation12], %s413
          %s416 = sshll.u32 [#allocation13], 4
          %s417 = int_to_ptr.vmem [resolvable:$true] %s416
          %419 = dma.hbm_to_vmem [thread:$0]  %s6, 16, %s417, [#allocation12]
        $region36: #{_lambda_.9} parent=11 // pred_fallthru
          _
        // Predicated region
        $region37: #{_lambda_.9} parent=11 // pred_check
          %p420 = pneg %p204
        $region38: #{_lambda_.9} parent=11 // pred_check_branch
          %422 = sbr.rel (%p420) target = $region40
        $region39: #{_lambda_.9} parent=11 // pred_region
          %s424 = ssub.s32 16, 16
          %425 = vsyncadd [#allocation15], %s424
          %s427 = sshll.u32 [#allocation14], 4
          %s428 = int_to_ptr.vmem [resolvable:$true] %s427
          %430 = dma.hbm_to_vmem [thread:$0]  %s7, 16, %s428, [#allocation15]
        $region40: #{_lambda_.9} parent=11 // pred_fallthru
          _
        // Predicated region
        $region41: #{_lambda_.9} parent=11 // pred_check
          %p431 = pneg %p225
        $region42: #{_lambda_.9} parent=11 // pred_check_branch
          %433 = sbr.rel (%p431) target = $region44
        $region43: #{_lambda_.9} parent=11 // pred_region
          %s435 = ssub.s32 16, 16
          %436 = vsyncadd [#allocation15], %s435
          %s438 = sshll.u32 [#allocation16], 4
          %s439 = int_to_ptr.vmem [resolvable:$true] %s438
          %441 = dma.hbm_to_vmem [thread:$0]  %s8, 16, %s439, [#allocation15]
        $region44: #{_lambda_.9} parent=11 // pred_fallthru
          _
        // Predicated region
        $region45: #{_lambda_.9} parent=11 // pred_check
          %p442 = pneg %p246
        $region46: #{_lambda_.9} parent=11 // pred_check_branch
          %444 = sbr.rel (%p442) target = $region48
        $region47: #{_lambda_.9} parent=11 // pred_region
          %s446 = ssub.s32 256, 256
          %447 = vsyncadd [#allocation18], %s446
          %s448 = sshll.u32 [#allocation17], 4
          %s449 = int_to_ptr.vmem [resolvable:$true] %s448
          %454 = dma.hbm_to_vmem [thread:$0]  %s9, 256, %s449, [#allocation18], 64, 64, 4
        $region48: #{_lambda_.9} parent=11 // pred_fallthru
          _
        // Predicated region
        $region49: #{_lambda_.9} parent=11 // pred_check
          %p455 = pneg %p267
        $region50: #{_lambda_.9} parent=11 // pred_check_branch
          %457 = sbr.rel (%p455) target = $region52
        $region51: #{_lambda_.9} parent=11 // pred_region
          %s459 = ssub.s32 16, 16
          %460 = vsyncadd [#allocation18], %s459
          %s462 = sshll.u32 [#allocation19], 4
          %s463 = int_to_ptr.vmem [resolvable:$true] %s462
          %465 = dma.hbm_to_vmem [thread:$0]  %s10, 16, %s463, [#allocation18]
        $region52: #{_lambda_.9} parent=11 // pred_fallthru
          _
        // Predicated region
        $region53: #{_lambda_.9} parent=11 // pred_check
          %p466 = pneg %p288
        $region54: #{_lambda_.9} parent=11 // pred_check_branch
          %468 = sbr.rel (%p466) target = $region56
        $region55: #{_lambda_.9} parent=11 // pred_region
          %s470 = ssub.s32 512, 512
          %471 = vsyncadd [#allocation21], %s470
          %s472 = sshll.u32 [#allocation20], 4
          %s473 = int_to_ptr.vmem [resolvable:$true] %s472
          %478 = dma.hbm_to_vmem [thread:$0]  %s11, 512, %s473, [#allocation21], 64, 64, 4
        $region56: #{_lambda_.9} parent=11 // pred_fallthru
          _
        // Predicated region
        $region57: #{_lambda_.9} parent=11 // pred_check
          %p479 = pneg %p309
        $region58: #{_lambda_.9} parent=11 // pred_check_branch
          %481 = sbr.rel (%p479) target = $region60
        $region59: #{_lambda_.9} parent=11 // pred_region
          %s483 = ssub.s32 16, 16
          %484 = vsyncadd [#allocation21], %s483
          %s486 = sshll.u32 [#allocation22], 4
          %s487 = int_to_ptr.vmem [resolvable:$true] %s486
          %489 = dma.hbm_to_vmem [thread:$0]  %s12, 16, %s487, [#allocation21]
        $region60: #{_lambda_.9} parent=11 // pred_fallthru
          _
      $region12: #{_lambda_.9} parent=5 // pred_fallthru
        _
      %p490 = scmp.lt.s32.totalorder %s31, 2
      // Predicated region
      $region61: #{_lambda_.9} parent=5 // pred_check
        %p491 = pneg %p490
      $region62: #{_lambda_.9} parent=5 // pred_check_branch
        %493 = sbr.rel (%p491) target = $region64
      $region63: #{_lambda_.9} parent=5 // pred_region
        // Predicated region
        $region65: #{_lambda_.9} parent=63 // pred_check
          %p494 = pneg %p51
        $region66: #{_lambda_.9} parent=63 // pred_check_branch
          %496 = sbr.rel (%p494) target = $region68
        $region67: #{_lambda_.9} parent=63 // pred_region
          %s497 = sand.u32 %s41, 1
          %s498 = scalar_lea.sflag [#allocation3], %s497
          %s499 = sand.u32 %s41, 1
          %s500 = smul.addr %s499, 8
          %s501 = scalar_lea.vmem [#allocation2], %s500
          %s503 = ssub.s32 128, 128
          %504 = vsyncadd %s498, %s503
          %s505 = smul.addr %s31, 2
          %s506 = smul.addr %s505, 64
          %s507 = scalar_lea.hbm %s0, %s506
          %s508 = sshll.u32 %s501, 4
          %s509 = int_to_ptr.vmem [resolvable:$true] %s508
          %514 = dma.hbm_to_vmem [thread:$0]  %s507, 128, %s509, %s498, 64, 64, 4
        $region68: #{_lambda_.9} parent=63 // pred_fallthru
          _
      $region64: #{_lambda_.9} parent=5 // pred_fallthru
        _
      %p515 = scmp.le.s32.totalorder 1, %s31
      %p516 = scmp.lt.s32.totalorder %s31, 3
      %p517 = pnand %p515, %p516
      %p518 = pneg %p517
      // Predicated region
      $region69: #{_lambda_.9} parent=5 // pred_check
        _
      $region70: #{_lambda_.9} parent=5 // pred_check_branch
        %520 = sbr.rel (%p517) target = $region72
      $region71: #{_lambda_.9} parent=5 // pred_region
        %s521 = ssub.s32 %s31, 1
        %s522 = sand.u32 %s44, 1
        %s523 = scalar_lea.sflag [#allocation3], %s522
        %s524 = sand.u32 %s44, 1
        %s525 = smul.addr %s524, 8
        %s526 = scalar_lea.vmem [#allocation2], %s525
        // Predicated region
        $region73: #{_lambda_.9} parent=71 // pred_check
          %p527 = pneg %p57
        $region74: #{_lambda_.9} parent=71 // pred_check_branch
          %529 = sbr.rel (%p527) target = $region76
        $region75: #{_lambda_.9} parent=71 // pred_region
          %530 = dma.done %s523, 128
        $region76: #{_lambda_.9} parent=71 // pred_fallthru
          _
        // Predicated region
        $region77: #{_lambda_.9} parent=71 // pred_check
          %p531 = pneg %p78
        $region78: #{_lambda_.9} parent=71 // pred_check_branch
          %533 = sbr.rel (%p531) target = $region80
        $region79: #{_lambda_.9} parent=71 // pred_region
          %534 = dma.done [#allocation6], 256
        $region80: #{_lambda_.9} parent=71 // pred_fallthru
          _
        // Predicated region
        $region81: #{_lambda_.9} parent=71 // pred_check
          %p535 = pneg %p99
        $region82: #{_lambda_.9} parent=71 // pred_check_branch
          %537 = sbr.rel (%p535) target = $region84
        $region83: #{_lambda_.9} parent=71 // pred_region
          %538 = dma.done [#allocation6], 16
        $region84: #{_lambda_.9} parent=71 // pred_fallthru
          _
        // Predicated region
        $region85: #{_lambda_.9} parent=71 // pred_check
          %p539 = pneg %p120
        $region86: #{_lambda_.9} parent=71 // pred_check_branch
          %541 = sbr.rel (%p539) target = $region88
        $region87: #{_lambda_.9} parent=71 // pred_region
          %542 = dma.done [#allocation9], 256
        $region88: #{_lambda_.9} parent=71 // pred_fallthru
          _
        // Predicated region
        $region89: #{_lambda_.9} parent=71 // pred_check
          %p543 = pneg %p141
        $region90: #{_lambda_.9} parent=71 // pred_check_branch
          %545 = sbr.rel (%p543) target = $region92
        $region91: #{_lambda_.9} parent=71 // pred_region
          %546 = dma.done [#allocation9], 16
        $region92: #{_lambda_.9} parent=71 // pred_fallthru
          _
        // Predicated region
        $region93: #{_lambda_.9} parent=71 // pred_check
          %p547 = pneg %p162
        $region94: #{_lambda_.9} parent=71 // pred_check_branch
          %549 = sbr.rel (%p547) target = $region96
        $region95: #{_lambda_.9} parent=71 // pred_region
          %550 = dma.done [#allocation12], 16
        $region96: #{_lambda_.9} parent=71 // pred_fallthru
          _
        // Predicated region
        $region97: #{_lambda_.9} parent=71 // pred_check
          %p551 = pneg %p183
        $region98: #{_lambda_.9} parent=71 // pred_check_branch
          %553 = sbr.rel (%p551) target = $region100
        $region99: #{_lambda_.9} parent=71 // pred_region
          %554 = dma.done [#allocation12], 16
        $region100: #{_lambda_.9} parent=71 // pred_fallthru
          _
        // Predicated region
        $region101: #{_lambda_.9} parent=71 // pred_check
          %p555 = pneg %p204
        $region102: #{_lambda_.9} parent=71 // pred_check_branch
          %557 = sbr.rel (%p555) target = $region104
        $region103: #{_lambda_.9} parent=71 // pred_region
          %558 = dma.done [#allocation15], 16
        $region104: #{_lambda_.9} parent=71 // pred_fallthru
          _
        // Predicated region
        $region105: #{_lambda_.9} parent=71 // pred_check
          %p559 = pneg %p225
        $region106: #{_lambda_.9} parent=71 // pred_check_branch
          %561 = sbr.rel (%p559) target = $region108
        $region107: #{_lambda_.9} parent=71 // pred_region
          %562 = dma.done [#allocation15], 16
        $region108: #{_lambda_.9} parent=71 // pred_fallthru
          _
        // Predicated region
        $region109: #{_lambda_.9} parent=71 // pred_check
          %p563 = pneg %p246
        $region110: #{_lambda_.9} parent=71 // pred_check_branch
          %565 = sbr.rel (%p563) target = $region112
        $region111: #{_lambda_.9} parent=71 // pred_region
          %566 = dma.done [#allocation18], 256
        $region112: #{_lambda_.9} parent=71 // pred_fallthru
          _
        // Predicated region
        $region113: #{_lambda_.9} parent=71 // pred_check
          %p567 = pneg %p267
        $region114: #{_lambda_.9} parent=71 // pred_check_branch
          %569 = sbr.rel (%p567) target = $region116
        $region115: #{_lambda_.9} parent=71 // pred_region
          %570 = dma.done [#allocation18], 16
        $region116: #{_lambda_.9} parent=71 // pred_fallthru
          _
        // Predicated region
        $region117: #{_lambda_.9} parent=71 // pred_check
          %p571 = pneg %p288
        $region118: #{_lambda_.9} parent=71 // pred_check_branch
          %573 = sbr.rel (%p571) target = $region120
        $region119: #{_lambda_.9} parent=71 // pred_region
          %574 = dma.done [#allocation21], 512
        $region120: #{_lambda_.9} parent=71 // pred_fallthru
          _
        // Predicated region
        $region121: #{_lambda_.9} parent=71 // pred_check
          %p575 = pneg %p309
        $region122: #{_lambda_.9} parent=71 // pred_check_branch
          %577 = sbr.rel (%p575) target = $region124
        $region123: #{_lambda_.9} parent=71 // pred_region
          %578 = dma.done [#allocation21], 16
        $region124: #{_lambda_.9} parent=71 // pred_fallthru
          _
        %s579 = sand.u32 %s44, 1
        %s580 = scalar_lea.sflag [#allocation3], %s579
        %s581 = sand.u32 %s44, 1
        %s582 = smul.addr %s581, 8
        %s583 = scalar_lea.vmem [#allocation2], %s582
        %p584 = pneg %p57
        %p585 = pneg %p54
        %p586 = pneg %p78
        %p587 = pneg %p75
        %p588 = pneg %p99
        %p589 = pneg %p96
        %p590 = pneg %p120
        %p591 = pneg %p117
        %p592 = pneg %p141
        %p593 = pneg %p138
        %p594 = pneg %p162
        %p595 = pneg %p159
        %p596 = pneg %p183
        %p597 = pneg %p180
        %p598 = pneg %p204
        %p599 = pneg %p201
        %p600 = pneg %p225
        %p601 = pneg %p222
        %p602 = pneg %p246
        %p603 = pneg %p243
        %p604 = pneg %p267
        %p605 = pneg %p264
        %p606 = pneg %p288
        %p607 = pneg %p285
        %p608 = pneg %p309
        %p609 = pneg %p306
        %p610 = pneg %p335
        %p611 = pneg %p332
        %s612 = sand.u32 %s322, 1
        %s613 = scalar_lea.sflag [#allocation4], %s612
        %s614 = sand.u32 %s322, 1
        %s615 = smul.addr %s614, 8
        %s616 = scalar_lea.vmem [#allocation23], %s615
        %v618 = vld [vmem:[%s526] sm:$0xf]
        %v619 = vld [vmem:[%s526 + $0x4] sm:$0xf]
        %v620 = vunpack.c.l.bf16 %v618
        %v621 = vunpack.c.l.bf16 %v619
        %v622 = vld [vmem:[#allocation11] sm:$0x1]
        %v623 = vld [vmem:[#allocation13] sm:$0x1]
        %vm624 = vcmask 261120
        %v625 = vsel %vm624, %v620, 0.0
        %626 = vadd.xlane.f32.xlu0 %v625
        %v627 = vpop.xlane.xlu0 %626
        %v628 = vsel %vm624, %v621, 0.0
        %629 = vadd.xlane.f32.xlu0 %v628
        %v630 = vpop.xlane.xlu0 %629
        %v631 = vrcp.pop 32.0
        %v632 = vmul.f32 %v627, %v631
        %v633 = vmul.f32 %v630, %v631
        %v634 = vsub.f32 %v620, %v632
        %v635 = vsub.f32 %v621, %v633
        %v636 = vmul.f32 %v634, %v634
        %v637 = vmul.f32 %v635, %v635
        %v638 = vsel %vm624, %v636, 0.0
        %639 = vadd.xlane.f32.xlu0 %v638
        %v640 = vpop.xlane.xlu0 %639
        %v641 = vsel %vm624, %v637, 0.0
        %642 = vadd.xlane.f32.xlu0 %v641
        %v643 = vpop.xlane.xlu0 %642
        %v644 = vmul.f32 %v640, %v631
        %v645 = vmul.f32 %v643, %v631
        %v646 = vadd.f32 %v644, 1e-06
        %v647 = vadd.f32 %v645, 1e-06
        %v648 = vrsqrt.pop %v646
        %v649 = vrsqrt.pop %v647
        %v650 = vmul.f32 %v634, %v648
        %v651 = vmul.f32 %v635, %v649
        %v653 = vlaneseq
        %v654 = vshrl.u32 %v653, 7
        %v655 = vsub.s32 0, %v654
        %v656 = vrot.slane %v622, %v655
        %v658 = vmul.f32 %v650, %v656
        %v659 = vmul.f32 %v651, %v656
        %v661 = vlaneseq
        %v662 = vshrl.u32 %v661, 7
        %v663 = vsub.s32 0, %v662
        %v664 = vrot.slane %v623, %v663
        %v666 = vadd.f32 %v658, %v664
        %v667 = vadd.f32 %v659, %v664
        %v668 = vpack.c.bf16 %v667, %v666
        %v669 = vld [vmem:[#allocation5] sm:$0xf]
        %v670 = vld [vmem:[#allocation5 + $0x4] sm:$0xf]
        %v671 = vld [vmem:[#allocation5 + $0x8] sm:$0xf]
        %v672 = vld [vmem:[#allocation5 + $0xc] sm:$0xf]
        %v673 = vld [vmem:[#allocation7] sm:$0x1]
        %v675 = vlaneseq
        %v676 = vshrl.u32 %v675, 7
        %v677 = vsub.s32 0, %v676
        %v678 = vrot.slane %v673, %v677
        %v684 = vunpack.c.l.b16 %v669
        %v685 = vunpack.c.l.b16 %v670
        %v686 = vunpack.c.l.b16 %v671
        %v687 = vunpack.c.l.b16 %v672
        %v688 = vpack.c.b16 %v685, %v684
        %v689 = vpack.c.b16 %v687, %v686
        %v693 = vsel %vm624, %v668, 0
        %695 = vmatprep.subr.bf16.mxu0 0
        %696 = vmatpush1.bf16.msra.mxu0 %v688
        %697 = vmatprep.subr.bf16.mxu0 0
        %698 = vmatpush1.bf16.msra.mxu0 %v689
        %699 = vmatprep.subr.bf16.mxu0 0
        %700 = vmatpush1.bf16.msra.mxu0 0
        %701 = vmatprep.subr.bf16.mxu0 0
        %702 = vmatpush1.bf16.msra.mxu0 0
        %703 = vmatprep.subr.bf16.mxu0 0
        %704 = vmatpush1.bf16.msra.mxu0 0
        %705 = vmatprep.subr.bf16.mxu0 0
        %706 = vmatpush1.bf16.msra.mxu0 0
        %707 = vmatprep.subr.bf16.mxu0 0
        %708 = vmatpush1.bf16.msra.mxu0 0
        %709 = vmatprep.subr.bf16.mxu0 0
        %710 = vmatpush1.bf16.msra.mxu0 0
        %711 = vmatprep.subr.bf16.mxu0 0
        %712 = vmatpush1.bf16.msra.mxu0 0
        %713 = vmatprep.subr.bf16.mxu0 0
        %714 = vmatpush1.bf16.msra.mxu0 0
        %715 = vmatprep.subr.bf16.mxu0 0
        %716 = vmatpush1.bf16.msra.mxu0 0
        %717 = vmatprep.subr.bf16.mxu0 0
        %718 = vmatpush1.bf16.msra.mxu0 0
        %719 = vmatprep.subr.bf16.mxu0 0
        %720 = vmatpush1.bf16.msra.mxu0 0
        %721 = vmatprep.subr.bf16.mxu0 0
        %722 = vmatpush1.bf16.msra.mxu0 0
        %723 = vmatprep.subr.bf16.mxu0 0
        %724 = vmatpush1.bf16.msra.mxu0 0
        %725 = vmatprep.subr.bf16.mxu0 0
        %726 = vmatpush1.bf16.msra.mxu0 0
        %727 = vmatprep.mubr.bf16.mxu0 0
        %728 = vmatmul.mubr.bf16.gmra.mrb[0].mxu0 %v693
        %v729 = vpop.f32.mrb[0].mxu0
        %v730 = vadd.f32 %v678, %v729
        %v731 = vpop.f32.mrb[0].mxu0
        %v732 = vpop.f32.mrb[0].mxu0
        %v733 = vadd.f32 %v678, %v732
        %v734 = vpop.f32.mrb[0].mxu0
        %735 = vdwg.mxu0
        %v736 = vpack.c.bf16 %v733, %v730
        %738 = vrot.lane.b32.xlu0 %v736, 120
        %v739 = vpop.permute.xlu0 %738
        %740 = vrot.lane.b32.xlu0 %v736, 112
        %v741 = vpop.permute.xlu0 %740
        %742 = vrot.lane.b32.xlu0 %v736, 104
        %v743 = vpop.permute.xlu0 %742
        %744 = vrot.lane.b32.xlu0 %v736, 96
        %v745 = vpop.permute.xlu0 %744
        %vm746 = vcmask 64512
        %v748 = vsel %vm746, %v736, 0
        %v751 = vsel %vm746, %v745, 0
        %753 = vmatprep.subr.bf16.mxu0 0
        %754 = vmatpush1.bf16.xpose.msra.mxu0 %v751
        %755 = vmatprep.subr.bf16.mxu0 0
        %756 = vmatpush1.bf16.xpose.msra.mxu0 0
        %757 = vmatprep.subr.bf16.mxu0 0
        %758 = vmatpush1.bf16.xpose.msra.mxu0 0
        %759 = vmatprep.subr.bf16.mxu0 0
        %760 = vmatpush1.bf16.xpose.msra.mxu0 0
        %761 = vmatprep.subr.bf16.mxu0 0
        %762 = vmatpush1.bf16.xpose.msra.mxu0 0
        %763 = vmatprep.subr.bf16.mxu0 0
        %764 = vmatpush1.bf16.xpose.msra.mxu0 0
        %765 = vmatprep.subr.bf16.mxu0 0
        %766 = vmatpush1.bf16.xpose.msra.mxu0 0
        %767 = vmatprep.subr.bf16.mxu0 0
        %768 = vmatpush1.bf16.xpose.msra.mxu0 0
        %769 = vmatprep.subr.bf16.mxu0 0
        %770 = vmatpush1.bf16.xpose.msra.mxu0 0
        %771 = vmatprep.subr.bf16.mxu0 0
        %772 = vmatpush1.bf16.xpose.msra.mxu0 0
        %773 = vmatprep.subr.bf16.mxu0 0
        %774 = vmatpush1.bf16.xpose.msra.mxu0 0
        %775 = vmatprep.subr.bf16.mxu0 0
        %776 = vmatpush1.bf16.xpose.msra.mxu0 0
        %777 = vmatprep.subr.bf16.mxu0 0
        %778 = vmatpush1.bf16.xpose.msra.mxu0 0
        %779 = vmatprep.subr.bf16.mxu0 0
        %780 = vmatpush1.bf16.xpose.msra.mxu0 0
        %781 = vmatprep.subr.bf16.mxu0 0
        %782 = vmatpush1.bf16.xpose.msra.mxu0 0
        %783 = vmatprep.subr.bf16.mxu0 0
        %784 = vmatpush1.bf16.xpose.msra.mxu0 0
        %785 = vmatprep.mubr.bf16.mxu0 0
        %786 = vmatmul.mubr.bf16.gmra.mrb[0].mxu0 %v748
        %v787 = vpop.f32.mrb[0].mxu0
        %v788 = vadd.f32 0.0, %v787
        %v789 = vpop.f32.mrb[0].mxu0
        %v790 = vpop.f32.mrb[0].mxu0
        %v791 = vadd.f32 0.0, %v790
        %v792 = vpop.f32.mrb[0].mxu0
        %793 = vdwg.mxu0
        %794 = vrot.lane.b32.xlu0 %v739, 96
        %v795 = vpop.permute.xlu0 %794
        %v797 = vsel %vm746, %v739, 0
        %v800 = vsel %vm746, %v795, 0
        %802 = vmatprep.subr.bf16.mxu0 0
        %803 = vmatpush1.bf16.xpose.msra.mxu0 %v800
        %804 = vmatprep.subr.bf16.mxu0 0
        %805 = vmatpush1.bf16.xpose.msra.mxu0 0
        %806 = vmatprep.subr.bf16.mxu0 0
        %807 = vmatpush1.bf16.xpose.msra.mxu0 0
        %808 = vmatprep.subr.bf16.mxu0 0
        %809 = vmatpush1.bf16.xpose.msra.mxu0 0
        %810 = vmatprep.subr.bf16.mxu0 0
        %811 = vmatpush1.bf16.xpose.msra.mxu0 0
        %812 = vmatprep.subr.bf16.mxu0 0
        %813 = vmatpush1.bf16.xpose.msra.mxu0 0
        %814 = vmatprep.subr.bf16.mxu0 0
        %815 = vmatpush1.bf16.xpose.msra.mxu0 0
        %816 = vmatprep.subr.bf16.mxu0 0
        %817 = vmatpush1.bf16.xpose.msra.mxu0 0
        %818 = vmatprep.subr.bf16.mxu0 0
        %819 = vmatpush1.bf16.xpose.msra.mxu0 0
        %820 = vmatprep.subr.bf16.mxu0 0
        %821 = vmatpush1.bf16.xpose.msra.mxu0 0
        %822 = vmatprep.subr.bf16.mxu0 0
        %823 = vmatpush1.bf16.xpose.msra.mxu0 0
        %824 = vmatprep.subr.bf16.mxu0 0
        %825 = vmatpush1.bf16.xpose.msra.mxu0 0
        %826 = vmatprep.subr.bf16.mxu0 0
        %827 = vmatpush1.bf16.xpose.msra.mxu0 0
        %828 = vmatprep.subr.bf16.mxu0 0
        %829 = vmatpush1.bf16.xpose.msra.mxu0 0
        %830 = vmatprep.subr.bf16.mxu0 0
        %831 = vmatpush1.bf16.xpose.msra.mxu0 0
        %832 = vmatprep.subr.bf16.mxu0 0
        %833 = vmatpush1.bf16.xpose.msra.mxu0 0
        %834 = vmatprep.mubr.bf16.mxu0 0
        %835 = vmatmul.mubr.bf16.gmra.mrb[0].mxu0 %v797
        %v836 = vpop.f32.mrb[0].mxu0
        %v837 = vadd.f32 0.0, %v836
        %v838 = vpop.f32.mrb[0].mxu0
        %v839 = vpop.f32.mrb[0].mxu0
        %v840 = vadd.f32 0.0, %v839
        %v841 = vpop.f32.mrb[0].mxu0
        %842 = vdwg.mxu0
        %843 = vrot.lane.b32.xlu0 %v741, 96
        %v844 = vpop.permute.xlu0 %843
        %v846 = vsel %vm746, %v741, 0
        %v849 = vsel %vm746, %v844, 0
        %851 = vmatprep.subr.bf16.mxu0 0
        %852 = vmatpush1.bf16.xpose.msra.mxu0 %v849
        %853 = vmatprep.subr.bf16.mxu0 0
        %854 = vmatpush1.bf16.xpose.msra.mxu0 0
        %855 = vmatprep.subr.bf16.mxu0 0
        %856 = vmatpush1.bf16.xpose.msra.mxu0 0
        %857 = vmatprep.subr.bf16.mxu0 0
        %858 = vmatpush1.bf16.xpose.msra.mxu0 0
        %859 = vmatprep.subr.bf16.mxu0 0
        %860 = vmatpush1.bf16.xpose.msra.mxu0 0
        %861 = vmatprep.subr.bf16.mxu0 0
        %862 = vmatpush1.bf16.xpose.msra.mxu0 0
        %863 = vmatprep.subr.bf16.mxu0 0
        %864 = vmatpush1.bf16.xpose.msra.mxu0 0
        %865 = vmatprep.subr.bf16.mxu0 0
        %866 = vmatpush1.bf16.xpose.msra.mxu0 0
        %867 = vmatprep.subr.bf16.mxu0 0
        %868 = vmatpush1.bf16.xpose.msra.mxu0 0
        %869 = vmatprep.subr.bf16.mxu0 0
        %870 = vmatpush1.bf16.xpose.msra.mxu0 0
        %871 = vmatprep.subr.bf16.mxu0 0
        %872 = vmatpush1.bf16.xpose.msra.mxu0 0
        %873 = vmatprep.subr.bf16.mxu0 0
        %874 = vmatpush1.bf16.xpose.msra.mxu0 0
        %875 = vmatprep.subr.bf16.mxu0 0
        %876 = vmatpush1.bf16.xpose.msra.mxu0 0
        %877 = vmatprep.subr.bf16.mxu0 0
        %878 = vmatpush1.bf16.xpose.msra.mxu0 0
        %879 = vmatprep.subr.bf16.mxu0 0
        %880 = vmatpush1.bf16.xpose.msra.mxu0 0
        %881 = vmatprep.subr.bf16.mxu0 0
        %882 = vmatpush1.bf16.xpose.msra.mxu0 0
        %883 = vmatprep.mubr.bf16.mxu0 0
        %884 = vmatmul.mubr.bf16.gmra.mrb[0].mxu0 %v846
        %v885 = vpop.f32.mrb[0].mxu0
        %v886 = vadd.f32 0.0, %v885
        %v887 = vpop.f32.mrb[0].mxu0
        %v888 = vpop.f32.mrb[0].mxu0
        %v889 = vadd.f32 0.0, %v888
        %v890 = vpop.f32.mrb[0].mxu0
        %891 = vdwg.mxu0
        %892 = vrot.lane.b32.xlu0 %v743, 96
        %v893 = vpop.permute.xlu0 %892
        %v895 = vsel %vm746, %v743, 0
        %v898 = vsel %vm746, %v893, 0
        %900 = vmatprep.subr.bf16.mxu0 0
        %901 = vmatpush1.bf16.xpose.msra.mxu0 %v898
        %902 = vmatprep.subr.bf16.mxu0 0
        %903 = vmatpush1.bf16.xpose.msra.mxu0 0
        %904 = vmatprep.subr.bf16.mxu0 0
        %905 = vmatpush1.bf16.xpose.msra.mxu0 0
        %906 = vmatprep.subr.bf16.mxu0 0
        %907 = vmatpush1.bf16.xpose.msra.mxu0 0
        %908 = vmatprep.subr.bf16.mxu0 0
        %909 = vmatpush1.bf16.xpose.msra.mxu0 0
        %910 = vmatprep.subr.bf16.mxu0 0
        %911 = vmatpush1.bf16.xpose.msra.mxu0 0
        %912 = vmatprep.subr.bf16.mxu0 0
        %913 = vmatpush1.bf16.xpose.msra.mxu0 0
        %914 = vmatprep.subr.bf16.mxu0 0
        %915 = vmatpush1.bf16.xpose.msra.mxu0 0
        %916 = vmatprep.subr.bf16.mxu0 0
        %917 = vmatpush1.bf16.xpose.msra.mxu0 0
        %918 = vmatprep.subr.bf16.mxu0 0
        %919 = vmatpush1.bf16.xpose.msra.mxu0 0
        %920 = vmatprep.subr.bf16.mxu0 0
        %921 = vmatpush1.bf16.xpose.msra.mxu0 0
        %922 = vmatprep.subr.bf16.mxu0 0
        %923 = vmatpush1.bf16.xpose.msra.mxu0 0
        %924 = vmatprep.subr.bf16.mxu0 0
        %925 = vmatpush1.bf16.xpose.msra.mxu0 0
        %926 = vmatprep.subr.bf16.mxu0 0
        %927 = vmatpush1.bf16.xpose.msra.mxu0 0
        %928 = vmatprep.subr.bf16.mxu0 0
        %929 = vmatpush1.bf16.xpose.msra.mxu0 0
        %930 = vmatprep.subr.bf16.mxu0 0
        %931 = vmatpush1.bf16.xpose.msra.mxu0 0
        %932 = vmatprep.mubr.bf16.mxu0 0
        %933 = vmatmul.mubr.bf16.gmra.mrb[0].mxu0 %v895
        %v934 = vpop.f32.mrb[0].mxu0
        %v935 = vadd.f32 0.0, %v934
        %v936 = vpop.f32.mrb[0].mxu0
        %v937 = vpop.f32.mrb[0].mxu0
        %v938 = vadd.f32 0.0, %v937
        %v939 = vpop.f32.mrb[0].mxu0
        %940 = vdwg.mxu0
        %v941 = vmul.f32 %v788, 0.35355338
        %v942 = vmul.f32 %v791, 0.35355338
        %v943 = vmul.f32 %v837, 0.35355338
        %v944 = vmul.f32 %v840, 0.35355338
        %v945 = vmul.f32 %v886, 0.35355338
        %v946 = vmul.f32 %v889, 0.35355338
        %v947 = vmul.f32 %v935, 0.35355338
        %v948 = vmul.f32 %v938, 0.35355338
        %v949 = vlaneseq
        %v950 = vand.u32 %v949, 127
        %vm951 = vcmp.lt.s32.totalorder %v950, 9
        %v952 = vsel %vm951, %v941, -1e+30
        %v953 = vsel %vm951, %v942, -1e+30
        %v954 = vsel %vm951, %v943, -1e+30
        %v955 = vsel %vm951, %v944, -1e+30
        %v956 = vsel %vm951, %v945, -1e+30
        %v957 = vsel %vm951, %v946, -1e+30
        %v958 = vsel %vm951, %v947, -1e+30
        %v959 = vsel %vm951, %v948, -1e+30
        %vm960 = vcmask 130048
        %v961 = vsel %vm960, %v952, -inf
        %962 = vmax.xlane.f32.xlu0 %v961
        %v963 = vpop.xlane.xlu0 %962
        %v964 = vsel %vm960, %v953, -inf
        %965 = vmax.xlane.f32.xlu0 %v964
        %v966 = vpop.xlane.xlu0 %965
        %v967 = vsel %vm960, %v954, -inf
        %968 = vmax.xlane.f32.xlu0 %v967
        %v969 = vpop.xlane.xlu0 %968
        %v970 = vsel %vm960, %v955, -inf
        %971 = vmax.xlane.f32.xlu0 %v970
        %v972 = vpop.xlane.xlu0 %971
        %v973 = vsel %vm960, %v956, -inf
        %974 = vmax.xlane.f32.xlu0 %v973
        %v975 = vpop.xlane.xlu0 %974
        %v976 = vsel %vm960, %v957, -inf
        %977 = vmax.xlane.f32.xlu0 %v976
        %v978 = vpop.xlane.xlu0 %977
        %v979 = vsel %vm960, %v958, -inf
        %980 = vmax.xlane.f32.xlu0 %v979
        %v981 = vpop.xlane.xlu0 %980
        %v982 = vsel %vm960, %v959, -inf
        %983 = vmax.xlane.f32.xlu0 %v982
        %v984 = vpop.xlane.xlu0 %983
        %v985 = vsub.f32 %v952, %v963
        %v986 = vsub.f32 %v953, %v966
        %v987 = vsub.f32 %v954, %v969
        %v988 = vsub.f32 %v955, %v972
        %v989 = vsub.f32 %v956, %v975
        %v990 = vsub.f32 %v957, %v978
        %v991 = vsub.f32 %v958, %v981
        %v992 = vsub.f32 %v959, %v984
        %v993 = vmul.f32 %v985, 1.442695
        %v994 = vpow.pop %v993
        %v995 = vmul.f32 %v986, 1.442695
        %v996 = vpow.pop %v995
        %v997 = vmul.f32 %v987, 1.442695
        %v998 = vpow.pop %v997
        %v999 = vmul.f32 %v988, 1.442695
        %v1000 = vpow.pop %v999
        %v1001 = vmul.f32 %v989, 1.442695
        %v1002 = vpow.pop %v1001
        %v1003 = vmul.f32 %v990, 1.442695
        %v1004 = vpow.pop %v1003
        %v1005 = vmul.f32 %v991, 1.442695
        %v1006 = vpow.pop %v1005
        %v1007 = vmul.f32 %v992, 1.442695
        %v1008 = vpow.pop %v1007
        %v1009 = vsel %vm960, %v994, 0.0
        %1010 = vadd.xlane.f32.xlu0 %v1009
        %v1011 = vpop.xlane.xlu0 %1010
        %v1012 = vsel %vm960, %v996, 0.0
        %1013 = vadd.xlane.f32.xlu0 %v1012
        %v1014 = vpop.xlane.xlu0 %1013
        %v1015 = vsel %vm960, %v998, 0.0
        %1016 = vadd.xlane.f32.xlu0 %v1015
        %v1017 = vpop.xlane.xlu0 %1016
        %v1018 = vsel %vm960, %v1000, 0.0
        %1019 = vadd.xlane.f32.xlu0 %v1018
        %v1020 = vpop.xlane.xlu0 %1019
        %v1021 = vsel %vm960, %v1002, 0.0
        %1022 = vadd.xlane.f32.xlu0 %v1021
        %v1023 = vpop.xlane.xlu0 %1022
        %v1024 = vsel %vm960, %v1004, 0.0
        %1025 = vadd.xlane.f32.xlu0 %v1024
        %v1026 = vpop.xlane.xlu0 %1025
        %v1027 = vsel %vm960, %v1006, 0.0
        %1028 = vadd.xlane.f32.xlu0 %v1027
        %v1029 = vpop.xlane.xlu0 %1028
        %v1030 = vsel %vm960, %v1008, 0.0
        %1031 = vadd.xlane.f32.xlu0 %v1030
        %v1032 = vpop.xlane.xlu0 %1031
        %v1033 = vrcp.pop %v1011
        %v1034 = vrcp.pop %v1014
        %v1035 = vrcp.pop %v1017
        %v1036 = vrcp.pop %v1020
        %v1037 = vrcp.pop %v1023
        %v1038 = vrcp.pop %v1026
        %v1039 = vrcp.pop %v1029
        %v1040 = vrcp.pop %v1032
        %v1041 = vmul.f32 %v994, %v1033
        %v1042 = vmul.f32 %v996, %v1034
        %v1043 = vmul.f32 %v998, %v1035
        %v1044 = vmul.f32 %v1000, %v1036
        %v1045 = vmul.f32 %v1002, %v1037
        %v1046 = vmul.f32 %v1004, %v1038
        %v1047 = vmul.f32 %v1006, %v1039
        %v1048 = vmul.f32 %v1008, %v1040
        %v1049 = vpack.c.bf16 %v1042, %v1041
        %v1050 = vpack.c.bf16 %v1044, %v1043
        %v1051 = vpack.c.bf16 %v1046, %v1045
        %v1052 = vpack.c.bf16 %v1048, %v1047
        %1053 = vrot.lane.b32.xlu0 %v736, 64
        %v1054 = vpop.permute.xlu0 %1053
        %v1057 = vsel %vm960, %v1049, 0
        %1059 = vmatprep.subr.bf16.mxu0 0
        %1060 = vmatpush1.bf16.msra.mxu0 %v1054
        %1061 = vmatprep.subr.bf16.mxu0 0
        %1062 = vmatpush1.bf16.msra.mxu0 0
        %1063 = vmatprep.subr.bf16.mxu0 0
        %1064 = vmatpush1.bf16.msra.mxu0 0
        %1065 = vmatprep.subr.bf16.mxu0 0
        %1066 = vmatpush1.bf16.msra.mxu0 0
        %1067 = vmatprep.subr.bf16.mxu0 0
        %1068 = vmatpush1.bf16.msra.mxu0 0
        %1069 = vmatprep.subr.bf16.mxu0 0
        %1070 = vmatpush1.bf16.msra.mxu0 0
        %1071 = vmatprep.subr.bf16.mxu0 0
        %1072 = vmatpush1.bf16.msra.mxu0 0
        %1073 = vmatprep.subr.bf16.mxu0 0
        %1074 = vmatpush1.bf16.msra.mxu0 0
        %1075 = vmatprep.subr.bf16.mxu0 0
        %1076 = vmatpush1.bf16.msra.mxu0 0
        %1077 = vmatprep.subr.bf16.mxu0 0
        %1078 = vmatpush1.bf16.msra.mxu0 0
        %1079 = vmatprep.subr.bf16.mxu0 0
        %1080 = vmatpush1.bf16.msra.mxu0 0
        %1081 = vmatprep.subr.bf16.mxu0 0
        %1082 = vmatpush1.bf16.msra.mxu0 0
        %1083 = vmatprep.subr.bf16.mxu0 0
        %1084 = vmatpush1.bf16.msra.mxu0 0
        %1085 = vmatprep.subr.bf16.mxu0 0
        %1086 = vmatpush1.bf16.msra.mxu0 0
        %1087 = vmatprep.subr.bf16.mxu0 0
        %1088 = vmatpush1.bf16.msra.mxu0 0
        %1089 = vmatprep.subr.bf16.mxu0 0
        %1090 = vmatpush1.bf16.msra.mxu0 0
        %1091 = vmatprep.mubr.bf16.mxu0 0
        %1092 = vmatmul.mubr.bf16.gmra.mrb[0].mxu0 %v1057
        %v1093 = vpop.f32.mrb[0].mxu0
        %v1094 = vadd.f32 0.0, %v1093
        %v1095 = vpop.f32.mrb[0].mxu0
        %v1096 = vpop.f32.mrb[0].mxu0
        %v1097 = vadd.f32 0.0, %v1096
        %v1098 = vpop.f32.mrb[0].mxu0
        %1099 = vdwg.mxu0
        %1100 = vrot.lane.b32.xlu0 %v739, 64
        %v1101 = vpop.permute.xlu0 %1100
        %v1104 = vsel %vm960, %v1050, 0
        %1106 = vmatprep.subr.bf16.mxu0 0
        %1107 = vmatpush1.bf16.msra.mxu0 %v1101
        %1108 = vmatprep.subr.bf16.mxu0 0
        %1109 = vmatpush1.bf16.msra.mxu0 0
        %1110 = vmatprep.subr.bf16.mxu0 0
        %1111 = vmatpush1.bf16.msra.mxu0 0
        %1112 = vmatprep.subr.bf16.mxu0 0
        %1113 = vmatpush1.bf16.msra.mxu0 0
        %1114 = vmatprep.subr.bf16.mxu0 0
        %1115 = vmatpush1.bf16.msra.mxu0 0
        %1116 = vmatprep.subr.bf16.mxu0 0
        %1117 = vmatpush1.bf16.msra.mxu0 0
        %1118 = vmatprep.subr.bf16.mxu0 0
        %1119 = vmatpush1.bf16.msra.mxu0 0
        %1120 = vmatprep.subr.bf16.mxu0 0
        %1121 = vmatpush1.bf16.msra.mxu0 0
        %1122 = vmatprep.subr.bf16.mxu0 0
        %1123 = vmatpush1.bf16.msra.mxu0 0
        %1124 = vmatprep.subr.bf16.mxu0 0
        %1125 = vmatpush1.bf16.msra.mxu0 0
        %1126 = vmatprep.subr.bf16.mxu0 0
        %1127 = vmatpush1.bf16.msra.mxu0 0
        %1128 = vmatprep.subr.bf16.mxu0 0
        %1129 = vmatpush1.bf16.msra.mxu0 0
        %1130 = vmatprep.subr.bf16.mxu0 0
        %1131 = vmatpush1.bf16.msra.mxu0 0
        %1132 = vmatprep.subr.bf16.mxu0 0
        %1133 = vmatpush1.bf16.msra.mxu0 0
        %1134 = vmatprep.subr.bf16.mxu0 0
        %1135 = vmatpush1.bf16.msra.mxu0 0
        %1136 = vmatprep.subr.bf16.mxu0 0
        %1137 = vmatpush1.bf16.msra.mxu0 0
        %1138 = vmatprep.mubr.bf16.mxu0 0
        %1139 = vmatmul.mubr.bf16.gmra.mrb[0].mxu0 %v1104
        %v1140 = vpop.f32.mrb[0].mxu0
        %v1141 = vadd.f32 0.0, %v1140
        %v1142 = vpop.f32.mrb[0].mxu0
        %v1143 = vpop.f32.mrb[0].mxu0
        %v1144 = vadd.f32 0.0, %v1143
        %v1145 = vpop.f32.mrb[0].mxu0
        %1146 = vdwg.mxu0
        %1147 = vrot.lane.b32.xlu0 %v741, 64
        %v1148 = vpop.permute.xlu0 %1147
        %v1151 = vsel %vm960, %v1051, 0
        %1153 = vmatprep.subr.bf16.mxu0 0
        %1154 = vmatpush1.bf16.msra.mxu0 %v1148
        %1155 = vmatprep.subr.bf16.mxu0 0
        %1156 = vmatpush1.bf16.msra.mxu0 0
        %1157 = vmatprep.subr.bf16.mxu0 0
        %1158 = vmatpush1.bf16.msra.mxu0 0
        %1159 = vmatprep.subr.bf16.mxu0 0
        %1160 = vmatpush1.bf16.msra.mxu0 0
        %1161 = vmatprep.subr.bf16.mxu0 0
        %1162 = vmatpush1.bf16.msra.mxu0 0
        %1163 = vmatprep.subr.bf16.mxu0 0
        %1164 = vmatpush1.bf16.msra.mxu0 0
        %1165 = vmatprep.subr.bf16.mxu0 0
        %1166 = vmatpush1.bf16.msra.mxu0 0
        %1167 = vmatprep.subr.bf16.mxu0 0
        %1168 = vmatpush1.bf16.msra.mxu0 0
        %1169 = vmatprep.subr.bf16.mxu0 0
        %1170 = vmatpush1.bf16.msra.mxu0 0
        %1171 = vmatprep.subr.bf16.mxu0 0
        %1172 = vmatpush1.bf16.msra.mxu0 0
        %1173 = vmatprep.subr.bf16.mxu0 0
        %1174 = vmatpush1.bf16.msra.mxu0 0
        %1175 = vmatprep.subr.bf16.mxu0 0
        %1176 = vmatpush1.bf16.msra.mxu0 0
        %1177 = vmatprep.subr.bf16.mxu0 0
        %1178 = vmatpush1.bf16.msra.mxu0 0
        %1179 = vmatprep.subr.bf16.mxu0 0
        %1180 = vmatpush1.bf16.msra.mxu0 0
        %1181 = vmatprep.subr.bf16.mxu0 0
        %1182 = vmatpush1.bf16.msra.mxu0 0
        %1183 = vmatprep.subr.bf16.mxu0 0
        %1184 = vmatpush1.bf16.msra.mxu0 0
        %1185 = vmatprep.mubr.bf16.mxu0 0
        %1186 = vmatmul.mubr.bf16.gmra.mrb[0].mxu0 %v1151
        %v1187 = vpop.f32.mrb[0].mxu0
        %v1188 = vadd.f32 0.0, %v1187
        %v1189 = vpop.f32.mrb[0].mxu0
        %v1190 = vpop.f32.mrb[0].mxu0
        %v1191 = vadd.f32 0.0, %v1190
        %v1192 = vpop.f32.mrb[0].mxu0
        %1193 = vdwg.mxu0
        %1194 = vrot.lane.b32.xlu0 %v743, 64
        %v1195 = vpop.permute.xlu0 %1194
        %v1198 = vsel %vm960, %v1052, 0
        %1200 = vmatprep.subr.bf16.mxu0 0
        %1201 = vmatpush1.bf16.msra.mxu0 %v1195
        %1202 = vmatprep.subr.bf16.mxu0 0
        %1203 = vmatpush1.bf16.msra.mxu0 0
        %1204 = vmatprep.subr.bf16.mxu0 0
        %1205 = vmatpush1.bf16.msra.mxu0 0
        %1206 = vmatprep.subr.bf16.mxu0 0
        %1207 = vmatpush1.bf16.msra.mxu0 0
        %1208 = vmatprep.subr.bf16.mxu0 0
        %1209 = vmatpush1.bf16.msra.mxu0 0
        %1210 = vmatprep.subr.bf16.mxu0 0
        %1211 = vmatpush1.bf16.msra.mxu0 0
        %1212 = vmatprep.subr.bf16.mxu0 0
        %1213 = vmatpush1.bf16.msra.mxu0 0
        %1214 = vmatprep.subr.bf16.mxu0 0
        %1215 = vmatpush1.bf16.msra.mxu0 0
        %1216 = vmatprep.subr.bf16.mxu0 0
        %1217 = vmatpush1.bf16.msra.mxu0 0
        %1218 = vmatprep.subr.bf16.mxu0 0
        %1219 = vmatpush1.bf16.msra.mxu0 0
        %1220 = vmatprep.subr.bf16.mxu0 0
        %1221 = vmatpush1.bf16.msra.mxu0 0
        %1222 = vmatprep.subr.bf16.mxu0 0
        %1223 = vmatpush1.bf16.msra.mxu0 0
        %1224 = vmatprep.subr.bf16.mxu0 0
        %1225 = vmatpush1.bf16.msra.mxu0 0
        %1226 = vmatprep.subr.bf16.mxu0 0
        %1227 = vmatpush1.bf16.msra.mxu0 0
        %1228 = vmatprep.subr.bf16.mxu0 0
        %1229 = vmatpush1.bf16.msra.mxu0 0
        %1230 = vmatprep.subr.bf16.mxu0 0
        %1231 = vmatpush1.bf16.msra.mxu0 0
        %1232 = vmatprep.mubr.bf16.mxu0 0
        %1233 = vmatmul.mubr.bf16.gmra.mrb[0].mxu0 %v1198
        %v1234 = vpop.f32.mrb[0].mxu0
        %v1235 = vadd.f32 0.0, %v1234
        %v1236 = vpop.f32.mrb[0].mxu0
        %v1237 = vpop.f32.mrb[0].mxu0
        %v1238 = vadd.f32 0.0, %v1237
        %v1239 = vpop.f32.mrb[0].mxu0
        %1240 = vdwg.mxu0
        %v1241 = vpack.c.bf16 %v1097, %v1094
        %v1242 = vpack.c.bf16 %v1144, %v1141
        %v1243 = vpack.c.bf16 %v1191, %v1188
        %v1244 = vpack.c.bf16 %v1238, %v1235
        %v1245 = vld [vmem:[#allocation8] sm:$0xf]
        %v1246 = vld [vmem:[#allocation8 + $0x4] sm:$0xf]
        %v1247 = vld [vmem:[#allocation8 + $0x8] sm:$0xf]
        %v1248 = vld [vmem:[#allocation8 + $0xc] sm:$0xf]
        %v1250 = vsel %vm746, %v1241, 0
        %vm1252 = vcmask 1043456
        %v1254 = vsel %vm1252, %v1245, 0
        %1256 = vmatprep.subr.bf16.mxu0 0
        %1257 = vmatpush1.bf16.msra.mxu0 %v1254
        %1258 = vmatprep.subr.bf16.mxu0 0
        %1259 = vmatpush1.bf16.msra.mxu0 0
        %1260 = vmatprep.subr.bf16.mxu0 0
        %1261 = vmatpush1.bf16.msra.mxu0 0
        %1262 = vmatprep.subr.bf16.mxu0 0
        %1263 = vmatpush1.bf16.msra.mxu0 0
        %1264 = vmatprep.subr.bf16.mxu0 0
        %1265 = vmatpush1.bf16.msra.mxu0 0
        %1266 = vmatprep.subr.bf16.mxu0 0
        %1267 = vmatpush1.bf16.msra.mxu0 0
        %1268 = vmatprep.subr.bf16.mxu0 0
        %1269 = vmatpush1.bf16.msra.mxu0 0
        %1270 = vmatprep.subr.bf16.mxu0 0
        %1271 = vmatpush1.bf16.msra.mxu0 0
        %1272 = vmatprep.subr.bf16.mxu0 0
        %1273 = vmatpush1.bf16.msra.mxu0 0
        %1274 = vmatprep.subr.bf16.mxu0 0
        %1275 = vmatpush1.bf16.msra.mxu0 0
        %1276 = vmatprep.subr.bf16.mxu0 0
        %1277 = vmatpush1.bf16.msra.mxu0 0
        %1278 = vmatprep.subr.bf16.mxu0 0
        %1279 = vmatpush1.bf16.msra.mxu0 0
        %1280 = vmatprep.subr.bf16.mxu0 0
        %1281 = vmatpush1.bf16.msra.mxu0 0
        %1282 = vmatprep.subr.bf16.mxu0 0
        %1283 = vmatpush1.bf16.msra.mxu0 0
        %1284 = vmatprep.subr.bf16.mxu0 0
        %1285 = vmatpush1.bf16.msra.mxu0 0
        %1286 = vmatprep.subr.bf16.mxu0 0
        %1287 = vmatpush1.bf16.msra.mxu0 0
        %1288 = vmatprep.mubr.bf16.mxu0 0
        %1289 = vmatmul.mubr.bf16.gmra.mrb[0].mxu0 %v1250
        %v1290 = vpop.f32.mrb[0].mxu0
        %v1291 = vadd.f32 0.0, %v1290
        %v1292 = vpop.f32.mrb[0].mxu0
        %v1293 = vpop.f32.mrb[0].mxu0
        %v1294 = vadd.f32 0.0, %v1293
        %v1295 = vpop.f32.mrb[0].mxu0
        %1296 = vdwg.mxu0
        %v1298 = vsel %vm746, %v1242, 0
        %v1301 = vsel %vm1252, %v1246, 0
        %1303 = vmatprep.subr.bf16.mxu0 0
        %1304 = vmatpush1.bf16.msra.mxu0 %v1301
        %1305 = vmatprep.subr.bf16.mxu0 0
        %1306 = vmatpush1.bf16.msra.mxu0 0
        %1307 = vmatprep.subr.bf16.mxu0 0
        %1308 = vmatpush1.bf16.msra.mxu0 0
        %1309 = vmatprep.subr.bf16.mxu0 0
        %1310 = vmatpush1.bf16.msra.mxu0 0
        %1311 = vmatprep.subr.bf16.mxu0 0
        %1312 = vmatpush1.bf16.msra.mxu0 0
        %1313 = vmatprep.subr.bf16.mxu0 0
        %1314 = vmatpush1.bf16.msra.mxu0 0
        %1315 = vmatprep.subr.bf16.mxu0 0
        %1316 = vmatpush1.bf16.msra.mxu0 0
        %1317 = vmatprep.subr.bf16.mxu0 0
        %1318 = vmatpush1.bf16.msra.mxu0 0
        %1319 = vmatprep.subr.bf16.mxu0 0
        %1320 = vmatpush1.bf16.msra.mxu0 0
        %1321 = vmatprep.subr.bf16.mxu0 0
        %1322 = vmatpush1.bf16.msra.mxu0 0
        %1323 = vmatprep.subr.bf16.mxu0 0
        %1324 = vmatpush1.bf16.msra.mxu0 0
        %1325 = vmatprep.subr.bf16.mxu0 0
        %1326 = vmatpush1.bf16.msra.mxu0 0
        %1327 = vmatprep.subr.bf16.mxu0 0
        %1328 = vmatpush1.bf16.msra.mxu0 0
        %1329 = vmatprep.subr.bf16.mxu0 0
        %1330 = vmatpush1.bf16.msra.mxu0 0
        %1331 = vmatprep.subr.bf16.mxu0 0
        %1332 = vmatpush1.bf16.msra.mxu0 0
        %1333 = vmatprep.subr.bf16.mxu0 0
        %1334 = vmatpush1.bf16.msra.mxu0 0
        %1335 = vmatprep.mubr.bf16.mxu0 0
        %1336 = vmatmul.mubr.bf16.gmra.mrb[0].mxu0 %v1298
        %v1337 = vpop.f32.mrb[0].mxu0
        %v1338 = vadd.f32 0.0, %v1337
        %v1339 = vpop.f32.mrb[0].mxu0
        %v1340 = vpop.f32.mrb[0].mxu0
        %v1341 = vadd.f32 0.0, %v1340
        %v1342 = vpop.f32.mrb[0].mxu0
        %1343 = vdwg.mxu0
        %v1345 = vsel %vm746, %v1243, 0
        %v1348 = vsel %vm1252, %v1247, 0
        %1350 = vmatprep.subr.bf16.mxu0 0
        %1351 = vmatpush1.bf16.msra.mxu0 %v1348
        %1352 = vmatprep.subr.bf16.mxu0 0
        %1353 = vmatpush1.bf16.msra.mxu0 0
        %1354 = vmatprep.subr.bf16.mxu0 0
        %1355 = vmatpush1.bf16.msra.mxu0 0
        %1356 = vmatprep.subr.bf16.mxu0 0
        %1357 = vmatpush1.bf16.msra.mxu0 0
        %1358 = vmatprep.subr.bf16.mxu0 0
        %1359 = vmatpush1.bf16.msra.mxu0 0
        %1360 = vmatprep.subr.bf16.mxu0 0
        %1361 = vmatpush1.bf16.msra.mxu0 0
        %1362 = vmatprep.subr.bf16.mxu0 0
        %1363 = vmatpush1.bf16.msra.mxu0 0
        %1364 = vmatprep.subr.bf16.mxu0 0
        %1365 = vmatpush1.bf16.msra.mxu0 0
        %1366 = vmatprep.subr.bf16.mxu0 0
        %1367 = vmatpush1.bf16.msra.mxu0 0
        %1368 = vmatprep.subr.bf16.mxu0 0
        %1369 = vmatpush1.bf16.msra.mxu0 0
        %1370 = vmatprep.subr.bf16.mxu0 0
        %1371 = vmatpush1.bf16.msra.mxu0 0
        %1372 = vmatprep.subr.bf16.mxu0 0
        %1373 = vmatpush1.bf16.msra.mxu0 0
        %1374 = vmatprep.subr.bf16.mxu0 0
        %1375 = vmatpush1.bf16.msra.mxu0 0
        %1376 = vmatprep.subr.bf16.mxu0 0
        %1377 = vmatpush1.bf16.msra.mxu0 0
        %1378 = vmatprep.subr.bf16.mxu0 0
        %1379 = vmatpush1.bf16.msra.mxu0 0
        %1380 = vmatprep.subr.bf16.mxu0 0
        %1381 = vmatpush1.bf16.msra.mxu0 0
        %1382 = vmatprep.mubr.bf16.mxu0 0
        %1383 = vmatmul.mubr.bf16.gmra.mrb[0].mxu0 %v1345
        %v1384 = vpop.f32.mrb[0].mxu0
        %v1385 = vadd.f32 0.0, %v1384
        %v1386 = vpop.f32.mrb[0].mxu0
        %v1387 = vpop.f32.mrb[0].mxu0
        %v1388 = vadd.f32 0.0, %v1387
        %v1389 = vpop.f32.mrb[0].mxu0
        %1390 = vdwg.mxu0
        %v1392 = vsel %vm746, %v1244, 0
        %v1395 = vsel %vm1252, %v1248, 0
        %1397 = vmatprep.subr.bf16.mxu0 0
        %1398 = vmatpush1.bf16.msra.mxu0 %v1395
        %1399 = vmatprep.subr.bf16.mxu0 0
        %1400 = vmatpush1.bf16.msra.mxu0 0
        %1401 = vmatprep.subr.bf16.mxu0 0
        %1402 = vmatpush1.bf16.msra.mxu0 0
        %1403 = vmatprep.subr.bf16.mxu0 0
        %1404 = vmatpush1.bf16.msra.mxu0 0
        %1405 = vmatprep.subr.bf16.mxu0 0
        %1406 = vmatpush1.bf16.msra.mxu0 0
        %1407 = vmatprep.subr.bf16.mxu0 0
        %1408 = vmatpush1.bf16.msra.mxu0 0
        %1409 = vmatprep.subr.bf16.mxu0 0
        %1410 = vmatpush1.bf16.msra.mxu0 0
        %1411 = vmatprep.subr.bf16.mxu0 0
        %1412 = vmatpush1.bf16.msra.mxu0 0
        %1413 = vmatprep.subr.bf16.mxu0 0
        %1414 = vmatpush1.bf16.msra.mxu0 0
        %1415 = vmatprep.subr.bf16.mxu0 0
        %1416 = vmatpush1.bf16.msra.mxu0 0
        %1417 = vmatprep.subr.bf16.mxu0 0
        %1418 = vmatpush1.bf16.msra.mxu0 0
        %1419 = vmatprep.subr.bf16.mxu0 0
        %1420 = vmatpush1.bf16.msra.mxu0 0
        %1421 = vmatprep.subr.bf16.mxu0 0
        %1422 = vmatpush1.bf16.msra.mxu0 0
        %1423 = vmatprep.subr.bf16.mxu0 0
        %1424 = vmatpush1.bf16.msra.mxu0 0
        %1425 = vmatprep.subr.bf16.mxu0 0
        %1426 = vmatpush1.bf16.msra.mxu0 0
        %1427 = vmatprep.subr.bf16.mxu0 0
        %1428 = vmatpush1.bf16.msra.mxu0 0
        %1429 = vmatprep.mubr.bf16.mxu0 0
        %1430 = vmatmul.mubr.bf16.gmra.mrb[0].mxu0 %v1392
        %v1431 = vpop.f32.mrb[0].mxu0
        %v1432 = vadd.f32 0.0, %v1431
        %v1433 = vpop.f32.mrb[0].mxu0
        %v1434 = vpop.f32.mrb[0].mxu0
        %v1435 = vadd.f32 0.0, %v1434
        %v1436 = vpop.f32.mrb[0].mxu0
        %1437 = vdwg.mxu0
        %v1438 = vsel %vm624, %v1291, 0.0
        %v1439 = vsel %vm624, %v1338, 0.0
        %v1440 = vadd.f32 %v1438, %v1439
        %v1441 = vsel %vm624, %v1385, 0.0
        %v1442 = vadd.f32 %v1440, %v1441
        %v1443 = vsel %vm624, %v1432, 0.0
        %v1444 = vadd.f32 %v1442, %v1443
        %v1445 = vsel %vm624, %v1294, 0.0
        %v1446 = vsel %vm624, %v1341, 0.0
        %v1447 = vadd.f32 %v1445, %v1446
        %v1448 = vsel %vm624, %v1388, 0.0
        %v1449 = vadd.f32 %v1447, %v1448
        %v1450 = vsel %vm624, %v1435, 0.0
        %v1451 = vadd.f32 %v1449, %v1450
        %v1452 = vld [vmem:[#allocation10] sm:$0x1]
        %v1454 = vlaneseq
        %v1455 = vshrl.u32 %v1454, 7
        %v1456 = vsub.s32 0, %v1455
        %v1457 = vrot.slane %v1452, %v1456
        %v1459 = vadd.f32 %v1444, %v1457
        %v1460 = vadd.f32 %v1451, %v1457
        %v1461 = vadd.f32 %v620, %v1459
        %v1462 = vadd.f32 %v621, %v1460
        %v1463 = vld [vmem:[#allocation14] sm:$0x1]
        %v1464 = vld [vmem:[#allocation16] sm:$0x1]
        %v1465 = vsel %vm624, %v1461, 0.0
        %1466 = vadd.xlane.f32.xlu0 %v1465
        %v1467 = vpop.xlane.xlu0 %1466
        %v1468 = vsel %vm624, %v1462, 0.0
        %1469 = vadd.xlane.f32.xlu0 %v1468
        %v1470 = vpop.xlane.xlu0 %1469
        %v1471 = vmul.f32 %v1467, %v631
        %v1472 = vmul.f32 %v1470, %v631
        %v1473 = vsub.f32 %v1461, %v1471
        %v1474 = vsub.f32 %v1462, %v1472
        %v1475 = vmul.f32 %v1473, %v1473
        %v1476 = vmul.f32 %v1474, %v1474
        %v1477 = vsel %vm624, %v1475, 0.0
        %1478 = vadd.xlane.f32.xlu0 %v1477
        %v1479 = vpop.xlane.xlu0 %1478
        %v1480 = vsel %vm624, %v1476, 0.0
        %1481 = vadd.xlane.f32.xlu0 %v1480
        %v1482 = vpop.xlane.xlu0 %1481
        %v1483 = vmul.f32 %v1479, %v631
        %v1484 = vmul.f32 %v1482, %v631
        %v1485 = vadd.f32 %v1483, 1e-06
        %v1486 = vadd.f32 %v1484, 1e-06
        %v1487 = vrsqrt.pop %v1485
        %v1488 = vrsqrt.pop %v1486
        %v1489 = vmul.f32 %v1473, %v1487
        %v1490 = vmul.f32 %v1474, %v1488
        %v1492 = vlaneseq
        %v1493 = vshrl.u32 %v1492, 7
        %v1494 = vsub.s32 0, %v1493
        %v1495 = vrot.slane %v1463, %v1494
        %v1497 = vmul.f32 %v1489, %v1495
        %v1498 = vmul.f32 %v1490, %v1495
        %v1500 = vlaneseq
        %v1501 = vshrl.u32 %v1500, 7
        %v1502 = vsub.s32 0, %v1501
        %v1503 = vrot.slane %v1464, %v1502
        %v1505 = vadd.f32 %v1497, %v1503
        %v1506 = vadd.f32 %v1498, %v1503
        %v1507 = vpack.c.bf16 %v1506, %v1505
        %v1508 = vld [vmem:[#allocation17] sm:$0xf]
        %v1509 = vld [vmem:[#allocation17 + $0x4] sm:$0xf]
        %v1510 = vld [vmem:[#allocation17 + $0x8] sm:$0xf]
        %v1511 = vld [vmem:[#allocation17 + $0xc] sm:$0xf]
        %v1512 = vld [vmem:[#allocation19] sm:$0x1]
        %v1514 = vlaneseq
        %v1515 = vshrl.u32 %v1514, 7
        %v1516 = vsub.s32 0, %v1515
        %v1517 = vrot.slane %v1512, %v1516
        %v1523 = vunpack.c.l.b16 %v1508
        %v1524 = vunpack.c.l.b16 %v1509
        %v1525 = vunpack.c.l.b16 %v1510
        %v1526 = vunpack.c.l.b16 %v1511
        %v1527 = vpack.c.b16 %v1524, %v1523
        %v1528 = vpack.c.b16 %v1526, %v1525
        %v1532 = vsel %vm624, %v1507, 0
        %1534 = vmatprep.subr.bf16.mxu0 0
        %1535 = vmatpush1.bf16.msra.mxu0 %v1527
        %1536 = vmatprep.subr.bf16.mxu0 0
        %1537 = vmatpush1.bf16.msra.mxu0 %v1528
        %1538 = vmatprep.subr.bf16.mxu0 0
        %1539 = vmatpush1.bf16.msra.mxu0 0
        %1540 = vmatprep.subr.bf16.mxu0 0
        %1541 = vmatpush1.bf16.msra.mxu0 0
        %1542 = vmatprep.subr.bf16.mxu0 0
        %1543 = vmatpush1.bf16.msra.mxu0 0
        %1544 = vmatprep.subr.bf16.mxu0 0
        %1545 = vmatpush1.bf16.msra.mxu0 0
        %1546 = vmatprep.subr.bf16.mxu0 0
        %1547 = vmatpush1.bf16.msra.mxu0 0
        %1548 = vmatprep.subr.bf16.mxu0 0
        %1549 = vmatpush1.bf16.msra.mxu0 0
        %1550 = vmatprep.subr.bf16.mxu0 0
        %1551 = vmatpush1.bf16.msra.mxu0 0
        %1552 = vmatprep.subr.bf16.mxu0 0
        %1553 = vmatpush1.bf16.msra.mxu0 0
        %1554 = vmatprep.subr.bf16.mxu0 0
        %1555 = vmatpush1.bf16.msra.mxu0 0
        %1556 = vmatprep.subr.bf16.mxu0 0
        %1557 = vmatpush1.bf16.msra.mxu0 0
        %1558 = vmatprep.subr.bf16.mxu0 0
        %1559 = vmatpush1.bf16.msra.mxu0 0
        %1560 = vmatprep.subr.bf16.mxu0 0
        %1561 = vmatpush1.bf16.msra.mxu0 0
        %1562 = vmatprep.subr.bf16.mxu0 0
        %1563 = vmatpush1.bf16.msra.mxu0 0
        %1564 = vmatprep.subr.bf16.mxu0 0
        %1565 = vmatpush1.bf16.msra.mxu0 0
        %1566 = vmatprep.mubr.bf16.mxu0 0
        %1567 = vmatmul.mubr.bf16.gmra.mrb[0].mxu0 %v1532
        %v1568 = vpop.f32.mrb[0].mxu0
        %v1569 = vadd.f32 %v1517, %v1568
        %v1570 = vpop.f32.mrb[0].mxu0
        %v1571 = vpop.f32.mrb[0].mxu0
        %v1572 = vadd.f32 %v1517, %v1571
        %v1573 = vpop.f32.mrb[0].mxu0
        %1574 = vdwg.mxu0
        %v1575 = vmul.f32 %v1569, %v1569
        %v1576 = vmul.f32 %v1572, %v1572
        %v1577 = vmul.f32 %v1569, %v1575
        %v1578 = vmul.f32 %v1572, %v1576
        %v1579 = vmul.f32 %v1577, 0.044715
        %v1580 = vmul.f32 %v1578, 0.044715
        %v1581 = vadd.f32 %v1569, %v1579
        %v1582 = vadd.f32 %v1572, %v1580
        %v1583 = vmul.f32 %v1581, 0.7978846
        %v1584 = vmul.f32 %v1582, 0.7978846
        %v1585 = vtanh.pop %v1583
        %v1586 = vtanh.pop %v1584
        %v1587 = vadd.f32 %v1585, 1.0
        %v1588 = vadd.f32 %v1586, 1.0
        %v1589 = vmul.f32 %v1587, 0.5
        %v1590 = vmul.f32 %v1588, 0.5
        %v1591 = vmul.f32 %v1569, %v1589
        %v1592 = vmul.f32 %v1572, %v1590
        %v1593 = vpack.c.bf16 %v1592, %v1591
        %v1594 = vld [vmem:[#allocation20] sm:$0xf]
        %v1595 = vld [vmem:[#allocation20 + $0x4] sm:$0xf]
        %v1596 = vld [vmem:[#allocation20 + $0x8] sm:$0xf]
        %v1597 = vld [vmem:[#allocation20 + $0xc] sm:$0xf]
        %v1598 = vld [vmem:[#allocation20 + $0x10] sm:$0xf]
        %v1599 = vld [vmem:[#allocation20 + $0x14] sm:$0xf]
        %v1600 = vld [vmem:[#allocation20 + $0x18] sm:$0xf]
        %v1601 = vld [vmem:[#allocation20 + $0x1c] sm:$0xf]
        %v1602 = vld [vmem:[#allocation22] sm:$0x1]
        %v1604 = vlaneseq
        %v1605 = vshrl.u32 %v1604, 7
        %v1606 = vsub.s32 0, %v1605
        %v1607 = vrot.slane %v1602, %v1606
        %v1617 = vunpack.c.l.b16 %v1594
        %v1618 = vunpack.c.l.b16 %v1595
        %v1619 = vunpack.c.l.b16 %v1596
        %v1620 = vunpack.c.l.b16 %v1597
        %v1621 = vunpack.c.l.b16 %v1598
        %v1622 = vunpack.c.l.b16 %v1599
        %v1623 = vunpack.c.l.b16 %v1600
        %v1624 = vunpack.c.l.b16 %v1601
        %v1625 = vpack.c.b16 %v1618, %v1617
        %v1626 = vpack.c.b16 %v1620, %v1619
        %v1627 = vpack.c.b16 %v1622, %v1621
        %v1628 = vpack.c.b16 %v1624, %v1623
        %vm1633 = vcmask 523264
        %v1635 = vsel %vm1633, %v1593, 0
        %1637 = vmatprep.subr.bf16.mxu0 0
        %1638 = vmatpush1.bf16.msra.mxu0 %v1625
        %1639 = vmatprep.subr.bf16.mxu0 0
        %1640 = vmatpush1.bf16.msra.mxu0 %v1626
        %1641 = vmatprep.subr.bf16.mxu0 0
        %1642 = vmatpush1.bf16.msra.mxu0 %v1627
        %1643 = vmatprep.subr.bf16.mxu0 0
        %1644 = vmatpush1.bf16.msra.mxu0 %v1628
        %1645 = vmatprep.subr.bf16.mxu0 0
        %1646 = vmatpush1.bf16.msra.mxu0 0
        %1647 = vmatprep.subr.bf16.mxu0 0
        %1648 = vmatpush1.bf16.msra.mxu0 0
        %1649 = vmatprep.subr.bf16.mxu0 0
        %1650 = vmatpush1.bf16.msra.mxu0 0
        %1651 = vmatprep.subr.bf16.mxu0 0
        %1652 = vmatpush1.bf16.msra.mxu0 0
        %1653 = vmatprep.subr.bf16.mxu0 0
        %1654 = vmatpush1.bf16.msra.mxu0 0
        %1655 = vmatprep.subr.bf16.mxu0 0
        %1656 = vmatpush1.bf16.msra.mxu0 0
        %1657 = vmatprep.subr.bf16.mxu0 0
        %1658 = vmatpush1.bf16.msra.mxu0 0
        %1659 = vmatprep.subr.bf16.mxu0 0
        %1660 = vmatpush1.bf16.msra.mxu0 0
        %1661 = vmatprep.subr.bf16.mxu0 0
        %1662 = vmatpush1.bf16.msra.mxu0 0
        %1663 = vmatprep.subr.bf16.mxu0 0
        %1664 = vmatpush1.bf16.msra.mxu0 0
        %1665 = vmatprep.subr.bf16.mxu0 0
        %1666 = vmatpush1.bf16.msra.mxu0 0
        %1667 = vmatprep.subr.bf16.mxu0 0
        %1668 = vmatpush1.bf16.msra.mxu0 0
        %1669 = vmatprep.mubr.bf16.mxu0 0
        %1670 = vmatmul.mubr.bf16.gmra.mrb[0].mxu0 %v1635
        %v1671 = vpop.f32.mrb[0].mxu0
        %v1672 = vadd.f32 %v1607, %v1671
        %v1673 = vpop.f32.mrb[0].mxu0
        %v1674 = vpop.f32.mrb[0].mxu0
        %v1675 = vadd.f32 %v1607, %v1674
        %v1676 = vpop.f32.mrb[0].mxu0
        %1677 = vdwg.mxu0
        %v1678 = vadd.f32 %v1461, %v1672
        %v1679 = vadd.f32 %v1462, %v1675
        %v1680 = vpack.c.bf16 %v1679, %v1678
        %v1682 = vunpack.c.l.b16 %v1680
        %v1683 = vunpack.c.h.b16 %v1680
        %v1684 = vpack.c.b16 %v1682, %v1682
        %v1685 = vpack.c.b16 %v1683, %v1683
        %vm1688 = vcmask 257024
        %1689 = vst.msk [vmem:[%s616] sm:$0xf] %vm1688, %v1684
        %1690 = vst.msk [vmem:[%s616 + $0x4] sm:$0xf] %vm1688, %v1685
        %s1691 = sand.u32 %s322, 1
        %s1692 = scalar_lea.sflag [#allocation4], %s1691
        %s1693 = sand.u32 %s322, 1
        %s1694 = smul.addr %s1693, 8
        %s1695 = scalar_lea.vmem [#allocation23], %s1694
        // Predicated region
        $region125: #{_lambda_.9} parent=71 // pred_check
          %p1696 = pneg %p332
        $region126: #{_lambda_.9} parent=71 // pred_check_branch
          %1698 = sbr.rel (%p1696) target = $region128
        $region127: #{_lambda_.9} parent=71 // pred_region
          %s1700 = ssub.s32 128, 128
          %1701 = vsyncadd %s1692, %s1700
          %s1702 = smul.addr %s36, 2
          %s1703 = smul.addr %s1702, 64
          %s1704 = scalar_lea.hbm %s13, %s1703
          %s1705 = sshll.u32 %s1695, 4
          %s1706 = int_to_ptr.vmem [resolvable:$true] %s1705
          %1711 = dma.vmem_to_hbm [thread:$0]  %s1706, 128, %s1704, %s1692, 64, 64, 4
        $region128: #{_lambda_.9} parent=71 // pred_fallthru
          _
      $region72: #{_lambda_.9} parent=5 // pred_fallthru
        _
      %p1712 = scmp.le.s32.totalorder 2, %s31
      // Predicated region
      $region129: #{_lambda_.9} parent=5 // pred_check
        %p1713 = pneg %p1712
      $region130: #{_lambda_.9} parent=5 // pred_check_branch
        %1715 = sbr.rel (%p1713) target = $region132
      $region131: #{_lambda_.9} parent=5 // pred_region
        %s1716 = ssub.s32 %s31, 2
        // Predicated region
        $region133: #{_lambda_.9} parent=131 // pred_check
          %p1717 = pneg %p338
        $region134: #{_lambda_.9} parent=131 // pred_check_branch
          %1719 = sbr.rel (%p1717) target = $region136
        $region135: #{_lambda_.9} parent=131 // pred_region
          %s1720 = sand.u32 %s323, 1
          %s1721 = scalar_lea.sflag [#allocation4], %s1720
          %s1722 = sand.u32 %s323, 1
          %s1723 = smul.addr %s1722, 8
          %s1724 = scalar_lea.vmem [#allocation23], %s1723
          %1725 = dma.done %s1721, 128
        $region136: #{_lambda_.9} parent=131 // pred_fallthru
          _
      $region132: #{_lambda_.9} parent=5 // pred_fallthru
        _
    $region6: #{_lambda_.9} parent=1 // loop_footer
      %s35 = sadd.s32 1, %s31
    $region7: #{_lambda_.9} parent=1 // loop_footer_branch
      %30 = sbr.rel target = $region3
    $region8: #{_lambda_.9} parent=1 // loop_exit
      _
    %1726 = vsyncpa [#allocation3], 1
    %s1727 = scalar_lea.sflag [#allocation3], 1
    %1728 = vsyncpa %s1727, 1
    %1729 = vsyncpa [#allocation6], 1
    %1730 = vsyncpa [#allocation9], 1
    %1731 = vsyncpa [#allocation12], 1
    %1732 = vsyncpa [#allocation15], 1
    %1733 = vsyncpa [#allocation18], 1
    %1734 = vsyncpa [#allocation21], 1
    %1735 = vsyncpa [#allocation4], 1
    %s1736 = scalar_lea.sflag [#allocation4], 1
    %1737 = vsyncpa %s1736, 1

// kernel: _lambda_.14
$region0: #{_lambda_.14}
  #allocation0 [shape = 'u32[]', space=smem, size = 0x4, offset = 0x4, fixed_abs, tag = 'smem constant byte address 0x4 - core index']
  #allocation1 [shape = 'u32[144,128]{1,0:T(1,128)}', space=vmem, size = 0x12000, scoped, tag = 'internal scratch']
  %s0 = inlined_call_operand.vmem [shape: bf16[32,32], index: 0, kind: input, shape index: {}]
  %s1 = inlined_call_operand.vmem [shape: f32[1,32], index: 1, kind: input, shape index: {}]
  %s2 = inlined_call_operand.vmem [shape: f32[1,32], index: 2, kind: input, shape index: {}]
  %s3 = inlined_call_operand.vmem [shape: bf16[32,32], index: 3, kind: input, shape index: {}]
  %s4 = inlined_call_operand.vmem [shape: f32[1,32], index: 4, kind: input, shape index: {}]
  %s5 = inlined_call_operand.vmem [shape: f32[32,32], index: 5, kind: output, shape index: {}]
  %s6 = sld [smem:[#allocation0]]
  $region30: #{_lambda_.14} parent=0
    _
  %s8 = ssub.s32 1, %s6
  %s9 = scalar_select 0, %s8, %s6
  // Predicated region
  $region2: #{_lambda_.14} parent=0 // pred_check
    _
  $region3: #{_lambda_.14} parent=0 // pred_check_branch
    %11 = sbr.rel (0) target = $region5
  $region4: #{_lambda_.14} parent=0 // pred_region
    _
  $region5: #{_lambda_.14} parent=0 // pred_fallthru
    _
  // Predicated region
  $region6: #{_lambda_.14} parent=0 // pred_check
    _
  $region7: #{_lambda_.14} parent=0 // pred_check_branch
    %13 = sbr.rel (0) target = $region9
  $region8: #{_lambda_.14} parent=0 // pred_region
    _
  $region9: #{_lambda_.14} parent=0 // pred_fallthru
    _
  // Predicated region
  $region10: #{_lambda_.14} parent=0 // pred_check
    _
  $region11: #{_lambda_.14} parent=0 // pred_check_branch
    %15 = sbr.rel (0) target = $region13
  $region12: #{_lambda_.14} parent=0 // pred_region
    _
  $region13: #{_lambda_.14} parent=0 // pred_fallthru
    _
  // Predicated region
  $region14: #{_lambda_.14} parent=0 // pred_check
    _
  $region15: #{_lambda_.14} parent=0 // pred_check_branch
    %17 = sbr.rel (0) target = $region17
  $region16: #{_lambda_.14} parent=0 // pred_region
    _
  $region17: #{_lambda_.14} parent=0 // pred_fallthru
    _
  // Predicated region
  $region18: #{_lambda_.14} parent=0 // pred_check
    _
  $region19: #{_lambda_.14} parent=0 // pred_check_branch
    %19 = sbr.rel (0) target = $region21
  $region20: #{_lambda_.14} parent=0 // pred_region
    _
  $region21: #{_lambda_.14} parent=0 // pred_fallthru
    _
  %v21 = vld [vmem:[%s0] sm:$0xf]
  %v22 = vld [vmem:[%s0 + $0x4] sm:$0xf]
  %v23 = vld [vmem:[%s0 + $0x8] sm:$0xf]
  %v24 = vld [vmem:[%s0 + $0xc] sm:$0xf]
  %v25 = vunpack.c.l.bf16 %v21
  %v26 = vunpack.c.l.bf16 %v22
  %v27 = vunpack.c.l.bf16 %v23
  %v28 = vunpack.c.l.bf16 %v24
  %v29 = vld [vmem:[%s1] sm:$0x1]
  %v30 = vld [vmem:[%s2] sm:$0x1]
  %vm31 = vcmask 261120
  %v32 = vsel %vm31, %v25, 0.0
  %33 = vadd.xlane.f32.xlu0 %v32
  %v34 = vpop.xlane.xlu0 %33
  %v35 = vsel %vm31, %v26, 0.0
  %36 = vadd.xlane.f32.xlu0 %v35
  %v37 = vpop.xlane.xlu0 %36
  %v38 = vsel %vm31, %v27, 0.0
  %39 = vadd.xlane.f32.xlu0 %v38
  %v40 = vpop.xlane.xlu0 %39
  %v41 = vsel %vm31, %v28, 0.0
  %42 = vadd.xlane.f32.xlu0 %v41
  %v43 = vpop.xlane.xlu0 %42
  %v44 = vrcp.pop 32.0
  %v45 = vmul.f32 %v34, %v44
  %v46 = vmul.f32 %v37, %v44
  %v47 = vmul.f32 %v40, %v44
  %v48 = vmul.f32 %v43, %v44
  %v49 = vsub.f32 %v25, %v45
  %v50 = vsub.f32 %v26, %v46
  %v51 = vsub.f32 %v27, %v47
  %v52 = vsub.f32 %v28, %v48
  %v53 = vmul.f32 %v49, %v49
  %v54 = vmul.f32 %v50, %v50
  %v55 = vmul.f32 %v51, %v51
  %v56 = vmul.f32 %v52, %v52
  %v57 = vsel %vm31, %v53, 0.0
  %58 = vadd.xlane.f32.xlu0 %v57
  %v59 = vpop.xlane.xlu0 %58
  %v60 = vsel %vm31, %v54, 0.0
  %61 = vadd.xlane.f32.xlu0 %v60
  %v62 = vpop.xlane.xlu0 %61
  %v63 = vsel %vm31, %v55, 0.0
  %64 = vadd.xlane.f32.xlu0 %v63
  %v65 = vpop.xlane.xlu0 %64
  %v66 = vsel %vm31, %v56, 0.0
  %67 = vadd.xlane.f32.xlu0 %v66
  %v68 = vpop.xlane.xlu0 %67
  %v69 = vmul.f32 %v59, %v44
  %v70 = vmul.f32 %v62, %v44
  %v71 = vmul.f32 %v65, %v44
  %v72 = vmul.f32 %v68, %v44
  %v73 = vadd.f32 %v69, 1e-06
  %v74 = vadd.f32 %v70, 1e-06
  %v75 = vadd.f32 %v71, 1e-06
  %v76 = vadd.f32 %v72, 1e-06
  %v77 = vrsqrt.pop %v73
  %v78 = vrsqrt.pop %v74
  %v79 = vrsqrt.pop %v75
  %v80 = vrsqrt.pop %v76
  %v81 = vmul.f32 %v49, %v77
  %v82 = vmul.f32 %v50, %v78
  %v83 = vmul.f32 %v51, %v79
  %v84 = vmul.f32 %v52, %v80
  %v86 = vlaneseq
  %v87 = vshrl.u32 %v86, 7
  %v88 = vsub.s32 0, %v87
  %v89 = vrot.slane %v29, %v88
  %v91 = vmul.f32 %v81, %v89
  %v92 = vmul.f32 %v82, %v89
  %v93 = vmul.f32 %v83, %v89
  %v94 = vmul.f32 %v84, %v89
  %v96 = vlaneseq
  %v97 = vshrl.u32 %v96, 7
  %v98 = vsub.s32 0, %v97
  %v99 = vrot.slane %v30, %v98
  %v101 = vadd.f32 %v91, %v99
  %v102 = vadd.f32 %v92, %v99
  %v103 = vadd.f32 %v93, %v99
  %v104 = vadd.f32 %v94, %v99
  %v105 = vpack.c.bf16 %v102, %v101
  %v106 = vpack.c.bf16 %v104, %v103
  %v107 = vld [vmem:[%s3] sm:$0xf]
  %v108 = vld [vmem:[%s3 + $0x4] sm:$0xf]
  %v109 = vld [vmem:[%s3 + $0x8] sm:$0xf]
  %v110 = vld [vmem:[%s3 + $0xc] sm:$0xf]
  %v111 = vld [vmem:[%s4] sm:$0x1]
  %v113 = vlaneseq
  %v114 = vshrl.u32 %v113, 7
  %v115 = vsub.s32 0, %v114
  %v116 = vrot.slane %v111, %v115
  %v122 = vunpack.c.l.b16 %v107
  %v123 = vunpack.c.l.b16 %v108
  %v124 = vunpack.c.l.b16 %v109
  %v125 = vunpack.c.l.b16 %v110
  %v126 = vpack.c.b16 %v123, %v122
  %v127 = vpack.c.b16 %v125, %v124
  %v131 = vsel %vm31, %v105, 0
  %v134 = vsel %vm31, %v106, 0
  %136 = vmatprep.subr.bf16.mxu0 0
  %137 = vmatpush1.bf16.msra.mxu0 %v126
  %138 = vmatprep.subr.bf16.mxu0 0
  %139 = vmatpush1.bf16.msra.mxu0 %v127
  %140 = vmatprep.subr.bf16.mxu0 0
  %141 = vmatpush1.bf16.msra.mxu0 0
  %142 = vmatprep.subr.bf16.mxu0 0
  %143 = vmatpush1.bf16.msra.mxu0 0
  %144 = vmatprep.subr.bf16.mxu0 0
  %145 = vmatpush1.bf16.msra.mxu0 0
  %146 = vmatprep.subr.bf16.mxu0 0
  %147 = vmatpush1.bf16.msra.mxu0 0
  %148 = vmatprep.subr.bf16.mxu0 0
  %149 = vmatpush1.bf16.msra.mxu0 0
  %150 = vmatprep.subr.bf16.mxu0 0
  %151 = vmatpush1.bf16.msra.mxu0 0
  %152 = vmatprep.subr.bf16.mxu0 0
  %153 = vmatpush1.bf16.msra.mxu0 0
  %154 = vmatprep.subr.bf16.mxu0 0
  %155 = vmatpush1.bf16.msra.mxu0 0
  %156 = vmatprep.subr.bf16.mxu0 0
  %157 = vmatpush1.bf16.msra.mxu0 0
  %158 = vmatprep.subr.bf16.mxu0 0
  %159 = vmatpush1.bf16.msra.mxu0 0
  %160 = vmatprep.subr.bf16.mxu0 0
  %161 = vmatpush1.bf16.msra.mxu0 0
  %162 = vmatprep.subr.bf16.mxu0 0
  %163 = vmatpush1.bf16.msra.mxu0 0
  %164 = vmatprep.subr.bf16.mxu0 0
  %165 = vmatpush1.bf16.msra.mxu0 0
  %166 = vmatprep.subr.bf16.mxu0 0
  %167 = vmatpush1.bf16.msra.mxu0 0
  %168 = vmatprep.mubr.bf16.mxu0 0
  %169 = vmatmul.mubr.bf16.gmra.mrb[0].mxu0 %v131
  %v170 = vpop.f32.mrb[0].mxu0
  %v171 = vadd.f32 %v116, %v170
  %v172 = vpop.f32.mrb[0].mxu0
  %v173 = vpop.f32.mrb[0].mxu0
  %v174 = vadd.f32 %v116, %v173
  %v175 = vpop.f32.mrb[0].mxu0
  %176 = vmatprep.mubr.bf16.mxu0 0
  %177 = vmatmul.mubr.bf16.gmra.mrb[0].mxu0 %v134
  %v178 = vpop.f32.mrb[0].mxu0
  %v179 = vadd.f32 %v116, %v178
  %v180 = vpop.f32.mrb[0].mxu0
  %v181 = vpop.f32.mrb[0].mxu0
  %v182 = vadd.f32 %v116, %v181
  %v183 = vpop.f32.mrb[0].mxu0
  %184 = vdwg.mxu0
  %185 = vst.msk [vmem:[%s5] sm:$0xff] %vm31, %v171
  %186 = vst.msk [vmem:[%s5 + $0x8] sm:$0xff] %vm31, %v174
  %187 = vst.msk [vmem:[%s5 + $0x10] sm:$0xff] %vm31, %v179
  %188 = vst.msk [vmem:[%s5 + $0x18] sm:$0xff] %vm31, %v182
  // Predicated region
  $region22: #{_lambda_.14} parent=0 // pred_check
    _
  $region23: #{_lambda_.14} parent=0 // pred_check_branch
    %190 = sbr.rel (0) target = $region25
  $region24: #{_lambda_.14} parent=0 // pred_region
    _
  $region25: #{_lambda_.14} parent=0 // pred_fallthru
    _
  // Predicated region
  $region26: #{_lambda_.14} parent=0 // pred_check
    _
  $region27: #{_lambda_.14} parent=0 // pred_check_branch
    %192 = sbr.rel (0) target = $region29
  $region28: #{_lambda_.14} parent=0 // pred_region
    _
  $region29: #{_lambda_.14} parent=0 // pred_fallthru
    _

// kernel: _lambda_.12
$region0: #{_lambda_.12}
  #allocation0 [shape = 'u32[]', space=smem, size = 0x4, offset = 0x4, fixed_abs, tag = 'smem constant byte address 0x4 - core index']
  #allocation1 [shape = 'u32[144,128]{1,0:T(1,128)}', space=vmem, size = 0x12000, scoped, tag = 'internal scratch']
  %s0 = inlined_call_operand.hbm [shape: bf16[2,24,32], index: 0, kind: input, shape index: {}]
  %s1 = inlined_call_operand.hbm [shape: f32[1,24,32], index: 1, kind: input, shape index: {}]
  %s2 = inlined_call_operand.hbm [shape: bf16[32,96], index: 2, kind: input, shape index: {}]
  %s3 = inlined_call_operand.hbm [shape: f32[1,96], index: 3, kind: input, shape index: {}]
  %s4 = inlined_call_operand.hbm [shape: bf16[4,8,32], index: 4, kind: input, shape index: {}]
  %s5 = inlined_call_operand.hbm [shape: f32[1,32], index: 5, kind: input, shape index: {}]
  %s6 = inlined_call_operand.hbm [shape: f32[1,32], index: 6, kind: input, shape index: {}]
  %s7 = inlined_call_operand.hbm [shape: f32[1,32], index: 7, kind: input, shape index: {}]
  %s8 = inlined_call_operand.hbm [shape: f32[1,32], index: 8, kind: input, shape index: {}]
  %s9 = inlined_call_operand.hbm [shape: f32[1,32], index: 9, kind: input, shape index: {}]
  %s10 = inlined_call_operand.hbm [shape: bf16[32,64], index: 10, kind: input, shape index: {}]
  %s11 = inlined_call_operand.hbm [shape: f32[1,64], index: 11, kind: input, shape index: {}]
  %s12 = inlined_call_operand.hbm [shape: bf16[64,32], index: 12, kind: input, shape index: {}]
  %s13 = inlined_call_operand.hbm [shape: f32[1,32], index: 13, kind: input, shape index: {}]
  %s14 = inlined_call_operand.hbm [shape: bf16[2,24,32], index: 14, kind: output, shape index: {}]
  %s15 = sld [smem:[#allocation0]]
  $region145: #{_lambda_.12} parent=0
    _
  %s17 = ssub.s32 1, %s15
  %s18 = scalar_select 0, %s17, %s15
  $region1: #{_lambda_.12} parent=0
    #allocation2 [shape = 'u8[12288]{0}', space=vmem, size = 0x3000, scoped, tag = 'input window, operand 0']
    #allocation3 [shape = 's32[2]{0}', space=sflag, size = 0x8, scoped, tag = 'scoped memory for _lambda_.12']
    #allocation4 [shape = 's32[2]{0}', space=sflag, size = 0x8, scoped, tag = 'scoped memory for _lambda_.12']
    #allocation5 [shape = 'u8[12288]{0}', space=vmem, size = 0x3000, scoped, tag = 'input window, operand 1, single buffered']
    #allocation6 [shape = 's32[1]{0}', space=sflag, size = 0x4, scoped, tag = 'scoped memory for _lambda_.12']
    #allocation7 [shape = 'u8[8192]{0}', space=vmem, size = 0x2000, scoped, tag = 'input window, operand 2, single buffered']
    #allocation8 [shape = 'u8[512]{0}', space=vmem, size = 0x400, scoped, tag = 'input window, operand 3, single buffered']
    #allocation9 [shape = 's32[1]{0}', space=sflag, size = 0x4, scoped, tag = 'scoped memory for _lambda_.12']
    #allocation10 [shape = 'u8[8192]{0}', space=vmem, size = 0x2000, scoped, tag = 'input window, operand 4, single buffered']
    #allocation11 [shape = 'u8[512]{0}', space=vmem, size = 0x400, scoped, tag = 'input window, operand 5, single buffered']
    #allocation12 [shape = 's32[1]{0}', space=sflag, size = 0x4, scoped, tag = 'scoped memory for _lambda_.12']
    #allocation13 [shape = 'u8[512]{0}', space=vmem, size = 0x400, scoped, tag = 'input window, operand 6, single buffered']
    #allocation14 [shape = 'u8[512]{0}', space=vmem, size = 0x400, scoped, tag = 'input window, operand 7, single buffered']
    #allocation15 [shape = 's32[1]{0}', space=sflag, size = 0x4, scoped, tag = 'scoped memory for _lambda_.12']
    #allocation16 [shape = 'u8[512]{0}', space=vmem, size = 0x400, scoped, tag = 'input window, operand 8, single buffered']
    #allocation17 [shape = 'u8[512]{0}', space=vmem, size = 0x400, scoped, tag = 'input window, operand 9, single buffered']
    #allocation18 [shape = 's32[1]{0}', space=sflag, size = 0x4, scoped, tag = 'scoped memory for _lambda_.12']
    #allocation19 [shape = 'u8[8192]{0}', space=vmem, size = 0x2000, scoped, tag = 'input window, operand 10, single buffered']
    #allocation20 [shape = 'u8[512]{0}', space=vmem, size = 0x400, scoped, tag = 'input window, operand 11, single buffered']
    #allocation21 [shape = 's32[1]{0}', space=sflag, size = 0x4, scoped, tag = 'scoped memory for _lambda_.12']
    #allocation22 [shape = 'u8[16384]{0}', space=vmem, size = 0x4000, scoped, tag = 'input window, operand 12, single buffered']
    #allocation23 [shape = 'u8[512]{0}', space=vmem, size = 0x400, scoped, tag = 'input window, operand 13, single buffered']
    #allocation24 [shape = 's32[1]{0}', space=sflag, size = 0x4, scoped, tag = 'scoped memory for _lambda_.12']
    #allocation25 [shape = 'u8[12288]{0}', space=vmem, size = 0x3000, scoped, tag = 'output window, operand 0']
    %19 = vsyncpa [#allocation3], 0
    %s20 = scalar_lea.sflag [#allocation3], 1
    %21 = vsyncpa %s20, 0
    %22 = vsyncpa [#allocation6], 0
    %23 = vsyncpa [#allocation9], 0
    %24 = vsyncpa [#allocation12], 0
    %25 = vsyncpa [#allocation15], 0
    %26 = vsyncpa [#allocation18], 0
    %27 = vsyncpa [#allocation21], 0
    %28 = vsyncpa [#allocation24], 0
    %29 = vsyncpa [#allocation4], 0
    %s30 = scalar_lea.sflag [#allocation4], 1
    %31 = vsyncpa %s30, 0
    loop: start=0, step=1, limit=4
    $region2: #{_lambda_.12} parent=1 // loop_pre_header
      _
    $region3: #{_lambda_.12} parent=1 // loop_header
      %s33 = sphi 0, %s37
      %p34 = scmp.ge.s32.totalorder %s33, 4
      %s43 = sphi 0, %s45
      %s46 = sphi 0, %s43
      %s47 = sphi 0, %s46
      %s63 = sphi 0, %s47
      %s67 = sphi 0, %s67
      %s69 = sphi 0, %s67
      %s70 = sphi 0, %s69
      %s84 = sphi 0, %s70
      %s88 = sphi 0, %s88
      %s90 = sphi 0, %s88
      %s91 = sphi 0, %s90
      %s105 = sphi 0, %s91
      %s109 = sphi 0, %s109
      %s111 = sphi 0, %s109
      %s112 = sphi 0, %s111
      %s126 = sphi 0, %s112
      %s130 = sphi 0, %s130
      %s132 = sphi 0, %s130
      %s133 = sphi 0, %s132
      %s147 = sphi 0, %s133
      %s151 = sphi 0, %s151
      %s153 = sphi 0, %s151
      %s154 = sphi 0, %s153
      %s168 = sphi 0, %s154
      %s172 = sphi 0, %s172
      %s174 = sphi 0, %s172
      %s175 = sphi 0, %s174
      %s189 = sphi 0, %s175
      %s193 = sphi 0, %s193
      %s195 = sphi 0, %s193
      %s196 = sphi 0, %s195
      %s210 = sphi 0, %s196
      %s214 = sphi 0, %s214
      %s216 = sphi 0, %s214
      %s217 = sphi 0, %s216
      %s231 = sphi 0, %s217
      %s235 = sphi 0, %s235
      %s237 = sphi 0, %s235
      %s238 = sphi 0, %s237
      %s252 = sphi 0, %s238
      %s256 = sphi 0, %s256
      %s258 = sphi 0, %s256
      %s259 = sphi 0, %s258
      %s273 = sphi 0, %s259
      %s277 = sphi 0, %s277
      %s279 = sphi 0, %s277
      %s280 = sphi 0, %s279
      %s294 = sphi 0, %s280
      %s298 = sphi 0, %s298
      %s300 = sphi 0, %s298
      %s301 = sphi 0, %s300
      %s315 = sphi 0, %s301
      %s319 = sphi 0, %s319
      %s321 = sphi 0, %s319
      %s322 = sphi 0, %s321
      %s336 = sphi 0, %s322
      %s342 = sphi 0, %s344
      %s345 = sphi 0, %s342
      %s346 = sphi 0, %s345
      %s362 = sphi 0, %s346
    $region4: #{_lambda_.12} parent=1 // loop_header_branch
      %36 = sbr.rel (%p34) target = $region8
    $region5: #{_lambda_.12} parent=1 // loop_body
      %s38 = ssub.s32 %s33, 1
      %s39 = ssub.s32 %s33, 2
      %s40 = sadd.s32 %s33, 1
      %s41 = ssub.s32 %s33, %s40
      %p42 = scmp.eq.s32.totalorder %s41, 0
      %s44 = sadd.s32 %s43, 1
      %s45 = scalar_select %p42, %s43, %s44
      %p48 = pneg %p42
      %p49 = scmp.eq.s32.totalorder %s33, 1
      %p50 = por %p48, %p49
      %p51 = scmp.ne.s32.totalorder %s43, %s46
      %p52 = scmp.eq.s32.totalorder %s33, 0
      %p53 = por %p51, %p52
      %p54 = scmp.ne.s32.totalorder %s43, %s46
      %p55 = scmp.eq.s32.totalorder %s38, 1
      %p56 = por %p54, %p55
      %p57 = scmp.ne.s32.totalorder %s46, %s47
      %p58 = scmp.eq.s32.totalorder %s38, 0
      %p59 = por %p57, %p58
      %p60 = scmp.ne.s32.totalorder %s46, %s47
      %p61 = scmp.eq.s32.totalorder %s39, 1
      %p62 = por %p60, %p61
      %p64 = scmp.ne.s32.totalorder %s47, %s63
      %p65 = scmp.eq.s32.totalorder %s39, 0
      %p66 = por %p64, %p65
      %s68 = sadd.s32 %s67, 1
      %p71 = scmp.eq.s32.totalorder %s33, 1
      %p72 = scmp.ne.s32.totalorder %s67, %s69
      %p73 = scmp.eq.s32.totalorder %s33, 0
      %p74 = por %p72, %p73
      %p75 = scmp.ne.s32.totalorder %s67, %s69
      %p76 = scmp.eq.s32.totalorder %s38, 1
      %p77 = por %p75, %p76
      %p78 = scmp.ne.s32.totalorder %s69, %s70
      %p79 = scmp.eq.s32.totalorder %s38, 0
      %p80 = por %p78, %p79
      %p81 = scmp.ne.s32.totalorder %s69, %s70
      %p82 = scmp.eq.s32.totalorder %s39, 1
      %p83 = por %p81, %p82
      %p85 = scmp.ne.s32.totalorder %s70, %s84
      %p86 = scmp.eq.s32.totalorder %s39, 0
      %p87 = por %p85, %p86
      %s89 = sadd.s32 %s88, 1
      %p92 = scmp.eq.s32.totalorder %s33, 1
      %p93 = scmp.ne.s32.totalorder %s88, %s90
      %p94 = scmp.eq.s32.totalorder %s33, 0
      %p95 = por %p93, %p94
      %p96 = scmp.ne.s32.totalorder %s88, %s90
      %p97 = scmp.eq.s32.totalorder %s38, 1
      %p98 = por %p96, %p97
      %p99 = scmp.ne.s32.totalorder %s90, %s91
      %p100 = scmp.eq.s32.totalorder %s38, 0
      %p101 = por %p99, %p100
      %p102 = scmp.ne.s32.totalorder %s90, %s91
      %p103 = scmp.eq.s32.totalorder %s39, 1
      %p104 = por %p102, %p103
      %p106 = scmp.ne.s32.totalorder %s91, %s105
      %p107 = scmp.eq.s32.totalorder %s39, 0
      %p108 = por %p106, %p107
      %s110 = sadd.s32 %s109, 1
      %p113 = scmp.eq.s32.totalorder %s33, 1
      %p114 = scmp.ne.s32.totalorder %s109, %s111
      %p115 = scmp.eq.s32.totalorder %s33, 0
      %p116 = por %p114, %p115
      %p117 = scmp.ne.s32.totalorder %s109, %s111
      %p118 = scmp.eq.s32.totalorder %s38, 1
      %p119 = por %p117, %p118
      %p120 = scmp.ne.s32.totalorder %s111, %s112
      %p121 = scmp.eq.s32.totalorder %s38, 0
      %p122 = por %p120, %p121
      %p123 = scmp.ne.s32.totalorder %s111, %s112
      %p124 = scmp.eq.s32.totalorder %s39, 1
      %p125 = por %p123, %p124
      %p127 = scmp.ne.s32.totalorder %s112, %s126
      %p128 = scmp.eq.s32.totalorder %s39, 0
      %p129 = por %p127, %p128
      %s131 = sadd.s32 %s130, 1
      %p134 = scmp.eq.s32.totalorder %s33, 1
      %p135 = scmp.ne.s32.totalorder %s130, %s132
      %p136 = scmp.eq.s32.totalorder %s33, 0
      %p137 = por %p135, %p136
      %p138 = scmp.ne.s32.totalorder %s130, %s132
      %p139 = scmp.eq.s32.totalorder %s38, 1
      %p140 = por %p138, %p139
      %p141 = scmp.ne.s32.totalorder %s132, %s133
      %p142 = scmp.eq.s32.totalorder %s38, 0
      %p143 = por %p141, %p142
      %p144 = scmp.ne.s32.totalorder %s132, %s133
      %p145 = scmp.eq.s32.totalorder %s39, 1
      %p146 = por %p144, %p145
      %p148 = scmp.ne.s32.totalorder %s133, %s147
      %p149 = scmp.eq.s32.totalorder %s39, 0
      %p150 = por %p148, %p149
      %s152 = sadd.s32 %s151, 1
      %p155 = scmp.eq.s32.totalorder %s33, 1
      %p156 = scmp.ne.s32.totalorder %s151, %s153
      %p157 = scmp.eq.s32.totalorder %s33, 0
      %p158 = por %p156, %p157
      %p159 = scmp.ne.s32.totalorder %s151, %s153
      %p160 = scmp.eq.s32.totalorder %s38, 1
      %p161 = por %p159, %p160
      %p162 = scmp.ne.s32.totalorder %s153, %s154
      %p163 = scmp.eq.s32.totalorder %s38, 0
      %p164 = por %p162, %p163
      %p165 = scmp.ne.s32.totalorder %s153, %s154
      %p166 = scmp.eq.s32.totalorder %s39, 1
      %p167 = por %p165, %p166
      %p169 = scmp.ne.s32.totalorder %s154, %s168
      %p170 = scmp.eq.s32.totalorder %s39, 0
      %p171 = por %p169, %p170
      %s173 = sadd.s32 %s172, 1
      %p176 = scmp.eq.s32.totalorder %s33, 1
      %p177 = scmp.ne.s32.totalorder %s172, %s174
      %p178 = scmp.eq.s32.totalorder %s33, 0
      %p179 = por %p177, %p178
      %p180 = scmp.ne.s32.totalorder %s172, %s174
      %p181 = scmp.eq.s32.totalorder %s38, 1
      %p182 = por %p180, %p181
      %p183 = scmp.ne.s32.totalorder %s174, %s175
      %p184 = scmp.eq.s32.totalorder %s38, 0
      %p185 = por %p183, %p184
      %p186 = scmp.ne.s32.totalorder %s174, %s175
      %p187 = scmp.eq.s32.totalorder %s39, 1
      %p188 = por %p186, %p187
      %p190 = scmp.ne.s32.totalorder %s175, %s189
      %p191 = scmp.eq.s32.totalorder %s39, 0
      %p192 = por %p190, %p191
      %s194 = sadd.s32 %s193, 1
      %p197 = scmp.eq.s32.totalorder %s33, 1
      %p198 = scmp.ne.s32.totalorder %s193, %s195
      %p199 = scmp.eq.s32.totalorder %s33, 0
      %p200 = por %p198, %p199
      %p201 = scmp.ne.s32.totalorder %s193, %s195
      %p202 = scmp.eq.s32.totalorder %s38, 1
      %p203 = por %p201, %p202
      %p204 = scmp.ne.s32.totalorder %s195, %s196
      %p205 = scmp.eq.s32.totalorder %s38, 0
      %p206 = por %p204, %p205
      %p207 = scmp.ne.s32.totalorder %s195, %s196
      %p208 = scmp.eq.s32.totalorder %s39, 1
      %p209 = por %p207, %p208
      %p211 = scmp.ne.s32.totalorder %s196, %s210
      %p212 = scmp.eq.s32.totalorder %s39, 0
      %p213 = por %p211, %p212
      %s215 = sadd.s32 %s214, 1
      %p218 = scmp.eq.s32.totalorder %s33, 1
      %p219 = scmp.ne.s32.totalorder %s214, %s216
      %p220 = scmp.eq.s32.totalorder %s33, 0
      %p221 = por %p219, %p220
      %p222 = scmp.ne.s32.totalorder %s214, %s216
      %p223 = scmp.eq.s32.totalorder %s38, 1
      %p224 = por %p222, %p223
      %p225 = scmp.ne.s32.totalorder %s216, %s217
      %p226 = scmp.eq.s32.totalorder %s38, 0
      %p227 = por %p225, %p226
      %p228 = scmp.ne.s32.totalorder %s216, %s217
      %p229 = scmp.eq.s32.totalorder %s39, 1
      %p230 = por %p228, %p229
      %p232 = scmp.ne.s32.totalorder %s217, %s231
      %p233 = scmp.eq.s32.totalorder %s39, 0
      %p234 = por %p232, %p233
      %s236 = sadd.s32 %s235, 1
      %p239 = scmp.eq.s32.totalorder %s33, 1
      %p240 = scmp.ne.s32.totalorder %s235, %s237
      %p241 = scmp.eq.s32.totalorder %s33, 0
      %p242 = por %p240, %p241
      %p243 = scmp.ne.s32.totalorder %s235, %s237
      %p244 = scmp.eq.s32.totalorder %s38, 1
      %p245 = por %p243, %p244
      %p246 = scmp.ne.s32.totalorder %s237, %s238
      %p247 = scmp.eq.s32.totalorder %s38, 0
      %p248 = por %p246, %p247
      %p249 = scmp.ne.s32.totalorder %s237, %s238
      %p250 = scmp.eq.s32.totalorder %s39, 1
      %p251 = por %p249, %p250
      %p253 = scmp.ne.s32.totalorder %s238, %s252
      %p254 = scmp.eq.s32.totalorder %s39, 0
      %p255 = por %p253, %p254
      %s257 = sadd.s32 %s256, 1
      %p260 = scmp.eq.s32.totalorder %s33, 1
      %p261 = scmp.ne.s32.totalorder %s256, %s258
      %p262 = scmp.eq.s32.totalorder %s33, 0
      %p263 = por %p261, %p262
      %p264 = scmp.ne.s32.totalorder %s256, %s258
      %p265 = scmp.eq.s32.totalorder %s38, 1
      %p266 = por %p264, %p265
      %p267 = scmp.ne.s32.totalorder %s258, %s259
      %p268 = scmp.eq.s32.totalorder %s38, 0
      %p269 = por %p267, %p268
      %p270 = scmp.ne.s32.totalorder %s258, %s259
      %p271 = scmp.eq.s32.totalorder %s39, 1
      %p272 = por %p270, %p271
      %p274 = scmp.ne.s32.totalorder %s259, %s273
      %p275 = scmp.eq.s32.totalorder %s39, 0
      %p276 = por %p274, %p275
      %s278 = sadd.s32 %s277, 1
      %p281 = scmp.eq.s32.totalorder %s33, 1
      %p282 = scmp.ne.s32.totalorder %s277, %s279
      %p283 = scmp.eq.s32.totalorder %s33, 0
      %p284 = por %p282, %p283
      %p285 = scmp.ne.s32.totalorder %s277, %s279
      %p286 = scmp.eq.s32.totalorder %s38, 1
      %p287 = por %p285, %p286
      %p288 = scmp.ne.s32.totalorder %s279, %s280
      %p289 = scmp.eq.s32.totalorder %s38, 0
      %p290 = por %p288, %p289
      %p291 = scmp.ne.s32.totalorder %s279, %s280
      %p292 = scmp.eq.s32.totalorder %s39, 1
      %p293 = por %p291, %p292
      %p295 = scmp.ne.s32.totalorder %s280, %s294
      %p296 = scmp.eq.s32.totalorder %s39, 0
      %p297 = por %p295, %p296
      %s299 = sadd.s32 %s298, 1
      %p302 = scmp.eq.s32.totalorder %s33, 1
      %p303 = scmp.ne.s32.totalorder %s298, %s300
      %p304 = scmp.eq.s32.totalorder %s33, 0
      %p305 = por %p303, %p304
      %p306 = scmp.ne.s32.totalorder %s298, %s300
      %p307 = scmp.eq.s32.totalorder %s38, 1
      %p308 = por %p306, %p307
      %p309 = scmp.ne.s32.totalorder %s300, %s301
      %p310 = scmp.eq.s32.totalorder %s38, 0
      %p311 = por %p309, %p310
      %p312 = scmp.ne.s32.totalorder %s300, %s301
      %p313 = scmp.eq.s32.totalorder %s39, 1
      %p314 = por %p312, %p313
      %p316 = scmp.ne.s32.totalorder %s301, %s315
      %p317 = scmp.eq.s32.totalorder %s39, 0
      %p318 = por %p316, %p317
      %s320 = sadd.s32 %s319, 1
      %p323 = scmp.eq.s32.totalorder %s33, 1
      %p324 = scmp.ne.s32.totalorder %s319, %s321
      %p325 = scmp.eq.s32.totalorder %s33, 0
      %p326 = por %p324, %p325
      %p327 = scmp.ne.s32.totalorder %s319, %s321
      %p328 = scmp.eq.s32.totalorder %s38, 1
      %p329 = por %p327, %p328
      %p330 = scmp.ne.s32.totalorder %s321, %s322
      %p331 = scmp.eq.s32.totalorder %s38, 0
      %p332 = por %p330, %p331
      %p333 = scmp.ne.s32.totalorder %s321, %s322
      %p334 = scmp.eq.s32.totalorder %s39, 1
      %p335 = por %p333, %p334
      %p337 = scmp.ne.s32.totalorder %s322, %s336
      %p338 = scmp.eq.s32.totalorder %s39, 0
      %p339 = por %p337, %p338
      %s340 = ssub.s32 %s33, %s40
      %p341 = scmp.eq.s32.totalorder %s340, 0
      %s343 = sadd.s32 %s342, 1
      %s344 = scalar_select %p341, %s342, %s343
      %p347 = pneg %p341
      %p348 = scmp.eq.s32.totalorder %s33, 1
      %p349 = por %p347, %p348
      %p350 = scmp.ne.s32.totalorder %s342, %s345
      %p351 = scmp.eq.s32.totalorder %s33, 0
      %p352 = por %p350, %p351
      %p353 = scmp.ne.s32.totalorder %s342, %s345
      %p354 = scmp.eq.s32.totalorder %s38, 1
      %p355 = por %p353, %p354
      %p356 = scmp.ne.s32.totalorder %s345, %s346
      %p357 = scmp.eq.s32.totalorder %s38, 0
      %p358 = por %p356, %p357
      %p359 = scmp.ne.s32.totalorder %s345, %s346
      %p360 = scmp.eq.s32.totalorder %s39, 1
      %p361 = por %p359, %p360
      %p363 = scmp.ne.s32.totalorder %s346, %s362
      %p364 = scmp.eq.s32.totalorder %s39, 0
      %p365 = por %p363, %p364
      %p366 = scmp.le.s32.totalorder 1, %s33
      %p367 = scmp.lt.s32.totalorder %s33, 3
      %p368 = pnand %p366, %p367
      %p369 = pneg %p368
      // Predicated region
      $region9: #{_lambda_.12} parent=5 // pred_check
        _
      $region10: #{_lambda_.12} parent=5 // pred_check_branch
        %371 = sbr.rel (%p368) target = $region12
      $region11: #{_lambda_.12} parent=5 // pred_region
        %s372 = ssub.s32 %s33, 1
        // Predicated region
        $region13: #{_lambda_.12} parent=11 // pred_check
          %p373 = pneg %p80
        $region14: #{_lambda_.12} parent=11 // pred_check_branch
          %375 = sbr.rel (%p373) target = $region16
        $region15: #{_lambda_.12} parent=11 // pred_region
          %s377 = ssub.s32 384, 384
          %378 = vsyncadd [#allocation6], %s377
          %s379 = sshll.u32 [#allocation5], 4
          %s380 = int_to_ptr.vmem [resolvable:$true] %s379
          %385 = dma.hbm_to_vmem [thread:$0]  %s1, 384, %s380, [#allocation6], 128, 128, 8
        $region16: #{_lambda_.12} parent=11 // pred_fallthru
          _
        // Predicated region
        $region17: #{_lambda_.12} parent=11 // pred_check
          %p386 = pneg %p101
        $region18: #{_lambda_.12} parent=11 // pred_check_branch
          %388 = sbr.rel (%p386) target = $region20
        $region19: #{_lambda_.12} parent=11 // pred_region
          %s390 = ssub.s32 256, 256
          %391 = vsyncadd [#allocation6], %s390
          %s392 = sshll.u32 [#allocation7], 4
          %s393 = int_to_ptr.vmem [resolvable:$true] %s392
          %398 = dma.hbm_to_vmem [thread:$0]  %s2, 256, %s393, [#allocation6], 64, 64, 4
        $region20: #{_lambda_.12} parent=11 // pred_fallthru
          _
        // Predicated region
        $region21: #{_lambda_.12} parent=11 // pred_check
          %p399 = pneg %p122
        $region22: #{_lambda_.12} parent=11 // pred_check_branch
          %401 = sbr.rel (%p399) target = $region24
        $region23: #{_lambda_.12} parent=11 // pred_region
          %s403 = ssub.s32 16, 16
          %404 = vsyncadd [#allocation9], %s403
          %s406 = sshll.u32 [#allocation8], 4
          %s407 = int_to_ptr.vmem [resolvable:$true] %s406
          %409 = dma.hbm_to_vmem [thread:$0]  %s3, 16, %s407, [#allocation9]
        $region24: #{_lambda_.12} parent=11 // pred_fallthru
          _
        // Predicated region
        $region25: #{_lambda_.12} parent=11 // pred_check
          %p410 = pneg %p143
        $region26: #{_lambda_.12} parent=11 // pred_check_branch
          %412 = sbr.rel (%p410) target = $region28
        $region27: #{_lambda_.12} parent=11 // pred_region
          %s414 = ssub.s32 256, 256
          %415 = vsyncadd [#allocation9], %s414
          %s416 = sshll.u32 [#allocation10], 4
          %s417 = int_to_ptr.vmem [resolvable:$true] %s416
          %422 = dma.hbm_to_vmem [thread:$0]  %s4, 256, %s417, [#allocation9], 64, 64, 4
        $region28: #{_lambda_.12} parent=11 // pred_fallthru
          _
        // Predicated region
        $region29: #{_lambda_.12} parent=11 // pred_check
          %p423 = pneg %p164
        $region30: #{_lambda_.12} parent=11 // pred_check_branch
          %425 = sbr.rel (%p423) target = $region32
        $region31: #{_lambda_.12} parent=11 // pred_region
          %s427 = ssub.s32 16, 16
          %428 = vsyncadd [#allocation12], %s427
          %s430 = sshll.u32 [#allocation11], 4
          %s431 = int_to_ptr.vmem [resolvable:$true] %s430
          %433 = dma.hbm_to_vmem [thread:$0]  %s5, 16, %s431, [#allocation12]
        $region32: #{_lambda_.12} parent=11 // pred_fallthru
          _
        // Predicated region
        $region33: #{_lambda_.12} parent=11 // pred_check
          %p434 = pneg %p185
        $region34: #{_lambda_.12} parent=11 // pred_check_branch
          %436 = sbr.rel (%p434) target = $region36
        $region35: #{_lambda_.12} parent=11 // pred_region
          %s438 = ssub.s32 16, 16
          %439 = vsyncadd [#allocation12], %s438
          %s441 = sshll.u32 [#allocation13], 4
          %s442 = int_to_ptr.vmem [resolvable:$true] %s441
          %444 = dma.hbm_to_vmem [thread:$0]  %s6, 16, %s442, [#allocation12]
        $region36: #{_lambda_.12} parent=11 // pred_fallthru
          _
        // Predicated region
        $region37: #{_lambda_.12} parent=11 // pred_check
          %p445 = pneg %p206
        $region38: #{_lambda_.12} parent=11 // pred_check_branch
          %447 = sbr.rel (%p445) target = $region40
        $region39: #{_lambda_.12} parent=11 // pred_region
          %s449 = ssub.s32 16, 16
          %450 = vsyncadd [#allocation15], %s449
          %s452 = sshll.u32 [#allocation14], 4
          %s453 = int_to_ptr.vmem [resolvable:$true] %s452
          %455 = dma.hbm_to_vmem [thread:$0]  %s7, 16, %s453, [#allocation15]
        $region40: #{_lambda_.12} parent=11 // pred_fallthru
          _
        // Predicated region
        $region41: #{_lambda_.12} parent=11 // pred_check
          %p456 = pneg %p227
        $region42: #{_lambda_.12} parent=11 // pred_check_branch
          %458 = sbr.rel (%p456) target = $region44
        $region43: #{_lambda_.12} parent=11 // pred_region
          %s460 = ssub.s32 16, 16
          %461 = vsyncadd [#allocation15], %s460
          %s463 = sshll.u32 [#allocation16], 4
          %s464 = int_to_ptr.vmem [resolvable:$true] %s463
          %466 = dma.hbm_to_vmem [thread:$0]  %s8, 16, %s464, [#allocation15]
        $region44: #{_lambda_.12} parent=11 // pred_fallthru
          _
        // Predicated region
        $region45: #{_lambda_.12} parent=11 // pred_check
          %p467 = pneg %p248
        $region46: #{_lambda_.12} parent=11 // pred_check_branch
          %469 = sbr.rel (%p467) target = $region48
        $region47: #{_lambda_.12} parent=11 // pred_region
          %s471 = ssub.s32 16, 16
          %472 = vsyncadd [#allocation18], %s471
          %s474 = sshll.u32 [#allocation17], 4
          %s475 = int_to_ptr.vmem [resolvable:$true] %s474
          %477 = dma.hbm_to_vmem [thread:$0]  %s9, 16, %s475, [#allocation18]
        $region48: #{_lambda_.12} parent=11 // pred_fallthru
          _
        // Predicated region
        $region49: #{_lambda_.12} parent=11 // pred_check
          %p478 = pneg %p269
        $region50: #{_lambda_.12} parent=11 // pred_check_branch
          %480 = sbr.rel (%p478) target = $region52
        $region51: #{_lambda_.12} parent=11 // pred_region
          %s482 = ssub.s32 256, 256
          %483 = vsyncadd [#allocation18], %s482
          %s484 = sshll.u32 [#allocation19], 4
          %s485 = int_to_ptr.vmem [resolvable:$true] %s484
          %490 = dma.hbm_to_vmem [thread:$0]  %s10, 256, %s485, [#allocation18], 64, 64, 4
        $region52: #{_lambda_.12} parent=11 // pred_fallthru
          _
        // Predicated region
        $region53: #{_lambda_.12} parent=11 // pred_check
          %p491 = pneg %p290
        $region54: #{_lambda_.12} parent=11 // pred_check_branch
          %493 = sbr.rel (%p491) target = $region56
        $region55: #{_lambda_.12} parent=11 // pred_region
          %s495 = ssub.s32 16, 16
          %496 = vsyncadd [#allocation21], %s495
          %s498 = sshll.u32 [#allocation20], 4
          %s499 = int_to_ptr.vmem [resolvable:$true] %s498
          %501 = dma.hbm_to_vmem [thread:$0]  %s11, 16, %s499, [#allocation21]
        $region56: #{_lambda_.12} parent=11 // pred_fallthru
          _
        // Predicated region
        $region57: #{_lambda_.12} parent=11 // pred_check
          %p502 = pneg %p311
        $region58: #{_lambda_.12} parent=11 // pred_check_branch
          %504 = sbr.rel (%p502) target = $region60
        $region59: #{_lambda_.12} parent=11 // pred_region
          %s506 = ssub.s32 512, 512
          %507 = vsyncadd [#allocation21], %s506
          %s508 = sshll.u32 [#allocation22], 4
          %s509 = int_to_ptr.vmem [resolvable:$true] %s508
          %514 = dma.hbm_to_vmem [thread:$0]  %s12, 512, %s509, [#allocation21], 64, 64, 4
        $region60: #{_lambda_.12} parent=11 // pred_fallthru
          _
        // Predicated region
        $region61: #{_lambda_.12} parent=11 // pred_check
          %p515 = pneg %p332
        $region62: #{_lambda_.12} parent=11 // pred_check_branch
          %517 = sbr.rel (%p515) target = $region64
        $region63: #{_lambda_.12} parent=11 // pred_region
          %s519 = ssub.s32 16, 16
          %520 = vsyncadd [#allocation24], %s519
          %s522 = sshll.u32 [#allocation23], 4
          %s523 = int_to_ptr.vmem [resolvable:$true] %s522
          %525 = dma.hbm_to_vmem [thread:$0]  %s13, 16, %s523, [#allocation24]
        $region64: #{_lambda_.12} parent=11 // pred_fallthru
          _
      $region12: #{_lambda_.12} parent=5 // pred_fallthru
        _
      %p526 = scmp.lt.s32.totalorder %s33, 2
      // Predicated region
      $region65: #{_lambda_.12} parent=5 // pred_check
        %p527 = pneg %p526
      $region66: #{_lambda_.12} parent=5 // pred_check_branch
        %529 = sbr.rel (%p527) target = $region68
      $region67: #{_lambda_.12} parent=5 // pred_region
        // Predicated region
        $region69: #{_lambda_.12} parent=67 // pred_check
          %p530 = pneg %p53
        $region70: #{_lambda_.12} parent=67 // pred_check_branch
          %532 = sbr.rel (%p530) target = $region72
        $region71: #{_lambda_.12} parent=67 // pred_region
          %s533 = sand.u32 %s43, 1
          %s534 = scalar_lea.sflag [#allocation3], %s533
          %s535 = sand.u32 %s43, 1
          %s536 = smul.addr %s535, 12
          %s537 = scalar_lea.vmem [#allocation2], %s536
          %s539 = ssub.s32 192, 192
          %540 = vsyncadd %s534, %s539
          %s541 = smul.addr %s33, 3
          %s542 = smul.addr %s541, 64
          %s543 = scalar_lea.hbm %s0, %s542
          %s544 = sshll.u32 %s537, 4
          %s545 = int_to_ptr.vmem [resolvable:$true] %s544
          %550 = dma.hbm_to_vmem [thread:$0]  %s543, 192, %s545, %s534, 64, 64, 4
        $region72: #{_lambda_.12} parent=67 // pred_fallthru
          _
      $region68: #{_lambda_.12} parent=5 // pred_fallthru
        _
      %p551 = scmp.le.s32.totalorder 1, %s33
      %p552 = scmp.lt.s32.totalorder %s33, 3
      %p553 = pnand %p551, %p552
      %p554 = pneg %p553
      // Predicated region
      $region73: #{_lambda_.12} parent=5 // pred_check
        _
      $region74: #{_lambda_.12} parent=5 // pred_check_branch
        %556 = sbr.rel (%p553) target = $region76
      $region75: #{_lambda_.12} parent=5 // pred_region
        %s557 = ssub.s32 %s33, 1
        %s558 = sand.u32 %s46, 1
        %s559 = scalar_lea.sflag [#allocation3], %s558
        %s560 = sand.u32 %s46, 1
        %s561 = smul.addr %s560, 12
        %s562 = scalar_lea.vmem [#allocation2], %s561
        // Predicated region
        $region77: #{_lambda_.12} parent=75 // pred_check
          %p563 = pneg %p59
        $region78: #{_lambda_.12} parent=75 // pred_check_branch
          %565 = sbr.rel (%p563) target = $region80
        $region79: #{_lambda_.12} parent=75 // pred_region
          %566 = dma.done %s559, 192
        $region80: #{_lambda_.12} parent=75 // pred_fallthru
          _
        // Predicated region
        $region81: #{_lambda_.12} parent=75 // pred_check
          %p567 = pneg %p80
        $region82: #{_lambda_.12} parent=75 // pred_check_branch
          %569 = sbr.rel (%p567) target = $region84
        $region83: #{_lambda_.12} parent=75 // pred_region
          %570 = dma.done [#allocation6], 384
        $region84: #{_lambda_.12} parent=75 // pred_fallthru
          _
        // Predicated region
        $region85: #{_lambda_.12} parent=75 // pred_check
          %p571 = pneg %p101
        $region86: #{_lambda_.12} parent=75 // pred_check_branch
          %573 = sbr.rel (%p571) target = $region88
        $region87: #{_lambda_.12} parent=75 // pred_region
          %574 = dma.done [#allocation6], 256
        $region88: #{_lambda_.12} parent=75 // pred_fallthru
          _
        // Predicated region
        $region89: #{_lambda_.12} parent=75 // pred_check
          %p575 = pneg %p122
        $region90: #{_lambda_.12} parent=75 // pred_check_branch
          %577 = sbr.rel (%p575) target = $region92
        $region91: #{_lambda_.12} parent=75 // pred_region
          %578 = dma.done [#allocation9], 16
        $region92: #{_lambda_.12} parent=75 // pred_fallthru
          _
        // Predicated region
        $region93: #{_lambda_.12} parent=75 // pred_check
          %p579 = pneg %p143
        $region94: #{_lambda_.12} parent=75 // pred_check_branch
          %581 = sbr.rel (%p579) target = $region96
        $region95: #{_lambda_.12} parent=75 // pred_region
          %582 = dma.done [#allocation9], 256
        $region96: #{_lambda_.12} parent=75 // pred_fallthru
          _
        // Predicated region
        $region97: #{_lambda_.12} parent=75 // pred_check
          %p583 = pneg %p164
        $region98: #{_lambda_.12} parent=75 // pred_check_branch
          %585 = sbr.rel (%p583) target = $region100
        $region99: #{_lambda_.12} parent=75 // pred_region
          %586 = dma.done [#allocation12], 16
        $region100: #{_lambda_.12} parent=75 // pred_fallthru
          _
        // Predicated region
        $region101: #{_lambda_.12} parent=75 // pred_check
          %p587 = pneg %p185
        $region102: #{_lambda_.12} parent=75 // pred_check_branch
          %589 = sbr.rel (%p587) target = $region104
        $region103: #{_lambda_.12} parent=75 // pred_region
          %590 = dma.done [#allocation12], 16
        $region104: #{_lambda_.12} parent=75 // pred_fallthru
          _
        // Predicated region
        $region105: #{_lambda_.12} parent=75 // pred_check
          %p591 = pneg %p206
        $region106: #{_lambda_.12} parent=75 // pred_check_branch
          %593 = sbr.rel (%p591) target = $region108
        $region107: #{_lambda_.12} parent=75 // pred_region
          %594 = dma.done [#allocation15], 16
        $region108: #{_lambda_.12} parent=75 // pred_fallthru
          _
        // Predicated region
        $region109: #{_lambda_.12} parent=75 // pred_check
          %p595 = pneg %p227
        $region110: #{_lambda_.12} parent=75 // pred_check_branch
          %597 = sbr.rel (%p595) target = $region112
        $region111: #{_lambda_.12} parent=75 // pred_region
          %598 = dma.done [#allocation15], 16
        $region112: #{_lambda_.12} parent=75 // pred_fallthru
          _
        // Predicated region
        $region113: #{_lambda_.12} parent=75 // pred_check
          %p599 = pneg %p248
        $region114: #{_lambda_.12} parent=75 // pred_check_branch
          %601 = sbr.rel (%p599) target = $region116
        $region115: #{_lambda_.12} parent=75 // pred_region
          %602 = dma.done [#allocation18], 16
        $region116: #{_lambda_.12} parent=75 // pred_fallthru
          _
        // Predicated region
        $region117: #{_lambda_.12} parent=75 // pred_check
          %p603 = pneg %p269
        $region118: #{_lambda_.12} parent=75 // pred_check_branch
          %605 = sbr.rel (%p603) target = $region120
        $region119: #{_lambda_.12} parent=75 // pred_region
          %606 = dma.done [#allocation18], 256
        $region120: #{_lambda_.12} parent=75 // pred_fallthru
          _
        // Predicated region
        $region121: #{_lambda_.12} parent=75 // pred_check
          %p607 = pneg %p290
        $region122: #{_lambda_.12} parent=75 // pred_check_branch
          %609 = sbr.rel (%p607) target = $region124
        $region123: #{_lambda_.12} parent=75 // pred_region
          %610 = dma.done [#allocation21], 16
        $region124: #{_lambda_.12} parent=75 // pred_fallthru
          _
        // Predicated region
        $region125: #{_lambda_.12} parent=75 // pred_check
          %p611 = pneg %p311
        $region126: #{_lambda_.12} parent=75 // pred_check_branch
          %613 = sbr.rel (%p611) target = $region128
        $region127: #{_lambda_.12} parent=75 // pred_region
          %614 = dma.done [#allocation21], 512
        $region128: #{_lambda_.12} parent=75 // pred_fallthru
          _
        // Predicated region
        $region129: #{_lambda_.12} parent=75 // pred_check
          %p615 = pneg %p332
        $region130: #{_lambda_.12} parent=75 // pred_check_branch
          %617 = sbr.rel (%p615) target = $region132
        $region131: #{_lambda_.12} parent=75 // pred_region
          %618 = dma.done [#allocation24], 16
        $region132: #{_lambda_.12} parent=75 // pred_fallthru
          _
        %s619 = sand.u32 %s46, 1
        %s620 = scalar_lea.sflag [#allocation3], %s619
        %s621 = sand.u32 %s46, 1
        %s622 = smul.addr %s621, 12
        %s623 = scalar_lea.vmem [#allocation2], %s622
        %p624 = pneg %p59
        %p625 = pneg %p56
        %p626 = pneg %p80
        %p627 = pneg %p77
        %p628 = pneg %p101
        %p629 = pneg %p98
        %p630 = pneg %p122
        %p631 = pneg %p119
        %p632 = pneg %p143
        %p633 = pneg %p140
        %p634 = pneg %p164
        %p635 = pneg %p161
        %p636 = pneg %p185
        %p637 = pneg %p182
        %p638 = pneg %p206
        %p639 = pneg %p203
        %p640 = pneg %p227
        %p641 = pneg %p224
        %p642 = pneg %p248
        %p643 = pneg %p245
        %p644 = pneg %p269
        %p645 = pneg %p266
        %p646 = pneg %p290
        %p647 = pneg %p287
        %p648 = pneg %p311
        %p649 = pneg %p308
        %p650 = pneg %p332
        %p651 = pneg %p329
        %p652 = pneg %p358
        %p653 = pneg %p355
        %s654 = sand.u32 %s345, 1
        %s655 = scalar_lea.sflag [#allocation4], %s654
        %s656 = sand.u32 %s345, 1
        %s657 = smul.addr %s656, 12
        %s658 = scalar_lea.vmem [#allocation25], %s657
        %v660 = vld [vmem:[%s562] sm:$0xf]
        %v661 = vld [vmem:[%s562 + $0x4] sm:$0xf]
        %v662 = vld [vmem:[%s562 + $0x8] sm:$0xf]
        %v663 = vunpack.c.l.bf16 %v660
        %v664 = vunpack.c.l.bf16 %v661
        %v665 = vunpack.c.l.bf16 %v662
        %v666 = vld [vmem:[#allocation5] sm:$0xff]
        %v667 = vld [vmem:[#allocation5 + $0x8] sm:$0xff]
        %v668 = vld [vmem:[#allocation5 + $0x10] sm:$0xff]
        %v669 = vadd.f32 %v663, %v666
        %v670 = vadd.f32 %v664, %v667
        %v671 = vadd.f32 %v665, %v668
        %v672 = vld [vmem:[#allocation13] sm:$0x1]
        %v673 = vld [vmem:[#allocation14] sm:$0x1]
        %vm674 = vcmask 261120
        %v675 = vsel %vm674, %v669, 0.0
        %676 = vadd.xlane.f32.xlu0 %v675
        %v677 = vpop.xlane.xlu0 %676
        %v678 = vsel %vm674, %v670, 0.0
        %679 = vadd.xlane.f32.xlu0 %v678
        %v680 = vpop.xlane.xlu0 %679
        %v681 = vsel %vm674, %v671, 0.0
        %682 = vadd.xlane.f32.xlu0 %v681
        %v683 = vpop.xlane.xlu0 %682
        %v684 = vrcp.pop 32.0
        %v685 = vmul.f32 %v677, %v684
        %v686 = vmul.f32 %v680, %v684
        %v687 = vmul.f32 %v683, %v684
        %v688 = vsub.f32 %v669, %v685
        %v689 = vsub.f32 %v670, %v686
        %v690 = vsub.f32 %v671, %v687
        %v691 = vmul.f32 %v688, %v688
        %v692 = vmul.f32 %v689, %v689
        %v693 = vmul.f32 %v690, %v690
        %v694 = vsel %vm674, %v691, 0.0
        %695 = vadd.xlane.f32.xlu0 %v694
        %v696 = vpop.xlane.xlu0 %695
        %v697 = vsel %vm674, %v692, 0.0
        %698 = vadd.xlane.f32.xlu0 %v697
        %v699 = vpop.xlane.xlu0 %698
        %v700 = vsel %vm674, %v693, 0.0
        %701 = vadd.xlane.f32.xlu0 %v700
        %v702 = vpop.xlane.xlu0 %701
        %v703 = vmul.f32 %v696, %v684
        %v704 = vmul.f32 %v699, %v684
        %v705 = vmul.f32 %v702, %v684
        %v706 = vadd.f32 %v703, 1e-06
        %v707 = vadd.f32 %v704, 1e-06
        %v708 = vadd.f32 %v705, 1e-06
        %v709 = vrsqrt.pop %v706
        %v710 = vrsqrt.pop %v707
        %v711 = vrsqrt.pop %v708
        %v712 = vmul.f32 %v688, %v709
        %v713 = vmul.f32 %v689, %v710
        %v714 = vmul.f32 %v690, %v711
        %v716 = vlaneseq
        %v717 = vshrl.u32 %v716, 7
        %v718 = vsub.s32 0, %v717
        %v719 = vrot.slane %v672, %v718
        %v721 = vmul.f32 %v712, %v719
        %v722 = vmul.f32 %v713, %v719
        %v723 = vmul.f32 %v714, %v719
        %v725 = vlaneseq
        %v726 = vshrl.u32 %v725, 7
        %v727 = vsub.s32 0, %v726
        %v728 = vrot.slane %v673, %v727
        %v730 = vadd.f32 %v721, %v728
        %v731 = vadd.f32 %v722, %v728
        %v732 = vadd.f32 %v723, %v728
        %v733 = vpack.c.bf16 %v731, %v730
        %v734 = vpack.c.bf16 %v732, %v732
        %v735 = vld [vmem:[#allocation7] sm:$0xf]
        %v736 = vld [vmem:[#allocation7 + $0x4] sm:$0xf]
        %v737 = vld [vmem:[#allocation7 + $0x8] sm:$0xf]
        %v738 = vld [vmem:[#allocation7 + $0xc] sm:$0xf]
        %v739 = vld [vmem:[#allocation8] sm:$0x1]
        %v741 = vlaneseq
        %v742 = vshrl.u32 %v741, 7
        %v743 = vsub.s32 0, %v742
        %v744 = vrot.slane %v739, %v743
        %v750 = vunpack.c.l.b16 %v735
        %v751 = vunpack.c.l.b16 %v736
        %v752 = vunpack.c.l.b16 %v737
        %v753 = vunpack.c.l.b16 %v738
        %v754 = vpack.c.b16 %v751, %v750
        %v755 = vpack.c.b16 %v753, %v752
        %v759 = vsel %vm674, %v733, 0
        %v762 = vsel %vm674, %v734, 0
        %764 = vmatprep.subr.bf16.mxu0 0
        %765 = vmatpush1.bf16.msra.mxu0 %v754
        %766 = vmatprep.subr.bf16.mxu0 0
        %767 = vmatpush1.bf16.msra.mxu0 %v755
        %768 = vmatprep.subr.bf16.mxu0 0
        %769 = vmatpush1.bf16.msra.mxu0 0
        %770 = vmatprep.subr.bf16.mxu0 0
        %771 = vmatpush1.bf16.msra.mxu0 0
        %772 = vmatprep.subr.bf16.mxu0 0
        %773 = vmatpush1.bf16.msra.mxu0 0
        %774 = vmatprep.subr.bf16.mxu0 0
        %775 = vmatpush1.bf16.msra.mxu0 0
        %776 = vmatprep.subr.bf16.mxu0 0
        %777 = vmatpush1.bf16.msra.mxu0 0
        %778 = vmatprep.subr.bf16.mxu0 0
        %779 = vmatpush1.bf16.msra.mxu0 0
        %780 = vmatprep.subr.bf16.mxu0 0
        %781 = vmatpush1.bf16.msra.mxu0 0
        %782 = vmatprep.subr.bf16.mxu0 0
        %783 = vmatpush1.bf16.msra.mxu0 0
        %784 = vmatprep.subr.bf16.mxu0 0
        %785 = vmatpush1.bf16.msra.mxu0 0
        %786 = vmatprep.subr.bf16.mxu0 0
        %787 = vmatpush1.bf16.msra.mxu0 0
        %788 = vmatprep.subr.bf16.mxu0 0
        %789 = vmatpush1.bf16.msra.mxu0 0
        %790 = vmatprep.subr.bf16.mxu0 0
        %791 = vmatpush1.bf16.msra.mxu0 0
        %792 = vmatprep.subr.bf16.mxu0 0
        %793 = vmatpush1.bf16.msra.mxu0 0
        %794 = vmatprep.subr.bf16.mxu0 0
        %795 = vmatpush1.bf16.msra.mxu0 0
        %796 = vmatprep.mubr.bf16.mxu0 0
        %797 = vmatmul.mubr.bf16.gmra.mrb[0].mxu0 %v759
        %v798 = vpop.f32.mrb[0].mxu0
        %v799 = vadd.f32 %v744, %v798
        %v800 = vpop.f32.mrb[0].mxu0
        %v801 = vpop.f32.mrb[0].mxu0
        %v802 = vadd.f32 %v744, %v801
        %v803 = vpop.f32.mrb[0].mxu0
        %804 = vmatprep.mubr.bf16.mxu0 0
        %805 = vmatmul.mubr.bf16.gmra.mrb[0].mxu0 %v762
        %v806 = vpop.f32.mrb[0].mxu0
        %v807 = vadd.f32 %v744, %v806
        %v808 = vpop.f32.mrb[0].mxu0
        %v809 = vpop.f32.mrb[0].mxu0
        %v810 = vpop.f32.mrb[0].mxu0
        %811 = vdwg.mxu0
        %v812 = vpack.c.bf16 %v802, %v799
        %v813 = vpack.c.bf16 %v807, %v807
        %816 = vrot.lane.b32.xlu0 %v812, 120
        %v817 = vpop.permute.xlu0 %816
        %818 = vrot.lane.b32.xlu0 %v813, 120
        %v819 = vpop.permute.xlu0 %818
        %820 = vrot.lane.b32.xlu0 %v812, 112
        %v821 = vpop.permute.xlu0 %820
        %822 = vrot.lane.b32.xlu0 %v813, 112
        %v823 = vpop.permute.xlu0 %822
        %824 = vrot.lane.b32.xlu0 %v812, 104
        %v825 = vpop.permute.xlu0 %824
        %826 = vrot.lane.b32.xlu0 %v813, 104
        %v827 = vpop.permute.xlu0 %826
        %828 = vrot.lane.b32.xlu0 %v812, 96
        %v829 = vpop.permute.xlu0 %828
        %830 = vrot.lane.b32.xlu0 %v813, 96
        %v831 = vpop.permute.xlu0 %830
        %vm832 = vcmask 64512
        %v834 = vsel %vm832, %v812, 0
        %v837 = vsel %vm832, %v813, 0
        %v840 = vsel %vm832, %v829, 0
        %v843 = vsel %vm832, %v831, 0
        %845 = vmatprep.subr.bf16.mxu0 0
        %846 = vmatpush1.bf16.xpose.msra.mxu0 %v840
        %847 = vmatprep.subr.bf16.mxu0 0
        %848 = vmatpush1.bf16.xpose.msra.mxu0 %v843
        %849 = vmatprep.subr.bf16.mxu0 0
        %850 = vmatpush1.bf16.xpose.msra.mxu0 0
        %851 = vmatprep.subr.bf16.mxu0 0
        %852 = vmatpush1.bf16.xpose.msra.mxu0 0
        %853 = vmatprep.subr.bf16.mxu0 0
        %854 = vmatpush1.bf16.xpose.msra.mxu0 0
        %855 = vmatprep.subr.bf16.mxu0 0
        %856 = vmatpush1.bf16.xpose.msra.mxu0 0
        %857 = vmatprep.subr.bf16.mxu0 0
        %858 = vmatpush1.bf16.xpose.msra.mxu0 0
        %859 = vmatprep.subr.bf16.mxu0 0
        %860 = vmatpush1.bf16.xpose.msra.mxu0 0
        %861 = vmatprep.subr.bf16.mxu0 0
        %862 = vmatpush1.bf16.xpose.msra.mxu0 0
        %863 = vmatprep.subr.bf16.mxu0 0
        %864 = vmatpush1.bf16.xpose.msra.mxu0 0
        %865 = vmatprep.subr.bf16.mxu0 0
        %866 = vmatpush1.bf16.xpose.msra.mxu0 0
        %867 = vmatprep.subr.bf16.mxu0 0
        %868 = vmatpush1.bf16.xpose.msra.mxu0 0
        %869 = vmatprep.subr.bf16.mxu0 0
        %870 = vmatpush1.bf16.xpose.msra.mxu0 0
        %871 = vmatprep.subr.bf16.mxu0 0
        %872 = vmatpush1.bf16.xpose.msra.mxu0 0
        %873 = vmatprep.subr.bf16.mxu0 0
        %874 = vmatpush1.bf16.xpose.msra.mxu0 0
        %875 = vmatprep.subr.bf16.mxu0 0
        %876 = vmatpush1.bf16.xpose.msra.mxu0 0
        %877 = vmatprep.mubr.bf16.mxu0 0
        %878 = vmatmul.mubr.bf16.gmra.mrb[0].mxu0 %v834
        %v879 = vpop.f32.mrb[0].mxu0
        %v880 = vadd.f32 0.0, %v879
        %v881 = vpop.f32.mrb[0].mxu0
        %v882 = vpop.f32.mrb[0].mxu0
        %v883 = vadd.f32 0.0, %v882
        %v884 = vpop.f32.mrb[0].mxu0
        %885 = vmatprep.mubr.bf16.mxu0 0
        %886 = vmatmul.mubr.bf16.gmra.mrb[0].mxu0 %v837
        %v887 = vpop.f32.mrb[0].mxu0
        %v888 = vadd.f32 0.0, %v887
        %v889 = vpop.f32.mrb[0].mxu0
        %v890 = vpop.f32.mrb[0].mxu0
        %v891 = vpop.f32.mrb[0].mxu0
        %892 = vdwg.mxu0
        %893 = vrot.lane.b32.xlu0 %v817, 96
        %v894 = vpop.permute.xlu0 %893
        %895 = vrot.lane.b32.xlu0 %v819, 96
        %v896 = vpop.permute.xlu0 %895
        %v898 = vsel %vm832, %v817, 0
        %v901 = vsel %vm832, %v819, 0
        %v904 = vsel %vm832, %v894, 0
        %v907 = vsel %vm832, %v896, 0
        %909 = vmatprep.subr.bf16.mxu0 0
        %910 = vmatpush1.bf16.xpose.msra.mxu0 %v904
        %911 = vmatprep.subr.bf16.mxu0 0
        %912 = vmatpush1.bf16.xpose.msra.mxu0 %v907
        %913 = vmatprep.subr.bf16.mxu0 0
        %914 = vmatpush1.bf16.xpose.msra.mxu0 0
        %915 = vmatprep.subr.bf16.mxu0 0
        %916 = vmatpush1.bf16.xpose.msra.mxu0 0
        %917 = vmatprep.subr.bf16.mxu0 0
        %918 = vmatpush1.bf16.xpose.msra.mxu0 0
        %919 = vmatprep.subr.bf16.mxu0 0
        %920 = vmatpush1.bf16.xpose.msra.mxu0 0
        %921 = vmatprep.subr.bf16.mxu0 0
        %922 = vmatpush1.bf16.xpose.msra.mxu0 0
        %923 = vmatprep.subr.bf16.mxu0 0
        %924 = vmatpush1.bf16.xpose.msra.mxu0 0
        %925 = vmatprep.subr.bf16.mxu0 0
        %926 = vmatpush1.bf16.xpose.msra.mxu0 0
        %927 = vmatprep.subr.bf16.mxu0 0
        %928 = vmatpush1.bf16.xpose.msra.mxu0 0
        %929 = vmatprep.subr.bf16.mxu0 0
        %930 = vmatpush1.bf16.xpose.msra.mxu0 0
        %931 = vmatprep.subr.bf16.mxu0 0
        %932 = vmatpush1.bf16.xpose.msra.mxu0 0
        %933 = vmatprep.subr.bf16.mxu0 0
        %934 = vmatpush1.bf16.xpose.msra.mxu0 0
        %935 = vmatprep.subr.bf16.mxu0 0
        %936 = vmatpush1.bf16.xpose.msra.mxu0 0
        %937 = vmatprep.subr.bf16.mxu0 0
        %938 = vmatpush1.bf16.xpose.msra.mxu0 0
        %939 = vmatprep.subr.bf16.mxu0 0
        %940 = vmatpush1.bf16.xpose.msra.mxu0 0
        %941 = vmatprep.mubr.bf16.mxu0 0
        %942 = vmatmul.mubr.bf16.gmra.mrb[0].mxu0 %v898
        %v943 = vpop.f32.mrb[0].mxu0
        %v944 = vadd.f32 0.0, %v943
        %v945 = vpop.f32.mrb[0].mxu0
        %v946 = vpop.f32.mrb[0].mxu0
        %v947 = vadd.f32 0.0, %v946
        %v948 = vpop.f32.mrb[0].mxu0
        %949 = vmatprep.mubr.bf16.mxu0 0
        %950 = vmatmul.mubr.bf16.gmra.mrb[0].mxu0 %v901
        %v951 = vpop.f32.mrb[0].mxu0
        %v952 = vadd.f32 0.0, %v951
        %v953 = vpop.f32.mrb[0].mxu0
        %v954 = vpop.f32.mrb[0].mxu0
        %v955 = vpop.f32.mrb[0].mxu0
        %956 = vdwg.mxu0
        %957 = vrot.lane.b32.xlu0 %v821, 96
        %v958 = vpop.permute.xlu0 %957
        %959 = vrot.lane.b32.xlu0 %v823, 96
        %v960 = vpop.permute.xlu0 %959
        %v962 = vsel %vm832, %v821, 0
        %v965 = vsel %vm832, %v823, 0
        %v968 = vsel %vm832, %v958, 0
        %v971 = vsel %vm832, %v960, 0
        %973 = vmatprep.subr.bf16.mxu0 0
        %974 = vmatpush1.bf16.xpose.msra.mxu0 %v968
        %975 = vmatprep.subr.bf16.mxu0 0
        %976 = vmatpush1.bf16.xpose.msra.mxu0 %v971
        %977 = vmatprep.subr.bf16.mxu0 0
        %978 = vmatpush1.bf16.xpose.msra.mxu0 0
        %979 = vmatprep.subr.bf16.mxu0 0
        %980 = vmatpush1.bf16.xpose.msra.mxu0 0
        %981 = vmatprep.subr.bf16.mxu0 0
        %982 = vmatpush1.bf16.xpose.msra.mxu0 0
        %983 = vmatprep.subr.bf16.mxu0 0
        %984 = vmatpush1.bf16.xpose.msra.mxu0 0
        %985 = vmatprep.subr.bf16.mxu0 0
        %986 = vmatpush1.bf16.xpose.msra.mxu0 0
        %987 = vmatprep.subr.bf16.mxu0 0
        %988 = vmatpush1.bf16.xpose.msra.mxu0 0
        %989 = vmatprep.subr.bf16.mxu0 0
        %990 = vmatpush1.bf16.xpose.msra.mxu0 0
        %991 = vmatprep.subr.bf16.mxu0 0
        %992 = vmatpush1.bf16.xpose.msra.mxu0 0
        %993 = vmatprep.subr.bf16.mxu0 0
        %994 = vmatpush1.bf16.xpose.msra.mxu0 0
        %995 = vmatprep.subr.bf16.mxu0 0
        %996 = vmatpush1.bf16.xpose.msra.mxu0 0
        %997 = vmatprep.subr.bf16.mxu0 0
        %998 = vmatpush1.bf16.xpose.msra.mxu0 0
        %999 = vmatprep.subr.bf16.mxu0 0
        %1000 = vmatpush1.bf16.xpose.msra.mxu0 0
        %1001 = vmatprep.subr.bf16.mxu0 0
        %1002 = vmatpush1.bf16.xpose.msra.mxu0 0
        %1003 = vmatprep.subr.bf16.mxu0 0
        %1004 = vmatpush1.bf16.xpose.msra.mxu0 0
        %1005 = vmatprep.mubr.bf16.mxu0 0
        %1006 = vmatmul.mubr.bf16.gmra.mrb[0].mxu0 %v962
        %v1007 = vpop.f32.mrb[0].mxu0
        %v1008 = vadd.f32 0.0, %v1007
        %v1009 = vpop.f32.mrb[0].mxu0
        %v1010 = vpop.f32.mrb[0].mxu0
        %v1011 = vadd.f32 0.0, %v1010
        %v1012 = vpop.f32.mrb[0].mxu0
        %1013 = vmatprep.mubr.bf16.mxu0 0
        %1014 = vmatmul.mubr.bf16.gmra.mrb[0].mxu0 %v965
        %v1015 = vpop.f32.mrb[0].mxu0
        %v1016 = vadd.f32 0.0, %v1015
        %v1017 = vpop.f32.mrb[0].mxu0
        %v1018 = vpop.f32.mrb[0].mxu0
        %v1019 = vpop.f32.mrb[0].mxu0
        %1020 = vdwg.mxu0
        %1021 = vrot.lane.b32.xlu0 %v825, 96
        %v1022 = vpop.permute.xlu0 %1021
        %1023 = vrot.lane.b32.xlu0 %v827, 96
        %v1024 = vpop.permute.xlu0 %1023
        %v1026 = vsel %vm832, %v825, 0
        %v1029 = vsel %vm832, %v827, 0
        %v1032 = vsel %vm832, %v1022, 0
        %v1035 = vsel %vm832, %v1024, 0
        %1037 = vmatprep.subr.bf16.mxu0 0
        %1038 = vmatpush1.bf16.xpose.msra.mxu0 %v1032
        %1039 = vmatprep.subr.bf16.mxu0 0
        %1040 = vmatpush1.bf16.xpose.msra.mxu0 %v1035
        %1041 = vmatprep.subr.bf16.mxu0 0
        %1042 = vmatpush1.bf16.xpose.msra.mxu0 0
        %1043 = vmatprep.subr.bf16.mxu0 0
        %1044 = vmatpush1.bf16.xpose.msra.mxu0 0
        %1045 = vmatprep.subr.bf16.mxu0 0
        %1046 = vmatpush1.bf16.xpose.msra.mxu0 0
        %1047 = vmatprep.subr.bf16.mxu0 0
        %1048 = vmatpush1.bf16.xpose.msra.mxu0 0
        %1049 = vmatprep.subr.bf16.mxu0 0
        %1050 = vmatpush1.bf16.xpose.msra.mxu0 0
        %1051 = vmatprep.subr.bf16.mxu0 0
        %1052 = vmatpush1.bf16.xpose.msra.mxu0 0
        %1053 = vmatprep.subr.bf16.mxu0 0
        %1054 = vmatpush1.bf16.xpose.msra.mxu0 0
        %1055 = vmatprep.subr.bf16.mxu0 0
        %1056 = vmatpush1.bf16.xpose.msra.mxu0 0
        %1057 = vmatprep.subr.bf16.mxu0 0
        %1058 = vmatpush1.bf16.xpose.msra.mxu0 0
        %1059 = vmatprep.subr.bf16.mxu0 0
        %1060 = vmatpush1.bf16.xpose.msra.mxu0 0
        %1061 = vmatprep.subr.bf16.mxu0 0
        %1062 = vmatpush1.bf16.xpose.msra.mxu0 0
        %1063 = vmatprep.subr.bf16.mxu0 0
        %1064 = vmatpush1.bf16.xpose.msra.mxu0 0
        %1065 = vmatprep.subr.bf16.mxu0 0
        %1066 = vmatpush1.bf16.xpose.msra.mxu0 0
        %1067 = vmatprep.subr.bf16.mxu0 0
        %1068 = vmatpush1.bf16.xpose.msra.mxu0 0
        %1069 = vmatprep.mubr.bf16.mxu0 0
        %1070 = vmatmul.mubr.bf16.gmra.mrb[0].mxu0 %v1026
        %v1071 = vpop.f32.mrb[0].mxu0
        %v1072 = vadd.f32 0.0, %v1071
        %v1073 = vpop.f32.mrb[0].mxu0
        %v1074 = vpop.f32.mrb[0].mxu0
        %v1075 = vadd.f32 0.0, %v1074
        %v1076 = vpop.f32.mrb[0].mxu0
        %1077 = vmatprep.mubr.bf16.mxu0 0
        %1078 = vmatmul.mubr.bf16.gmra.mrb[0].mxu0 %v1029
        %v1079 = vpop.f32.mrb[0].mxu0
        %v1080 = vadd.f32 0.0, %v1079
        %v1081 = vpop.f32.mrb[0].mxu0
        %v1082 = vpop.f32.mrb[0].mxu0
        %v1083 = vpop.f32.mrb[0].mxu0
        %1084 = vdwg.mxu0
        %v1085 = vmul.f32 %v880, 0.35355338
        %v1086 = vmul.f32 %v883, 0.35355338
        %v1087 = vmul.f32 %v888, 0.35355338
        %v1088 = vmul.f32 %v944, 0.35355338
        %v1089 = vmul.f32 %v947, 0.35355338
        %v1090 = vmul.f32 %v952, 0.35355338
        %v1091 = vmul.f32 %v1008, 0.35355338
        %v1092 = vmul.f32 %v1011, 0.35355338
        %v1093 = vmul.f32 %v1016, 0.35355338
        %v1094 = vmul.f32 %v1072, 0.35355338
        %v1095 = vmul.f32 %v1075, 0.35355338
        %v1096 = vmul.f32 %v1080, 0.35355338
        %v1097 = vlaneseq
        %v1098 = vand.u32 %v1097, 127
        %vm1099 = vcmp.lt.s32.totalorder %v1098, 17
        %v1100 = vsel %vm1099, %v1085, -1e+30
        %v1101 = vsel %vm1099, %v1086, -1e+30
        %v1102 = vsel %vm1099, %v1087, -1e+30
        %v1103 = vsel %vm1099, %v1088, -1e+30
        %v1104 = vsel %vm1099, %v1089, -1e+30
        %v1105 = vsel %vm1099, %v1090, -1e+30
        %v1106 = vsel %vm1099, %v1091, -1e+30
        %v1107 = vsel %vm1099, %v1092, -1e+30
        %v1108 = vsel %vm1099, %v1093, -1e+30
        %v1109 = vsel %vm1099, %v1094, -1e+30
        %v1110 = vsel %vm1099, %v1095, -1e+30
        %v1111 = vsel %vm1099, %v1096, -1e+30
        %vm1112 = vcmask 195584
        %v1113 = vsel %vm1112, %v1100, -inf
        %1114 = vmax.xlane.f32.xlu0 %v1113
        %v1115 = vpop.xlane.xlu0 %1114
        %v1116 = vsel %vm1112, %v1101, -inf
        %1117 = vmax.xlane.f32.xlu0 %v1116
        %v1118 = vpop.xlane.xlu0 %1117
        %v1119 = vsel %vm1112, %v1102, -inf
        %1120 = vmax.xlane.f32.xlu0 %v1119
        %v1121 = vpop.xlane.xlu0 %1120
        %v1122 = vsel %vm1112, %v1103, -inf
        %1123 = vmax.xlane.f32.xlu0 %v1122
        %v1124 = vpop.xlane.xlu0 %1123
        %v1125 = vsel %vm1112, %v1104, -inf
        %1126 = vmax.xlane.f32.xlu0 %v1125
        %v1127 = vpop.xlane.xlu0 %1126
        %v1128 = vsel %vm1112, %v1105, -inf
        %1129 = vmax.xlane.f32.xlu0 %v1128
        %v1130 = vpop.xlane.xlu0 %1129
        %v1131 = vsel %vm1112, %v1106, -inf
        %1132 = vmax.xlane.f32.xlu0 %v1131
        %v1133 = vpop.xlane.xlu0 %1132
        %v1134 = vsel %vm1112, %v1107, -inf
        %1135 = vmax.xlane.f32.xlu0 %v1134
        %v1136 = vpop.xlane.xlu0 %1135
        %v1137 = vsel %vm1112, %v1108, -inf
        %1138 = vmax.xlane.f32.xlu0 %v1137
        %v1139 = vpop.xlane.xlu0 %1138
        %v1140 = vsel %vm1112, %v1109, -inf
        %1141 = vmax.xlane.f32.xlu0 %v1140
        %v1142 = vpop.xlane.xlu0 %1141
        %v1143 = vsel %vm1112, %v1110, -inf
        %1144 = vmax.xlane.f32.xlu0 %v1143
        %v1145 = vpop.xlane.xlu0 %1144
        %v1146 = vsel %vm1112, %v1111, -inf
        %1147 = vmax.xlane.f32.xlu0 %v1146
        %v1148 = vpop.xlane.xlu0 %1147
        %v1149 = vsub.f32 %v1100, %v1115
        %v1150 = vsub.f32 %v1101, %v1118
        %v1151 = vsub.f32 %v1102, %v1121
        %v1152 = vsub.f32 %v1103, %v1124
        %v1153 = vsub.f32 %v1104, %v1127
        %v1154 = vsub.f32 %v1105, %v1130
        %v1155 = vsub.f32 %v1106, %v1133
        %v1156 = vsub.f32 %v1107, %v1136
        %v1157 = vsub.f32 %v1108, %v1139
        %v1158 = vsub.f32 %v1109, %v1142
        %v1159 = vsub.f32 %v1110, %v1145
        %v1160 = vsub.f32 %v1111, %v1148
        %v1161 = vmul.f32 %v1149, 1.442695
        %v1162 = vpow.pop %v1161
        %v1163 = vmul.f32 %v1150, 1.442695
        %v1164 = vpow.pop %v1163
        %v1165 = vmul.f32 %v1151, 1.442695
        %v1166 = vpow.pop %v1165
        %v1167 = vmul.f32 %v1152, 1.442695
        %v1168 = vpow.pop %v1167
        %v1169 = vmul.f32 %v1153, 1.442695
        %v1170 = vpow.pop %v1169
        %v1171 = vmul.f32 %v1154, 1.442695
        %v1172 = vpow.pop %v1171
        %v1173 = vmul.f32 %v1155, 1.442695
        %v1174 = vpow.pop %v1173
        %v1175 = vmul.f32 %v1156, 1.442695
        %v1176 = vpow.pop %v1175
        %v1177 = vmul.f32 %v1157, 1.442695
        %v1178 = vpow.pop %v1177
        %v1179 = vmul.f32 %v1158, 1.442695
        %v1180 = vpow.pop %v1179
        %v1181 = vmul.f32 %v1159, 1.442695
        %v1182 = vpow.pop %v1181
        %v1183 = vmul.f32 %v1160, 1.442695
        %v1184 = vpow.pop %v1183
        %v1185 = vsel %vm1112, %v1162, 0.0
        %1186 = vadd.xlane.f32.xlu0 %v1185
        %v1187 = vpop.xlane.xlu0 %1186
        %v1188 = vsel %vm1112, %v1164, 0.0
        %1189 = vadd.xlane.f32.xlu0 %v1188
        %v1190 = vpop.xlane.xlu0 %1189
        %v1191 = vsel %vm1112, %v1166, 0.0
        %1192 = vadd.xlane.f32.xlu0 %v1191
        %v1193 = vpop.xlane.xlu0 %1192
        %v1194 = vsel %vm1112, %v1168, 0.0
        %1195 = vadd.xlane.f32.xlu0 %v1194
        %v1196 = vpop.xlane.xlu0 %1195
        %v1197 = vsel %vm1112, %v1170, 0.0
        %1198 = vadd.xlane.f32.xlu0 %v1197
        %v1199 = vpop.xlane.xlu0 %1198
        %v1200 = vsel %vm1112, %v1172, 0.0
        %1201 = vadd.xlane.f32.xlu0 %v1200
        %v1202 = vpop.xlane.xlu0 %1201
        %v1203 = vsel %vm1112, %v1174, 0.0
        %1204 = vadd.xlane.f32.xlu0 %v1203
        %v1205 = vpop.xlane.xlu0 %1204
        %v1206 = vsel %vm1112, %v1176, 0.0
        %1207 = vadd.xlane.f32.xlu0 %v1206
        %v1208 = vpop.xlane.xlu0 %1207
        %v1209 = vsel %vm1112, %v1178, 0.0
        %1210 = vadd.xlane.f32.xlu0 %v1209
        %v1211 = vpop.xlane.xlu0 %1210
        %v1212 = vsel %vm1112, %v1180, 0.0
        %1213 = vadd.xlane.f32.xlu0 %v1212
        %v1214 = vpop.xlane.xlu0 %1213
        %v1215 = vsel %vm1112, %v1182, 0.0
        %1216 = vadd.xlane.f32.xlu0 %v1215
        %v1217 = vpop.xlane.xlu0 %1216
        %v1218 = vsel %vm1112, %v1184, 0.0
        %1219 = vadd.xlane.f32.xlu0 %v1218
        %v1220 = vpop.xlane.xlu0 %1219
        %v1221 = vrcp.pop %v1187
        %v1222 = vrcp.pop %v1190
        %v1223 = vrcp.pop %v1193
        %v1224 = vrcp.pop %v1196
        %v1225 = vrcp.pop %v1199
        %v1226 = vrcp.pop %v1202
        %v1227 = vrcp.pop %v1205
        %v1228 = vrcp.pop %v1208
        %v1229 = vrcp.pop %v1211
        %v1230 = vrcp.pop %v1214
        %v1231 = vrcp.pop %v1217
        %v1232 = vrcp.pop %v1220
        %v1233 = vmul.f32 %v1162, %v1221
        %v1234 = vmul.f32 %v1164, %v1222
        %v1235 = vmul.f32 %v1166, %v1223
        %v1236 = vmul.f32 %v1168, %v1224
        %v1237 = vmul.f32 %v1170, %v1225
        %v1238 = vmul.f32 %v1172, %v1226
        %v1239 = vmul.f32 %v1174, %v1227
        %v1240 = vmul.f32 %v1176, %v1228
        %v1241 = vmul.f32 %v1178, %v1229
        %v1242 = vmul.f32 %v1180, %v1230
        %v1243 = vmul.f32 %v1182, %v1231
        %v1244 = vmul.f32 %v1184, %v1232
        %v1245 = vpack.c.bf16 %v1234, %v1233
        %v1246 = vpack.c.bf16 %v1235, %v1235
        %v1247 = vpack.c.bf16 %v1237, %v1236
        %v1248 = vpack.c.bf16 %v1238, %v1238
        %v1249 = vpack.c.bf16 %v1240, %v1239
        %v1250 = vpack.c.bf16 %v1241, %v1241
        %v1251 = vpack.c.bf16 %v1243, %v1242
        %v1252 = vpack.c.bf16 %v1244, %v1244
        %1253 = vrot.lane.b32.xlu0 %v812, 64
        %v1254 = vpop.permute.xlu0 %1253
        %1255 = vrot.lane.b32.xlu0 %v813, 64
        %v1256 = vpop.permute.xlu0 %1255
        %v1259 = vsel %vm1112, %v1245, 0
        %v1262 = vsel %vm1112, %v1246, 0
        %vm1264 = vcmask 1043456
        %v1266 = vsel %vm1264, %v1256, 0
        %1268 = vmatprep.subr.bf16.mxu0 0
        %1269 = vmatpush1.bf16.msra.mxu0 %v1254
        %1270 = vmatprep.subr.bf16.mxu0 0
        %1271 = vmatpush1.bf16.msra.mxu0 %v1266
        %1272 = vmatprep.subr.bf16.mxu0 0
        %1273 = vmatpush1.bf16.msra.mxu0 0
        %1274 = vmatprep.subr.bf16.mxu0 0
        %1275 = vmatpush1.bf16.msra.mxu0 0
        %1276 = vmatprep.subr.bf16.mxu0 0
        %1277 = vmatpush1.bf16.msra.mxu0 0
        %1278 = vmatprep.subr.bf16.mxu0 0
        %1279 = vmatpush1.bf16.msra.mxu0 0
        %1280 = vmatprep.subr.bf16.mxu0 0
        %1281 = vmatpush1.bf16.msra.mxu0 0
        %1282 = vmatprep.subr.bf16.mxu0 0
        %1283 = vmatpush1.bf16.msra.mxu0 0
        %1284 = vmatprep.subr.bf16.mxu0 0
        %1285 = vmatpush1.bf16.msra.mxu0 0
        %1286 = vmatprep.subr.bf16.mxu0 0
        %1287 = vmatpush1.bf16.msra.mxu0 0
        %1288 = vmatprep.subr.bf16.mxu0 0
        %1289 = vmatpush1.bf16.msra.mxu0 0
        %1290 = vmatprep.subr.bf16.mxu0 0
        %1291 = vmatpush1.bf16.msra.mxu0 0
        %1292 = vmatprep.subr.bf16.mxu0 0
        %1293 = vmatpush1.bf16.msra.mxu0 0
        %1294 = vmatprep.subr.bf16.mxu0 0
        %1295 = vmatpush1.bf16.msra.mxu0 0
        %1296 = vmatprep.subr.bf16.mxu0 0
        %1297 = vmatpush1.bf16.msra.mxu0 0
        %1298 = vmatprep.subr.bf16.mxu0 0
        %1299 = vmatpush1.bf16.msra.mxu0 0
        %1300 = vmatprep.mubr.bf16.mxu0 0
        %1301 = vmatmul.mubr.bf16.gmra.mrb[0].mxu0 %v1259
        %v1302 = vpop.f32.mrb[0].mxu0
        %v1303 = vadd.f32 0.0, %v1302
        %v1304 = vpop.f32.mrb[0].mxu0
        %v1305 = vpop.f32.mrb[0].mxu0
        %v1306 = vadd.f32 0.0, %v1305
        %v1307 = vpop.f32.mrb[0].mxu0
        %1308 = vmatprep.mubr.bf16.mxu0 0
        %1309 = vmatmul.mubr.bf16.gmra.mrb[0].mxu0 %v1262
        %v1310 = vpop.f32.mrb[0].mxu0
        %v1311 = vadd.f32 0.0, %v1310
        %v1312 = vpop.f32.mrb[0].mxu0
        %v1313 = vpop.f32.mrb[0].mxu0
        %v1314 = vpop.f32.mrb[0].mxu0
        %1315 = vdwg.mxu0
        %1316 = vrot.lane.b32.xlu0 %v817, 64
        %v1317 = vpop.permute.xlu0 %1316
        %1318 = vrot.lane.b32.xlu0 %v819, 64
        %v1319 = vpop.permute.xlu0 %1318
        %v1322 = vsel %vm1112, %v1247, 0
        %v1325 = vsel %vm1112, %v1248, 0
        %v1328 = vsel %vm1264, %v1319, 0
        %1330 = vmatprep.subr.bf16.mxu0 0
        %1331 = vmatpush1.bf16.msra.mxu0 %v1317
        %1332 = vmatprep.subr.bf16.mxu0 0
        %1333 = vmatpush1.bf16.msra.mxu0 %v1328
        %1334 = vmatprep.subr.bf16.mxu0 0
        %1335 = vmatpush1.bf16.msra.mxu0 0
        %1336 = vmatprep.subr.bf16.mxu0 0
        %1337 = vmatpush1.bf16.msra.mxu0 0
        %1338 = vmatprep.subr.bf16.mxu0 0
        %1339 = vmatpush1.bf16.msra.mxu0 0
        %1340 = vmatprep.subr.bf16.mxu0 0
        %1341 = vmatpush1.bf16.msra.mxu0 0
        %1342 = vmatprep.subr.bf16.mxu0 0
        %1343 = vmatpush1.bf16.msra.mxu0 0
        %1344 = vmatprep.subr.bf16.mxu0 0
        %1345 = vmatpush1.bf16.msra.mxu0 0
        %1346 = vmatprep.subr.bf16.mxu0 0
        %1347 = vmatpush1.bf16.msra.mxu0 0
        %1348 = vmatprep.subr.bf16.mxu0 0
        %1349 = vmatpush1.bf16.msra.mxu0 0
        %1350 = vmatprep.subr.bf16.mxu0 0
        %1351 = vmatpush1.bf16.msra.mxu0 0
        %1352 = vmatprep.subr.bf16.mxu0 0
        %1353 = vmatpush1.bf16.msra.mxu0 0
        %1354 = vmatprep.subr.bf16.mxu0 0
        %1355 = vmatpush1.bf16.msra.mxu0 0
        %1356 = vmatprep.subr.bf16.mxu0 0
        %1357 = vmatpush1.bf16.msra.mxu0 0
        %1358 = vmatprep.subr.bf16.mxu0 0
        %1359 = vmatpush1.bf16.msra.mxu0 0
        %1360 = vmatprep.subr.bf16.mxu0 0
        %1361 = vmatpush1.bf16.msra.mxu0 0
        %1362 = vmatprep.mubr.bf16.mxu0 0
        %1363 = vmatmul.mubr.bf16.gmra.mrb[0].mxu0 %v1322
        %v1364 = vpop.f32.mrb[0].mxu0
        %v1365 = vadd.f32 0.0, %v1364
        %v1366 = vpop.f32.mrb[0].mxu0
        %v1367 = vpop.f32.mrb[0].mxu0
        %v1368 = vadd.f32 0.0, %v1367
        %v1369 = vpop.f32.mrb[0].mxu0
        %1370 = vmatprep.mubr.bf16.mxu0 0
        %1371 = vmatmul.mubr.bf16.gmra.mrb[0].mxu0 %v1325
        %v1372 = vpop.f32.mrb[0].mxu0
        %v1373 = vadd.f32 0.0, %v1372
        %v1374 = vpop.f32.mrb[0].mxu0
        %v1375 = vpop.f32.mrb[0].mxu0
        %v1376 = vpop.f32.mrb[0].mxu0
        %1377 = vdwg.mxu0
        %1378 = vrot.lane.b32.xlu0 %v821, 64
        %v1379 = vpop.permute.xlu0 %1378
        %1380 = vrot.lane.b32.xlu0 %v823, 64
        %v1381 = vpop.permute.xlu0 %1380
        %v1384 = vsel %vm1112, %v1249, 0
        %v1387 = vsel %vm1112, %v1250, 0
        %v1390 = vsel %vm1264, %v1381, 0
        %1392 = vmatprep.subr.bf16.mxu0 0
        %1393 = vmatpush1.bf16.msra.mxu0 %v1379
        %1394 = vmatprep.subr.bf16.mxu0 0
        %1395 = vmatpush1.bf16.msra.mxu0 %v1390
        %1396 = vmatprep.subr.bf16.mxu0 0
        %1397 = vmatpush1.bf16.msra.mxu0 0
        %1398 = vmatprep.subr.bf16.mxu0 0
        %1399 = vmatpush1.bf16.msra.mxu0 0
        %1400 = vmatprep.subr.bf16.mxu0 0
        %1401 = vmatpush1.bf16.msra.mxu0 0
        %1402 = vmatprep.subr.bf16.mxu0 0
        %1403 = vmatpush1.bf16.msra.mxu0 0
        %1404 = vmatprep.subr.bf16.mxu0 0
        %1405 = vmatpush1.bf16.msra.mxu0 0
        %1406 = vmatprep.subr.bf16.mxu0 0
        %1407 = vmatpush1.bf16.msra.mxu0 0
        %1408 = vmatprep.subr.bf16.mxu0 0
        %1409 = vmatpush1.bf16.msra.mxu0 0
        %1410 = vmatprep.subr.bf16.mxu0 0
        %1411 = vmatpush1.bf16.msra.mxu0 0
        %1412 = vmatprep.subr.bf16.mxu0 0
        %1413 = vmatpush1.bf16.msra.mxu0 0
        %1414 = vmatprep.subr.bf16.mxu0 0
        %1415 = vmatpush1.bf16.msra.mxu0 0
        %1416 = vmatprep.subr.bf16.mxu0 0
        %1417 = vmatpush1.bf16.msra.mxu0 0
        %1418 = vmatprep.subr.bf16.mxu0 0
        %1419 = vmatpush1.bf16.msra.mxu0 0
        %1420 = vmatprep.subr.bf16.mxu0 0
        %1421 = vmatpush1.bf16.msra.mxu0 0
        %1422 = vmatprep.subr.bf16.mxu0 0
        %1423 = vmatpush1.bf16.msra.mxu0 0
        %1424 = vmatprep.mubr.bf16.mxu0 0
        %1425 = vmatmul.mubr.bf16.gmra.mrb[0].mxu0 %v1384
        %v1426 = vpop.f32.mrb[0].mxu0
        %v1427 = vadd.f32 0.0, %v1426
        %v1428 = vpop.f32.mrb[0].mxu0
        %v1429 = vpop.f32.mrb[0].mxu0
        %v1430 = vadd.f32 0.0, %v1429
        %v1431 = vpop.f32.mrb[0].mxu0
        %1432 = vmatprep.mubr.bf16.mxu0 0
        %1433 = vmatmul.mubr.bf16.gmra.mrb[0].mxu0 %v1387
        %v1434 = vpop.f32.mrb[0].mxu0
        %v1435 = vadd.f32 0.0, %v1434
        %v1436 = vpop.f32.mrb[0].mxu0
        %v1437 = vpop.f32.mrb[0].mxu0
        %v1438 = vpop.f32.mrb[0].mxu0
        %1439 = vdwg.mxu0
        %1440 = vrot.lane.b32.xlu0 %v825, 64
        %v1441 = vpop.permute.xlu0 %1440
        %1442 = vrot.lane.b32.xlu0 %v827, 64
        %v1443 = vpop.permute.xlu0 %1442
        %v1446 = vsel %vm1112, %v1251, 0
        %v1449 = vsel %vm1112, %v1252, 0
        %v1452 = vsel %vm1264, %v1443, 0
        %1454 = vmatprep.subr.bf16.mxu0 0
        %1455 = vmatpush1.bf16.msra.mxu0 %v1441
        %1456 = vmatprep.subr.bf16.mxu0 0
        %1457 = vmatpush1.bf16.msra.mxu0 %v1452
        %1458 = vmatprep.subr.bf16.mxu0 0
        %1459 = vmatpush1.bf16.msra.mxu0 0
        %1460 = vmatprep.subr.bf16.mxu0 0
        %1461 = vmatpush1.bf16.msra.mxu0 0
        %1462 = vmatprep.subr.bf16.mxu0 0
        %1463 = vmatpush1.bf16.msra.mxu0 0
        %1464 = vmatprep.subr.bf16.mxu0 0
        %1465 = vmatpush1.bf16.msra.mxu0 0
        %1466 = vmatprep.subr.bf16.mxu0 0
        %1467 = vmatpush1.bf16.msra.mxu0 0
        %1468 = vmatprep.subr.bf16.mxu0 0
        %1469 = vmatpush1.bf16.msra.mxu0 0
        %1470 = vmatprep.subr.bf16.mxu0 0
        %1471 = vmatpush1.bf16.msra.mxu0 0
        %1472 = vmatprep.subr.bf16.mxu0 0
        %1473 = vmatpush1.bf16.msra.mxu0 0
        %1474 = vmatprep.subr.bf16.mxu0 0
        %1475 = vmatpush1.bf16.msra.mxu0 0
        %1476 = vmatprep.subr.bf16.mxu0 0
        %1477 = vmatpush1.bf16.msra.mxu0 0
        %1478 = vmatprep.subr.bf16.mxu0 0
        %1479 = vmatpush1.bf16.msra.mxu0 0
        %1480 = vmatprep.subr.bf16.mxu0 0
        %1481 = vmatpush1.bf16.msra.mxu0 0
        %1482 = vmatprep.subr.bf16.mxu0 0
        %1483 = vmatpush1.bf16.msra.mxu0 0
        %1484 = vmatprep.subr.bf16.mxu0 0
        %1485 = vmatpush1.bf16.msra.mxu0 0
        %1486 = vmatprep.mubr.bf16.mxu0 0
        %1487 = vmatmul.mubr.bf16.gmra.mrb[0].mxu0 %v1446
        %v1488 = vpop.f32.mrb[0].mxu0
        %v1489 = vadd.f32 0.0, %v1488
        %v1490 = vpop.f32.mrb[0].mxu0
        %v1491 = vpop.f32.mrb[0].mxu0
        %v1492 = vadd.f32 0.0, %v1491
        %v1493 = vpop.f32.mrb[0].mxu0
        %1494 = vmatprep.mubr.bf16.mxu0 0
        %1495 = vmatmul.mubr.bf16.gmra.mrb[0].mxu0 %v1449
        %v1496 = vpop.f32.mrb[0].mxu0
        %v1497 = vadd.f32 0.0, %v1496
        %v1498 = vpop.f32.mrb[0].mxu0
        %v1499 = vpop.f32.mrb[0].mxu0
        %v1500 = vpop.f32.mrb[0].mxu0
        %1501 = vdwg.mxu0
        %v1502 = vpack.c.bf16 %v1306, %v1303
        %v1503 = vpack.c.bf16 %v1311, %v1311
        %v1504 = vpack.c.bf16 %v1368, %v1365
        %v1505 = vpack.c.bf16 %v1373, %v1373
        %v1506 = vpack.c.bf16 %v1430, %v1427
        %v1507 = vpack.c.bf16 %v1435, %v1435
        %v1508 = vpack.c.bf16 %v1492, %v1489
        %v1509 = vpack.c.bf16 %v1497, %v1497
        %v1510 = vld [vmem:[#allocation10] sm:$0xf]
        %v1511 = vld [vmem:[#allocation10 + $0x4] sm:$0xf]
        %v1512 = vld [vmem:[#allocation10 + $0x8] sm:$0xf]
        %v1513 = vld [vmem:[#allocation10 + $0xc] sm:$0xf]
        %v1515 = vsel %vm832, %v1502, 0
        %v1518 = vsel %vm832, %v1503, 0
        %v1521 = vsel %vm1264, %v1510, 0
        %1523 = vmatprep.subr.bf16.mxu0 0
        %1524 = vmatpush1.bf16.msra.mxu0 %v1521
        %1525 = vmatprep.subr.bf16.mxu0 0
        %1526 = vmatpush1.bf16.msra.mxu0 0
        %1527 = vmatprep.subr.bf16.mxu0 0
        %1528 = vmatpush1.bf16.msra.mxu0 0
        %1529 = vmatprep.subr.bf16.mxu0 0
        %1530 = vmatpush1.bf16.msra.mxu0 0
        %1531 = vmatprep.subr.bf16.mxu0 0
        %1532 = vmatpush1.bf16.msra.mxu0 0
        %1533 = vmatprep.subr.bf16.mxu0 0
        %1534 = vmatpush1.bf16.msra.mxu0 0
        %1535 = vmatprep.subr.bf16.mxu0 0
        %1536 = vmatpush1.bf16.msra.mxu0 0
        %1537 = vmatprep.subr.bf16.mxu0 0
        %1538 = vmatpush1.bf16.msra.mxu0 0
        %1539 = vmatprep.subr.bf16.mxu0 0
        %1540 = vmatpush1.bf16.msra.mxu0 0
        %1541 = vmatprep.subr.bf16.mxu0 0
        %1542 = vmatpush1.bf16.msra.mxu0 0
        %1543 = vmatprep.subr.bf16.mxu0 0
        %1544 = vmatpush1.bf16.msra.mxu0 0
        %1545 = vmatprep.subr.bf16.mxu0 0
        %1546 = vmatpush1.bf16.msra.mxu0 0
        %1547 = vmatprep.subr.bf16.mxu0 0
        %1548 = vmatpush1.bf16.msra.mxu0 0
        %1549 = vmatprep.subr.bf16.mxu0 0
        %1550 = vmatpush1.bf16.msra.mxu0 0
        %1551 = vmatprep.subr.bf16.mxu0 0
        %1552 = vmatpush1.bf16.msra.mxu0 0
        %1553 = vmatprep.subr.bf16.mxu0 0
        %1554 = vmatpush1.bf16.msra.mxu0 0
        %1555 = vmatprep.mubr.bf16.mxu0 0
        %1556 = vmatmul.mubr.bf16.gmra.mrb[0].mxu0 %v1515
        %v1557 = vpop.f32.mrb[0].mxu0
        %v1558 = vadd.f32 0.0, %v1557
        %v1559 = vpop.f32.mrb[0].mxu0
        %v1560 = vpop.f32.mrb[0].mxu0
        %v1561 = vadd.f32 0.0, %v1560
        %v1562 = vpop.f32.mrb[0].mxu0
        %1563 = vmatprep.mubr.bf16.mxu0 0
        %1564 = vmatmul.mubr.bf16.gmra.mrb[0].mxu0 %v1518
        %v1565 = vpop.f32.mrb[0].mxu0
        %v1566 = vadd.f32 0.0, %v1565
        %v1567 = vpop.f32.mrb[0].mxu0
        %v1568 = vpop.f32.mrb[0].mxu0
        %v1569 = vpop.f32.mrb[0].mxu0
        %1570 = vdwg.mxu0
        %v1572 = vsel %vm832, %v1504, 0
        %v1575 = vsel %vm832, %v1505, 0
        %v1578 = vsel %vm1264, %v1511, 0
        %1580 = vmatprep.subr.bf16.mxu0 0
        %1581 = vmatpush1.bf16.msra.mxu0 %v1578
        %1582 = vmatprep.subr.bf16.mxu0 0
        %1583 = vmatpush1.bf16.msra.mxu0 0
        %1584 = vmatprep.subr.bf16.mxu0 0
        %1585 = vmatpush1.bf16.msra.mxu0 0
        %1586 = vmatprep.subr.bf16.mxu0 0
        %1587 = vmatpush1.bf16.msra.mxu0 0
        %1588 = vmatprep.subr.bf16.mxu0 0
        %1589 = vmatpush1.bf16.msra.mxu0 0
        %1590 = vmatprep.subr.bf16.mxu0 0
        %1591 = vmatpush1.bf16.msra.mxu0 0
        %1592 = vmatprep.subr.bf16.mxu0 0
        %1593 = vmatpush1.bf16.msra.mxu0 0
        %1594 = vmatprep.subr.bf16.mxu0 0
        %1595 = vmatpush1.bf16.msra.mxu0 0
        %1596 = vmatprep.subr.bf16.mxu0 0
        %1597 = vmatpush1.bf16.msra.mxu0 0
        %1598 = vmatprep.subr.bf16.mxu0 0
        %1599 = vmatpush1.bf16.msra.mxu0 0
        %1600 = vmatprep.subr.bf16.mxu0 0
        %1601 = vmatpush1.bf16.msra.mxu0 0
        %1602 = vmatprep.subr.bf16.mxu0 0
        %1603 = vmatpush1.bf16.msra.mxu0 0
        %1604 = vmatprep.subr.bf16.mxu0 0
        %1605 = vmatpush1.bf16.msra.mxu0 0
        %1606 = vmatprep.subr.bf16.mxu0 0
        %1607 = vmatpush1.bf16.msra.mxu0 0
        %1608 = vmatprep.subr.bf16.mxu0 0
        %1609 = vmatpush1.bf16.msra.mxu0 0
        %1610 = vmatprep.subr.bf16.mxu0 0
        %1611 = vmatpush1.bf16.msra.mxu0 0
        %1612 = vmatprep.mubr.bf16.mxu0 0
        %1613 = vmatmul.mubr.bf16.gmra.mrb[0].mxu0 %v1572
        %v1614 = vpop.f32.mrb[0].mxu0
        %v1615 = vadd.f32 0.0, %v1614
        %v1616 = vpop.f32.mrb[0].mxu0
        %v1617 = vpop.f32.mrb[0].mxu0
        %v1618 = vadd.f32 0.0, %v1617
        %v1619 = vpop.f32.mrb[0].mxu0
        %1620 = vmatprep.mubr.bf16.mxu0 0
        %1621 = vmatmul.mubr.bf16.gmra.mrb[0].mxu0 %v1575
        %v1622 = vpop.f32.mrb[0].mxu0
        %v1623 = vadd.f32 0.0, %v1622
        %v1624 = vpop.f32.mrb[0].mxu0
        %v1625 = vpop.f32.mrb[0].mxu0
        %v1626 = vpop.f32.mrb[0].mxu0
        %1627 = vdwg.mxu0
        %v1629 = vsel %vm832, %v1506, 0
        %v1632 = vsel %vm832, %v1507, 0
        %v1635 = vsel %vm1264, %v1512, 0
        %1637 = vmatprep.subr.bf16.mxu0 0
        %1638 = vmatpush1.bf16.msra.mxu0 %v1635
        %1639 = vmatprep.subr.bf16.mxu0 0
        %1640 = vmatpush1.bf16.msra.mxu0 0
        %1641 = vmatprep.subr.bf16.mxu0 0
        %1642 = vmatpush1.bf16.msra.mxu0 0
        %1643 = vmatprep.subr.bf16.mxu0 0
        %1644 = vmatpush1.bf16.msra.mxu0 0
        %1645 = vmatprep.subr.bf16.mxu0 0
        %1646 = vmatpush1.bf16.msra.mxu0 0
        %1647 = vmatprep.subr.bf16.mxu0 0
        %1648 = vmatpush1.bf16.msra.mxu0 0
        %1649 = vmatprep.subr.bf16.mxu0 0
        %1650 = vmatpush1.bf16.msra.mxu0 0
        %1651 = vmatprep.subr.bf16.mxu0 0
        %1652 = vmatpush1.bf16.msra.mxu0 0
        %1653 = vmatprep.subr.bf16.mxu0 0
        %1654 = vmatpush1.bf16.msra.mxu0 0
        %1655 = vmatprep.subr.bf16.mxu0 0
        %1656 = vmatpush1.bf16.msra.mxu0 0
        %1657 = vmatprep.subr.bf16.mxu0 0
        %1658 = vmatpush1.bf16.msra.mxu0 0
        %1659 = vmatprep.subr.bf16.mxu0 0
        %1660 = vmatpush1.bf16.msra.mxu0 0
        %1661 = vmatprep.subr.bf16.mxu0 0
        %1662 = vmatpush1.bf16.msra.mxu0 0
        %1663 = vmatprep.subr.bf16.mxu0 0
        %1664 = vmatpush1.bf16.msra.mxu0 0
        %1665 = vmatprep.subr.bf16.mxu0 0
        %1666 = vmatpush1.bf16.msra.mxu0 0
        %1667 = vmatprep.subr.bf16.mxu0 0
        %1668 = vmatpush1.bf16.msra.mxu0 0
        %1669 = vmatprep.mubr.bf16.mxu0 0
        %1670 = vmatmul.mubr.bf16.gmra.mrb[0].mxu0 %v1629
        %v1671 = vpop.f32.mrb[0].mxu0
        %v1672 = vadd.f32 0.0, %v1671
        %v1673 = vpop.f32.mrb[0].mxu0
        %v1674 = vpop.f32.mrb[0].mxu0
        %v1675 = vadd.f32 0.0, %v1674
        %v1676 = vpop.f32.mrb[0].mxu0
        %1677 = vmatprep.mubr.bf16.mxu0 0
        %1678 = vmatmul.mubr.bf16.gmra.mrb[0].mxu0 %v1632
        %v1679 = vpop.f32.mrb[0].mxu0
        %v1680 = vadd.f32 0.0, %v1679
        %v1681 = vpop.f32.mrb[0].mxu0
        %v1682 = vpop.f32.mrb[0].mxu0
        %v1683 = vpop.f32.mrb[0].mxu0
        %1684 = vdwg.mxu0
        %v1686 = vsel %vm832, %v1508, 0
        %v1689 = vsel %vm832, %v1509, 0
        %v1692 = vsel %vm1264, %v1513, 0
        %1694 = vmatprep.subr.bf16.mxu0 0
        %1695 = vmatpush1.bf16.msra.mxu0 %v1692
        %1696 = vmatprep.subr.bf16.mxu0 0
        %1697 = vmatpush1.bf16.msra.mxu0 0
        %1698 = vmatprep.subr.bf16.mxu0 0
        %1699 = vmatpush1.bf16.msra.mxu0 0
        %1700 = vmatprep.subr.bf16.mxu0 0
        %1701 = vmatpush1.bf16.msra.mxu0 0
        %1702 = vmatprep.subr.bf16.mxu0 0
        %1703 = vmatpush1.bf16.msra.mxu0 0
        %1704 = vmatprep.subr.bf16.mxu0 0
        %1705 = vmatpush1.bf16.msra.mxu0 0
        %1706 = vmatprep.subr.bf16.mxu0 0
        %1707 = vmatpush1.bf16.msra.mxu0 0
        %1708 = vmatprep.subr.bf16.mxu0 0
        %1709 = vmatpush1.bf16.msra.mxu0 0
        %1710 = vmatprep.subr.bf16.mxu0 0
        %1711 = vmatpush1.bf16.msra.mxu0 0
        %1712 = vmatprep.subr.bf16.mxu0 0
        %1713 = vmatpush1.bf16.msra.mxu0 0
        %1714 = vmatprep.subr.bf16.mxu0 0
        %1715 = vmatpush1.bf16.msra.mxu0 0
        %1716 = vmatprep.subr.bf16.mxu0 0
        %1717 = vmatpush1.bf16.msra.mxu0 0
        %1718 = vmatprep.subr.bf16.mxu0 0
        %1719 = vmatpush1.bf16.msra.mxu0 0
        %1720 = vmatprep.subr.bf16.mxu0 0
        %1721 = vmatpush1.bf16.msra.mxu0 0
        %1722 = vmatprep.subr.bf16.mxu0 0
        %1723 = vmatpush1.bf16.msra.mxu0 0
        %1724 = vmatprep.subr.bf16.mxu0 0
        %1725 = vmatpush1.bf16.msra.mxu0 0
        %1726 = vmatprep.mubr.bf16.mxu0 0
        %1727 = vmatmul.mubr.bf16.gmra.mrb[0].mxu0 %v1686
        %v1728 = vpop.f32.mrb[0].mxu0
        %v1729 = vadd.f32 0.0, %v1728
        %v1730 = vpop.f32.mrb[0].mxu0
        %v1731 = vpop.f32.mrb[0].mxu0
        %v1732 = vadd.f32 0.0, %v1731
        %v1733 = vpop.f32.mrb[0].mxu0
        %1734 = vmatprep.mubr.bf16.mxu0 0
        %1735 = vmatmul.mubr.bf16.gmra.mrb[0].mxu0 %v1689
        %v1736 = vpop.f32.mrb[0].mxu0
        %v1737 = vadd.f32 0.0, %v1736
        %v1738 = vpop.f32.mrb[0].mxu0
        %v1739 = vpop.f32.mrb[0].mxu0
        %v1740 = vpop.f32.mrb[0].mxu0
        %1741 = vdwg.mxu0
        %v1742 = vsel %vm674, %v1558, 0.0
        %v1743 = vsel %vm674, %v1615, 0.0
        %v1744 = vadd.f32 %v1742, %v1743
        %v1745 = vsel %vm674, %v1672, 0.0
        %v1746 = vadd.f32 %v1744, %v1745
        %v1747 = vsel %vm674, %v1729, 0.0
        %v1748 = vadd.f32 %v1746, %v1747
        %v1749 = vsel %vm674, %v1561, 0.0
        %v1750 = vsel %vm674, %v1618, 0.0
        %v1751 = vadd.f32 %v1749, %v1750
        %v1752 = vsel %vm674, %v1675, 0.0
        %v1753 = vadd.f32 %v1751, %v1752
        %v1754 = vsel %vm674, %v1732, 0.0
        %v1755 = vadd.f32 %v1753, %v1754
        %v1756 = vsel %vm674, %v1566, 0.0
        %v1757 = vsel %vm674, %v1623, 0.0
        %v1758 = vadd.f32 %v1756, %v1757
        %v1759 = vsel %vm674, %v1680, 0.0
        %v1760 = vadd.f32 %v1758, %v1759
        %v1761 = vsel %vm674, %v1737, 0.0
        %v1762 = vadd.f32 %v1760, %v1761
        %v1763 = vld [vmem:[#allocation11] sm:$0x1]
        %v1765 = vlaneseq
        %v1766 = vshrl.u32 %v1765, 7
        %v1767 = vsub.s32 0, %v1766
        %v1768 = vrot.slane %v1763, %v1767
        %v1770 = vadd.f32 %v1748, %v1768
        %v1771 = vadd.f32 %v1755, %v1768
        %v1772 = vadd.f32 %v1762, %v1768
        %v1773 = vadd.f32 %v669, %v1770
        %v1774 = vadd.f32 %v670, %v1771
        %v1775 = vadd.f32 %v671, %v1772
        %v1776 = vld [vmem:[#allocation16] sm:$0x1]
        %v1777 = vld [vmem:[#allocation17] sm:$0x1]
        %v1778 = vsel %vm674, %v1773, 0.0
        %1779 = vadd.xlane.f32.xlu0 %v1778
        %v1780 = vpop.xlane.xlu0 %1779
        %v1781 = vsel %vm674, %v1774, 0.0
        %1782 = vadd.xlane.f32.xlu0 %v1781
        %v1783 = vpop.xlane.xlu0 %1782
        %v1784 = vsel %vm674, %v1775, 0.0
        %1785 = vadd.xlane.f32.xlu0 %v1784
        %v1786 = vpop.xlane.xlu0 %1785
        %v1787 = vmul.f32 %v1780, %v684
        %v1788 = vmul.f32 %v1783, %v684
        %v1789 = vmul.f32 %v1786, %v684
        %v1790 = vsub.f32 %v1773, %v1787
        %v1791 = vsub.f32 %v1774, %v1788
        %v1792 = vsub.f32 %v1775, %v1789
        %v1793 = vmul.f32 %v1790, %v1790
        %v1794 = vmul.f32 %v1791, %v1791
        %v1795 = vmul.f32 %v1792, %v1792
        %v1796 = vsel %vm674, %v1793, 0.0
        %1797 = vadd.xlane.f32.xlu0 %v1796
        %v1798 = vpop.xlane.xlu0 %1797
        %v1799 = vsel %vm674, %v1794, 0.0
        %1800 = vadd.xlane.f32.xlu0 %v1799
        %v1801 = vpop.xlane.xlu0 %1800
        %v1802 = vsel %vm674, %v1795, 0.0
        %1803 = vadd.xlane.f32.xlu0 %v1802
        %v1804 = vpop.xlane.xlu0 %1803
        %v1805 = vmul.f32 %v1798, %v684
        %v1806 = vmul.f32 %v1801, %v684
        %v1807 = vmul.f32 %v1804, %v684
        %v1808 = vadd.f32 %v1805, 1e-06
        %v1809 = vadd.f32 %v1806, 1e-06
        %v1810 = vadd.f32 %v1807, 1e-06
        %v1811 = vrsqrt.pop %v1808
        %v1812 = vrsqrt.pop %v1809
        %v1813 = vrsqrt.pop %v1810
        %v1814 = vmul.f32 %v1790, %v1811
        %v1815 = vmul.f32 %v1791, %v1812
        %v1816 = vmul.f32 %v1792, %v1813
        %v1818 = vlaneseq
        %v1819 = vshrl.u32 %v1818, 7
        %v1820 = vsub.s32 0, %v1819
        %v1821 = vrot.slane %v1776, %v1820
        %v1823 = vmul.f32 %v1814, %v1821
        %v1824 = vmul.f32 %v1815, %v1821
        %v1825 = vmul.f32 %v1816, %v1821
        %v1827 = vlaneseq
        %v1828 = vshrl.u32 %v1827, 7
        %v1829 = vsub.s32 0, %v1828
        %v1830 = vrot.slane %v1777, %v1829
        %v1832 = vadd.f32 %v1823, %v1830
        %v1833 = vadd.f32 %v1824, %v1830
        %v1834 = vadd.f32 %v1825, %v1830
        %v1835 = vpack.c.bf16 %v1833, %v1832
        %v1836 = vpack.c.bf16 %v1834, %v1834
        %v1837 = vld [vmem:[#allocation19] sm:$0xf]
        %v1838 = vld [vmem:[#allocation19 + $0x4] sm:$0xf]
        %v1839 = vld [vmem:[#allocation19 + $0x8] sm:$0xf]
        %v1840 = vld [vmem:[#allocation19 + $0xc] sm:$0xf]
        %v1841 = vld [vmem:[#allocation20] sm:$0x1]
        %v1843 = vlaneseq
        %v1844 = vshrl.u32 %v1843, 7
        %v1845 = vsub.s32 0, %v1844
        %v1846 = vrot.slane %v1841, %v1845
        %v1852 = vunpack.c.l.b16 %v1837
        %v1853 = vunpack.c.l.b16 %v1838
        %v1854 = vunpack.c.l.b16 %v1839
        %v1855 = vunpack.c.l.b16 %v1840
        %v1856 = vpack.c.b16 %v1853, %v1852
        %v1857 = vpack.c.b16 %v1855, %v1854
        %v1861 = vsel %vm674, %v1835, 0
        %v1864 = vsel %vm674, %v1836, 0
        %1866 = vmatprep.subr.bf16.mxu0 0
        %1867 = vmatpush1.bf16.msra.mxu0 %v1856
        %1868 = vmatprep.subr.bf16.mxu0 0
        %1869 = vmatpush1.bf16.msra.mxu0 %v1857
        %1870 = vmatprep.subr.bf16.mxu0 0
        %1871 = vmatpush1.bf16.msra.mxu0 0
        %1872 = vmatprep.subr.bf16.mxu0 0
        %1873 = vmatpush1.bf16.msra.mxu0 0
        %1874 = vmatprep.subr.bf16.mxu0 0
        %1875 = vmatpush1.bf16.msra.mxu0 0
        %1876 = vmatprep.subr.bf16.mxu0 0
        %1877 = vmatpush1.bf16.msra.mxu0 0
        %1878 = vmatprep.subr.bf16.mxu0 0
        %1879 = vmatpush1.bf16.msra.mxu0 0
        %1880 = vmatprep.subr.bf16.mxu0 0
        %1881 = vmatpush1.bf16.msra.mxu0 0
        %1882 = vmatprep.subr.bf16.mxu0 0
        %1883 = vmatpush1.bf16.msra.mxu0 0
        %1884 = vmatprep.subr.bf16.mxu0 0
        %1885 = vmatpush1.bf16.msra.mxu0 0
        %1886 = vmatprep.subr.bf16.mxu0 0
        %1887 = vmatpush1.bf16.msra.mxu0 0
        %1888 = vmatprep.subr.bf16.mxu0 0
        %1889 = vmatpush1.bf16.msra.mxu0 0
        %1890 = vmatprep.subr.bf16.mxu0 0
        %1891 = vmatpush1.bf16.msra.mxu0 0
        %1892 = vmatprep.subr.bf16.mxu0 0
        %1893 = vmatpush1.bf16.msra.mxu0 0
        %1894 = vmatprep.subr.bf16.mxu0 0
        %1895 = vmatpush1.bf16.msra.mxu0 0
        %1896 = vmatprep.subr.bf16.mxu0 0
        %1897 = vmatpush1.bf16.msra.mxu0 0
        %1898 = vmatprep.mubr.bf16.mxu0 0
        %1899 = vmatmul.mubr.bf16.gmra.mrb[0].mxu0 %v1861
        %v1900 = vpop.f32.mrb[0].mxu0
        %v1901 = vadd.f32 %v1846, %v1900
        %v1902 = vpop.f32.mrb[0].mxu0
        %v1903 = vpop.f32.mrb[0].mxu0
        %v1904 = vadd.f32 %v1846, %v1903
        %v1905 = vpop.f32.mrb[0].mxu0
        %1906 = vmatprep.mubr.bf16.mxu0 0
        %1907 = vmatmul.mubr.bf16.gmra.mrb[0].mxu0 %v1864
        %v1908 = vpop.f32.mrb[0].mxu0
        %v1909 = vadd.f32 %v1846, %v1908
        %v1910 = vpop.f32.mrb[0].mxu0
        %v1911 = vpop.f32.mrb[0].mxu0
        %v1912 = vpop.f32.mrb[0].mxu0
        %1913 = vdwg.mxu0
        %v1914 = vmul.f32 %v1901, %v1901
        %v1915 = vmul.f32 %v1904, %v1904
        %v1916 = vmul.f32 %v1909, %v1909
        %v1917 = vmul.f32 %v1901, %v1914
        %v1918 = vmul.f32 %v1904, %v1915
        %v1919 = vmul.f32 %v1909, %v1916
        %v1920 = vmul.f32 %v1917, 0.044715
        %v1921 = vmul.f32 %v1918, 0.044715
        %v1922 = vmul.f32 %v1919, 0.044715
        %v1923 = vadd.f32 %v1901, %v1920
        %v1924 = vadd.f32 %v1904, %v1921
        %v1925 = vadd.f32 %v1909, %v1922
        %v1926 = vmul.f32 %v1923, 0.7978846
        %v1927 = vmul.f32 %v1924, 0.7978846
        %v1928 = vmul.f32 %v1925, 0.7978846
        %v1929 = vtanh.pop %v1926
        %v1930 = vtanh.pop %v1927
        %v1931 = vtanh.pop %v1928
        %v1932 = vadd.f32 %v1929, 1.0
        %v1933 = vadd.f32 %v1930, 1.0
        %v1934 = vadd.f32 %v1931, 1.0
        %v1935 = vmul.f32 %v1932, 0.5
        %v1936 = vmul.f32 %v1933, 0.5
        %v1937 = vmul.f32 %v1934, 0.5
        %v1938 = vmul.f32 %v1901, %v1935
        %v1939 = vmul.f32 %v1904, %v1936
        %v1940 = vmul.f32 %v1909, %v1937
        %v1941 = vpack.c.bf16 %v1939, %v1938
        %v1942 = vpack.c.bf16 %v1940, %v1940
        %v1943 = vld [vmem:[#allocation22] sm:$0xf]
        %v1944 = vld [vmem:[#allocation22 + $0x4] sm:$0xf]
        %v1945 = vld [vmem:[#allocation22 + $0x8] sm:$0xf]
        %v1946 = vld [vmem:[#allocation22 + $0xc] sm:$0xf]
        %v1947 = vld [vmem:[#allocation22 + $0x10] sm:$0xf]
        %v1948 = vld [vmem:[#allocation22 + $0x14] sm:$0xf]
        %v1949 = vld [vmem:[#allocation22 + $0x18] sm:$0xf]
        %v1950 = vld [vmem:[#allocation22 + $0x1c] sm:$0xf]
        %v1951 = vld [vmem:[#allocation23] sm:$0x1]
        %v1953 = vlaneseq
        %v1954 = vshrl.u32 %v1953, 7
        %v1955 = vsub.s32 0, %v1954
        %v1956 = vrot.slane %v1951, %v1955
        %v1966 = vunpack.c.l.b16 %v1943
        %v1967 = vunpack.c.l.b16 %v1944
        %v1968 = vunpack.c.l.b16 %v1945
        %v1969 = vunpack.c.l.b16 %v1946
        %v1970 = vunpack.c.l.b16 %v1947
        %v1971 = vunpack.c.l.b16 %v1948
        %v1972 = vunpack.c.l.b16 %v1949
        %v1973 = vunpack.c.l.b16 %v1950
        %v1974 = vpack.c.b16 %v1967, %v1966
        %v1975 = vpack.c.b16 %v1969, %v1968
        %v1976 = vpack.c.b16 %v1971, %v1970
        %v1977 = vpack.c.b16 %v1973, %v1972
        %vm1982 = vcmask 523264
        %v1984 = vsel %vm1982, %v1941, 0
        %v1987 = vsel %vm1982, %v1942, 0
        %1989 = vmatprep.subr.bf16.mxu0 0
        %1990 = vmatpush1.bf16.msra.mxu0 %v1974
        %1991 = vmatprep.subr.bf16.mxu0 0
        %1992 = vmatpush1.bf16.msra.mxu0 %v1975
        %1993 = vmatprep.subr.bf16.mxu0 0
        %1994 = vmatpush1.bf16.msra.mxu0 %v1976
        %1995 = vmatprep.subr.bf16.mxu0 0
        %1996 = vmatpush1.bf16.msra.mxu0 %v1977
        %1997 = vmatprep.subr.bf16.mxu0 0
        %1998 = vmatpush1.bf16.msra.mxu0 0
        %1999 = vmatprep.subr.bf16.mxu0 0
        %2000 = vmatpush1.bf16.msra.mxu0 0
        %2001 = vmatprep.subr.bf16.mxu0 0
        %2002 = vmatpush1.bf16.msra.mxu0 0
        %2003 = vmatprep.subr.bf16.mxu0 0
        %2004 = vmatpush1.bf16.msra.mxu0 0
        %2005 = vmatprep.subr.bf16.mxu0 0
        %2006 = vmatpush1.bf16.msra.mxu0 0
        %2007 = vmatprep.subr.bf16.mxu0 0
        %2008 = vmatpush1.bf16.msra.mxu0 0
        %2009 = vmatprep.subr.bf16.mxu0 0
        %2010 = vmatpush1.bf16.msra.mxu0 0
        %2011 = vmatprep.subr.bf16.mxu0 0
        %2012 = vmatpush1.bf16.msra.mxu0 0
        %2013 = vmatprep.subr.bf16.mxu0 0
        %2014 = vmatpush1.bf16.msra.mxu0 0
        %2015 = vmatprep.subr.bf16.mxu0 0
        %2016 = vmatpush1.bf16.msra.mxu0 0
        %2017 = vmatprep.subr.bf16.mxu0 0
        %2018 = vmatpush1.bf16.msra.mxu0 0
        %2019 = vmatprep.subr.bf16.mxu0 0
        %2020 = vmatpush1.bf16.msra.mxu0 0
        %2021 = vmatprep.mubr.bf16.mxu0 0
        %2022 = vmatmul.mubr.bf16.gmra.mrb[0].mxu0 %v1984
        %v2023 = vpop.f32.mrb[0].mxu0
        %v2024 = vadd.f32 %v1956, %v2023
        %v2025 = vpop.f32.mrb[0].mxu0
        %v2026 = vpop.f32.mrb[0].mxu0
        %v2027 = vadd.f32 %v1956, %v2026
        %v2028 = vpop.f32.mrb[0].mxu0
        %2029 = vmatprep.mubr.bf16.mxu0 0
        %2030 = vmatmul.mubr.bf16.gmra.mrb[0].mxu0 %v1987
        %v2031 = vpop.f32.mrb[0].mxu0
        %v2032 = vadd.f32 %v1956, %v2031
        %v2033 = vpop.f32.mrb[0].mxu0
        %v2034 = vpop.f32.mrb[0].mxu0
        %v2035 = vpop.f32.mrb[0].mxu0
        %2036 = vdwg.mxu0
        %v2037 = vadd.f32 %v1773, %v2024
        %v2038 = vadd.f32 %v1774, %v2027
        %v2039 = vadd.f32 %v1775, %v2032
        %v2040 = vpack.c.bf16 %v2038, %v2037
        %v2041 = vpack.c.bf16 %v2039, %v2039
        %v2044 = vunpack.c.l.b16 %v2040
        %v2045 = vunpack.c.h.b16 %v2040
        %v2046 = vunpack.c.l.b16 %v2041
        %v2047 = vpack.c.b16 %v2044, %v2044
        %v2048 = vpack.c.b16 %v2045, %v2045
        %v2049 = vpack.c.b16 %v2046, %v2046
        %vm2053 = vcmask 257024
        %2054 = vst.msk [vmem:[%s658] sm:$0xf] %vm2053, %v2047
        %2055 = vst.msk [vmem:[%s658 + $0x4] sm:$0xf] %vm2053, %v2048
        %2056 = vst.msk [vmem:[%s658 + $0x8] sm:$0xf] %vm2053, %v2049
        %s2057 = sand.u32 %s345, 1
        %s2058 = scalar_lea.sflag [#allocation4], %s2057
        %s2059 = sand.u32 %s345, 1
        %s2060 = smul.addr %s2059, 12
        %s2061 = scalar_lea.vmem [#allocation25], %s2060
        // Predicated region
        $region133: #{_lambda_.12} parent=75 // pred_check
          %p2062 = pneg %p355
        $region134: #{_lambda_.12} parent=75 // pred_check_branch
          %2064 = sbr.rel (%p2062) target = $region136
        $region135: #{_lambda_.12} parent=75 // pred_region
          %s2066 = ssub.s32 192, 192
          %2067 = vsyncadd %s2058, %s2066
          %s2068 = smul.addr %s38, 3
          %s2069 = smul.addr %s2068, 64
          %s2070 = scalar_lea.hbm %s14, %s2069
          %s2071 = sshll.u32 %s2061, 4
          %s2072 = int_to_ptr.vmem [resolvable:$true] %s2071
          %2077 = dma.vmem_to_hbm [thread:$0]  %s2072, 192, %s2070, %s2058, 64, 64, 4
        $region136: #{_lambda_.12} parent=75 // pred_fallthru
          _
      $region76: #{_lambda_.12} parent=5 // pred_fallthru
        _
      %p2078 = scmp.le.s32.totalorder 2, %s33
      // Predicated region
      $region137: #{_lambda_.12} parent=5 // pred_check
        %p2079 = pneg %p2078
      $region138: #{_lambda_.12} parent=5 // pred_check_branch
        %2081 = sbr.rel (%p2079) target = $region140
      $region139: #{_lambda_.12} parent=5 // pred_region
        %s2082 = ssub.s32 %s33, 2
        // Predicated region
        $region141: #{_lambda_.12} parent=139 // pred_check
          %p2083 = pneg %p361
        $region142: #{_lambda_.12} parent=139 // pred_check_branch
          %2085 = sbr.rel (%p2083) target = $region144
        $region143: #{_lambda_.12} parent=139 // pred_region
          %s2086 = sand.u32 %s346, 1
          %s2087 = scalar_lea.sflag [#allocation4], %s2086
          %s2088 = sand.u32 %s346, 1
          %s2089 = smul.addr %s2088, 12
          %s2090 = scalar_lea.vmem [#allocation25], %s2089
          %2091 = dma.done %s2087, 192
        $region144: #{_lambda_.12} parent=139 // pred_fallthru
          _
      $region140: #{_lambda_.12} parent=5 // pred_fallthru
        _
    $region6: #{_lambda_.12} parent=1 // loop_footer
      %s37 = sadd.s32 1, %s33
    $region7: #{_lambda_.12} parent=1 // loop_footer_branch
      %32 = sbr.rel target = $region3
    $region8: #{_lambda_.12} parent=1 // loop_exit
      _
    %2092 = vsyncpa [#allocation3], 1
    %s2093 = scalar_lea.sflag [#allocation3], 1
    %2094 = vsyncpa %s2093, 1
    %2095 = vsyncpa [#allocation6], 1
    %2096 = vsyncpa [#allocation9], 1
    %2097 = vsyncpa [#allocation12], 1
    %2098 = vsyncpa [#allocation15], 1
    %2099 = vsyncpa [#allocation18], 1
    %2100 = vsyncpa [#allocation21], 1
    %2101 = vsyncpa [#allocation24], 1
    %2102 = vsyncpa [#allocation4], 1
    %s2103 = scalar_lea.sflag [#allocation4], 1
    %2104 = vsyncpa %s2103, 1

// kernel: _lambda_.13
$region0: #{_lambda_.13}
  #allocation0 [shape = 'u32[]', space=smem, size = 0x4, offset = 0x4, fixed_abs, tag = 'smem constant byte address 0x4 - core index']
  #allocation1 [shape = 'u32[144,128]{1,0:T(1,128)}', space=vmem, size = 0x12000, scoped, tag = 'internal scratch']
  %s0 = inlined_call_operand.hbm [shape: bf16[2,24,32], index: 0, kind: input, shape index: {}]
  %s1 = inlined_call_operand.hbm [shape: bf16[32,96], index: 1, kind: input, shape index: {}]
  %s2 = inlined_call_operand.hbm [shape: f32[1,96], index: 2, kind: input, shape index: {}]
  %s3 = inlined_call_operand.hbm [shape: bf16[4,8,32], index: 3, kind: input, shape index: {}]
  %s4 = inlined_call_operand.hbm [shape: f32[1,32], index: 4, kind: input, shape index: {}]
  %s5 = inlined_call_operand.hbm [shape: f32[1,32], index: 5, kind: input, shape index: {}]
  %s6 = inlined_call_operand.hbm [shape: f32[1,32], index: 6, kind: input, shape index: {}]
  %s7 = inlined_call_operand.hbm [shape: f32[1,32], index: 7, kind: input, shape index: {}]
  %s8 = inlined_call_operand.hbm [shape: f32[1,32], index: 8, kind: input, shape index: {}]
  %s9 = inlined_call_operand.hbm [shape: bf16[32,64], index: 9, kind: input, shape index: {}]
  %s10 = inlined_call_operand.hbm [shape: f32[1,64], index: 10, kind: input, shape index: {}]
  %s11 = inlined_call_operand.hbm [shape: bf16[64,32], index: 11, kind: input, shape index: {}]
  %s12 = inlined_call_operand.hbm [shape: f32[1,32], index: 12, kind: input, shape index: {}]
  %s13 = inlined_call_operand.hbm [shape: bf16[2,24,32], index: 13, kind: output, shape index: {}]
  %s14 = sld [smem:[#allocation0]]
  $region137: #{_lambda_.13} parent=0
    _
  %s16 = ssub.s32 1, %s14
  %s17 = scalar_select 0, %s16, %s14
  $region1: #{_lambda_.13} parent=0
    #allocation2 [shape = 'u8[12288]{0}', space=vmem, size = 0x3000, scoped, tag = 'input window, operand 0']
    #allocation3 [shape = 's32[2]{0}', space=sflag, size = 0x8, scoped, tag = 'scoped memory for _lambda_.13']
    #allocation4 [shape = 's32[2]{0}', space=sflag, size = 0x8, scoped, tag = 'scoped memory for _lambda_.13']
    #allocation5 [shape = 'u8[8192]{0}', space=vmem, size = 0x2000, scoped, tag = 'input window, operand 1, single buffered']
    #allocation6 [shape = 's32[1]{0}', space=sflag, size = 0x4, scoped, tag = 'scoped memory for _lambda_.13']
    #allocation7 [shape = 'u8[512]{0}', space=vmem, size = 0x400, scoped, tag = 'input window, operand 2, single buffered']
    #allocation8 [shape = 'u8[8192]{0}', space=vmem, size = 0x2000, scoped, tag = 'input window, operand 3, single buffered']
    #allocation9 [shape = 's32[1]{0}', space=sflag, size = 0x4, scoped, tag = 'scoped memory for _lambda_.13']
    #allocation10 [shape = 'u8[512]{0}', space=vmem, size = 0x400, scoped, tag = 'input window, operand 4, single buffered']
    #allocation11 [shape = 'u8[512]{0}', space=vmem, size = 0x400, scoped, tag = 'input window, operand 5, single buffered']
    #allocation12 [shape = 's32[1]{0}', space=sflag, size = 0x4, scoped, tag = 'scoped memory for _lambda_.13']
    #allocation13 [shape = 'u8[512]{0}', space=vmem, size = 0x400, scoped, tag = 'input window, operand 6, single buffered']
    #allocation14 [shape = 'u8[512]{0}', space=vmem, size = 0x400, scoped, tag = 'input window, operand 7, single buffered']
    #allocation15 [shape = 's32[1]{0}', space=sflag, size = 0x4, scoped, tag = 'scoped memory for _lambda_.13']
    #allocation16 [shape = 'u8[512]{0}', space=vmem, size = 0x400, scoped, tag = 'input window, operand 8, single buffered']
    #allocation17 [shape = 'u8[8192]{0}', space=vmem, size = 0x2000, scoped, tag = 'input window, operand 9, single buffered']
    #allocation18 [shape = 's32[1]{0}', space=sflag, size = 0x4, scoped, tag = 'scoped memory for _lambda_.13']
    #allocation19 [shape = 'u8[512]{0}', space=vmem, size = 0x400, scoped, tag = 'input window, operand 10, single buffered']
    #allocation20 [shape = 'u8[16384]{0}', space=vmem, size = 0x4000, scoped, tag = 'input window, operand 11, single buffered']
    #allocation21 [shape = 's32[1]{0}', space=sflag, size = 0x4, scoped, tag = 'scoped memory for _lambda_.13']
    #allocation22 [shape = 'u8[512]{0}', space=vmem, size = 0x400, scoped, tag = 'input window, operand 12, single buffered']
    #allocation23 [shape = 'u8[12288]{0}', space=vmem, size = 0x3000, scoped, tag = 'output window, operand 0']
    %18 = vsyncpa [#allocation3], 0
    %s19 = scalar_lea.sflag [#allocation3], 1
    %20 = vsyncpa %s19, 0
    %21 = vsyncpa [#allocation6], 0
    %22 = vsyncpa [#allocation9], 0
    %23 = vsyncpa [#allocation12], 0
    %24 = vsyncpa [#allocation15], 0
    %25 = vsyncpa [#allocation18], 0
    %26 = vsyncpa [#allocation21], 0
    %27 = vsyncpa [#allocation4], 0
    %s28 = scalar_lea.sflag [#allocation4], 1
    %29 = vsyncpa %s28, 0
    loop: start=0, step=1, limit=4
    $region2: #{_lambda_.13} parent=1 // loop_pre_header
      _
    $region3: #{_lambda_.13} parent=1 // loop_header
      %s31 = sphi 0, %s35
      %p32 = scmp.ge.s32.totalorder %s31, 4
      %s41 = sphi 0, %s43
      %s44 = sphi 0, %s41
      %s45 = sphi 0, %s44
      %s61 = sphi 0, %s45
      %s65 = sphi 0, %s65
      %s67 = sphi 0, %s65
      %s68 = sphi 0, %s67
      %s82 = sphi 0, %s68
      %s86 = sphi 0, %s86
      %s88 = sphi 0, %s86
      %s89 = sphi 0, %s88
      %s103 = sphi 0, %s89
      %s107 = sphi 0, %s107
      %s109 = sphi 0, %s107
      %s110 = sphi 0, %s109
      %s124 = sphi 0, %s110
      %s128 = sphi 0, %s128
      %s130 = sphi 0, %s128
      %s131 = sphi 0, %s130
      %s145 = sphi 0, %s131
      %s149 = sphi 0, %s149
      %s151 = sphi 0, %s149
      %s152 = sphi 0, %s151
      %s166 = sphi 0, %s152
      %s170 = sphi 0, %s170
      %s172 = sphi 0, %s170
      %s173 = sphi 0, %s172
      %s187 = sphi 0, %s173
      %s191 = sphi 0, %s191
      %s193 = sphi 0, %s191
      %s194 = sphi 0, %s193
      %s208 = sphi 0, %s194
      %s212 = sphi 0, %s212
      %s214 = sphi 0, %s212
      %s215 = sphi 0, %s214
      %s229 = sphi 0, %s215
      %s233 = sphi 0, %s233
      %s235 = sphi 0, %s233
      %s236 = sphi 0, %s235
      %s250 = sphi 0, %s236
      %s254 = sphi 0, %s254
      %s256 = sphi 0, %s254
      %s257 = sphi 0, %s256
      %s271 = sphi 0, %s257
      %s275 = sphi 0, %s275
      %s277 = sphi 0, %s275
      %s278 = sphi 0, %s277
      %s292 = sphi 0, %s278
      %s296 = sphi 0, %s296
      %s298 = sphi 0, %s296
      %s299 = sphi 0, %s298
      %s313 = sphi 0, %s299
      %s319 = sphi 0, %s321
      %s322 = sphi 0, %s319
      %s323 = sphi 0, %s322
      %s339 = sphi 0, %s323
    $region4: #{_lambda_.13} parent=1 // loop_header_branch
      %34 = sbr.rel (%p32) target = $region8
    $region5: #{_lambda_.13} parent=1 // loop_body
      %s36 = ssub.s32 %s31, 1
      %s37 = ssub.s32 %s31, 2
      %s38 = sadd.s32 %s31, 1
      %s39 = ssub.s32 %s31, %s38
      %p40 = scmp.eq.s32.totalorder %s39, 0
      %s42 = sadd.s32 %s41, 1
      %s43 = scalar_select %p40, %s41, %s42
      %p46 = pneg %p40
      %p47 = scmp.eq.s32.totalorder %s31, 1
      %p48 = por %p46, %p47
      %p49 = scmp.ne.s32.totalorder %s41, %s44
      %p50 = scmp.eq.s32.totalorder %s31, 0
      %p51 = por %p49, %p50
      %p52 = scmp.ne.s32.totalorder %s41, %s44
      %p53 = scmp.eq.s32.totalorder %s36, 1
      %p54 = por %p52, %p53
      %p55 = scmp.ne.s32.totalorder %s44, %s45
      %p56 = scmp.eq.s32.totalorder %s36, 0
      %p57 = por %p55, %p56
      %p58 = scmp.ne.s32.totalorder %s44, %s45
      %p59 = scmp.eq.s32.totalorder %s37, 1
      %p60 = por %p58, %p59
      %p62 = scmp.ne.s32.totalorder %s45, %s61
      %p63 = scmp.eq.s32.totalorder %s37, 0
      %p64 = por %p62, %p63
      %s66 = sadd.s32 %s65, 1
      %p69 = scmp.eq.s32.totalorder %s31, 1
      %p70 = scmp.ne.s32.totalorder %s65, %s67
      %p71 = scmp.eq.s32.totalorder %s31, 0
      %p72 = por %p70, %p71
      %p73 = scmp.ne.s32.totalorder %s65, %s67
      %p74 = scmp.eq.s32.totalorder %s36, 1
      %p75 = por %p73, %p74
      %p76 = scmp.ne.s32.totalorder %s67, %s68
      %p77 = scmp.eq.s32.totalorder %s36, 0
      %p78 = por %p76, %p77
      %p79 = scmp.ne.s32.totalorder %s67, %s68
      %p80 = scmp.eq.s32.totalorder %s37, 1
      %p81 = por %p79, %p80
      %p83 = scmp.ne.s32.totalorder %s68, %s82
      %p84 = scmp.eq.s32.totalorder %s37, 0
      %p85 = por %p83, %p84
      %s87 = sadd.s32 %s86, 1
      %p90 = scmp.eq.s32.totalorder %s31, 1
      %p91 = scmp.ne.s32.totalorder %s86, %s88
      %p92 = scmp.eq.s32.totalorder %s31, 0
      %p93 = por %p91, %p92
      %p94 = scmp.ne.s32.totalorder %s86, %s88
      %p95 = scmp.eq.s32.totalorder %s36, 1
      %p96 = por %p94, %p95
      %p97 = scmp.ne.s32.totalorder %s88, %s89
      %p98 = scmp.eq.s32.totalorder %s36, 0
      %p99 = por %p97, %p98
      %p100 = scmp.ne.s32.totalorder %s88, %s89
      %p101 = scmp.eq.s32.totalorder %s37, 1
      %p102 = por %p100, %p101
      %p104 = scmp.ne.s32.totalorder %s89, %s103
      %p105 = scmp.eq.s32.totalorder %s37, 0
      %p106 = por %p104, %p105
      %s108 = sadd.s32 %s107, 1
      %p111 = scmp.eq.s32.totalorder %s31, 1
      %p112 = scmp.ne.s32.totalorder %s107, %s109
      %p113 = scmp.eq.s32.totalorder %s31, 0
      %p114 = por %p112, %p113
      %p115 = scmp.ne.s32.totalorder %s107, %s109
      %p116 = scmp.eq.s32.totalorder %s36, 1
      %p117 = por %p115, %p116
      %p118 = scmp.ne.s32.totalorder %s109, %s110
      %p119 = scmp.eq.s32.totalorder %s36, 0
      %p120 = por %p118, %p119
      %p121 = scmp.ne.s32.totalorder %s109, %s110
      %p122 = scmp.eq.s32.totalorder %s37, 1
      %p123 = por %p121, %p122
      %p125 = scmp.ne.s32.totalorder %s110, %s124
      %p126 = scmp.eq.s32.totalorder %s37, 0
      %p127 = por %p125, %p126
      %s129 = sadd.s32 %s128, 1
      %p132 = scmp.eq.s32.totalorder %s31, 1
      %p133 = scmp.ne.s32.totalorder %s128, %s130
      %p134 = scmp.eq.s32.totalorder %s31, 0
      %p135 = por %p133, %p134
      %p136 = scmp.ne.s32.totalorder %s128, %s130
      %p137 = scmp.eq.s32.totalorder %s36, 1
      %p138 = por %p136, %p137
      %p139 = scmp.ne.s32.totalorder %s130, %s131
      %p140 = scmp.eq.s32.totalorder %s36, 0
      %p141 = por %p139, %p140
      %p142 = scmp.ne.s32.totalorder %s130, %s131
      %p143 = scmp.eq.s32.totalorder %s37, 1
      %p144 = por %p142, %p143
      %p146 = scmp.ne.s32.totalorder %s131, %s145
      %p147 = scmp.eq.s32.totalorder %s37, 0
      %p148 = por %p146, %p147
      %s150 = sadd.s32 %s149, 1
      %p153 = scmp.eq.s32.totalorder %s31, 1
      %p154 = scmp.ne.s32.totalorder %s149, %s151
      %p155 = scmp.eq.s32.totalorder %s31, 0
      %p156 = por %p154, %p155
      %p157 = scmp.ne.s32.totalorder %s149, %s151
      %p158 = scmp.eq.s32.totalorder %s36, 1
      %p159 = por %p157, %p158
      %p160 = scmp.ne.s32.totalorder %s151, %s152
      %p161 = scmp.eq.s32.totalorder %s36, 0
      %p162 = por %p160, %p161
      %p163 = scmp.ne.s32.totalorder %s151, %s152
      %p164 = scmp.eq.s32.totalorder %s37, 1
      %p165 = por %p163, %p164
      %p167 = scmp.ne.s32.totalorder %s152, %s166
      %p168 = scmp.eq.s32.totalorder %s37, 0
      %p169 = por %p167, %p168
      %s171 = sadd.s32 %s170, 1
      %p174 = scmp.eq.s32.totalorder %s31, 1
      %p175 = scmp.ne.s32.totalorder %s170, %s172
      %p176 = scmp.eq.s32.totalorder %s31, 0
      %p177 = por %p175, %p176
      %p178 = scmp.ne.s32.totalorder %s170, %s172
      %p179 = scmp.eq.s32.totalorder %s36, 1
      %p180 = por %p178, %p179
      %p181 = scmp.ne.s32.totalorder %s172, %s173
      %p182 = scmp.eq.s32.totalorder %s36, 0
      %p183 = por %p181, %p182
      %p184 = scmp.ne.s32.totalorder %s172, %s173
      %p185 = scmp.eq.s32.totalorder %s37, 1
      %p186 = por %p184, %p185
      %p188 = scmp.ne.s32.totalorder %s173, %s187
      %p189 = scmp.eq.s32.totalorder %s37, 0
      %p190 = por %p188, %p189
      %s192 = sadd.s32 %s191, 1
      %p195 = scmp.eq.s32.totalorder %s31, 1
      %p196 = scmp.ne.s32.totalorder %s191, %s193
      %p197 = scmp.eq.s32.totalorder %s31, 0
      %p198 = por %p196, %p197
      %p199 = scmp.ne.s32.totalorder %s191, %s193
      %p200 = scmp.eq.s32.totalorder %s36, 1
      %p201 = por %p199, %p200
      %p202 = scmp.ne.s32.totalorder %s193, %s194
      %p203 = scmp.eq.s32.totalorder %s36, 0
      %p204 = por %p202, %p203
      %p205 = scmp.ne.s32.totalorder %s193, %s194
      %p206 = scmp.eq.s32.totalorder %s37, 1
      %p207 = por %p205, %p206
      %p209 = scmp.ne.s32.totalorder %s194, %s208
      %p210 = scmp.eq.s32.totalorder %s37, 0
      %p211 = por %p209, %p210
      %s213 = sadd.s32 %s212, 1
      %p216 = scmp.eq.s32.totalorder %s31, 1
      %p217 = scmp.ne.s32.totalorder %s212, %s214
      %p218 = scmp.eq.s32.totalorder %s31, 0
      %p219 = por %p217, %p218
      %p220 = scmp.ne.s32.totalorder %s212, %s214
      %p221 = scmp.eq.s32.totalorder %s36, 1
      %p222 = por %p220, %p221
      %p223 = scmp.ne.s32.totalorder %s214, %s215
      %p224 = scmp.eq.s32.totalorder %s36, 0
      %p225 = por %p223, %p224
      %p226 = scmp.ne.s32.totalorder %s214, %s215
      %p227 = scmp.eq.s32.totalorder %s37, 1
      %p228 = por %p226, %p227
      %p230 = scmp.ne.s32.totalorder %s215, %s229
      %p231 = scmp.eq.s32.totalorder %s37, 0
      %p232 = por %p230, %p231
      %s234 = sadd.s32 %s233, 1
      %p237 = scmp.eq.s32.totalorder %s31, 1
      %p238 = scmp.ne.s32.totalorder %s233, %s235
      %p239 = scmp.eq.s32.totalorder %s31, 0
      %p240 = por %p238, %p239
      %p241 = scmp.ne.s32.totalorder %s233, %s235
      %p242 = scmp.eq.s32.totalorder %s36, 1
      %p243 = por %p241, %p242
      %p244 = scmp.ne.s32.totalorder %s235, %s236
      %p245 = scmp.eq.s32.totalorder %s36, 0
      %p246 = por %p244, %p245
      %p247 = scmp.ne.s32.totalorder %s235, %s236
      %p248 = scmp.eq.s32.totalorder %s37, 1
      %p249 = por %p247, %p248
      %p251 = scmp.ne.s32.totalorder %s236, %s250
      %p252 = scmp.eq.s32.totalorder %s37, 0
      %p253 = por %p251, %p252
      %s255 = sadd.s32 %s254, 1
      %p258 = scmp.eq.s32.totalorder %s31, 1
      %p259 = scmp.ne.s32.totalorder %s254, %s256
      %p260 = scmp.eq.s32.totalorder %s31, 0
      %p261 = por %p259, %p260
      %p262 = scmp.ne.s32.totalorder %s254, %s256
      %p263 = scmp.eq.s32.totalorder %s36, 1
      %p264 = por %p262, %p263
      %p265 = scmp.ne.s32.totalorder %s256, %s257
      %p266 = scmp.eq.s32.totalorder %s36, 0
      %p267 = por %p265, %p266
      %p268 = scmp.ne.s32.totalorder %s256, %s257
      %p269 = scmp.eq.s32.totalorder %s37, 1
      %p270 = por %p268, %p269
      %p272 = scmp.ne.s32.totalorder %s257, %s271
      %p273 = scmp.eq.s32.totalorder %s37, 0
      %p274 = por %p272, %p273
      %s276 = sadd.s32 %s275, 1
      %p279 = scmp.eq.s32.totalorder %s31, 1
      %p280 = scmp.ne.s32.totalorder %s275, %s277
      %p281 = scmp.eq.s32.totalorder %s31, 0
      %p282 = por %p280, %p281
      %p283 = scmp.ne.s32.totalorder %s275, %s277
      %p284 = scmp.eq.s32.totalorder %s36, 1
      %p285 = por %p283, %p284
      %p286 = scmp.ne.s32.totalorder %s277, %s278
      %p287 = scmp.eq.s32.totalorder %s36, 0
      %p288 = por %p286, %p287
      %p289 = scmp.ne.s32.totalorder %s277, %s278
      %p290 = scmp.eq.s32.totalorder %s37, 1
      %p291 = por %p289, %p290
      %p293 = scmp.ne.s32.totalorder %s278, %s292
      %p294 = scmp.eq.s32.totalorder %s37, 0
      %p295 = por %p293, %p294
      %s297 = sadd.s32 %s296, 1
      %p300 = scmp.eq.s32.totalorder %s31, 1
      %p301 = scmp.ne.s32.totalorder %s296, %s298
      %p302 = scmp.eq.s32.totalorder %s31, 0
      %p303 = por %p301, %p302
      %p304 = scmp.ne.s32.totalorder %s296, %s298
      %p305 = scmp.eq.s32.totalorder %s36, 1
      %p306 = por %p304, %p305
      %p307 = scmp.ne.s32.totalorder %s298, %s299
      %p308 = scmp.eq.s32.totalorder %s36, 0
      %p309 = por %p307, %p308
      %p310 = scmp.ne.s32.totalorder %s298, %s299
      %p311 = scmp.eq.s32.totalorder %s37, 1
      %p312 = por %p310, %p311
      %p314 = scmp.ne.s32.totalorder %s299, %s313
      %p315 = scmp.eq.s32.totalorder %s37, 0
      %p316 = por %p314, %p315
      %s317 = ssub.s32 %s31, %s38
      %p318 = scmp.eq.s32.totalorder %s317, 0
      %s320 = sadd.s32 %s319, 1
      %s321 = scalar_select %p318, %s319, %s320
      %p324 = pneg %p318
      %p325 = scmp.eq.s32.totalorder %s31, 1
      %p326 = por %p324, %p325
      %p327 = scmp.ne.s32.totalorder %s319, %s322
      %p328 = scmp.eq.s32.totalorder %s31, 0
      %p329 = por %p327, %p328
      %p330 = scmp.ne.s32.totalorder %s319, %s322
      %p331 = scmp.eq.s32.totalorder %s36, 1
      %p332 = por %p330, %p331
      %p333 = scmp.ne.s32.totalorder %s322, %s323
      %p334 = scmp.eq.s32.totalorder %s36, 0
      %p335 = por %p333, %p334
      %p336 = scmp.ne.s32.totalorder %s322, %s323
      %p337 = scmp.eq.s32.totalorder %s37, 1
      %p338 = por %p336, %p337
      %p340 = scmp.ne.s32.totalorder %s323, %s339
      %p341 = scmp.eq.s32.totalorder %s37, 0
      %p342 = por %p340, %p341
      %p343 = scmp.le.s32.totalorder 1, %s31
      %p344 = scmp.lt.s32.totalorder %s31, 3
      %p345 = pnand %p343, %p344
      %p346 = pneg %p345
      // Predicated region
      $region9: #{_lambda_.13} parent=5 // pred_check
        _
      $region10: #{_lambda_.13} parent=5 // pred_check_branch
        %348 = sbr.rel (%p345) target = $region12
      $region11: #{_lambda_.13} parent=5 // pred_region
        %s349 = ssub.s32 %s31, 1
        // Predicated region
        $region13: #{_lambda_.13} parent=11 // pred_check
          %p350 = pneg %p78
        $region14: #{_lambda_.13} parent=11 // pred_check_branch
          %352 = sbr.rel (%p350) target = $region16
        $region15: #{_lambda_.13} parent=11 // pred_region
          %s354 = ssub.s32 256, 256
          %355 = vsyncadd [#allocation6], %s354
          %s356 = sshll.u32 [#allocation5], 4
          %s357 = int_to_ptr.vmem [resolvable:$true] %s356
          %362 = dma.hbm_to_vmem [thread:$0]  %s1, 256, %s357, [#allocation6], 64, 64, 4
        $region16: #{_lambda_.13} parent=11 // pred_fallthru
          _
        // Predicated region
        $region17: #{_lambda_.13} parent=11 // pred_check
          %p363 = pneg %p99
        $region18: #{_lambda_.13} parent=11 // pred_check_branch
          %365 = sbr.rel (%p363) target = $region20
        $region19: #{_lambda_.13} parent=11 // pred_region
          %s367 = ssub.s32 16, 16
          %368 = vsyncadd [#allocation6], %s367
          %s370 = sshll.u32 [#allocation7], 4
          %s371 = int_to_ptr.vmem [resolvable:$true] %s370
          %373 = dma.hbm_to_vmem [thread:$0]  %s2, 16, %s371, [#allocation6]
        $region20: #{_lambda_.13} parent=11 // pred_fallthru
          _
        // Predicated region
        $region21: #{_lambda_.13} parent=11 // pred_check
          %p374 = pneg %p120
        $region22: #{_lambda_.13} parent=11 // pred_check_branch
          %376 = sbr.rel (%p374) target = $region24
        $region23: #{_lambda_.13} parent=11 // pred_region
          %s378 = ssub.s32 256, 256
          %379 = vsyncadd [#allocation9], %s378
          %s380 = sshll.u32 [#allocation8], 4
          %s381 = int_to_ptr.vmem [resolvable:$true] %s380
          %386 = dma.hbm_to_vmem [thread:$0]  %s3, 256, %s381, [#allocation9], 64, 64, 4
        $region24: #{_lambda_.13} parent=11 // pred_fallthru
          _
        // Predicated region
        $region25: #{_lambda_.13} parent=11 // pred_check
          %p387 = pneg %p141
        $region26: #{_lambda_.13} parent=11 // pred_check_branch
          %389 = sbr.rel (%p387) target = $region28
        $region27: #{_lambda_.13} parent=11 // pred_region
          %s391 = ssub.s32 16, 16
          %392 = vsyncadd [#allocation9], %s391
          %s394 = sshll.u32 [#allocation10], 4
          %s395 = int_to_ptr.vmem [resolvable:$true] %s394
          %397 = dma.hbm_to_vmem [thread:$0]  %s4, 16, %s395, [#allocation9]
        $region28: #{_lambda_.13} parent=11 // pred_fallthru
          _
        // Predicated region
        $region29: #{_lambda_.13} parent=11 // pred_check
          %p398 = pneg %p162
        $region30: #{_lambda_.13} parent=11 // pred_check_branch
          %400 = sbr.rel (%p398) target = $region32
        $region31: #{_lambda_.13} parent=11 // pred_region
          %s402 = ssub.s32 16, 16
          %403 = vsyncadd [#allocation12], %s402
          %s405 = sshll.u32 [#allocation11], 4
          %s406 = int_to_ptr.vmem [resolvable:$true] %s405
          %408 = dma.hbm_to_vmem [thread:$0]  %s5, 16, %s406, [#allocation12]
        $region32: #{_lambda_.13} parent=11 // pred_fallthru
          _
        // Predicated region
        $region33: #{_lambda_.13} parent=11 // pred_check
          %p409 = pneg %p183
        $region34: #{_lambda_.13} parent=11 // pred_check_branch
          %411 = sbr.rel (%p409) target = $region36
        $region35: #{_lambda_.13} parent=11 // pred_region
          %s413 = ssub.s32 16, 16
          %414 = vsyncadd [#allocation12], %s413
          %s416 = sshll.u32 [#allocation13], 4
          %s417 = int_to_ptr.vmem [resolvable:$true] %s416
          %419 = dma.hbm_to_vmem [thread:$0]  %s6, 16, %s417, [#allocation12]
        $region36: #{_lambda_.13} parent=11 // pred_fallthru
          _
        // Predicated region
        $region37: #{_lambda_.13} parent=11 // pred_check
          %p420 = pneg %p204
        $region38: #{_lambda_.13} parent=11 // pred_check_branch
          %422 = sbr.rel (%p420) target = $region40
        $region39: #{_lambda_.13} parent=11 // pred_region
          %s424 = ssub.s32 16, 16
          %425 = vsyncadd [#allocation15], %s424
          %s427 = sshll.u32 [#allocation14], 4
          %s428 = int_to_ptr.vmem [resolvable:$true] %s427
          %430 = dma.hbm_to_vmem [thread:$0]  %s7, 16, %s428, [#allocation15]
        $region40: #{_lambda_.13} parent=11 // pred_fallthru
          _
        // Predicated region
        $region41: #{_lambda_.13} parent=11 // pred_check
          %p431 = pneg %p225
        $region42: #{_lambda_.13} parent=11 // pred_check_branch
          %433 = sbr.rel (%p431) target = $region44
        $region43: #{_lambda_.13} parent=11 // pred_region
          %s435 = ssub.s32 16, 16
          %436 = vsyncadd [#allocation15], %s435
          %s438 = sshll.u32 [#allocation16], 4
          %s439 = int_to_ptr.vmem [resolvable:$true] %s438
          %441 = dma.hbm_to_vmem [thread:$0]  %s8, 16, %s439, [#allocation15]
        $region44: #{_lambda_.13} parent=11 // pred_fallthru
          _
        // Predicated region
        $region45: #{_lambda_.13} parent=11 // pred_check
          %p442 = pneg %p246
        $region46: #{_lambda_.13} parent=11 // pred_check_branch
          %444 = sbr.rel (%p442) target = $region48
        $region47: #{_lambda_.13} parent=11 // pred_region
          %s446 = ssub.s32 256, 256
          %447 = vsyncadd [#allocation18], %s446
          %s448 = sshll.u32 [#allocation17], 4
          %s449 = int_to_ptr.vmem [resolvable:$true] %s448
          %454 = dma.hbm_to_vmem [thread:$0]  %s9, 256, %s449, [#allocation18], 64, 64, 4
        $region48: #{_lambda_.13} parent=11 // pred_fallthru
          _
        // Predicated region
        $region49: #{_lambda_.13} parent=11 // pred_check
          %p455 = pneg %p267
        $region50: #{_lambda_.13} parent=11 // pred_check_branch
          %457 = sbr.rel (%p455) target = $region52
        $region51: #{_lambda_.13} parent=11 // pred_region
          %s459 = ssub.s32 16, 16
          %460 = vsyncadd [#allocation18], %s459
          %s462 = sshll.u32 [#allocation19], 4
          %s463 = int_to_ptr.vmem [resolvable:$true] %s462
          %465 = dma.hbm_to_vmem [thread:$0]  %s10, 16, %s463, [#allocation18]
        $region52: #{_lambda_.13} parent=11 // pred_fallthru
          _
        // Predicated region
        $region53: #{_lambda_.13} parent=11 // pred_check
          %p466 = pneg %p288
        $region54: #{_lambda_.13} parent=11 // pred_check_branch
          %468 = sbr.rel (%p466) target = $region56
        $region55: #{_lambda_.13} parent=11 // pred_region
          %s470 = ssub.s32 512, 512
          %471 = vsyncadd [#allocation21], %s470
          %s472 = sshll.u32 [#allocation20], 4
          %s473 = int_to_ptr.vmem [resolvable:$true] %s472
          %478 = dma.hbm_to_vmem [thread:$0]  %s11, 512, %s473, [#allocation21], 64, 64, 4
        $region56: #{_lambda_.13} parent=11 // pred_fallthru
          _
        // Predicated region
        $region57: #{_lambda_.13} parent=11 // pred_check
          %p479 = pneg %p309
        $region58: #{_lambda_.13} parent=11 // pred_check_branch
          %481 = sbr.rel (%p479) target = $region60
        $region59: #{_lambda_.13} parent=11 // pred_region
          %s483 = ssub.s32 16, 16
          %484 = vsyncadd [#allocation21], %s483
          %s486 = sshll.u32 [#allocation22], 4
          %s487 = int_to_ptr.vmem [resolvable:$true] %s486
          %489 = dma.hbm_to_vmem [thread:$0]  %s12, 16, %s487, [#allocation21]
        $region60: #{_lambda_.13} parent=11 // pred_fallthru
          _
      $region12: #{_lambda_.13} parent=5 // pred_fallthru
        _
      %p490 = scmp.lt.s32.totalorder %s31, 2
      // Predicated region
      $region61: #{_lambda_.13} parent=5 // pred_check
        %p491 = pneg %p490
      $region62: #{_lambda_.13} parent=5 // pred_check_branch
        %493 = sbr.rel (%p491) target = $region64
      $region63: #{_lambda_.13} parent=5 // pred_region
        // Predicated region
        $region65: #{_lambda_.13} parent=63 // pred_check
          %p494 = pneg %p51
        $region66: #{_lambda_.13} parent=63 // pred_check_branch
          %496 = sbr.rel (%p494) target = $region68
        $region67: #{_lambda_.13} parent=63 // pred_region
          %s497 = sand.u32 %s41, 1
          %s498 = scalar_lea.sflag [#allocation3], %s497
          %s499 = sand.u32 %s41, 1
          %s500 = smul.addr %s499, 12
          %s501 = scalar_lea.vmem [#allocation2], %s500
          %s503 = ssub.s32 192, 192
          %504 = vsyncadd %s498, %s503
          %s505 = smul.addr %s31, 3
          %s506 = smul.addr %s505, 64
          %s507 = scalar_lea.hbm %s0, %s506
          %s508 = sshll.u32 %s501, 4
          %s509 = int_to_ptr.vmem [resolvable:$true] %s508
          %514 = dma.hbm_to_vmem [thread:$0]  %s507, 192, %s509, %s498, 64, 64, 4
        $region68: #{_lambda_.13} parent=63 // pred_fallthru
          _
      $region64: #{_lambda_.13} parent=5 // pred_fallthru
        _
      %p515 = scmp.le.s32.totalorder 1, %s31
      %p516 = scmp.lt.s32.totalorder %s31, 3
      %p517 = pnand %p515, %p516
      %p518 = pneg %p517
      // Predicated region
      $region69: #{_lambda_.13} parent=5 // pred_check
        _
      $region70: #{_lambda_.13} parent=5 // pred_check_branch
        %520 = sbr.rel (%p517) target = $region72
      $region71: #{_lambda_.13} parent=5 // pred_region
        %s521 = ssub.s32 %s31, 1
        %s522 = sand.u32 %s44, 1
        %s523 = scalar_lea.sflag [#allocation3], %s522
        %s524 = sand.u32 %s44, 1
        %s525 = smul.addr %s524, 12
        %s526 = scalar_lea.vmem [#allocation2], %s525
        // Predicated region
        $region73: #{_lambda_.13} parent=71 // pred_check
          %p527 = pneg %p57
        $region74: #{_lambda_.13} parent=71 // pred_check_branch
          %529 = sbr.rel (%p527) target = $region76
        $region75: #{_lambda_.13} parent=71 // pred_region
          %530 = dma.done %s523, 192
        $region76: #{_lambda_.13} parent=71 // pred_fallthru
          _
        // Predicated region
        $region77: #{_lambda_.13} parent=71 // pred_check
          %p531 = pneg %p78
        $region78: #{_lambda_.13} parent=71 // pred_check_branch
          %533 = sbr.rel (%p531) target = $region80
        $region79: #{_lambda_.13} parent=71 // pred_region
          %534 = dma.done [#allocation6], 256
        $region80: #{_lambda_.13} parent=71 // pred_fallthru
          _
        // Predicated region
        $region81: #{_lambda_.13} parent=71 // pred_check
          %p535 = pneg %p99
        $region82: #{_lambda_.13} parent=71 // pred_check_branch
          %537 = sbr.rel (%p535) target = $region84
        $region83: #{_lambda_.13} parent=71 // pred_region
          %538 = dma.done [#allocation6], 16
        $region84: #{_lambda_.13} parent=71 // pred_fallthru
          _
        // Predicated region
        $region85: #{_lambda_.13} parent=71 // pred_check
          %p539 = pneg %p120
        $region86: #{_lambda_.13} parent=71 // pred_check_branch
          %541 = sbr.rel (%p539) target = $region88
        $region87: #{_lambda_.13} parent=71 // pred_region
          %542 = dma.done [#allocation9], 256
        $region88: #{_lambda_.13} parent=71 // pred_fallthru
          _
        // Predicated region
        $region89: #{_lambda_.13} parent=71 // pred_check
          %p543 = pneg %p141
        $region90: #{_lambda_.13} parent=71 // pred_check_branch
          %545 = sbr.rel (%p543) target = $region92
        $region91: #{_lambda_.13} parent=71 // pred_region
          %546 = dma.done [#allocation9], 16
        $region92: #{_lambda_.13} parent=71 // pred_fallthru
          _
        // Predicated region
        $region93: #{_lambda_.13} parent=71 // pred_check
          %p547 = pneg %p162
        $region94: #{_lambda_.13} parent=71 // pred_check_branch
          %549 = sbr.rel (%p547) target = $region96
        $region95: #{_lambda_.13} parent=71 // pred_region
          %550 = dma.done [#allocation12], 16
        $region96: #{_lambda_.13} parent=71 // pred_fallthru
          _
        // Predicated region
        $region97: #{_lambda_.13} parent=71 // pred_check
          %p551 = pneg %p183
        $region98: #{_lambda_.13} parent=71 // pred_check_branch
          %553 = sbr.rel (%p551) target = $region100
        $region99: #{_lambda_.13} parent=71 // pred_region
          %554 = dma.done [#allocation12], 16
        $region100: #{_lambda_.13} parent=71 // pred_fallthru
          _
        // Predicated region
        $region101: #{_lambda_.13} parent=71 // pred_check
          %p555 = pneg %p204
        $region102: #{_lambda_.13} parent=71 // pred_check_branch
          %557 = sbr.rel (%p555) target = $region104
        $region103: #{_lambda_.13} parent=71 // pred_region
          %558 = dma.done [#allocation15], 16
        $region104: #{_lambda_.13} parent=71 // pred_fallthru
          _
        // Predicated region
        $region105: #{_lambda_.13} parent=71 // pred_check
          %p559 = pneg %p225
        $region106: #{_lambda_.13} parent=71 // pred_check_branch
          %561 = sbr.rel (%p559) target = $region108
        $region107: #{_lambda_.13} parent=71 // pred_region
          %562 = dma.done [#allocation15], 16
        $region108: #{_lambda_.13} parent=71 // pred_fallthru
          _
        // Predicated region
        $region109: #{_lambda_.13} parent=71 // pred_check
          %p563 = pneg %p246
        $region110: #{_lambda_.13} parent=71 // pred_check_branch
          %565 = sbr.rel (%p563) target = $region112
        $region111: #{_lambda_.13} parent=71 // pred_region
          %566 = dma.done [#allocation18], 256
        $region112: #{_lambda_.13} parent=71 // pred_fallthru
          _
        // Predicated region
        $region113: #{_lambda_.13} parent=71 // pred_check
          %p567 = pneg %p267
        $region114: #{_lambda_.13} parent=71 // pred_check_branch
          %569 = sbr.rel (%p567) target = $region116
        $region115: #{_lambda_.13} parent=71 // pred_region
          %570 = dma.done [#allocation18], 16
        $region116: #{_lambda_.13} parent=71 // pred_fallthru
          _
        // Predicated region
        $region117: #{_lambda_.13} parent=71 // pred_check
          %p571 = pneg %p288
        $region118: #{_lambda_.13} parent=71 // pred_check_branch
          %573 = sbr.rel (%p571) target = $region120
        $region119: #{_lambda_.13} parent=71 // pred_region
          %574 = dma.done [#allocation21], 512
        $region120: #{_lambda_.13} parent=71 // pred_fallthru
          _
        // Predicated region
        $region121: #{_lambda_.13} parent=71 // pred_check
          %p575 = pneg %p309
        $region122: #{_lambda_.13} parent=71 // pred_check_branch
          %577 = sbr.rel (%p575) target = $region124
        $region123: #{_lambda_.13} parent=71 // pred_region
          %578 = dma.done [#allocation21], 16
        $region124: #{_lambda_.13} parent=71 // pred_fallthru
          _
        %s579 = sand.u32 %s44, 1
        %s580 = scalar_lea.sflag [#allocation3], %s579
        %s581 = sand.u32 %s44, 1
        %s582 = smul.addr %s581, 12
        %s583 = scalar_lea.vmem [#allocation2], %s582
        %p584 = pneg %p57
        %p585 = pneg %p54
        %p586 = pneg %p78
        %p587 = pneg %p75
        %p588 = pneg %p99
        %p589 = pneg %p96
        %p590 = pneg %p120
        %p591 = pneg %p117
        %p592 = pneg %p141
        %p593 = pneg %p138
        %p594 = pneg %p162
        %p595 = pneg %p159
        %p596 = pneg %p183
        %p597 = pneg %p180
        %p598 = pneg %p204
        %p599 = pneg %p201
        %p600 = pneg %p225
        %p601 = pneg %p222
        %p602 = pneg %p246
        %p603 = pneg %p243
        %p604 = pneg %p267
        %p605 = pneg %p264
        %p606 = pneg %p288
        %p607 = pneg %p285
        %p608 = pneg %p309
        %p609 = pneg %p306
        %p610 = pneg %p335
        %p611 = pneg %p332
        %s612 = sand.u32 %s322, 1
        %s613 = scalar_lea.sflag [#allocation4], %s612
        %s614 = sand.u32 %s322, 1
        %s615 = smul.addr %s614, 12
        %s616 = scalar_lea.vmem [#allocation23], %s615
        %v618 = vld [vmem:[%s526] sm:$0xf]
        %v619 = vld [vmem:[%s526 + $0x4] sm:$0xf]
        %v620 = vld [vmem:[%s526 + $0x8] sm:$0xf]
        %v621 = vunpack.c.l.bf16 %v618
        %v622 = vunpack.c.l.bf16 %v619
        %v623 = vunpack.c.l.bf16 %v620
        %v624 = vld [vmem:[#allocation11] sm:$0x1]
        %v625 = vld [vmem:[#allocation13] sm:$0x1]
        %vm626 = vcmask 261120
        %v627 = vsel %vm626, %v621, 0.0
        %628 = vadd.xlane.f32.xlu0 %v627
        %v629 = vpop.xlane.xlu0 %628
        %v630 = vsel %vm626, %v622, 0.0
        %631 = vadd.xlane.f32.xlu0 %v630
        %v632 = vpop.xlane.xlu0 %631
        %v633 = vsel %vm626, %v623, 0.0
        %634 = vadd.xlane.f32.xlu0 %v633
        %v635 = vpop.xlane.xlu0 %634
        %v636 = vrcp.pop 32.0
        %v637 = vmul.f32 %v629, %v636
        %v638 = vmul.f32 %v632, %v636
        %v639 = vmul.f32 %v635, %v636
        %v640 = vsub.f32 %v621, %v637
        %v641 = vsub.f32 %v622, %v638
        %v642 = vsub.f32 %v623, %v639
        %v643 = vmul.f32 %v640, %v640
        %v644 = vmul.f32 %v641, %v641
        %v645 = vmul.f32 %v642, %v642
        %v646 = vsel %vm626, %v643, 0.0
        %647 = vadd.xlane.f32.xlu0 %v646
        %v648 = vpop.xlane.xlu0 %647
        %v649 = vsel %vm626, %v644, 0.0
        %650 = vadd.xlane.f32.xlu0 %v649
        %v651 = vpop.xlane.xlu0 %650
        %v652 = vsel %vm626, %v645, 0.0
        %653 = vadd.xlane.f32.xlu0 %v652
        %v654 = vpop.xlane.xlu0 %653
        %v655 = vmul.f32 %v648, %v636
        %v656 = vmul.f32 %v651, %v636
        %v657 = vmul.f32 %v654, %v636
        %v658 = vadd.f32 %v655, 1e-06
        %v659 = vadd.f32 %v656, 1e-06
        %v660 = vadd.f32 %v657, 1e-06
        %v661 = vrsqrt.pop %v658
        %v662 = vrsqrt.pop %v659
        %v663 = vrsqrt.pop %v660
        %v664 = vmul.f32 %v640, %v661
        %v665 = vmul.f32 %v641, %v662
        %v666 = vmul.f32 %v642, %v663
        %v668 = vlaneseq
        %v669 = vshrl.u32 %v668, 7
        %v670 = vsub.s32 0, %v669
        %v671 = vrot.slane %v624, %v670
        %v673 = vmul.f32 %v664, %v671
        %v674 = vmul.f32 %v665, %v671
        %v675 = vmul.f32 %v666, %v671
        %v677 = vlaneseq
        %v678 = vshrl.u32 %v677, 7
        %v679 = vsub.s32 0, %v678
        %v680 = vrot.slane %v625, %v679
        %v682 = vadd.f32 %v673, %v680
        %v683 = vadd.f32 %v674, %v680
        %v684 = vadd.f32 %v675, %v680
        %v685 = vpack.c.bf16 %v683, %v682
        %v686 = vpack.c.bf16 %v684, %v684
        %v687 = vld [vmem:[#allocation5] sm:$0xf]
        %v688 = vld [vmem:[#allocation5 + $0x4] sm:$0xf]
        %v689 = vld [vmem:[#allocation5 + $0x8] sm:$0xf]
        %v690 = vld [vmem:[#allocation5 + $0xc] sm:$0xf]
        %v691 = vld [vmem:[#allocation7] sm:$0x1]
        %v693 = vlaneseq
        %v694 = vshrl.u32 %v693, 7
        %v695 = vsub.s32 0, %v694
        %v696 = vrot.slane %v691, %v695
        %v702 = vunpack.c.l.b16 %v687
        %v703 = vunpack.c.l.b16 %v688
        %v704 = vunpack.c.l.b16 %v689
        %v705 = vunpack.c.l.b16 %v690
        %v706 = vpack.c.b16 %v703, %v702
        %v707 = vpack.c.b16 %v705, %v704
        %v711 = vsel %vm626, %v685, 0
        %v714 = vsel %vm626, %v686, 0
        %716 = vmatprep.subr.bf16.mxu0 0
        %717 = vmatpush1.bf16.msra.mxu0 %v706
        %718 = vmatprep.subr.bf16.mxu0 0
        %719 = vmatpush1.bf16.msra.mxu0 %v707
        %720 = vmatprep.subr.bf16.mxu0 0
        %721 = vmatpush1.bf16.msra.mxu0 0
        %722 = vmatprep.subr.bf16.mxu0 0
        %723 = vmatpush1.bf16.msra.mxu0 0
        %724 = vmatprep.subr.bf16.mxu0 0
        %725 = vmatpush1.bf16.msra.mxu0 0
        %726 = vmatprep.subr.bf16.mxu0 0
        %727 = vmatpush1.bf16.msra.mxu0 0
        %728 = vmatprep.subr.bf16.mxu0 0
        %729 = vmatpush1.bf16.msra.mxu0 0
        %730 = vmatprep.subr.bf16.mxu0 0
        %731 = vmatpush1.bf16.msra.mxu0 0
        %732 = vmatprep.subr.bf16.mxu0 0
        %733 = vmatpush1.bf16.msra.mxu0 0
        %734 = vmatprep.subr.bf16.mxu0 0
        %735 = vmatpush1.bf16.msra.mxu0 0
        %736 = vmatprep.subr.bf16.mxu0 0
        %737 = vmatpush1.bf16.msra.mxu0 0
        %738 = vmatprep.subr.bf16.mxu0 0
        %739 = vmatpush1.bf16.msra.mxu0 0
        %740 = vmatprep.subr.bf16.mxu0 0
        %741 = vmatpush1.bf16.msra.mxu0 0
        %742 = vmatprep.subr.bf16.mxu0 0
        %743 = vmatpush1.bf16.msra.mxu0 0
        %744 = vmatprep.subr.bf16.mxu0 0
        %745 = vmatpush1.bf16.msra.mxu0 0
        %746 = vmatprep.subr.bf16.mxu0 0
        %747 = vmatpush1.bf16.msra.mxu0 0
        %748 = vmatprep.mubr.bf16.mxu0 0
        %749 = vmatmul.mubr.bf16.gmra.mrb[0].mxu0 %v711
        %v750 = vpop.f32.mrb[0].mxu0
        %v751 = vadd.f32 %v696, %v750
        %v752 = vpop.f32.mrb[0].mxu0
        %v753 = vpop.f32.mrb[0].mxu0
        %v754 = vadd.f32 %v696, %v753
        %v755 = vpop.f32.mrb[0].mxu0
        %756 = vmatprep.mubr.bf16.mxu0 0
        %757 = vmatmul.mubr.bf16.gmra.mrb[0].mxu0 %v714
        %v758 = vpop.f32.mrb[0].mxu0
        %v759 = vadd.f32 %v696, %v758
        %v760 = vpop.f32.mrb[0].mxu0
        %v761 = vpop.f32.mrb[0].mxu0
        %v762 = vpop.f32.mrb[0].mxu0
        %763 = vdwg.mxu0
        %v764 = vpack.c.bf16 %v754, %v751
        %v765 = vpack.c.bf16 %v759, %v759
        %768 = vrot.lane.b32.xlu0 %v764, 120
        %v769 = vpop.permute.xlu0 %768
        %770 = vrot.lane.b32.xlu0 %v765, 120
        %v771 = vpop.permute.xlu0 %770
        %772 = vrot.lane.b32.xlu0 %v764, 112
        %v773 = vpop.permute.xlu0 %772
        %774 = vrot.lane.b32.xlu0 %v765, 112
        %v775 = vpop.permute.xlu0 %774
        %776 = vrot.lane.b32.xlu0 %v764, 104
        %v777 = vpop.permute.xlu0 %776
        %778 = vrot.lane.b32.xlu0 %v765, 104
        %v779 = vpop.permute.xlu0 %778
        %780 = vrot.lane.b32.xlu0 %v764, 96
        %v781 = vpop.permute.xlu0 %780
        %782 = vrot.lane.b32.xlu0 %v765, 96
        %v783 = vpop.permute.xlu0 %782
        %vm784 = vcmask 64512
        %v786 = vsel %vm784, %v764, 0
        %v789 = vsel %vm784, %v765, 0
        %v792 = vsel %vm784, %v781, 0
        %v795 = vsel %vm784, %v783, 0
        %797 = vmatprep.subr.bf16.mxu0 0
        %798 = vmatpush1.bf16.xpose.msra.mxu0 %v792
        %799 = vmatprep.subr.bf16.mxu0 0
        %800 = vmatpush1.bf16.xpose.msra.mxu0 %v795
        %801 = vmatprep.subr.bf16.mxu0 0
        %802 = vmatpush1.bf16.xpose.msra.mxu0 0
        %803 = vmatprep.subr.bf16.mxu0 0
        %804 = vmatpush1.bf16.xpose.msra.mxu0 0
        %805 = vmatprep.subr.bf16.mxu0 0
        %806 = vmatpush1.bf16.xpose.msra.mxu0 0
        %807 = vmatprep.subr.bf16.mxu0 0
        %808 = vmatpush1.bf16.xpose.msra.mxu0 0
        %809 = vmatprep.subr.bf16.mxu0 0
        %810 = vmatpush1.bf16.xpose.msra.mxu0 0
        %811 = vmatprep.subr.bf16.mxu0 0
        %812 = vmatpush1.bf16.xpose.msra.mxu0 0
        %813 = vmatprep.subr.bf16.mxu0 0
        %814 = vmatpush1.bf16.xpose.msra.mxu0 0
        %815 = vmatprep.subr.bf16.mxu0 0
        %816 = vmatpush1.bf16.xpose.msra.mxu0 0
        %817 = vmatprep.subr.bf16.mxu0 0
        %818 = vmatpush1.bf16.xpose.msra.mxu0 0
        %819 = vmatprep.subr.bf16.mxu0 0
        %820 = vmatpush1.bf16.xpose.msra.mxu0 0
        %821 = vmatprep.subr.bf16.mxu0 0
        %822 = vmatpush1.bf16.xpose.msra.mxu0 0
        %823 = vmatprep.subr.bf16.mxu0 0
        %824 = vmatpush1.bf16.xpose.msra.mxu0 0
        %825 = vmatprep.subr.bf16.mxu0 0
        %826 = vmatpush1.bf16.xpose.msra.mxu0 0
        %827 = vmatprep.subr.bf16.mxu0 0
        %828 = vmatpush1.bf16.xpose.msra.mxu0 0
        %829 = vmatprep.mubr.bf16.mxu0 0
        %830 = vmatmul.mubr.bf16.gmra.mrb[0].mxu0 %v786
        %v831 = vpop.f32.mrb[0].mxu0
        %v832 = vadd.f32 0.0, %v831
        %v833 = vpop.f32.mrb[0].mxu0
        %v834 = vpop.f32.mrb[0].mxu0
        %v835 = vadd.f32 0.0, %v834
        %v836 = vpop.f32.mrb[0].mxu0
        %837 = vmatprep.mubr.bf16.mxu0 0
        %838 = vmatmul.mubr.bf16.gmra.mrb[0].mxu0 %v789
        %v839 = vpop.f32.mrb[0].mxu0
        %v840 = vadd.f32 0.0, %v839
        %v841 = vpop.f32.mrb[0].mxu0
        %v842 = vpop.f32.mrb[0].mxu0
        %v843 = vpop.f32.mrb[0].mxu0
        %844 = vdwg.mxu0
        %845 = vrot.lane.b32.xlu0 %v769, 96
        %v846 = vpop.permute.xlu0 %845
        %847 = vrot.lane.b32.xlu0 %v771, 96
        %v848 = vpop.permute.xlu0 %847
        %v850 = vsel %vm784, %v769, 0
        %v853 = vsel %vm784, %v771, 0
        %v856 = vsel %vm784, %v846, 0
        %v859 = vsel %vm784, %v848, 0
        %861 = vmatprep.subr.bf16.mxu0 0
        %862 = vmatpush1.bf16.xpose.msra.mxu0 %v856
        %863 = vmatprep.subr.bf16.mxu0 0
        %864 = vmatpush1.bf16.xpose.msra.mxu0 %v859
        %865 = vmatprep.subr.bf16.mxu0 0
        %866 = vmatpush1.bf16.xpose.msra.mxu0 0
        %867 = vmatprep.subr.bf16.mxu0 0
        %868 = vmatpush1.bf16.xpose.msra.mxu0 0
        %869 = vmatprep.subr.bf16.mxu0 0
        %870 = vmatpush1.bf16.xpose.msra.mxu0 0
        %871 = vmatprep.subr.bf16.mxu0 0
        %872 = vmatpush1.bf16.xpose.msra.mxu0 0
        %873 = vmatprep.subr.bf16.mxu0 0
        %874 = vmatpush1.bf16.xpose.msra.mxu0 0
        %875 = vmatprep.subr.bf16.mxu0 0
        %876 = vmatpush1.bf16.xpose.msra.mxu0 0
        %877 = vmatprep.subr.bf16.mxu0 0
        %878 = vmatpush1.bf16.xpose.msra.mxu0 0
        %879 = vmatprep.subr.bf16.mxu0 0
        %880 = vmatpush1.bf16.xpose.msra.mxu0 0
        %881 = vmatprep.subr.bf16.mxu0 0
        %882 = vmatpush1.bf16.xpose.msra.mxu0 0
        %883 = vmatprep.subr.bf16.mxu0 0
        %884 = vmatpush1.bf16.xpose.msra.mxu0 0
        %885 = vmatprep.subr.bf16.mxu0 0
        %886 = vmatpush1.bf16.xpose.msra.mxu0 0
        %887 = vmatprep.subr.bf16.mxu0 0
        %888 = vmatpush1.bf16.xpose.msra.mxu0 0
        %889 = vmatprep.subr.bf16.mxu0 0
        %890 = vmatpush1.bf16.xpose.msra.mxu0 0
        %891 = vmatprep.subr.bf16.mxu0 0
        %892 = vmatpush1.bf16.xpose.msra.mxu0 0
        %893 = vmatprep.mubr.bf16.mxu0 0
        %894 = vmatmul.mubr.bf16.gmra.mrb[0].mxu0 %v850
        %v895 = vpop.f32.mrb[0].mxu0
        %v896 = vadd.f32 0.0, %v895
        %v897 = vpop.f32.mrb[0].mxu0
        %v898 = vpop.f32.mrb[0].mxu0
        %v899 = vadd.f32 0.0, %v898
        %v900 = vpop.f32.mrb[0].mxu0
        %901 = vmatprep.mubr.bf16.mxu0 0
        %902 = vmatmul.mubr.bf16.gmra.mrb[0].mxu0 %v853
        %v903 = vpop.f32.mrb[0].mxu0
        %v904 = vadd.f32 0.0, %v903
        %v905 = vpop.f32.mrb[0].mxu0
        %v906 = vpop.f32.mrb[0].mxu0
        %v907 = vpop.f32.mrb[0].mxu0
        %908 = vdwg.mxu0
        %909 = vrot.lane.b32.xlu0 %v773, 96
        %v910 = vpop.permute.xlu0 %909
        %911 = vrot.lane.b32.xlu0 %v775, 96
        %v912 = vpop.permute.xlu0 %911
        %v914 = vsel %vm784, %v773, 0
        %v917 = vsel %vm784, %v775, 0
        %v920 = vsel %vm784, %v910, 0
        %v923 = vsel %vm784, %v912, 0
        %925 = vmatprep.subr.bf16.mxu0 0
        %926 = vmatpush1.bf16.xpose.msra.mxu0 %v920
        %927 = vmatprep.subr.bf16.mxu0 0
        %928 = vmatpush1.bf16.xpose.msra.mxu0 %v923
        %929 = vmatprep.subr.bf16.mxu0 0
        %930 = vmatpush1.bf16.xpose.msra.mxu0 0
        %931 = vmatprep.subr.bf16.mxu0 0
        %932 = vmatpush1.bf16.xpose.msra.mxu0 0
        %933 = vmatprep.subr.bf16.mxu0 0
        %934 = vmatpush1.bf16.xpose.msra.mxu0 0
        %935 = vmatprep.subr.bf16.mxu0 0
        %936 = vmatpush1.bf16.xpose.msra.mxu0 0
        %937 = vmatprep.subr.bf16.mxu0 0
        %938 = vmatpush1.bf16.xpose.msra.mxu0 0
        %939 = vmatprep.subr.bf16.mxu0 0
        %940 = vmatpush1.bf16.xpose.msra.mxu0 0
        %941 = vmatprep.subr.bf16.mxu0 0
        %942 = vmatpush1.bf16.xpose.msra.mxu0 0
        %943 = vmatprep.subr.bf16.mxu0 0
        %944 = vmatpush1.bf16.xpose.msra.mxu0 0
        %945 = vmatprep.subr.bf16.mxu0 0
        %946 = vmatpush1.bf16.xpose.msra.mxu0 0
        %947 = vmatprep.subr.bf16.mxu0 0
        %948 = vmatpush1.bf16.xpose.msra.mxu0 0
        %949 = vmatprep.subr.bf16.mxu0 0
        %950 = vmatpush1.bf16.xpose.msra.mxu0 0
        %951 = vmatprep.subr.bf16.mxu0 0
        %952 = vmatpush1.bf16.xpose.msra.mxu0 0
        %953 = vmatprep.subr.bf16.mxu0 0
        %954 = vmatpush1.bf16.xpose.msra.mxu0 0
        %955 = vmatprep.subr.bf16.mxu0 0
        %956 = vmatpush1.bf16.xpose.msra.mxu0 0
        %957 = vmatprep.mubr.bf16.mxu0 0
        %958 = vmatmul.mubr.bf16.gmra.mrb[0].mxu0 %v914
        %v959 = vpop.f32.mrb[0].mxu0
        %v960 = vadd.f32 0.0, %v959
        %v961 = vpop.f32.mrb[0].mxu0
        %v962 = vpop.f32.mrb[0].mxu0
        %v963 = vadd.f32 0.0, %v962
        %v964 = vpop.f32.mrb[0].mxu0
        %965 = vmatprep.mubr.bf16.mxu0 0
        %966 = vmatmul.mubr.bf16.gmra.mrb[0].mxu0 %v917
        %v967 = vpop.f32.mrb[0].mxu0
        %v968 = vadd.f32 0.0, %v967
        %v969 = vpop.f32.mrb[0].mxu0
        %v970 = vpop.f32.mrb[0].mxu0
        %v971 = vpop.f32.mrb[0].mxu0
        %972 = vdwg.mxu0
        %973 = vrot.lane.b32.xlu0 %v777, 96
        %v974 = vpop.permute.xlu0 %973
        %975 = vrot.lane.b32.xlu0 %v779, 96
        %v976 = vpop.permute.xlu0 %975
        %v978 = vsel %vm784, %v777, 0
        %v981 = vsel %vm784, %v779, 0
        %v984 = vsel %vm784, %v974, 0
        %v987 = vsel %vm784, %v976, 0
        %989 = vmatprep.subr.bf16.mxu0 0
        %990 = vmatpush1.bf16.xpose.msra.mxu0 %v984
        %991 = vmatprep.subr.bf16.mxu0 0
        %992 = vmatpush1.bf16.xpose.msra.mxu0 %v987
        %993 = vmatprep.subr.bf16.mxu0 0
        %994 = vmatpush1.bf16.xpose.msra.mxu0 0
        %995 = vmatprep.subr.bf16.mxu0 0
        %996 = vmatpush1.bf16.xpose.msra.mxu0 0
        %997 = vmatprep.subr.bf16.mxu0 0
        %998 = vmatpush1.bf16.xpose.msra.mxu0 0
        %999 = vmatprep.subr.bf16.mxu0 0
        %1000 = vmatpush1.bf16.xpose.msra.mxu0 0
        %1001 = vmatprep.subr.bf16.mxu0 0
        %1002 = vmatpush1.bf16.xpose.msra.mxu0 0
        %1003 = vmatprep.subr.bf16.mxu0 0
        %1004 = vmatpush1.bf16.xpose.msra.mxu0 0
        %1005 = vmatprep.subr.bf16.mxu0 0
        %1006 = vmatpush1.bf16.xpose.msra.mxu0 0
        %1007 = vmatprep.subr.bf16.mxu0 0
        %1008 = vmatpush1.bf16.xpose.msra.mxu0 0
        %1009 = vmatprep.subr.bf16.mxu0 0
        %1010 = vmatpush1.bf16.xpose.msra.mxu0 0
        %1011 = vmatprep.subr.bf16.mxu0 0
        %1012 = vmatpush1.bf16.xpose.msra.mxu0 0
        %1013 = vmatprep.subr.bf16.mxu0 0
        %1014 = vmatpush1.bf16.xpose.msra.mxu0 0
        %1015 = vmatprep.subr.bf16.mxu0 0
        %1016 = vmatpush1.bf16.xpose.msra.mxu0 0
        %1017 = vmatprep.subr.bf16.mxu0 0
        %1018 = vmatpush1.bf16.xpose.msra.mxu0 0
        %1019 = vmatprep.subr.bf16.mxu0 0
        %1020 = vmatpush1.bf16.xpose.msra.mxu0 0
        %1021 = vmatprep.mubr.bf16.mxu0 0
        %1022 = vmatmul.mubr.bf16.gmra.mrb[0].mxu0 %v978
        %v1023 = vpop.f32.mrb[0].mxu0
        %v1024 = vadd.f32 0.0, %v1023
        %v1025 = vpop.f32.mrb[0].mxu0
        %v1026 = vpop.f32.mrb[0].mxu0
        %v1027 = vadd.f32 0.0, %v1026
        %v1028 = vpop.f32.mrb[0].mxu0
        %1029 = vmatprep.mubr.bf16.mxu0 0
        %1030 = vmatmul.mubr.bf16.gmra.mrb[0].mxu0 %v981
        %v1031 = vpop.f32.mrb[0].mxu0
        %v1032 = vadd.f32 0.0, %v1031
        %v1033 = vpop.f32.mrb[0].mxu0
        %v1034 = vpop.f32.mrb[0].mxu0
        %v1035 = vpop.f32.mrb[0].mxu0
        %1036 = vdwg.mxu0
        %v1037 = vmul.f32 %v832, 0.35355338
        %v1038 = vmul.f32 %v835, 0.35355338
        %v1039 = vmul.f32 %v840, 0.35355338
        %v1040 = vmul.f32 %v896, 0.35355338
        %v1041 = vmul.f32 %v899, 0.35355338
        %v1042 = vmul.f32 %v904, 0.35355338
        %v1043 = vmul.f32 %v960, 0.35355338
        %v1044 = vmul.f32 %v963, 0.35355338
        %v1045 = vmul.f32 %v968, 0.35355338
        %v1046 = vmul.f32 %v1024, 0.35355338
        %v1047 = vmul.f32 %v1027, 0.35355338
        %v1048 = vmul.f32 %v1032, 0.35355338
        %v1049 = vlaneseq
        %v1050 = vand.u32 %v1049, 127
        %vm1051 = vcmp.lt.s32.totalorder %v1050, 17
        %v1052 = vsel %vm1051, %v1037, -1e+30
        %v1053 = vsel %vm1051, %v1038, -1e+30
        %v1054 = vsel %vm1051, %v1039, -1e+30
        %v1055 = vsel %vm1051, %v1040, -1e+30
        %v1056 = vsel %vm1051, %v1041, -1e+30
        %v1057 = vsel %vm1051, %v1042, -1e+30
        %v1058 = vsel %vm1051, %v1043, -1e+30
        %v1059 = vsel %vm1051, %v1044, -1e+30
        %v1060 = vsel %vm1051, %v1045, -1e+30
        %v1061 = vsel %vm1051, %v1046, -1e+30
        %v1062 = vsel %vm1051, %v1047, -1e+30
        %v1063 = vsel %vm1051, %v1048, -1e+30
        %vm1064 = vcmask 195584
        %v1065 = vsel %vm1064, %v1052, -inf
        %1066 = vmax.xlane.f32.xlu0 %v1065
        %v1067 = vpop.xlane.xlu0 %1066
        %v1068 = vsel %vm1064, %v1053, -inf
        %1069 = vmax.xlane.f32.xlu0 %v1068
        %v1070 = vpop.xlane.xlu0 %1069
        %v1071 = vsel %vm1064, %v1054, -inf
        %1072 = vmax.xlane.f32.xlu0 %v1071
        %v1073 = vpop.xlane.xlu0 %1072
        %v1074 = vsel %vm1064, %v1055, -inf
        %1075 = vmax.xlane.f32.xlu0 %v1074
        %v1076 = vpop.xlane.xlu0 %1075
        %v1077 = vsel %vm1064, %v1056, -inf
        %1078 = vmax.xlane.f32.xlu0 %v1077
        %v1079 = vpop.xlane.xlu0 %1078
        %v1080 = vsel %vm1064, %v1057, -inf
        %1081 = vmax.xlane.f32.xlu0 %v1080
        %v1082 = vpop.xlane.xlu0 %1081
        %v1083 = vsel %vm1064, %v1058, -inf
        %1084 = vmax.xlane.f32.xlu0 %v1083
        %v1085 = vpop.xlane.xlu0 %1084
        %v1086 = vsel %vm1064, %v1059, -inf
        %1087 = vmax.xlane.f32.xlu0 %v1086
        %v1088 = vpop.xlane.xlu0 %1087
        %v1089 = vsel %vm1064, %v1060, -inf
        %1090 = vmax.xlane.f32.xlu0 %v1089
        %v1091 = vpop.xlane.xlu0 %1090
        %v1092 = vsel %vm1064, %v1061, -inf
        %1093 = vmax.xlane.f32.xlu0 %v1092
        %v1094 = vpop.xlane.xlu0 %1093
        %v1095 = vsel %vm1064, %v1062, -inf
        %1096 = vmax.xlane.f32.xlu0 %v1095
        %v1097 = vpop.xlane.xlu0 %1096
        %v1098 = vsel %vm1064, %v1063, -inf
        %1099 = vmax.xlane.f32.xlu0 %v1098
        %v1100 = vpop.xlane.xlu0 %1099
        %v1101 = vsub.f32 %v1052, %v1067
        %v1102 = vsub.f32 %v1053, %v1070
        %v1103 = vsub.f32 %v1054, %v1073
        %v1104 = vsub.f32 %v1055, %v1076
        %v1105 = vsub.f32 %v1056, %v1079
        %v1106 = vsub.f32 %v1057, %v1082
        %v1107 = vsub.f32 %v1058, %v1085
        %v1108 = vsub.f32 %v1059, %v1088
        %v1109 = vsub.f32 %v1060, %v1091
        %v1110 = vsub.f32 %v1061, %v1094
        %v1111 = vsub.f32 %v1062, %v1097
        %v1112 = vsub.f32 %v1063, %v1100
        %v1113 = vmul.f32 %v1101, 1.442695
        %v1114 = vpow.pop %v1113
        %v1115 = vmul.f32 %v1102, 1.442695
        %v1116 = vpow.pop %v1115
        %v1117 = vmul.f32 %v1103, 1.442695
        %v1118 = vpow.pop %v1117
        %v1119 = vmul.f32 %v1104, 1.442695
        %v1120 = vpow.pop %v1119
        %v1121 = vmul.f32 %v1105, 1.442695
        %v1122 = vpow.pop %v1121
        %v1123 = vmul.f32 %v1106, 1.442695
        %v1124 = vpow.pop %v1123
        %v1125 = vmul.f32 %v1107, 1.442695
        %v1126 = vpow.pop %v1125
        %v1127 = vmul.f32 %v1108, 1.442695
        %v1128 = vpow.pop %v1127
        %v1129 = vmul.f32 %v1109, 1.442695
        %v1130 = vpow.pop %v1129
        %v1131 = vmul.f32 %v1110, 1.442695
        %v1132 = vpow.pop %v1131
        %v1133 = vmul.f32 %v1111, 1.442695
        %v1134 = vpow.pop %v1133
        %v1135 = vmul.f32 %v1112, 1.442695
        %v1136 = vpow.pop %v1135
        %v1137 = vsel %vm1064, %v1114, 0.0
        %1138 = vadd.xlane.f32.xlu0 %v1137
        %v1139 = vpop.xlane.xlu0 %1138
        %v1140 = vsel %vm1064, %v1116, 0.0
        %1141 = vadd.xlane.f32.xlu0 %v1140
        %v1142 = vpop.xlane.xlu0 %1141
        %v1143 = vsel %vm1064, %v1118, 0.0
        %1144 = vadd.xlane.f32.xlu0 %v1143
        %v1145 = vpop.xlane.xlu0 %1144
        %v1146 = vsel %vm1064, %v1120, 0.0
        %1147 = vadd.xlane.f32.xlu0 %v1146
        %v1148 = vpop.xlane.xlu0 %1147
        %v1149 = vsel %vm1064, %v1122, 0.0
        %1150 = vadd.xlane.f32.xlu0 %v1149
        %v1151 = vpop.xlane.xlu0 %1150
        %v1152 = vsel %vm1064, %v1124, 0.0
        %1153 = vadd.xlane.f32.xlu0 %v1152
        %v1154 = vpop.xlane.xlu0 %1153
        %v1155 = vsel %vm1064, %v1126, 0.0
        %1156 = vadd.xlane.f32.xlu0 %v1155
        %v1157 = vpop.xlane.xlu0 %1156
        %v1158 = vsel %vm1064, %v1128, 0.0
        %1159 = vadd.xlane.f32.xlu0 %v1158
        %v1160 = vpop.xlane.xlu0 %1159
        %v1161 = vsel %vm1064, %v1130, 0.0
        %1162 = vadd.xlane.f32.xlu0 %v1161
        %v1163 = vpop.xlane.xlu0 %1162
        %v1164 = vsel %vm1064, %v1132, 0.0
        %1165 = vadd.xlane.f32.xlu0 %v1164
        %v1166 = vpop.xlane.xlu0 %1165
        %v1167 = vsel %vm1064, %v1134, 0.0
        %1168 = vadd.xlane.f32.xlu0 %v1167
        %v1169 = vpop.xlane.xlu0 %1168
        %v1170 = vsel %vm1064, %v1136, 0.0
        %1171 = vadd.xlane.f32.xlu0 %v1170
        %v1172 = vpop.xlane.xlu0 %1171
        %v1173 = vrcp.pop %v1139
        %v1174 = vrcp.pop %v1142
        %v1175 = vrcp.pop %v1145
        %v1176 = vrcp.pop %v1148
        %v1177 = vrcp.pop %v1151
        %v1178 = vrcp.pop %v1154
        %v1179 = vrcp.pop %v1157
        %v1180 = vrcp.pop %v1160
        %v1181 = vrcp.pop %v1163
        %v1182 = vrcp.pop %v1166
        %v1183 = vrcp.pop %v1169
        %v1184 = vrcp.pop %v1172
        %v1185 = vmul.f32 %v1114, %v1173
        %v1186 = vmul.f32 %v1116, %v1174
        %v1187 = vmul.f32 %v1118, %v1175
        %v1188 = vmul.f32 %v1120, %v1176
        %v1189 = vmul.f32 %v1122, %v1177
        %v1190 = vmul.f32 %v1124, %v1178
        %v1191 = vmul.f32 %v1126, %v1179
        %v1192 = vmul.f32 %v1128, %v1180
        %v1193 = vmul.f32 %v1130, %v1181
        %v1194 = vmul.f32 %v1132, %v1182
        %v1195 = vmul.f32 %v1134, %v1183
        %v1196 = vmul.f32 %v1136, %v1184
        %v1197 = vpack.c.bf16 %v1186, %v1185
        %v1198 = vpack.c.bf16 %v1187, %v1187
        %v1199 = vpack.c.bf16 %v1189, %v1188
        %v1200 = vpack.c.bf16 %v1190, %v1190
        %v1201 = vpack.c.bf16 %v1192, %v1191
        %v1202 = vpack.c.bf16 %v1193, %v1193
        %v1203 = vpack.c.bf16 %v1195, %v1194
        %v1204 = vpack.c.bf16 %v1196, %v1196
        %1205 = vrot.lane.b32.xlu0 %v764, 64
        %v1206 = vpop.permute.xlu0 %1205
        %1207 = vrot.lane.b32.xlu0 %v765, 64
        %v1208 = vpop.permute.xlu0 %1207
        %v1211 = vsel %vm1064, %v1197, 0
        %v1214 = vsel %vm1064, %v1198, 0
        %vm1216 = vcmask 1043456
        %v1218 = vsel %vm1216, %v1208, 0
        %1220 = vmatprep.subr.bf16.mxu0 0
        %1221 = vmatpush1.bf16.msra.mxu0 %v1206
        %1222 = vmatprep.subr.bf16.mxu0 0
        %1223 = vmatpush1.bf16.msra.mxu0 %v1218
        %1224 = vmatprep.subr.bf16.mxu0 0
        %1225 = vmatpush1.bf16.msra.mxu0 0
        %1226 = vmatprep.subr.bf16.mxu0 0
        %1227 = vmatpush1.bf16.msra.mxu0 0
        %1228 = vmatprep.subr.bf16.mxu0 0
        %1229 = vmatpush1.bf16.msra.mxu0 0
        %1230 = vmatprep.subr.bf16.mxu0 0
        %1231 = vmatpush1.bf16.msra.mxu0 0
        %1232 = vmatprep.subr.bf16.mxu0 0
        %1233 = vmatpush1.bf16.msra.mxu0 0
        %1234 = vmatprep.subr.bf16.mxu0 0
        %1235 = vmatpush1.bf16.msra.mxu0 0
        %1236 = vmatprep.subr.bf16.mxu0 0
        %1237 = vmatpush1.bf16.msra.mxu0 0
        %1238 = vmatprep.subr.bf16.mxu0 0
        %1239 = vmatpush1.bf16.msra.mxu0 0
        %1240 = vmatprep.subr.bf16.mxu0 0
        %1241 = vmatpush1.bf16.msra.mxu0 0
        %1242 = vmatprep.subr.bf16.mxu0 0
        %1243 = vmatpush1.bf16.msra.mxu0 0
        %1244 = vmatprep.subr.bf16.mxu0 0
        %1245 = vmatpush1.bf16.msra.mxu0 0
        %1246 = vmatprep.subr.bf16.mxu0 0
        %1247 = vmatpush1.bf16.msra.mxu0 0
        %1248 = vmatprep.subr.bf16.mxu0 0
        %1249 = vmatpush1.bf16.msra.mxu0 0
        %1250 = vmatprep.subr.bf16.mxu0 0
        %1251 = vmatpush1.bf16.msra.mxu0 0
        %1252 = vmatprep.mubr.bf16.mxu0 0
        %1253 = vmatmul.mubr.bf16.gmra.mrb[0].mxu0 %v1211
        %v1254 = vpop.f32.mrb[0].mxu0
        %v1255 = vadd.f32 0.0, %v1254
        %v1256 = vpop.f32.mrb[0].mxu0
        %v1257 = vpop.f32.mrb[0].mxu0
        %v1258 = vadd.f32 0.0, %v1257
        %v1259 = vpop.f32.mrb[0].mxu0
        %1260 = vmatprep.mubr.bf16.mxu0 0
        %1261 = vmatmul.mubr.bf16.gmra.mrb[0].mxu0 %v1214
        %v1262 = vpop.f32.mrb[0].mxu0
        %v1263 = vadd.f32 0.0, %v1262
        %v1264 = vpop.f32.mrb[0].mxu0
        %v1265 = vpop.f32.mrb[0].mxu0
        %v1266 = vpop.f32.mrb[0].mxu0
        %1267 = vdwg.mxu0
        %1268 = vrot.lane.b32.xlu0 %v769, 64
        %v1269 = vpop.permute.xlu0 %1268
        %1270 = vrot.lane.b32.xlu0 %v771, 64
        %v1271 = vpop.permute.xlu0 %1270
        %v1274 = vsel %vm1064, %v1199, 0
        %v1277 = vsel %vm1064, %v1200, 0
        %v1280 = vsel %vm1216, %v1271, 0
        %1282 = vmatprep.subr.bf16.mxu0 0
        %1283 = vmatpush1.bf16.msra.mxu0 %v1269
        %1284 = vmatprep.subr.bf16.mxu0 0
        %1285 = vmatpush1.bf16.msra.mxu0 %v1280
        %1286 = vmatprep.subr.bf16.mxu0 0
        %1287 = vmatpush1.bf16.msra.mxu0 0
        %1288 = vmatprep.subr.bf16.mxu0 0
        %1289 = vmatpush1.bf16.msra.mxu0 0
        %1290 = vmatprep.subr.bf16.mxu0 0
        %1291 = vmatpush1.bf16.msra.mxu0 0
        %1292 = vmatprep.subr.bf16.mxu0 0
        %1293 = vmatpush1.bf16.msra.mxu0 0
        %1294 = vmatprep.subr.bf16.mxu0 0
        %1295 = vmatpush1.bf16.msra.mxu0 0
        %1296 = vmatprep.subr.bf16.mxu0 0
        %1297 = vmatpush1.bf16.msra.mxu0 0
        %1298 = vmatprep.subr.bf16.mxu0 0
        %1299 = vmatpush1.bf16.msra.mxu0 0
        %1300 = vmatprep.subr.bf16.mxu0 0
        %1301 = vmatpush1.bf16.msra.mxu0 0
        %1302 = vmatprep.subr.bf16.mxu0 0
        %1303 = vmatpush1.bf16.msra.mxu0 0
        %1304 = vmatprep.subr.bf16.mxu0 0
        %1305 = vmatpush1.bf16.msra.mxu0 0
        %1306 = vmatprep.subr.bf16.mxu0 0
        %1307 = vmatpush1.bf16.msra.mxu0 0
        %1308 = vmatprep.subr.bf16.mxu0 0
        %1309 = vmatpush1.bf16.msra.mxu0 0
        %1310 = vmatprep.subr.bf16.mxu0 0
        %1311 = vmatpush1.bf16.msra.mxu0 0
        %1312 = vmatprep.subr.bf16.mxu0 0
        %1313 = vmatpush1.bf16.msra.mxu0 0
        %1314 = vmatprep.mubr.bf16.mxu0 0
        %1315 = vmatmul.mubr.bf16.gmra.mrb[0].mxu0 %v1274
        %v1316 = vpop.f32.mrb[0].mxu0
        %v1317 = vadd.f32 0.0, %v1316
        %v1318 = vpop.f32.mrb[0].mxu0
        %v1319 = vpop.f32.mrb[0].mxu0
        %v1320 = vadd.f32 0.0, %v1319
        %v1321 = vpop.f32.mrb[0].mxu0
        %1322 = vmatprep.mubr.bf16.mxu0 0
        %1323 = vmatmul.mubr.bf16.gmra.mrb[0].mxu0 %v1277
        %v1324 = vpop.f32.mrb[0].mxu0
        %v1325 = vadd.f32 0.0, %v1324
        %v1326 = vpop.f32.mrb[0].mxu0
        %v1327 = vpop.f32.mrb[0].mxu0
        %v1328 = vpop.f32.mrb[0].mxu0
        %1329 = vdwg.mxu0
        %1330 = vrot.lane.b32.xlu0 %v773, 64
        %v1331 = vpop.permute.xlu0 %1330
        %1332 = vrot.lane.b32.xlu0 %v775, 64
        %v1333 = vpop.permute.xlu0 %1332
        %v1336 = vsel %vm1064, %v1201, 0
        %v1339 = vsel %vm1064, %v1202, 0
        %v1342 = vsel %vm1216, %v1333, 0
        %1344 = vmatprep.subr.bf16.mxu0 0
        %1345 = vmatpush1.bf16.msra.mxu0 %v1331
        %1346 = vmatprep.subr.bf16.mxu0 0
        %1347 = vmatpush1.bf16.msra.mxu0 %v1342
        %1348 = vmatprep.subr.bf16.mxu0 0
        %1349 = vmatpush1.bf16.msra.mxu0 0
        %1350 = vmatprep.subr.bf16.mxu0 0
        %1351 = vmatpush1.bf16.msra.mxu0 0
        %1352 = vmatprep.subr.bf16.mxu0 0
        %1353 = vmatpush1.bf16.msra.mxu0 0
        %1354 = vmatprep.subr.bf16.mxu0 0
        %1355 = vmatpush1.bf16.msra.mxu0 0
        %1356 = vmatprep.subr.bf16.mxu0 0
        %1357 = vmatpush1.bf16.msra.mxu0 0
        %1358 = vmatprep.subr.bf16.mxu0 0
        %1359 = vmatpush1.bf16.msra.mxu0 0
        %1360 = vmatprep.subr.bf16.mxu0 0
        %1361 = vmatpush1.bf16.msra.mxu0 0
        %1362 = vmatprep.subr.bf16.mxu0 0
        %1363 = vmatpush1.bf16.msra.mxu0 0
        %1364 = vmatprep.subr.bf16.mxu0 0
        %1365 = vmatpush1.bf16.msra.mxu0 0
        %1366 = vmatprep.subr.bf16.mxu0 0
        %1367 = vmatpush1.bf16.msra.mxu0 0
        %1368 = vmatprep.subr.bf16.mxu0 0
        %1369 = vmatpush1.bf16.msra.mxu0 0
        %1370 = vmatprep.subr.bf16.mxu0 0
        %1371 = vmatpush1.bf16.msra.mxu0 0
        %1372 = vmatprep.subr.bf16.mxu0 0
        %1373 = vmatpush1.bf16.msra.mxu0 0
        %1374 = vmatprep.subr.bf16.mxu0 0
        %1375 = vmatpush1.bf16.msra.mxu0 0
        %1376 = vmatprep.mubr.bf16.mxu0 0
        %1377 = vmatmul.mubr.bf16.gmra.mrb[0].mxu0 %v1336
        %v1378 = vpop.f32.mrb[0].mxu0
        %v1379 = vadd.f32 0.0, %v1378
        %v1380 = vpop.f32.mrb[0].mxu0
        %v1381 = vpop.f32.mrb[0].mxu0
        %v1382 = vadd.f32 0.0, %v1381
        %v1383 = vpop.f32.mrb[0].mxu0
        %1384 = vmatprep.mubr.bf16.mxu0 0
        %1385 = vmatmul.mubr.bf16.gmra.mrb[0].mxu0 %v1339
        %v1386 = vpop.f32.mrb[0].mxu0
        %v1387 = vadd.f32 0.0, %v1386
        %v1388 = vpop.f32.mrb[0].mxu0
        %v1389 = vpop.f32.mrb[0].mxu0
        %v1390 = vpop.f32.mrb[0].mxu0
        %1391 = vdwg.mxu0
        %1392 = vrot.lane.b32.xlu0 %v777, 64
        %v1393 = vpop.permute.xlu0 %1392
        %1394 = vrot.lane.b32.xlu0 %v779, 64
        %v1395 = vpop.permute.xlu0 %1394
        %v1398 = vsel %vm1064, %v1203, 0
        %v1401 = vsel %vm1064, %v1204, 0
        %v1404 = vsel %vm1216, %v1395, 0
        %1406 = vmatprep.subr.bf16.mxu0 0
        %1407 = vmatpush1.bf16.msra.mxu0 %v1393
        %1408 = vmatprep.subr.bf16.mxu0 0
        %1409 = vmatpush1.bf16.msra.mxu0 %v1404
        %1410 = vmatprep.subr.bf16.mxu0 0
        %1411 = vmatpush1.bf16.msra.mxu0 0
        %1412 = vmatprep.subr.bf16.mxu0 0
        %1413 = vmatpush1.bf16.msra.mxu0 0
        %1414 = vmatprep.subr.bf16.mxu0 0
        %1415 = vmatpush1.bf16.msra.mxu0 0
        %1416 = vmatprep.subr.bf16.mxu0 0
        %1417 = vmatpush1.bf16.msra.mxu0 0
        %1418 = vmatprep.subr.bf16.mxu0 0
        %1419 = vmatpush1.bf16.msra.mxu0 0
        %1420 = vmatprep.subr.bf16.mxu0 0
        %1421 = vmatpush1.bf16.msra.mxu0 0
        %1422 = vmatprep.subr.bf16.mxu0 0
        %1423 = vmatpush1.bf16.msra.mxu0 0
        %1424 = vmatprep.subr.bf16.mxu0 0
        %1425 = vmatpush1.bf16.msra.mxu0 0
        %1426 = vmatprep.subr.bf16.mxu0 0
        %1427 = vmatpush1.bf16.msra.mxu0 0
        %1428 = vmatprep.subr.bf16.mxu0 0
        %1429 = vmatpush1.bf16.msra.mxu0 0
        %1430 = vmatprep.subr.bf16.mxu0 0
        %1431 = vmatpush1.bf16.msra.mxu0 0
        %1432 = vmatprep.subr.bf16.mxu0 0
        %1433 = vmatpush1.bf16.msra.mxu0 0
        %1434 = vmatprep.subr.bf16.mxu0 0
        %1435 = vmatpush1.bf16.msra.mxu0 0
        %1436 = vmatprep.subr.bf16.mxu0 0
        %1437 = vmatpush1.bf16.msra.mxu0 0
        %1438 = vmatprep.mubr.bf16.mxu0 0
        %1439 = vmatmul.mubr.bf16.gmra.mrb[0].mxu0 %v1398
        %v1440 = vpop.f32.mrb[0].mxu0
        %v1441 = vadd.f32 0.0, %v1440
        %v1442 = vpop.f32.mrb[0].mxu0
        %v1443 = vpop.f32.mrb[0].mxu0
        %v1444 = vadd.f32 0.0, %v1443
        %v1445 = vpop.f32.mrb[0].mxu0
        %1446 = vmatprep.mubr.bf16.mxu0 0
        %1447 = vmatmul.mubr.bf16.gmra.mrb[0].mxu0 %v1401
        %v1448 = vpop.f32.mrb[0].mxu0
        %v1449 = vadd.f32 0.0, %v1448
        %v1450 = vpop.f32.mrb[0].mxu0
        %v1451 = vpop.f32.mrb[0].mxu0
        %v1452 = vpop.f32.mrb[0].mxu0
        %1453 = vdwg.mxu0
        %v1454 = vpack.c.bf16 %v1258, %v1255
        %v1455 = vpack.c.bf16 %v1263, %v1263
        %v1456 = vpack.c.bf16 %v1320, %v1317
        %v1457 = vpack.c.bf16 %v1325, %v1325
        %v1458 = vpack.c.bf16 %v1382, %v1379
        %v1459 = vpack.c.bf16 %v1387, %v1387
        %v1460 = vpack.c.bf16 %v1444, %v1441
        %v1461 = vpack.c.bf16 %v1449, %v1449
        %v1462 = vld [vmem:[#allocation8] sm:$0xf]
        %v1463 = vld [vmem:[#allocation8 + $0x4] sm:$0xf]
        %v1464 = vld [vmem:[#allocation8 + $0x8] sm:$0xf]
        %v1465 = vld [vmem:[#allocation8 + $0xc] sm:$0xf]
        %v1467 = vsel %vm784, %v1454, 0
        %v1470 = vsel %vm784, %v1455, 0
        %v1473 = vsel %vm1216, %v1462, 0
        %1475 = vmatprep.subr.bf16.mxu0 0
        %1476 = vmatpush1.bf16.msra.mxu0 %v1473
        %1477 = vmatprep.subr.bf16.mxu0 0
        %1478 = vmatpush1.bf16.msra.mxu0 0
        %1479 = vmatprep.subr.bf16.mxu0 0
        %1480 = vmatpush1.bf16.msra.mxu0 0
        %1481 = vmatprep.subr.bf16.mxu0 0
        %1482 = vmatpush1.bf16.msra.mxu0 0
        %1483 = vmatprep.subr.bf16.mxu0 0
        %1484 = vmatpush1.bf16.msra.mxu0 0
        %1485 = vmatprep.subr.bf16.mxu0 0
        %1486 = vmatpush1.bf16.msra.mxu0 0
        %1487 = vmatprep.subr.bf16.mxu0 0
        %1488 = vmatpush1.bf16.msra.mxu0 0
        %1489 = vmatprep.subr.bf16.mxu0 0
        %1490 = vmatpush1.bf16.msra.mxu0 0
        %1491 = vmatprep.subr.bf16.mxu0 0
        %1492 = vmatpush1.bf16.msra.mxu0 0
        %1493 = vmatprep.subr.bf16.mxu0 0
        %1494 = vmatpush1.bf16.msra.mxu0 0
        %1495 = vmatprep.subr.bf16.mxu0 0
        %1496 = vmatpush1.bf16.msra.mxu0 0
        %1497 = vmatprep.subr.bf16.mxu0 0
        %1498 = vmatpush1.bf16.msra.mxu0 0
        %1499 = vmatprep.subr.bf16.mxu0 0
        %1500 = vmatpush1.bf16.msra.mxu0 0
        %1501 = vmatprep.subr.bf16.mxu0 0
        %1502 = vmatpush1.bf16.msra.mxu0 0
        %1503 = vmatprep.subr.bf16.mxu0 0
        %1504 = vmatpush1.bf16.msra.mxu0 0
        %1505 = vmatprep.subr.bf16.mxu0 0
        %1506 = vmatpush1.bf16.msra.mxu0 0
        %1507 = vmatprep.mubr.bf16.mxu0 0
        %1508 = vmatmul.mubr.bf16.gmra.mrb[0].mxu0 %v1467
        %v1509 = vpop.f32.mrb[0].mxu0
        %v1510 = vadd.f32 0.0, %v1509
        %v1511 = vpop.f32.mrb[0].mxu0
        %v1512 = vpop.f32.mrb[0].mxu0
        %v1513 = vadd.f32 0.0, %v1512
        %v1514 = vpop.f32.mrb[0].mxu0
        %1515 = vmatprep.mubr.bf16.mxu0 0
        %1516 = vmatmul.mubr.bf16.gmra.mrb[0].mxu0 %v1470
        %v1517 = vpop.f32.mrb[0].mxu0
        %v1518 = vadd.f32 0.0, %v1517
        %v1519 = vpop.f32.mrb[0].mxu0
        %v1520 = vpop.f32.mrb[0].mxu0
        %v1521 = vpop.f32.mrb[0].mxu0
        %1522 = vdwg.mxu0
        %v1524 = vsel %vm784, %v1456, 0
        %v1527 = vsel %vm784, %v1457, 0
        %v1530 = vsel %vm1216, %v1463, 0
        %1532 = vmatprep.subr.bf16.mxu0 0
        %1533 = vmatpush1.bf16.msra.mxu0 %v1530
        %1534 = vmatprep.subr.bf16.mxu0 0
        %1535 = vmatpush1.bf16.msra.mxu0 0
        %1536 = vmatprep.subr.bf16.mxu0 0
        %1537 = vmatpush1.bf16.msra.mxu0 0
        %1538 = vmatprep.subr.bf16.mxu0 0
        %1539 = vmatpush1.bf16.msra.mxu0 0
        %1540 = vmatprep.subr.bf16.mxu0 0
        %1541 = vmatpush1.bf16.msra.mxu0 0
        %1542 = vmatprep.subr.bf16.mxu0 0
        %1543 = vmatpush1.bf16.msra.mxu0 0
        %1544 = vmatprep.subr.bf16.mxu0 0
        %1545 = vmatpush1.bf16.msra.mxu0 0
        %1546 = vmatprep.subr.bf16.mxu0 0
        %1547 = vmatpush1.bf16.msra.mxu0 0
        %1548 = vmatprep.subr.bf16.mxu0 0
        %1549 = vmatpush1.bf16.msra.mxu0 0
        %1550 = vmatprep.subr.bf16.mxu0 0
        %1551 = vmatpush1.bf16.msra.mxu0 0
        %1552 = vmatprep.subr.bf16.mxu0 0
        %1553 = vmatpush1.bf16.msra.mxu0 0
        %1554 = vmatprep.subr.bf16.mxu0 0
        %1555 = vmatpush1.bf16.msra.mxu0 0
        %1556 = vmatprep.subr.bf16.mxu0 0
        %1557 = vmatpush1.bf16.msra.mxu0 0
        %1558 = vmatprep.subr.bf16.mxu0 0
        %1559 = vmatpush1.bf16.msra.mxu0 0
        %1560 = vmatprep.subr.bf16.mxu0 0
        %1561 = vmatpush1.bf16.msra.mxu0 0
        %1562 = vmatprep.subr.bf16.mxu0 0
        %1563 = vmatpush1.bf16.msra.mxu0 0
        %1564 = vmatprep.mubr.bf16.mxu0 0
        %1565 = vmatmul.mubr.bf16.gmra.mrb[0].mxu0 %v1524
        %v1566 = vpop.f32.mrb[0].mxu0
        %v1567 = vadd.f32 0.0, %v1566
        %v1568 = vpop.f32.mrb[0].mxu0
        %v1569 = vpop.f32.mrb[0].mxu0
        %v1570 = vadd.f32 0.0, %v1569
        %v1571 = vpop.f32.mrb[0].mxu0
        %1572 = vmatprep.mubr.bf16.mxu0 0
        %1573 = vmatmul.mubr.bf16.gmra.mrb[0].mxu0 %v1527
        %v1574 = vpop.f32.mrb[0].mxu0
        %v1575 = vadd.f32 0.0, %v1574
        %v1576 = vpop.f32.mrb[0].mxu0
        %v1577 = vpop.f32.mrb[0].mxu0
        %v1578 = vpop.f32.mrb[0].mxu0
        %1579 = vdwg.mxu0
        %v1581 = vsel %vm784, %v1458, 0
        %v1584 = vsel %vm784, %v1459, 0
        %v1587 = vsel %vm1216, %v1464, 0
        %1589 = vmatprep.subr.bf16.mxu0 0
        %1590 = vmatpush1.bf16.msra.mxu0 %v1587
        %1591 = vmatprep.subr.bf16.mxu0 0
        %1592 = vmatpush1.bf16.msra.mxu0 0
        %1593 = vmatprep.subr.bf16.mxu0 0
        %1594 = vmatpush1.bf16.msra.mxu0 0
        %1595 = vmatprep.subr.bf16.mxu0 0
        %1596 = vmatpush1.bf16.msra.mxu0 0
        %1597 = vmatprep.subr.bf16.mxu0 0
        %1598 = vmatpush1.bf16.msra.mxu0 0
        %1599 = vmatprep.subr.bf16.mxu0 0
        %1600 = vmatpush1.bf16.msra.mxu0 0
        %1601 = vmatprep.subr.bf16.mxu0 0
        %1602 = vmatpush1.bf16.msra.mxu0 0
        %1603 = vmatprep.subr.bf16.mxu0 0
        %1604 = vmatpush1.bf16.msra.mxu0 0
        %1605 = vmatprep.subr.bf16.mxu0 0
        %1606 = vmatpush1.bf16.msra.mxu0 0
        %1607 = vmatprep.subr.bf16.mxu0 0
        %1608 = vmatpush1.bf16.msra.mxu0 0
        %1609 = vmatprep.subr.bf16.mxu0 0
        %1610 = vmatpush1.bf16.msra.mxu0 0
        %1611 = vmatprep.subr.bf16.mxu0 0
        %1612 = vmatpush1.bf16.msra.mxu0 0
        %1613 = vmatprep.subr.bf16.mxu0 0
        %1614 = vmatpush1.bf16.msra.mxu0 0
        %1615 = vmatprep.subr.bf16.mxu0 0
        %1616 = vmatpush1.bf16.msra.mxu0 0
        %1617 = vmatprep.subr.bf16.mxu0 0
        %1618 = vmatpush1.bf16.msra.mxu0 0
        %1619 = vmatprep.subr.bf16.mxu0 0
        %1620 = vmatpush1.bf16.msra.mxu0 0
        %1621 = vmatprep.mubr.bf16.mxu0 0
        %1622 = vmatmul.mubr.bf16.gmra.mrb[0].mxu0 %v1581
        %v1623 = vpop.f32.mrb[0].mxu0
        %v1624 = vadd.f32 0.0, %v1623
        %v1625 = vpop.f32.mrb[0].mxu0
        %v1626 = vpop.f32.mrb[0].mxu0
        %v1627 = vadd.f32 0.0, %v1626
        %v1628 = vpop.f32.mrb[0].mxu0
        %1629 = vmatprep.mubr.bf16.mxu0 0
        %1630 = vmatmul.mubr.bf16.gmra.mrb[0].mxu0 %v1584
        %v1631 = vpop.f32.mrb[0].mxu0
        %v1632 = vadd.f32 0.0, %v1631
        %v1633 = vpop.f32.mrb[0].mxu0
        %v1634 = vpop.f32.mrb[0].mxu0
        %v1635 = vpop.f32.mrb[0].mxu0
        %1636 = vdwg.mxu0
        %v1638 = vsel %vm784, %v1460, 0
        %v1641 = vsel %vm784, %v1461, 0
        %v1644 = vsel %vm1216, %v1465, 0
        %1646 = vmatprep.subr.bf16.mxu0 0
        %1647 = vmatpush1.bf16.msra.mxu0 %v1644
        %1648 = vmatprep.subr.bf16.mxu0 0
        %1649 = vmatpush1.bf16.msra.mxu0 0
        %1650 = vmatprep.subr.bf16.mxu0 0
        %1651 = vmatpush1.bf16.msra.mxu0 0
        %1652 = vmatprep.subr.bf16.mxu0 0
        %1653 = vmatpush1.bf16.msra.mxu0 0
        %1654 = vmatprep.subr.bf16.mxu0 0
        %1655 = vmatpush1.bf16.msra.mxu0 0
        %1656 = vmatprep.subr.bf16.mxu0 0
        %1657 = vmatpush1.bf16.msra.mxu0 0
        %1658 = vmatprep.subr.bf16.mxu0 0
        %1659 = vmatpush1.bf16.msra.mxu0 0
        %1660 = vmatprep.subr.bf16.mxu0 0
        %1661 = vmatpush1.bf16.msra.mxu0 0
        %1662 = vmatprep.subr.bf16.mxu0 0
        %1663 = vmatpush1.bf16.msra.mxu0 0
        %1664 = vmatprep.subr.bf16.mxu0 0
        %1665 = vmatpush1.bf16.msra.mxu0 0
        %1666 = vmatprep.subr.bf16.mxu0 0
        %1667 = vmatpush1.bf16.msra.mxu0 0
        %1668 = vmatprep.subr.bf16.mxu0 0
        %1669 = vmatpush1.bf16.msra.mxu0 0
        %1670 = vmatprep.subr.bf16.mxu0 0
        %1671 = vmatpush1.bf16.msra.mxu0 0
        %1672 = vmatprep.subr.bf16.mxu0 0
        %1673 = vmatpush1.bf16.msra.mxu0 0
        %1674 = vmatprep.subr.bf16.mxu0 0
        %1675 = vmatpush1.bf16.msra.mxu0 0
        %1676 = vmatprep.subr.bf16.mxu0 0
        %1677 = vmatpush1.bf16.msra.mxu0 0
        %1678 = vmatprep.mubr.bf16.mxu0 0
        %1679 = vmatmul.mubr.bf16.gmra.mrb[0].mxu0 %v1638
        %v1680 = vpop.f32.mrb[0].mxu0
        %v1681 = vadd.f32 0.0, %v1680
        %v1682 = vpop.f32.mrb[0].mxu0
        %v1683 = vpop.f32.mrb[0].mxu0
        %v1684 = vadd.f32 0.0, %v1683
        %v1685 = vpop.f32.mrb[0].mxu0
        %1686 = vmatprep.mubr.bf16.mxu0 0
        %1687 = vmatmul.mubr.bf16.gmra.mrb[0].mxu0 %v1641
        %v1688 = vpop.f32.mrb[0].mxu0
        %v1689 = vadd.f32 0.0, %v1688
        %v1690 = vpop.f32.mrb[0].mxu0
        %v1691 = vpop.f32.mrb[0].mxu0
        %v1692 = vpop.f32.mrb[0].mxu0
        %1693 = vdwg.mxu0
        %v1694 = vsel %vm626, %v1510, 0.0
        %v1695 = vsel %vm626, %v1567, 0.0
        %v1696 = vadd.f32 %v1694, %v1695
        %v1697 = vsel %vm626, %v1624, 0.0
        %v1698 = vadd.f32 %v1696, %v1697
        %v1699 = vsel %vm626, %v1681, 0.0
        %v1700 = vadd.f32 %v1698, %v1699
        %v1701 = vsel %vm626, %v1513, 0.0
        %v1702 = vsel %vm626, %v1570, 0.0
        %v1703 = vadd.f32 %v1701, %v1702
        %v1704 = vsel %vm626, %v1627, 0.0
        %v1705 = vadd.f32 %v1703, %v1704
        %v1706 = vsel %vm626, %v1684, 0.0
        %v1707 = vadd.f32 %v1705, %v1706
        %v1708 = vsel %vm626, %v1518, 0.0
        %v1709 = vsel %vm626, %v1575, 0.0
        %v1710 = vadd.f32 %v1708, %v1709
        %v1711 = vsel %vm626, %v1632, 0.0
        %v1712 = vadd.f32 %v1710, %v1711
        %v1713 = vsel %vm626, %v1689, 0.0
        %v1714 = vadd.f32 %v1712, %v1713
        %v1715 = vld [vmem:[#allocation10] sm:$0x1]
        %v1717 = vlaneseq
        %v1718 = vshrl.u32 %v1717, 7
        %v1719 = vsub.s32 0, %v1718
        %v1720 = vrot.slane %v1715, %v1719
        %v1722 = vadd.f32 %v1700, %v1720
        %v1723 = vadd.f32 %v1707, %v1720
        %v1724 = vadd.f32 %v1714, %v1720
        %v1725 = vadd.f32 %v621, %v1722
        %v1726 = vadd.f32 %v622, %v1723
        %v1727 = vadd.f32 %v623, %v1724
        %v1728 = vld [vmem:[#allocation14] sm:$0x1]
        %v1729 = vld [vmem:[#allocation16] sm:$0x1]
        %v1730 = vsel %vm626, %v1725, 0.0
        %1731 = vadd.xlane.f32.xlu0 %v1730
        %v1732 = vpop.xlane.xlu0 %1731
        %v1733 = vsel %vm626, %v1726, 0.0
        %1734 = vadd.xlane.f32.xlu0 %v1733
        %v1735 = vpop.xlane.xlu0 %1734
        %v1736 = vsel %vm626, %v1727, 0.0
        %1737 = vadd.xlane.f32.xlu0 %v1736
        %v1738 = vpop.xlane.xlu0 %1737
        %v1739 = vmul.f32 %v1732, %v636
        %v1740 = vmul.f32 %v1735, %v636
        %v1741 = vmul.f32 %v1738, %v636
        %v1742 = vsub.f32 %v1725, %v1739
        %v1743 = vsub.f32 %v1726, %v1740
        %v1744 = vsub.f32 %v1727, %v1741
        %v1745 = vmul.f32 %v1742, %v1742
        %v1746 = vmul.f32 %v1743, %v1743
        %v1747 = vmul.f32 %v1744, %v1744
        %v1748 = vsel %vm626, %v1745, 0.0
        %1749 = vadd.xlane.f32.xlu0 %v1748
        %v1750 = vpop.xlane.xlu0 %1749
        %v1751 = vsel %vm626, %v1746, 0.0
        %1752 = vadd.xlane.f32.xlu0 %v1751
        %v1753 = vpop.xlane.xlu0 %1752
        %v1754 = vsel %vm626, %v1747, 0.0
        %1755 = vadd.xlane.f32.xlu0 %v1754
        %v1756 = vpop.xlane.xlu0 %1755
        %v1757 = vmul.f32 %v1750, %v636
        %v1758 = vmul.f32 %v1753, %v636
        %v1759 = vmul.f32 %v1756, %v636
        %v1760 = vadd.f32 %v1757, 1e-06
        %v1761 = vadd.f32 %v1758, 1e-06
        %v1762 = vadd.f32 %v1759, 1e-06
        %v1763 = vrsqrt.pop %v1760
        %v1764 = vrsqrt.pop %v1761
        %v1765 = vrsqrt.pop %v1762
        %v1766 = vmul.f32 %v1742, %v1763
        %v1767 = vmul.f32 %v1743, %v1764
        %v1768 = vmul.f32 %v1744, %v1765
        %v1770 = vlaneseq
        %v1771 = vshrl.u32 %v1770, 7
        %v1772 = vsub.s32 0, %v1771
        %v1773 = vrot.slane %v1728, %v1772
        %v1775 = vmul.f32 %v1766, %v1773
        %v1776 = vmul.f32 %v1767, %v1773
        %v1777 = vmul.f32 %v1768, %v1773
        %v1779 = vlaneseq
        %v1780 = vshrl.u32 %v1779, 7
        %v1781 = vsub.s32 0, %v1780
        %v1782 = vrot.slane %v1729, %v1781
        %v1784 = vadd.f32 %v1775, %v1782
        %v1785 = vadd.f32 %v1776, %v1782
        %v1786 = vadd.f32 %v1777, %v1782
        %v1787 = vpack.c.bf16 %v1785, %v1784
        %v1788 = vpack.c.bf16 %v1786, %v1786
        %v1789 = vld [vmem:[#allocation17] sm:$0xf]
        %v1790 = vld [vmem:[#allocation17 + $0x4] sm:$0xf]
        %v1791 = vld [vmem:[#allocation17 + $0x8] sm:$0xf]
        %v1792 = vld [vmem:[#allocation17 + $0xc] sm:$0xf]
        %v1793 = vld [vmem:[#allocation19] sm:$0x1]
        %v1795 = vlaneseq
        %v1796 = vshrl.u32 %v1795, 7
        %v1797 = vsub.s32 0, %v1796
        %v1798 = vrot.slane %v1793, %v1797
        %v1804 = vunpack.c.l.b16 %v1789
        %v1805 = vunpack.c.l.b16 %v1790
        %v1806 = vunpack.c.l.b16 %v1791
        %v1807 = vunpack.c.l.b16 %v1792
        %v1808 = vpack.c.b16 %v1805, %v1804
        %v1809 = vpack.c.b16 %v1807, %v1806
        %v1813 = vsel %vm626, %v1787, 0
        %v1816 = vsel %vm626, %v1788, 0
        %1818 = vmatprep.subr.bf16.mxu0 0
        %1819 = vmatpush1.bf16.msra.mxu0 %v1808
        %1820 = vmatprep.subr.bf16.mxu0 0
        %1821 = vmatpush1.bf16.msra.mxu0 %v1809
        %1822 = vmatprep.subr.bf16.mxu0 0
        %1823 = vmatpush1.bf16.msra.mxu0 0
        %1824 = vmatprep.subr.bf16.mxu0 0
        %1825 = vmatpush1.bf16.msra.mxu0 0
        %1826 = vmatprep.subr.bf16.mxu0 0
        %1827 = vmatpush1.bf16.msra.mxu0 0
        %1828 = vmatprep.subr.bf16.mxu0 0
        %1829 = vmatpush1.bf16.msra.mxu0 0
        %1830 = vmatprep.subr.bf16.mxu0 0
        %1831 = vmatpush1.bf16.msra.mxu0 0
        %1832 = vmatprep.subr.bf16.mxu0 0
        %1833 = vmatpush1.bf16.msra.mxu0 0
        %1834 = vmatprep.subr.bf16.mxu0 0
        %1835 = vmatpush1.bf16.msra.mxu0 0
        %1836 = vmatprep.subr.bf16.mxu0 0
        %1837 = vmatpush1.bf16.msra.mxu0 0
        %1838 = vmatprep.subr.bf16.mxu0 0
        %1839 = vmatpush1.bf16.msra.mxu0 0
        %1840 = vmatprep.subr.bf16.mxu0 0
        %1841 = vmatpush1.bf16.msra.mxu0 0
        %1842 = vmatprep.subr.bf16.mxu0 0
        %1843 = vmatpush1.bf16.msra.mxu0 0
        %1844 = vmatprep.subr.bf16.mxu0 0
        %1845 = vmatpush1.bf16.msra.mxu0 0
        %1846 = vmatprep.subr.bf16.mxu0 0
        %1847 = vmatpush1.bf16.msra.mxu0 0
        %1848 = vmatprep.subr.bf16.mxu0 0
        %1849 = vmatpush1.bf16.msra.mxu0 0
        %1850 = vmatprep.mubr.bf16.mxu0 0
        %1851 = vmatmul.mubr.bf16.gmra.mrb[0].mxu0 %v1813
        %v1852 = vpop.f32.mrb[0].mxu0
        %v1853 = vadd.f32 %v1798, %v1852
        %v1854 = vpop.f32.mrb[0].mxu0
        %v1855 = vpop.f32.mrb[0].mxu0
        %v1856 = vadd.f32 %v1798, %v1855
        %v1857 = vpop.f32.mrb[0].mxu0
        %1858 = vmatprep.mubr.bf16.mxu0 0
        %1859 = vmatmul.mubr.bf16.gmra.mrb[0].mxu0 %v1816
        %v1860 = vpop.f32.mrb[0].mxu0
        %v1861 = vadd.f32 %v1798, %v1860
        %v1862 = vpop.f32.mrb[0].mxu0
        %v1863 = vpop.f32.mrb[0].mxu0
        %v1864 = vpop.f32.mrb[0].mxu0
        %1865 = vdwg.mxu0
        %v1866 = vmul.f32 %v1853, %v1853
        %v1867 = vmul.f32 %v1856, %v1856
        %v1868 = vmul.f32 %v1861, %v1861
        %v1869 = vmul.f32 %v1853, %v1866
        %v1870 = vmul.f32 %v1856, %v1867
        %v1871 = vmul.f32 %v1861, %v1868
        %v1872 = vmul.f32 %v1869, 0.044715
        %v1873 = vmul.f32 %v1870, 0.044715
        %v1874 = vmul.f32 %v1871, 0.044715
        %v1875 = vadd.f32 %v1853, %v1872
        %v1876 = vadd.f32 %v1856, %v1873
        %v1877 = vadd.f32 %v1861, %v1874
        %v1878 = vmul.f32 %v1875, 0.7978846
        %v1879 = vmul.f32 %v1876, 0.7978846
        %v1880 = vmul.f32 %v1877, 0.7978846
        %v1881 = vtanh.pop %v1878
        %v1882 = vtanh.pop %v1879
        %v1883 = vtanh.pop %v1880
        %v1884 = vadd.f32 %v1881, 1.0
        %v1885 = vadd.f32 %v1882, 1.0
        %v1886 = vadd.f32 %v1883, 1.0
        %v1887 = vmul.f32 %v1884, 0.5
        %v1888 = vmul.f32 %v1885, 0.5
        %v1889 = vmul.f32 %v1886, 0.5
        %v1890 = vmul.f32 %v1853, %v1887
        %v1891 = vmul.f32 %v1856, %v1888
        %v1892 = vmul.f32 %v1861, %v1889
        %v1893 = vpack.c.bf16 %v1891, %v1890
        %v1894 = vpack.c.bf16 %v1892, %v1892
        %v1895 = vld [vmem:[#allocation20] sm:$0xf]
        %v1896 = vld [vmem:[#allocation20 + $0x4] sm:$0xf]
        %v1897 = vld [vmem:[#allocation20 + $0x8] sm:$0xf]
        %v1898 = vld [vmem:[#allocation20 + $0xc] sm:$0xf]
        %v1899 = vld [vmem:[#allocation20 + $0x10] sm:$0xf]
        %v1900 = vld [vmem:[#allocation20 + $0x14] sm:$0xf]
        %v1901 = vld [vmem:[#allocation20 + $0x18] sm:$0xf]
        %v1902 = vld [vmem:[#allocation20 + $0x1c] sm:$0xf]
        %v1903 = vld [vmem:[#allocation22] sm:$0x1]
        %v1905 = vlaneseq
        %v1906 = vshrl.u32 %v1905, 7
        %v1907 = vsub.s32 0, %v1906
        %v1908 = vrot.slane %v1903, %v1907
        %v1918 = vunpack.c.l.b16 %v1895
        %v1919 = vunpack.c.l.b16 %v1896
        %v1920 = vunpack.c.l.b16 %v1897
        %v1921 = vunpack.c.l.b16 %v1898
        %v1922 = vunpack.c.l.b16 %v1899
        %v1923 = vunpack.c.l.b16 %v1900
        %v1924 = vunpack.c.l.b16 %v1901
        %v1925 = vunpack.c.l.b16 %v1902
        %v1926 = vpack.c.b16 %v1919, %v1918
        %v1927 = vpack.c.b16 %v1921, %v1920
        %v1928 = vpack.c.b16 %v1923, %v1922
        %v1929 = vpack.c.b16 %v1925, %v1924
        %vm1934 = vcmask 523264
        %v1936 = vsel %vm1934, %v1893, 0
        %v1939 = vsel %vm1934, %v1894, 0
        %1941 = vmatprep.subr.bf16.mxu0 0
        %1942 = vmatpush1.bf16.msra.mxu0 %v1926
        %1943 = vmatprep.subr.bf16.mxu0 0
        %1944 = vmatpush1.bf16.msra.mxu0 %v1927
        %1945 = vmatprep.subr.bf16.mxu0 0
        %1946 = vmatpush1.bf16.msra.mxu0 %v1928
        %1947 = vmatprep.subr.bf16.mxu0 0
        %1948 = vmatpush1.bf16.msra.mxu0 %v1929
        %1949 = vmatprep.subr.bf16.mxu0 0
        %1950 = vmatpush1.bf16.msra.mxu0 0
        %1951 = vmatprep.subr.bf16.mxu0 0
        %1952 = vmatpush1.bf16.msra.mxu0 0
        %1953 = vmatprep.subr.bf16.mxu0 0
        %1954 = vmatpush1.bf16.msra.mxu0 0
        %1955 = vmatprep.subr.bf16.mxu0 0
        %1956 = vmatpush1.bf16.msra.mxu0 0
        %1957 = vmatprep.subr.bf16.mxu0 0
        %1958 = vmatpush1.bf16.msra.mxu0 0
        %1959 = vmatprep.subr.bf16.mxu0 0
        %1960 = vmatpush1.bf16.msra.mxu0 0
        %1961 = vmatprep.subr.bf16.mxu0 0
        %1962 = vmatpush1.bf16.msra.mxu0 0
        %1963 = vmatprep.subr.bf16.mxu0 0
        %1964 = vmatpush1.bf16.msra.mxu0 0
        %1965 = vmatprep.subr.bf16.mxu0 0
        %1966 = vmatpush1.bf16.msra.mxu0 0
        %1967 = vmatprep.subr.bf16.mxu0 0
        %1968 = vmatpush1.bf16.msra.mxu0 0
        %1969 = vmatprep.subr.bf16.mxu0 0
        %1970 = vmatpush1.bf16.msra.mxu0 0
        %1971 = vmatprep.subr.bf16.mxu0 0
        %1972 = vmatpush1.bf16.msra.mxu0 0
        %1973 = vmatprep.mubr.bf16.mxu0 0
        %1974 = vmatmul.mubr.bf16.gmra.mrb[0].mxu0 %v1936
        %v1975 = vpop.f32.mrb[0].mxu0
        %v1976 = vadd.f32 %v1908, %v1975
        %v1977 = vpop.f32.mrb[0].mxu0
        %v1978 = vpop.f32.mrb[0].mxu0
        %v1979 = vadd.f32 %v1908, %v1978
        %v1980 = vpop.f32.mrb[0].mxu0
        %1981 = vmatprep.mubr.bf16.mxu0 0
        %1982 = vmatmul.mubr.bf16.gmra.mrb[0].mxu0 %v1939
        %v1983 = vpop.f32.mrb[0].mxu0
        %v1984 = vadd.f32 %v1908, %v1983
        %v1985 = vpop.f32.mrb[0].mxu0
        %v1986 = vpop.f32.mrb[0].mxu0
        %v1987 = vpop.f32.mrb[0].mxu0
        %1988 = vdwg.mxu0
        %v1989 = vadd.f32 %v1725, %v1976
        %v1990 = vadd.f32 %v1726, %v1979
        %v1991 = vadd.f32 %v1727, %v1984
        %v1992 = vpack.c.bf16 %v1990, %v1989
        %v1993 = vpack.c.bf16 %v1991, %v1991
        %v1996 = vunpack.c.l.b16 %v1992
        %v1997 = vunpack.c.h.b16 %v1992
        %v1998 = vunpack.c.l.b16 %v1993
        %v1999 = vpack.c.b16 %v1996, %v1996
        %v2000 = vpack.c.b16 %v1997, %v1997
        %v2001 = vpack.c.b16 %v1998, %v1998
        %vm2005 = vcmask 257024
        %2006 = vst.msk [vmem:[%s616] sm:$0xf] %vm2005, %v1999
        %2007 = vst.msk [vmem:[%s616 + $0x4] sm:$0xf] %vm2005, %v2000
        %2008 = vst.msk [vmem:[%s616 + $0x8] sm:$0xf] %vm2005, %v2001
        %s2009 = sand.u32 %s322, 1
        %s2010 = scalar_lea.sflag [#allocation4], %s2009
        %s2011 = sand.u32 %s322, 1
        %s2012 = smul.addr %s2011, 12
        %s2013 = scalar_lea.vmem [#allocation23], %s2012
        // Predicated region
        $region125: #{_lambda_.13} parent=71 // pred_check
          %p2014 = pneg %p332
        $region126: #{_lambda_.13} parent=71 // pred_check_branch
          %2016 = sbr.rel (%p2014) target = $region128
        $region127: #{_lambda_.13} parent=71 // pred_region
          %s2018 = ssub.s32 192, 192
          %2019 = vsyncadd %s2010, %s2018
          %s2020 = smul.addr %s36, 3
          %s2021 = smul.addr %s2020, 64
          %s2022 = scalar_lea.hbm %s13, %s2021
          %s2023 = sshll.u32 %s2013, 4
          %s2024 = int_to_ptr.vmem [resolvable:$true] %s2023
          %2029 = dma.vmem_to_hbm [thread:$0]  %s2024, 192, %s2022, %s2010, 64, 64, 4
        $region128: #{_lambda_.13} parent=71 // pred_fallthru
          _
      $region72: #{_lambda_.13} parent=5 // pred_fallthru
        _
      %p2030 = scmp.le.s32.totalorder 2, %s31
      // Predicated region
      $region129: #{_lambda_.13} parent=5 // pred_check
        %p2031 = pneg %p2030
      $region130: #{_lambda_.13} parent=5 // pred_check_branch
        %2033 = sbr.rel (%p2031) target = $region132
      $region131: #{_lambda_.13} parent=5 // pred_region
        %s2034 = ssub.s32 %s31, 2
        // Predicated region
        $region133: #{_lambda_.13} parent=131 // pred_check
          %p2035 = pneg %p338
        $region134: #{_lambda_.13} parent=131 // pred_check_branch
          %2037 = sbr.rel (%p2035) target = $region136
        $region135: #{_lambda_.13} parent=131 // pred_region
          %s2038 = sand.u32 %s323, 1
          %s2039 = scalar_lea.sflag [#allocation4], %s2038
          %s2040 = sand.u32 %s323, 1
          %s2041 = smul.addr %s2040, 12
          %s2042 = scalar_lea.vmem [#allocation23], %s2041
          %2043 = dma.done %s2039, 192
        $region136: #{_lambda_.13} parent=131 // pred_fallthru
          _
      $region132: #{_lambda_.13} parent=5 // pred_fallthru
        _
    $region6: #{_lambda_.13} parent=1 // loop_footer
      %s35 = sadd.s32 1, %s31
    $region7: #{_lambda_.13} parent=1 // loop_footer_branch
      %30 = sbr.rel target = $region3
    $region8: #{_lambda_.13} parent=1 // loop_exit
      _
    %2044 = vsyncpa [#allocation3], 1
    %s2045 = scalar_lea.sflag [#allocation3], 1
    %2046 = vsyncpa %s2045, 1
    %2047 = vsyncpa [#allocation6], 1
    %2048 = vsyncpa [#allocation9], 1
    %2049 = vsyncpa [#allocation12], 1
    %2050 = vsyncpa [#allocation15], 1
    %2051 = vsyncpa [#allocation18], 1
    %2052 = vsyncpa [#allocation21], 1
    %2053 = vsyncpa [#allocation4], 1
    %s2054 = scalar_lea.sflag [#allocation4], 1
    %2055 = vsyncpa %s2054, 1

// kernel: _lambda_.15
$region0: #{_lambda_.15}
  #allocation0 [shape = 'u32[]', space=smem, size = 0x4, offset = 0x4, fixed_abs, tag = 'smem constant byte address 0x4 - core index']
  #allocation1 [shape = 'u32[144,128]{1,0:T(1,128)}', space=vmem, size = 0x12000, scoped, tag = 'internal scratch']
  #allocation2 [shape = 'f32[1,1]{1,0:T(1,128)}', space=vmem, size = 0x200, scoped, tag = 'scratch operand']
  #allocation3 [shape = 'f32[1,1]{1,0:T(1,128)}', space=vmem, size = 0x200, scoped, tag = 'scratch operand']
  %s0 = inlined_call_operand.vmem [shape: f32[32,128], index: 0, kind: input, shape index: {}]
  %s1 = inlined_call_operand.vmem [shape: f32[32,128], index: 1, kind: input, shape index: {}]
  %s2 = inlined_call_operand.hbm [shape: f32[1,1], index: 2, kind: output, shape index: {}]
  %s3 = sld [smem:[#allocation0]]
  $region26: #{_lambda_.15} parent=0
    _
  %s5 = ssub.s32 1, %s3
  %s6 = scalar_select 0, %s5, %s3
  $region1: #{_lambda_.15} parent=0
    #allocation4 [shape = 'u8[512]{0}', space=vmem, size = 0x400, scoped, tag = 'output window, operand 0, single buffered']
    #allocation5 [shape = 's32[1]{0}', space=sflag, size = 0x4, scoped, tag = 'scoped memory for _lambda_.15']
    %7 = vsyncpa [#allocation5], 0
    // Predicated region
    $region2: #{_lambda_.15} parent=1 // pred_check
      _
    $region3: #{_lambda_.15} parent=1 // pred_check_branch
      %9 = sbr.rel (0) target = $region5
    $region4: #{_lambda_.15} parent=1 // pred_region
      _
    $region5: #{_lambda_.15} parent=1 // pred_fallthru
      _
    // Predicated region
    $region6: #{_lambda_.15} parent=1 // pred_check
      _
    $region7: #{_lambda_.15} parent=1 // pred_check_branch
      %11 = sbr.rel (0) target = $region9
    $region8: #{_lambda_.15} parent=1 // pred_region
      _
    $region9: #{_lambda_.15} parent=1 // pred_fallthru
      _
    %p12 = scmp.eq.s32.totalorder 0, 0
    // Predicated region
    $region10: #{_lambda_.15} parent=1 // pred_check
      %p13 = pneg %p12
    $region11: #{_lambda_.15} parent=1 // pred_check_branch
      %15 = sbr.rel (%p13) target = $region13
    $region12: #{_lambda_.15} parent=1 // pred_region
      %vm16 = vcmask 0
      %17 = vst.msk [vmem:[#allocation2] sm:$0x1] %vm16, 0.0
      %18 = vst.msk [vmem:[#allocation3] sm:$0x1] %vm16, 0.0
    $region13: #{_lambda_.15} parent=1 // pred_fallthru
      _
    %v19 = vld [vmem:[%s0] sm:$0xff]
    %v20 = vld [vmem:[%s0 + $0x8] sm:$0xff]
    %v21 = vld [vmem:[%s0 + $0x10] sm:$0xff]
    %v22 = vld [vmem:[%s0 + $0x18] sm:$0xff]
    %v23 = vld [vmem:[%s1] sm:$0xff]
    %v24 = vld [vmem:[%s1 + $0x8] sm:$0xff]
    %v25 = vld [vmem:[%s1 + $0x10] sm:$0xff]
    %v26 = vld [vmem:[%s1 + $0x18] sm:$0xff]
    %v27 = vsub.f32 %v19, %v23
    %v28 = vsub.f32 %v20, %v24
    %v29 = vsub.f32 %v21, %v25
    %v30 = vsub.f32 %v22, %v26
    %v31 = vmul.f32 %v27, %v27
    %v32 = vmul.f32 %v28, %v28
    %v33 = vmul.f32 %v29, %v29
    %v34 = vmul.f32 %v30, %v30
    %35 = vadd.xlane.f32.xlu0 %v31
    %v36 = vpop.xlane.xlu0 %35
    %37 = vadd.xlane.f32.xlu0 %v32
    %v38 = vpop.xlane.xlu0 %37
    %39 = vadd.xlane.f32.xlu0 %v33
    %v40 = vpop.xlane.xlu0 %39
    %41 = vadd.xlane.f32.xlu0 %v34
    %v42 = vpop.xlane.xlu0 %41
    %v43 = vld [vmem:[#allocation2] sm:$0x1]
    %v44 = vmul.f32 %v36, %v19
    %v45 = vmul.f32 %v38, %v20
    %v46 = vmul.f32 %v40, %v21
    %v47 = vmul.f32 %v42, %v22
    %52 = vrot.lane.b32.xlu0 %v44, 1
    %v53 = vpop.permute.xlu0 %52
    %54 = vrot.lane.b32.xlu0 %v45, 1
    %v55 = vpop.permute.xlu0 %54
    %56 = vrot.lane.b32.xlu0 %v46, 1
    %v57 = vpop.permute.xlu0 %56
    %58 = vrot.lane.b32.xlu0 %v47, 1
    %v59 = vpop.permute.xlu0 %58
    %vm64 = vcmask 7168
    %v65 = vsel %vm64, %v53, 0.0
    %v66 = vsel %vm64, %v55, 0.0
    %v67 = vadd.f32 %v65, %v66
    %v68 = vsel %vm64, %v57, 0.0
    %v69 = vadd.f32 %v67, %v68
    %v70 = vsel %vm64, %v59, 0.0
    %v71 = vadd.f32 %v69, %v70
    %72 = vadd.xlane.f32.xlu0 %v71
    %v73 = vpop.xlane.xlu0 %72
    %v74 = vrot.slane %v73, 4
    %v75 = vadd.f32 %v73, %v74
    %v76 = vrot.slane %v75, 2
    %v77 = vadd.f32 %v75, %v76
    %v78 = vrot.slane %v77, 1
    %v79 = vadd.f32 %v77, %v78
    %s80 = vtos %v79
    %v81 = vstv %s80
    %v82 = vadd.f32 %v43, %v81
    %vm83 = vcmask 0
    %84 = vst.msk [vmem:[#allocation2] sm:$0x1] %vm83, %v82
    %v85 = vld [vmem:[#allocation3] sm:$0x1]
    %90 = vrot.lane.b32.xlu0 %v19, 1
    %v91 = vpop.permute.xlu0 %90
    %92 = vrot.lane.b32.xlu0 %v20, 1
    %v93 = vpop.permute.xlu0 %92
    %94 = vrot.lane.b32.xlu0 %v21, 1
    %v95 = vpop.permute.xlu0 %94
    %96 = vrot.lane.b32.xlu0 %v22, 1
    %v97 = vpop.permute.xlu0 %96
    %v102 = vsel %vm64, %v91, 0.0
    %v103 = vsel %vm64, %v93, 0.0
    %v104 = vadd.f32 %v102, %v103
    %v105 = vsel %vm64, %v95, 0.0
    %v106 = vadd.f32 %v104, %v105
    %v107 = vsel %vm64, %v97, 0.0
    %v108 = vadd.f32 %v106, %v107
    %109 = vadd.xlane.f32.xlu0 %v108
    %v110 = vpop.xlane.xlu0 %109
    %v111 = vrot.slane %v110, 4
    %v112 = vadd.f32 %v110, %v111
    %v113 = vrot.slane %v112, 2
    %v114 = vadd.f32 %v112, %v113
    %v115 = vrot.slane %v114, 1
    %v116 = vadd.f32 %v114, %v115
    %s117 = vtos %v116
    %v118 = vstv %s117
    %v119 = vadd.f32 %v85, %v118
    %120 = vst.msk [vmem:[#allocation3] sm:$0x1] %vm83, %v119
    // Predicated region
    $region14: #{_lambda_.15} parent=1 // pred_check
      %p121 = pneg %p12
    $region15: #{_lambda_.15} parent=1 // pred_check_branch
      %123 = sbr.rel (%p121) target = $region17
    $region16: #{_lambda_.15} parent=1 // pred_region
      %v124 = vld [vmem:[#allocation2] sm:$0x1]
      %v125 = vmul.f32 %v124, 0.03125
      %v126 = vld [vmem:[#allocation3] sm:$0x1]
      %v127 = vrcp.pop %v126
      %v128 = vmul.f32 %v125, %v127
      %129 = vst.msk [vmem:[#allocation4] sm:$0x1] %vm83, %v128
    $region17: #{_lambda_.15} parent=1 // pred_fallthru
      _
    // Predicated region
    $region18: #{_lambda_.15} parent=1 // pred_check
      _
    $region19: #{_lambda_.15} parent=1 // pred_check_branch
      %131 = sbr.rel (0) target = $region21
    $region20: #{_lambda_.15} parent=1 // pred_region
      %s133 = ssub.s32 16, 16
      %134 = vsyncadd [#allocation5], %s133
      %s136 = sshll.u32 [#allocation4], 4
      %s137 = int_to_ptr.vmem [resolvable:$true] %s136
      %139 = dma.vmem_to_hbm [thread:$0]  %s137, 16, %s2, [#allocation5]
    $region21: #{_lambda_.15} parent=1 // pred_fallthru
      _
    // Predicated region
    $region22: #{_lambda_.15} parent=1 // pred_check
      _
    $region23: #{_lambda_.15} parent=1 // pred_check_branch
      %141 = sbr.rel (0) target = $region25
    $region24: #{_lambda_.15} parent=1 // pred_region
      %142 = dma.done [#allocation5], 16
    $region25: #{_lambda_.15} parent=1 // pred_fallthru
      _
    %143 = vsyncpa [#allocation5], 1

</llo_original>
